<compile_context>
chip_gen: v6e
topology: v6e:2x2x1
jax: 0.10.0
libtpu: 0.0.40
codegen_flags: <defaults>
</compile_context>

<pallas_src>
import functools

import jax
import jax.numpy as jnp
from jax.experimental import pallas as pl
from jax.experimental.pallas import tpu as pltpu


# ----------------------------- kernel helpers ------------------------------

def _layernorm(x, w, b, eps=1e-5):
    mu = jnp.mean(x, axis=-1, keepdims=True)
    var = jnp.mean((x - mu) ** 2, axis=-1, keepdims=True)
    return (x - mu) * jax.lax.rsqrt(var + eps) * w + b


# --------------------------------- kernel ----------------------------------

def model_kernel(
    x_ref,                               # (seq*bs, input)   time-major flat
    wxf_ref, bxf_ref,                    # fused x projection (input, 6H), (1, 6H)
    gwh0_ref,                            # layer-0 recurrent gate weight (H, 4H)
    l1w0_ref, l1b0_ref, l2w0_ref, l2b0_ref,
    gwx1_ref, gwh1_ref, gb1_ref,         # layer-1 gate weights / bias
    l1w1_ref, l1b1_ref, l2w1_ref, l2b1_ref,
    aw1_ref, ab1_ref, aw2_ref, ab2_ref,  # attention
    hw1_ref, hb1_ref, hw2_ref, hb2_ref,  # packed prediction heads
    pred_ref,                            # (bs, out_steps)  lane-dense
    attnw_ref,                           # (bs, seq)        lane-dense
    *, seq_len, batch, hidden):
    H = hidden
    B = batch
    f32 = jnp.float32

    # ---- one batched matmul for everything that depends only on x ----
    # columns: [ layer-0 gates x-part + gb0 (4H) | residual_proj0+skip0 (H) | skip1 (H) ]
    xproj = (jnp.dot(x_ref[...], wxf_ref[...], preferred_element_type=f32)
             + bxf_ref[...])                                   # (seq*bs, 6H)

    # ---- preload recurrent weights once; they stay register/VMEM resident ----
    gwh0 = gwh0_ref[...]
    l1w0 = l1w0_ref[...]; l1b0 = l1b0_ref[...]
    l2w0 = l2w0_ref[...]; l2b0 = l2b0_ref[...]
    gwx1 = gwx1_ref[...]; gwh1 = gwh1_ref[...]; gb1 = gb1_ref[...]
    l1w1 = l1w1_ref[...]; l1b1 = l1b1_ref[...]
    l2w1 = l2w1_ref[...]; l2b1 = l2b1_ref[...]

    h0 = jnp.zeros((B, H), f32)
    c0 = jnp.zeros((B, H), f32)
    h1 = jnp.zeros((B, H), f32)
    c1 = jnp.zeros((B, H), f32)
    h_mean = []

    # ---- fully-unrolled recurrence: 3 serial MXU dots per step ----
    for t in range(seq_len):
        xp_t = xproj[t * B:(t + 1) * B]          # (B, 6H) static slice
        gx0 = xp_t[:, 0:4 * H]                   # x-part of layer-0 gates (+bias)
        rs0 = xp_t[:, 4 * H:5 * H]               # residual_proj + skip, layer 0
        sk1 = xp_t[:, 5 * H:6 * H]               # skip, layer 1

        # ---- layer 0 ----
        g0 = gx0 + jnp.dot(h0, gwh0, preferred_element_type=f32)
        s0 = jax.nn.sigmoid(g0)                  # full-vreg transcendentals,
        q0 = jnp.tanh(g0)                        # slice afterwards
        i0, f0, o0 = s0[:, 0:H], s0[:, H:2 * H], s0[:, 3 * H:4 * H]
        gg0 = q0[:, 2 * H:3 * H]
        c0 = _layernorm(f0 * c0 + i0 * gg0, l1w0, l1b0)
        h0 = _layernorm(o0 * jnp.tanh(c0), l2w0, l2b0) + rs0

        # ---- layer 1 (input is the skip-augmented h0) ----
        g1 = (jnp.dot(h0, gwx1, preferred_element_type=f32)
              + jnp.dot(h1, gwh1, preferred_element_type=f32) + gb1)
        s1 = jax.nn.sigmoid(g1)
        q1 = jnp.tanh(g1)
        i1, f1, o1 = s1[:, 0:H], s1[:, H:2 * H], s1[:, 3 * H:4 * H]
        gg1 = q1[:, 2 * H:3 * H]
        c1 = _layernorm(f1 * c1 + i1 * gg1, l1w1, l1b1)
        h1 = _layernorm(o1 * jnp.tanh(c1), l2w1, l2b1) + sk1

        h_mean.append((h0 + h1) * 0.5)

    # ---- attention (entirely off the recurrent critical path) ----
    aw1 = aw1_ref[...]; ab1 = ab1_ref[...]
    aw2 = aw2_ref[...]; ab2 = ab2_ref[...]
    for t in range(seq_len):
        a1 = jnp.tanh(jnp.dot(h_mean[t], aw1, preferred_element_type=f32) + ab1)
        # stage raw scores lane-dense into the output buffer
        attnw_ref[:, t:t + 1] = (jnp.dot(a1, aw2, preferred_element_type=f32)
                                 + ab2)

    scores = attnw_ref[...]                                  # (B, seq)
    m = jnp.max(scores, axis=-1, keepdims=True)              # lane reductions
    e = jnp.exp(scores - m)
    w = e / jnp.sum(e, axis=-1, keepdims=True)
    attnw_ref[...] = w

    attended = w[:, 0:1] * h_mean[0]
    for t in range(1, seq_len):
        attended = attended + w[:, t:t + 1] * h_mean[t]      # (B, H)

    # ---- prediction heads packed into 2 matmuls, lane-dense output ----
    hdn = jnp.maximum(
        jnp.dot(attended, hw1_ref[...], preferred_element_type=f32)
        + hb1_ref[...], 0.0)                                 # (B, S*H/2)
    pred_ref[...] = (jnp.dot(hdn, hw2_ref[...], preferred_element_type=f32)
                     + hb2_ref[...])                         # (B, S)


# --------------------------------- wrapper ---------------------------------

def _pack_params(p, hidden, out_steps):
    """Fuse x-only projections and stack the per-step prediction heads."""
    # x-projection: [gwx0 | rpw0+skw0 | skw1]   (exact: x@A + x@B = x@(A+B))
    wxf = jnp.concatenate([p['gwx0'], p['rpw0'] + p['skw0'], p['skw1']], axis=1)
    bxf = jnp.concatenate([p['gb0'], p['rpb0'] + p['skb0'], p['skb1']], axis=1)
    # prediction heads: first layers side-by-side, second layers block-diagonal
    hw1 = jnp.concatenate([p['hw1'][s] for s in range(out_steps)], axis=1)
    hb1 = jnp.concatenate([p['hb1'][s] for s in range(out_steps)], axis=1)
    hw2 = jax.scipy.linalg.block_diag(*[p['hw2'][s] for s in range(out_steps)])
    hb2 = p['hb2'].reshape(1, out_steps)
    return [
        wxf, bxf,
        p['gwh0'], p['l1w0'], p['l1b0'], p['l2w0'], p['l2b0'],
        p['gwx1'], p['gwh1'], p['gb1'],
        p['l1w1'], p['l1b1'], p['l2w1'], p['l2b1'],
        p['aw1'], p['ab1'], p['aw2'], p['ab2'],
        hw1, hb1, hw2, hb2,
    ]


def multi_step_price_prediction(x, p, *, hidden, out_steps):
    bs, seq, input_size = x.shape
    # time-major flat layout so each timestep is a contiguous row-slice
    x_flat = jnp.transpose(x, (1, 0, 2)).reshape(seq * bs, input_size)
    packed = _pack_params(p, hidden, out_steps)

    kernel = functools.partial(model_kernel, seq_len=seq, batch=bs, hidden=hidden)
    vmem = pl.BlockSpec(memory_space=pltpu.MemorySpace.VMEM)

    pred, attnw = pl.pallas_call(
        kernel,
        out_shape=(jax.ShapeDtypeStruct((bs, out_steps), jnp.float32),
                   jax.ShapeDtypeStruct((bs, seq), jnp.float32)),
        in_specs=[vmem] * (1 + len(packed)),
        out_specs=(vmem, vmem),
    )(x_flat, *packed)

    # back to PyTorch shapes (b, steps, 1) / (b, seq, 1) — layout plumbing only
    return pred[:, :, None], attnw[:, :, None]


# -------------------------- deterministic params ---------------------------

def init_params(key, input_size, hidden, out_steps):
    H = hidden
    ks = iter(jax.random.split(key, 28))

    def u(shape, s=0.1):
        return jax.random.uniform(next(ks), shape, jnp.float32, -s, s)

    p = {}
    # layer 0
    p['gwx0'] = u((input_size, 4 * H)); p['gwh0'] = u((H, 4 * H))
    p['gb0'] = u((1, 4 * H))
    p['l1w0'] = 1.0 + u((1, H)); p['l1b0'] = u((1, H))
    p['l2w0'] = 1.0 + u((1, H)); p['l2b0'] = u((1, H))
    p['rpw0'] = u((input_size, H)); p['rpb0'] = u((1, H))
    p['skw0'] = u((input_size, H)); p['skb0'] = u((1, H))
    # layer 1
    p['gwx1'] = u((H, 4 * H)); p['gwh1'] = u((H, 4 * H))
    p['gb1'] = u((1, 4 * H))
    p['l1w1'] = 1.0 + u((1, H)); p['l1b1'] = u((1, H))
    p['l2w1'] = 1.0 + u((1, H)); p['l2b1'] = u((1, H))
    p['skw1'] = u((input_size, H)); p['skb1'] = u((1, H))
    # attention
    p['aw1'] = u((H, H)); p['ab1'] = u((1, H))
    p['aw2'] = u((H, 1)); p['ab2'] = u((1, 1))
    # prediction heads
    p['hw1'] = u((out_steps, H, H // 2)); p['hb1'] = u((out_steps, 1, H // 2))
    p['hw2'] = u((out_steps, H // 2, 1)); p['hb2'] = u((out_steps, 1, 1))
    return p


# ------------------------- pure-JAX reference model ------------------------

def reference_forward(x, p, hidden, out_steps):
    bs, seq, _ = x.shape
    H = hidden

    def ln(v, w, b, eps=1e-5):
        mu = v.mean(-1, keepdims=True)
        var = ((v - mu) ** 2).mean(-1, keepdims=True)
        return (v - mu) / jnp.sqrt(var + eps) * w + b

    def cell(x_t, h, c, gwx, gwh, gb, l1w, l1b, l2w, l2b):
        g = x_t @ gwx + h @ gwh + gb
        i = jax.nn.sigmoid(g[:, :H]); f = jax.nn.sigmoid(g[:, H:2 * H])
        gg = jnp.tanh(g[:, 2 * H:3 * H]); o = jax.nn.sigmoid(g[:, 3 * H:])
        c = ln(f * c + i * gg, l1w, l1b)
        h = ln(o * jnp.tanh(c), l2w, l2b)
        return h, c

    h = [jnp.zeros((bs, H), jnp.float32) for _ in range(2)]
    c = [jnp.zeros((bs, H), jnp.float32) for _ in range(2)]
    hseq = []
    for t in range(seq):
        x_t = x[:, t, :]
        h0, c0 = cell(x_t, h[0], c[0], p['gwx0'], p['gwh0'], p['gb0'],
                      p['l1w0'], p['l1b0'], p['l2w0'], p['l2b0'])
        h0 = h0 + x_t @ p['rpw0'] + p['rpb0']
        h0 = h0 + x_t @ p['skw0'] + p['skb0']
        h[0], c[0] = h0, c0
        h1, c1 = cell(h0, h[1], c[1], p['gwx1'], p['gwh1'], p['gb1'],
                      p['l1w1'], p['l1b1'], p['l2w1'], p['l2b1'])
        h1 = h1 + x_t @ p['skw1'] + p['skb1']
        h[1], c[1] = h1, c1
        hseq.append((h0 + h1) * 0.5)
    hseq = jnp.stack(hseq, axis=1)                                    # (bs,seq,H)
    scores = jnp.tanh(hseq @ p['aw1'] + p['ab1']) @ p['aw2'] + p['ab2']
    w = jax.nn.softmax(scores, axis=1)                                # (bs,seq,1)
    attended = jnp.sum(w * hseq, axis=1)                              # (bs,H)
    preds = []
    for s in range(out_steps):
        hdn = jnp.maximum(attended @ p['hw1'][s] + p['hb1'][s], 0.0)
        preds.append(hdn @ p['hw2'][s] + p['hb2'][s])
    return jnp.stack(preds, axis=1), w                                # (bs,steps,1)


# ----------------------------------- main -----------------------------------

if __name__ == "__main__":
    bs, seq, input_size, hidden, out_steps = 2, 8, 8, 32, 3

    key = jax.random.PRNGKey(0)
    kx, kp = jax.random.split(key)
    x = jax.random.normal(kx, (bs, seq, input_size), jnp.float32)
    p = init_params(kp, input_size, hidden, out_steps)

    preds, attn = multi_step_price_prediction(
        x, p, hidden=hidden, out_steps=out_steps)
    preds = jax.block_until_ready(preds)
    attn = jax.block_until_ready(attn)

    ref_preds, ref_attn = reference_forward(x, p, hidden, out_steps)
    assert preds.shape == (bs, out_steps, 1)
    assert attn.shape == (bs, seq, 1)
    assert jnp.allclose(preds, ref_preds, atol=2e-3, rtol=2e-3)
    assert jnp.allclose(attn, ref_attn, atol=2e-3, rtol=2e-3)

    print("KERNEL_OK")
</pallas_src>

<mosaic_0001>
module attributes {stable_mosaic.version = 11 : i64} {
  func.func @model_kernel(%arg0: memref<16x8xf32, #tpu.memory_space<vmem>>, %arg1: memref<8x192xf32, #tpu.memory_space<vmem>>, %arg2: memref<1x192xf32, #tpu.memory_space<vmem>>, %arg3: memref<32x128xf32, #tpu.memory_space<vmem>>, %arg4: memref<1x32xf32, #tpu.memory_space<vmem>>, %arg5: memref<1x32xf32, #tpu.memory_space<vmem>>, %arg6: memref<1x32xf32, #tpu.memory_space<vmem>>, %arg7: memref<1x32xf32, #tpu.memory_space<vmem>>, %arg8: memref<32x128xf32, #tpu.memory_space<vmem>>, %arg9: memref<32x128xf32, #tpu.memory_space<vmem>>, %arg10: memref<1x128xf32, #tpu.memory_space<vmem>>, %arg11: memref<1x32xf32, #tpu.memory_space<vmem>>, %arg12: memref<1x32xf32, #tpu.memory_space<vmem>>, %arg13: memref<1x32xf32, #tpu.memory_space<vmem>>, %arg14: memref<1x32xf32, #tpu.memory_space<vmem>>, %arg15: memref<32x32xf32, #tpu.memory_space<vmem>>, %arg16: memref<1x32xf32, #tpu.memory_space<vmem>>, %arg17: memref<32x1xf32, #tpu.memory_space<vmem>>, %arg18: memref<1x1xf32, #tpu.memory_space<vmem>>, %arg19: memref<32x48xf32, #tpu.memory_space<vmem>>, %arg20: memref<1x48xf32, #tpu.memory_space<vmem>>, %arg21: memref<48x3xf32, #tpu.memory_space<vmem>>, %arg22: memref<1x3xf32, #tpu.memory_space<vmem>>, %arg23: memref<2x3xf32, #tpu.memory_space<vmem>>, %arg24: memref<2x8xf32, #tpu.memory_space<vmem>>) attributes {dimension_semantics = [], scalar_prefetch = 0 : i64, scratch_operands = 0 : i64, tpu.core_type = #tpu.core_type<tc>} {
    %c0 = arith.constant 0 : index
    %c0_0 = arith.constant 0 : index
    %0 = vector.load %arg0[%c0, %c0_0] : memref<16x8xf32, #tpu.memory_space<vmem>>, vector<16x8xf32>
    %c0_1 = arith.constant 0 : index
    %c0_2 = arith.constant 0 : index
    %1 = vector.load %arg1[%c0_1, %c0_2] : memref<8x192xf32, #tpu.memory_space<vmem>>, vector<8x192xf32>
    %cst = arith.constant dense<0.000000e+00> : vector<16x192xf32>
    %2 = tpu.matmul %0, %1, %cst {dimension_numbers = #tpu.dot_dimension_numbers<[1], [0], [0], [1], [0, 0, 1, 1], [], []>} : vector<16x8xf32>, vector<8x192xf32>, vector<16x192xf32> -> vector<16x192xf32>
    %c0_3 = arith.constant 0 : index
    %c0_4 = arith.constant 0 : index
    %3 = vector.load %arg2[%c0_3, %c0_4] : memref<1x192xf32, #tpu.memory_space<vmem>>, vector<1x192xf32>
    %4 = vector.broadcast %3 : vector<1x192xf32> to vector<16x192xf32>
    %5 = arith.addf %2, %4 : vector<16x192xf32>
    %c0_5 = arith.constant 0 : index
    %c0_6 = arith.constant 0 : index
    %6 = vector.load %arg3[%c0_5, %c0_6] : memref<32x128xf32, #tpu.memory_space<vmem>>, vector<32x128xf32>
    %c0_7 = arith.constant 0 : index
    %c0_8 = arith.constant 0 : index
    %7 = vector.load %arg4[%c0_7, %c0_8] : memref<1x32xf32, #tpu.memory_space<vmem>>, vector<1x32xf32>
    %c0_9 = arith.constant 0 : index
    %c0_10 = arith.constant 0 : index
    %8 = vector.load %arg5[%c0_9, %c0_10] : memref<1x32xf32, #tpu.memory_space<vmem>>, vector<1x32xf32>
    %c0_11 = arith.constant 0 : index
    %c0_12 = arith.constant 0 : index
    %9 = vector.load %arg6[%c0_11, %c0_12] : memref<1x32xf32, #tpu.memory_space<vmem>>, vector<1x32xf32>
    %c0_13 = arith.constant 0 : index
    %c0_14 = arith.constant 0 : index
    %10 = vector.load %arg7[%c0_13, %c0_14] : memref<1x32xf32, #tpu.memory_space<vmem>>, vector<1x32xf32>
    %c0_15 = arith.constant 0 : index
    %c0_16 = arith.constant 0 : index
    %11 = vector.load %arg8[%c0_15, %c0_16] : memref<32x128xf32, #tpu.memory_space<vmem>>, vector<32x128xf32>
    %c0_17 = arith.constant 0 : index
    %c0_18 = arith.constant 0 : index
    %12 = vector.load %arg9[%c0_17, %c0_18] : memref<32x128xf32, #tpu.memory_space<vmem>>, vector<32x128xf32>
    %c0_19 = arith.constant 0 : index
    %c0_20 = arith.constant 0 : index
    %13 = vector.load %arg10[%c0_19, %c0_20] : memref<1x128xf32, #tpu.memory_space<vmem>>, vector<1x128xf32>
    %c0_21 = arith.constant 0 : index
    %c0_22 = arith.constant 0 : index
    %14 = vector.load %arg11[%c0_21, %c0_22] : memref<1x32xf32, #tpu.memory_space<vmem>>, vector<1x32xf32>
    %c0_23 = arith.constant 0 : index
    %c0_24 = arith.constant 0 : index
    %15 = vector.load %arg12[%c0_23, %c0_24] : memref<1x32xf32, #tpu.memory_space<vmem>>, vector<1x32xf32>
    %c0_25 = arith.constant 0 : index
    %c0_26 = arith.constant 0 : index
    %16 = vector.load %arg13[%c0_25, %c0_26] : memref<1x32xf32, #tpu.memory_space<vmem>>, vector<1x32xf32>
    %c0_27 = arith.constant 0 : index
    %c0_28 = arith.constant 0 : index
    %17 = vector.load %arg14[%c0_27, %c0_28] : memref<1x32xf32, #tpu.memory_space<vmem>>, vector<1x32xf32>
    %cst_29 = arith.constant 0.000000e+00 : f32
    %18 = vector.broadcast %cst_29 : f32 to vector<2x32xf32>
    %cst_30 = arith.constant 0.000000e+00 : f32
    %19 = vector.broadcast %cst_30 : f32 to vector<2x32xf32>
    %cst_31 = arith.constant 0.000000e+00 : f32
    %20 = vector.broadcast %cst_31 : f32 to vector<2x32xf32>
    %cst_32 = arith.constant 0.000000e+00 : f32
    %21 = vector.broadcast %cst_32 : f32 to vector<2x32xf32>
    %22 = vector.extract_strided_slice %5 {offsets = [0, 0], sizes = [2, 192], strides = [1, 1]} : vector<16x192xf32> to vector<2x192xf32>
    %23 = vector.extract_strided_slice %22 {offsets = [0, 0], sizes = [2, 128], strides = [1, 1]} : vector<2x192xf32> to vector<2x128xf32>
    %24 = vector.extract_strided_slice %22 {offsets = [0, 128], sizes = [2, 32], strides = [1, 1]} : vector<2x192xf32> to vector<2x32xf32>
    %25 = vector.extract_strided_slice %22 {offsets = [0, 160], sizes = [2, 32], strides = [1, 1]} : vector<2x192xf32> to vector<2x32xf32>
    %cst_33 = arith.constant dense<0.000000e+00> : vector<2x128xf32>
    %26 = tpu.matmul %18, %6, %cst_33 {dimension_numbers = #tpu.dot_dimension_numbers<[1], [0], [0], [1], [0, 0, 1, 1], [], []>} : vector<2x32xf32>, vector<32x128xf32>, vector<2x128xf32> -> vector<2x128xf32>
    %27 = arith.addf %23, %26 : vector<2x128xf32>
    %28 = arith.negf %27 : vector<2x128xf32>
    %29 = math.exp %28 : vector<2x128xf32>
    %cst_34 = arith.constant 1.000000e+00 : f32
    %30 = vector.broadcast %cst_34 : f32 to vector<2x128xf32>
    %31 = arith.addf %30, %29 : vector<2x128xf32>
    %32 = arith.divf %30, %31 : vector<2x128xf32>
    %33 = math.tanh %27 : vector<2x128xf32>
    %34 = vector.extract_strided_slice %32 {offsets = [0, 0], sizes = [2, 32], strides = [1, 1]} : vector<2x128xf32> to vector<2x32xf32>
    %35 = vector.extract_strided_slice %32 {offsets = [0, 32], sizes = [2, 32], strides = [1, 1]} : vector<2x128xf32> to vector<2x32xf32>
    %36 = vector.extract_strided_slice %32 {offsets = [0, 96], sizes = [2, 32], strides = [1, 1]} : vector<2x128xf32> to vector<2x32xf32>
    %37 = vector.extract_strided_slice %33 {offsets = [0, 64], sizes = [2, 32], strides = [1, 1]} : vector<2x128xf32> to vector<2x32xf32>
    %38 = arith.mulf %35, %19 : vector<2x32xf32>
    %39 = arith.mulf %34, %37 : vector<2x32xf32>
    %40 = arith.addf %38, %39 : vector<2x32xf32>
    %cst_35 = arith.constant dense<0.000000e+00> : vector<2xf32>
    %41 = vector.multi_reduction <add>, %40, %cst_35 [1] : vector<2x32xf32> to vector<2xf32>
    %42 = vector.shape_cast %41 : vector<2xf32> to vector<2x1xf32>
    %cst_36 = arith.constant 3.200000e+01 : f32
    %43 = vector.broadcast %cst_36 : f32 to vector<2x1xf32>
    %44 = arith.divf %42, %43 : vector<2x1xf32>
    %45 = vector.broadcast %44 : vector<2x1xf32> to vector<2x32xf32>
    %46 = arith.subf %40, %45 : vector<2x32xf32>
    %47 = arith.mulf %46, %46 : vector<2x32xf32>
    %cst_37 = arith.constant dense<0.000000e+00> : vector<2xf32>
    %48 = vector.multi_reduction <add>, %47, %cst_37 [1] : vector<2x32xf32> to vector<2xf32>
    %49 = vector.shape_cast %48 : vector<2xf32> to vector<2x1xf32>
    %cst_38 = arith.constant 3.200000e+01 : f32
    %50 = vector.broadcast %cst_38 : f32 to vector<2x1xf32>
    %51 = arith.divf %49, %50 : vector<2x1xf32>
    %52 = vector.broadcast %44 : vector<2x1xf32> to vector<2x32xf32>
    %53 = arith.subf %40, %52 : vector<2x32xf32>
    %cst_39 = arith.constant 9.99999974E-6 : f32
    %54 = vector.broadcast %cst_39 : f32 to vector<2x1xf32>
    %55 = arith.addf %51, %54 : vector<2x1xf32>
    %56 = math.rsqrt %55 : vector<2x1xf32>
    %57 = vector.broadcast %56 : vector<2x1xf32> to vector<2x32xf32>
    %58 = arith.mulf %53, %57 : vector<2x32xf32>
    %59 = vector.broadcast %7 : vector<1x32xf32> to vector<2x32xf32>
    %60 = arith.mulf %58, %59 : vector<2x32xf32>
    %61 = vector.broadcast %8 : vector<1x32xf32> to vector<2x32xf32>
    %62 = arith.addf %60, %61 : vector<2x32xf32>
    %63 = math.tanh %62 : vector<2x32xf32>
    %64 = arith.mulf %36, %63 : vector<2x32xf32>
    %cst_40 = arith.constant dense<0.000000e+00> : vector<2xf32>
    %65 = vector.multi_reduction <add>, %64, %cst_40 [1] : vector<2x32xf32> to vector<2xf32>
    %66 = vector.shape_cast %65 : vector<2xf32> to vector<2x1xf32>
    %cst_41 = arith.constant 3.200000e+01 : f32
    %67 = vector.broadcast %cst_41 : f32 to vector<2x1xf32>
    %68 = arith.divf %66, %67 : vector<2x1xf32>
    %69 = vector.broadcast %68 : vector<2x1xf32> to vector<2x32xf32>
    %70 = arith.subf %64, %69 : vector<2x32xf32>
    %71 = arith.mulf %70, %70 : vector<2x32xf32>
    %cst_42 = arith.constant dense<0.000000e+00> : vector<2xf32>
    %72 = vector.multi_reduction <add>, %71, %cst_42 [1] : vector<2x32xf32> to vector<2xf32>
    %73 = vector.shape_cast %72 : vector<2xf32> to vector<2x1xf32>
    %cst_43 = arith.constant 3.200000e+01 : f32
    %74 = vector.broadcast %cst_43 : f32 to vector<2x1xf32>
    %75 = arith.divf %73, %74 : vector<2x1xf32>
    %76 = vector.broadcast %68 : vector<2x1xf32> to vector<2x32xf32>
    %77 = arith.subf %64, %76 : vector<2x32xf32>
    %cst_44 = arith.constant 9.99999974E-6 : f32
    %78 = vector.broadcast %cst_44 : f32 to vector<2x1xf32>
    %79 = arith.addf %75, %78 : vector<2x1xf32>
    %80 = math.rsqrt %79 : vector<2x1xf32>
    %81 = vector.broadcast %80 : vector<2x1xf32> to vector<2x32xf32>
    %82 = arith.mulf %77, %81 : vector<2x32xf32>
    %83 = vector.broadcast %9 : vector<1x32xf32> to vector<2x32xf32>
    %84 = arith.mulf %82, %83 : vector<2x32xf32>
    %85 = vector.broadcast %10 : vector<1x32xf32> to vector<2x32xf32>
    %86 = arith.addf %84, %85 : vector<2x32xf32>
    %87 = arith.addf %86, %24 : vector<2x32xf32>
    %cst_45 = arith.constant dense<0.000000e+00> : vector<2x128xf32>
    %88 = tpu.matmul %87, %11, %cst_45 {dimension_numbers = #tpu.dot_dimension_numbers<[1], [0], [0], [1], [0, 0, 1, 1], [], []>} : vector<2x32xf32>, vector<32x128xf32>, vector<2x128xf32> -> vector<2x128xf32>
    %cst_46 = arith.constant dense<0.000000e+00> : vector<2x128xf32>
    %89 = tpu.matmul %20, %12, %cst_46 {dimension_numbers = #tpu.dot_dimension_numbers<[1], [0], [0], [1], [0, 0, 1, 1], [], []>} : vector<2x32xf32>, vector<32x128xf32>, vector<2x128xf32> -> vector<2x128xf32>
    %90 = arith.addf %88, %89 : vector<2x128xf32>
    %91 = vector.broadcast %13 : vector<1x128xf32> to vector<2x128xf32>
    %92 = arith.addf %90, %91 : vector<2x128xf32>
    %93 = arith.negf %92 : vector<2x128xf32>
    %94 = math.exp %93 : vector<2x128xf32>
    %cst_47 = arith.constant 1.000000e+00 : f32
    %95 = vector.broadcast %cst_47 : f32 to vector<2x128xf32>
    %96 = arith.addf %95, %94 : vector<2x128xf32>
    %97 = arith.divf %95, %96 : vector<2x128xf32>
    %98 = math.tanh %92 : vector<2x128xf32>
    %99 = vector.extract_strided_slice %97 {offsets = [0, 0], sizes = [2, 32], strides = [1, 1]} : vector<2x128xf32> to vector<2x32xf32>
    %100 = vector.extract_strided_slice %97 {offsets = [0, 32], sizes = [2, 32], strides = [1, 1]} : vector<2x128xf32> to vector<2x32xf32>
    %101 = vector.extract_strided_slice %97 {offsets = [0, 96], sizes = [2, 32], strides = [1, 1]} : vector<2x128xf32> to vector<2x32xf32>
    %102 = vector.extract_strided_slice %98 {offsets = [0, 64], sizes = [2, 32], strides = [1, 1]} : vector<2x128xf32> to vector<2x32xf32>
    %103 = arith.mulf %100, %21 : vector<2x32xf32>
    %104 = arith.mulf %99, %102 : vector<2x32xf32>
    %105 = arith.addf %103, %104 : vector<2x32xf32>
    %cst_48 = arith.constant dense<0.000000e+00> : vector<2xf32>
    %106 = vector.multi_reduction <add>, %105, %cst_48 [1] : vector<2x32xf32> to vector<2xf32>
    %107 = vector.shape_cast %106 : vector<2xf32> to vector<2x1xf32>
    %cst_49 = arith.constant 3.200000e+01 : f32
    %108 = vector.broadcast %cst_49 : f32 to vector<2x1xf32>
    %109 = arith.divf %107, %108 : vector<2x1xf32>
    %110 = vector.broadcast %109 : vector<2x1xf32> to vector<2x32xf32>
    %111 = arith.subf %105, %110 : vector<2x32xf32>
    %112 = arith.mulf %111, %111 : vector<2x32xf32>
    %cst_50 = arith.constant dense<0.000000e+00> : vector<2xf32>
    %113 = vector.multi_reduction <add>, %112, %cst_50 [1] : vector<2x32xf32> to vector<2xf32>
    %114 = vector.shape_cast %113 : vector<2xf32> to vector<2x1xf32>
    %cst_51 = arith.constant 3.200000e+01 : f32
    %115 = vector.broadcast %cst_51 : f32 to vector<2x1xf32>
    %116 = arith.divf %114, %115 : vector<2x1xf32>
    %117 = vector.broadcast %109 : vector<2x1xf32> to vector<2x32xf32>
    %118 = arith.subf %105, %117 : vector<2x32xf32>
    %cst_52 = arith.constant 9.99999974E-6 : f32
    %119 = vector.broadcast %cst_52 : f32 to vector<2x1xf32>
    %120 = arith.addf %116, %119 : vector<2x1xf32>
    %121 = math.rsqrt %120 : vector<2x1xf32>
    %122 = vector.broadcast %121 : vector<2x1xf32> to vector<2x32xf32>
    %123 = arith.mulf %118, %122 : vector<2x32xf32>
    %124 = vector.broadcast %14 : vector<1x32xf32> to vector<2x32xf32>
    %125 = arith.mulf %123, %124 : vector<2x32xf32>
    %126 = vector.broadcast %15 : vector<1x32xf32> to vector<2x32xf32>
    %127 = arith.addf %125, %126 : vector<2x32xf32>
    %128 = math.tanh %127 : vector<2x32xf32>
    %129 = arith.mulf %101, %128 : vector<2x32xf32>
    %cst_53 = arith.constant dense<0.000000e+00> : vector<2xf32>
    %130 = vector.multi_reduction <add>, %129, %cst_53 [1] : vector<2x32xf32> to vector<2xf32>
    %131 = vector.shape_cast %130 : vector<2xf32> to vector<2x1xf32>
    %cst_54 = arith.constant 3.200000e+01 : f32
    %132 = vector.broadcast %cst_54 : f32 to vector<2x1xf32>
    %133 = arith.divf %131, %132 : vector<2x1xf32>
    %134 = vector.broadcast %133 : vector<2x1xf32> to vector<2x32xf32>
    %135 = arith.subf %129, %134 : vector<2x32xf32>
    %136 = arith.mulf %135, %135 : vector<2x32xf32>
    %cst_55 = arith.constant dense<0.000000e+00> : vector<2xf32>
    %137 = vector.multi_reduction <add>, %136, %cst_55 [1] : vector<2x32xf32> to vector<2xf32>
    %138 = vector.shape_cast %137 : vector<2xf32> to vector<2x1xf32>
    %cst_56 = arith.constant 3.200000e+01 : f32
    %139 = vector.broadcast %cst_56 : f32 to vector<2x1xf32>
    %140 = arith.divf %138, %139 : vector<2x1xf32>
    %141 = vector.broadcast %133 : vector<2x1xf32> to vector<2x32xf32>
    %142 = arith.subf %129, %141 : vector<2x32xf32>
    %cst_57 = arith.constant 9.99999974E-6 : f32
    %143 = vector.broadcast %cst_57 : f32 to vector<2x1xf32>
    %144 = arith.addf %140, %143 : vector<2x1xf32>
    %145 = math.rsqrt %144 : vector<2x1xf32>
    %146 = vector.broadcast %145 : vector<2x1xf32> to vector<2x32xf32>
    %147 = arith.mulf %142, %146 : vector<2x32xf32>
    %148 = vector.broadcast %16 : vector<1x32xf32> to vector<2x32xf32>
    %149 = arith.mulf %147, %148 : vector<2x32xf32>
    %150 = vector.broadcast %17 : vector<1x32xf32> to vector<2x32xf32>
    %151 = arith.addf %149, %150 : vector<2x32xf32>
    %152 = arith.addf %151, %25 : vector<2x32xf32>
    %153 = arith.addf %87, %152 : vector<2x32xf32>
    %cst_58 = arith.constant 5.000000e-01 : f32
    %154 = vector.broadcast %cst_58 : f32 to vector<2x32xf32>
    %155 = arith.mulf %153, %154 : vector<2x32xf32>
    %156 = vector.extract_strided_slice %5 {offsets = [2, 0], sizes = [2, 192], strides = [1, 1]} : vector<16x192xf32> to vector<2x192xf32>
    %157 = vector.extract_strided_slice %156 {offsets = [0, 0], sizes = [2, 128], strides = [1, 1]} : vector<2x192xf32> to vector<2x128xf32>
    %158 = vector.extract_strided_slice %156 {offsets = [0, 128], sizes = [2, 32], strides = [1, 1]} : vector<2x192xf32> to vector<2x32xf32>
    %159 = vector.extract_strided_slice %156 {offsets = [0, 160], sizes = [2, 32], strides = [1, 1]} : vector<2x192xf32> to vector<2x32xf32>
    %cst_59 = arith.constant dense<0.000000e+00> : vector<2x128xf32>
    %160 = tpu.matmul %87, %6, %cst_59 {dimension_numbers = #tpu.dot_dimension_numbers<[1], [0], [0], [1], [0, 0, 1, 1], [], []>} : vector<2x32xf32>, vector<32x128xf32>, vector<2x128xf32> -> vector<2x128xf32>
    %161 = arith.addf %157, %160 : vector<2x128xf32>
    %162 = arith.negf %161 : vector<2x128xf32>
    %163 = math.exp %162 : vector<2x128xf32>
    %cst_60 = arith.constant 1.000000e+00 : f32
    %164 = vector.broadcast %cst_60 : f32 to vector<2x128xf32>
    %165 = arith.addf %164, %163 : vector<2x128xf32>
    %166 = arith.divf %164, %165 : vector<2x128xf32>
    %167 = math.tanh %161 : vector<2x128xf32>
    %168 = vector.extract_strided_slice %166 {offsets = [0, 0], sizes = [2, 32], strides = [1, 1]} : vector<2x128xf32> to vector<2x32xf32>
    %169 = vector.extract_strided_slice %166 {offsets = [0, 32], sizes = [2, 32], strides = [1, 1]} : vector<2x128xf32> to vector<2x32xf32>
    %170 = vector.extract_strided_slice %166 {offsets = [0, 96], sizes = [2, 32], strides = [1, 1]} : vector<2x128xf32> to vector<2x32xf32>
    %171 = vector.extract_strided_slice %167 {offsets = [0, 64], sizes = [2, 32], strides = [1, 1]} : vector<2x128xf32> to vector<2x32xf32>
    %172 = arith.mulf %169, %62 : vector<2x32xf32>
    %173 = arith.mulf %168, %171 : vector<2x32xf32>
    %174 = arith.addf %172, %173 : vector<2x32xf32>
    %cst_61 = arith.constant dense<0.000000e+00> : vector<2xf32>
    %175 = vector.multi_reduction <add>, %174, %cst_61 [1] : vector<2x32xf32> to vector<2xf32>
    %176 = vector.shape_cast %175 : vector<2xf32> to vector<2x1xf32>
    %cst_62 = arith.constant 3.200000e+01 : f32
    %177 = vector.broadcast %cst_62 : f32 to vector<2x1xf32>
    %178 = arith.divf %176, %177 : vector<2x1xf32>
    %179 = vector.broadcast %178 : vector<2x1xf32> to vector<2x32xf32>
    %180 = arith.subf %174, %179 : vector<2x32xf32>
    %181 = arith.mulf %180, %180 : vector<2x32xf32>
    %cst_63 = arith.constant dense<0.000000e+00> : vector<2xf32>
    %182 = vector.multi_reduction <add>, %181, %cst_63 [1] : vector<2x32xf32> to vector<2xf32>
    %183 = vector.shape_cast %182 : vector<2xf32> to vector<2x1xf32>
    %cst_64 = arith.constant 3.200000e+01 : f32
    %184 = vector.broadcast %cst_64 : f32 to vector<2x1xf32>
    %185 = arith.divf %183, %184 : vector<2x1xf32>
    %186 = vector.broadcast %178 : vector<2x1xf32> to vector<2x32xf32>
    %187 = arith.subf %174, %186 : vector<2x32xf32>
    %cst_65 = arith.constant 9.99999974E-6 : f32
    %188 = vector.broadcast %cst_65 : f32 to vector<2x1xf32>
    %189 = arith.addf %185, %188 : vector<2x1xf32>
    %190 = math.rsqrt %189 : vector<2x1xf32>
    %191 = vector.broadcast %190 : vector<2x1xf32> to vector<2x32xf32>
    %192 = arith.mulf %187, %191 : vector<2x32xf32>
    %193 = vector.broadcast %7 : vector<1x32xf32> to vector<2x32xf32>
    %194 = arith.mulf %192, %193 : vector<2x32xf32>
    %195 = vector.broadcast %8 : vector<1x32xf32> to vector<2x32xf32>
    %196 = arith.addf %194, %195 : vector<2x32xf32>
    %197 = math.tanh %196 : vector<2x32xf32>
    %198 = arith.mulf %170, %197 : vector<2x32xf32>
    %cst_66 = arith.constant dense<0.000000e+00> : vector<2xf32>
    %199 = vector.multi_reduction <add>, %198, %cst_66 [1] : vector<2x32xf32> to vector<2xf32>
    %200 = vector.shape_cast %199 : vector<2xf32> to vector<2x1xf32>
    %cst_67 = arith.constant 3.200000e+01 : f32
    %201 = vector.broadcast %cst_67 : f32 to vector<2x1xf32>
    %202 = arith.divf %200, %201 : vector<2x1xf32>
    %203 = vector.broadcast %202 : vector<2x1xf32> to vector<2x32xf32>
    %204 = arith.subf %198, %203 : vector<2x32xf32>
    %205 = arith.mulf %204, %204 : vector<2x32xf32>
    %cst_68 = arith.constant dense<0.000000e+00> : vector<2xf32>
    %206 = vector.multi_reduction <add>, %205, %cst_68 [1] : vector<2x32xf32> to vector<2xf32>
    %207 = vector.shape_cast %206 : vector<2xf32> to vector<2x1xf32>
    %cst_69 = arith.constant 3.200000e+01 : f32
    %208 = vector.broadcast %cst_69 : f32 to vector<2x1xf32>
    %209 = arith.divf %207, %208 : vector<2x1xf32>
    %210 = vector.broadcast %202 : vector<2x1xf32> to vector<2x32xf32>
    %211 = arith.subf %198, %210 : vector<2x32xf32>
    %cst_70 = arith.constant 9.99999974E-6 : f32
    %212 = vector.broadcast %cst_70 : f32 to vector<2x1xf32>
    %213 = arith.addf %209, %212 : vector<2x1xf32>
    %214 = math.rsqrt %213 : vector<2x1xf32>
    %215 = vector.broadcast %214 : vector<2x1xf32> to vector<2x32xf32>
    %216 = arith.mulf %211, %215 : vector<2x32xf32>
    %217 = vector.broadcast %9 : vector<1x32xf32> to vector<2x32xf32>
    %218 = arith.mulf %216, %217 : vector<2x32xf32>
    %219 = vector.broadcast %10 : vector<1x32xf32> to vector<2x32xf32>
    %220 = arith.addf %218, %219 : vector<2x32xf32>
    %221 = arith.addf %220, %158 : vector<2x32xf32>
    %cst_71 = arith.constant dense<0.000000e+00> : vector<2x128xf32>
    %222 = tpu.matmul %221, %11, %cst_71 {dimension_numbers = #tpu.dot_dimension_numbers<[1], [0], [0], [1], [0, 0, 1, 1], [], []>} : vector<2x32xf32>, vector<32x128xf32>, vector<2x128xf32> -> vector<2x128xf32>
    %cst_72 = arith.constant dense<0.000000e+00> : vector<2x128xf32>
    %223 = tpu.matmul %152, %12, %cst_72 {dimension_numbers = #tpu.dot_dimension_numbers<[1], [0], [0], [1], [0, 0, 1, 1], [], []>} : vector<2x32xf32>, vector<32x128xf32>, vector<2x128xf32> -> vector<2x128xf32>
    %224 = arith.addf %222, %223 : vector<2x128xf32>
    %225 = vector.broadcast %13 : vector<1x128xf32> to vector<2x128xf32>
    %226 = arith.addf %224, %225 : vector<2x128xf32>
    %227 = arith.negf %226 : vector<2x128xf32>
    %228 = math.exp %227 : vector<2x128xf32>
    %cst_73 = arith.constant 1.000000e+00 : f32
    %229 = vector.broadcast %cst_73 : f32 to vector<2x128xf32>
    %230 = arith.addf %229, %228 : vector<2x128xf32>
    %231 = arith.divf %229, %230 : vector<2x128xf32>
    %232 = math.tanh %226 : vector<2x128xf32>
    %233 = vector.extract_strided_slice %231 {offsets = [0, 0], sizes = [2, 32], strides = [1, 1]} : vector<2x128xf32> to vector<2x32xf32>
    %234 = vector.extract_strided_slice %231 {offsets = [0, 32], sizes = [2, 32], strides = [1, 1]} : vector<2x128xf32> to vector<2x32xf32>
    %235 = vector.extract_strided_slice %231 {offsets = [0, 96], sizes = [2, 32], strides = [1, 1]} : vector<2x128xf32> to vector<2x32xf32>
    %236 = vector.extract_strided_slice %232 {offsets = [0, 64], sizes = [2, 32], strides = [1, 1]} : vector<2x128xf32> to vector<2x32xf32>
    %237 = arith.mulf %234, %127 : vector<2x32xf32>
    %238 = arith.mulf %233, %236 : vector<2x32xf32>
    %239 = arith.addf %237, %238 : vector<2x32xf32>
    %cst_74 = arith.constant dense<0.000000e+00> : vector<2xf32>
    %240 = vector.multi_reduction <add>, %239, %cst_74 [1] : vector<2x32xf32> to vector<2xf32>
    %241 = vector.shape_cast %240 : vector<2xf32> to vector<2x1xf32>
    %cst_75 = arith.constant 3.200000e+01 : f32
    %242 = vector.broadcast %cst_75 : f32 to vector<2x1xf32>
    %243 = arith.divf %241, %242 : vector<2x1xf32>
    %244 = vector.broadcast %243 : vector<2x1xf32> to vector<2x32xf32>
    %245 = arith.subf %239, %244 : vector<2x32xf32>
    %246 = arith.mulf %245, %245 : vector<2x32xf32>
    %cst_76 = arith.constant dense<0.000000e+00> : vector<2xf32>
    %247 = vector.multi_reduction <add>, %246, %cst_76 [1] : vector<2x32xf32> to vector<2xf32>
    %248 = vector.shape_cast %247 : vector<2xf32> to vector<2x1xf32>
    %cst_77 = arith.constant 3.200000e+01 : f32
    %249 = vector.broadcast %cst_77 : f32 to vector<2x1xf32>
    %250 = arith.divf %248, %249 : vector<2x1xf32>
    %251 = vector.broadcast %243 : vector<2x1xf32> to vector<2x32xf32>
    %252 = arith.subf %239, %251 : vector<2x32xf32>
    %cst_78 = arith.constant 9.99999974E-6 : f32
    %253 = vector.broadcast %cst_78 : f32 to vector<2x1xf32>
    %254 = arith.addf %250, %253 : vector<2x1xf32>
    %255 = math.rsqrt %254 : vector<2x1xf32>
    %256 = vector.broadcast %255 : vector<2x1xf32> to vector<2x32xf32>
    %257 = arith.mulf %252, %256 : vector<2x32xf32>
    %258 = vector.broadcast %14 : vector<1x32xf32> to vector<2x32xf32>
    %259 = arith.mulf %257, %258 : vector<2x32xf32>
    %260 = vector.broadcast %15 : vector<1x32xf32> to vector<2x32xf32>
    %261 = arith.addf %259, %260 : vector<2x32xf32>
    %262 = math.tanh %261 : vector<2x32xf32>
    %263 = arith.mulf %235, %262 : vector<2x32xf32>
    %cst_79 = arith.constant dense<0.000000e+00> : vector<2xf32>
    %264 = vector.multi_reduction <add>, %263, %cst_79 [1] : vector<2x32xf32> to vector<2xf32>
    %265 = vector.shape_cast %264 : vector<2xf32> to vector<2x1xf32>
    %cst_80 = arith.constant 3.200000e+01 : f32
    %266 = vector.broadcast %cst_80 : f32 to vector<2x1xf32>
    %267 = arith.divf %265, %266 : vector<2x1xf32>
    %268 = vector.broadcast %267 : vector<2x1xf32> to vector<2x32xf32>
    %269 = arith.subf %263, %268 : vector<2x32xf32>
    %270 = arith.mulf %269, %269 : vector<2x32xf32>
    %cst_81 = arith.constant dense<0.000000e+00> : vector<2xf32>
    %271 = vector.multi_reduction <add>, %270, %cst_81 [1] : vector<2x32xf32> to vector<2xf32>
    %272 = vector.shape_cast %271 : vector<2xf32> to vector<2x1xf32>
    %cst_82 = arith.constant 3.200000e+01 : f32
    %273 = vector.broadcast %cst_82 : f32 to vector<2x1xf32>
    %274 = arith.divf %272, %273 : vector<2x1xf32>
    %275 = vector.broadcast %267 : vector<2x1xf32> to vector<2x32xf32>
    %276 = arith.subf %263, %275 : vector<2x32xf32>
    %cst_83 = arith.constant 9.99999974E-6 : f32
    %277 = vector.broadcast %cst_83 : f32 to vector<2x1xf32>
    %278 = arith.addf %274, %277 : vector<2x1xf32>
    %279 = math.rsqrt %278 : vector<2x1xf32>
    %280 = vector.broadcast %279 : vector<2x1xf32> to vector<2x32xf32>
    %281 = arith.mulf %276, %280 : vector<2x32xf32>
    %282 = vector.broadcast %16 : vector<1x32xf32> to vector<2x32xf32>
    %283 = arith.mulf %281, %282 : vector<2x32xf32>
    %284 = vector.broadcast %17 : vector<1x32xf32> to vector<2x32xf32>
    %285 = arith.addf %283, %284 : vector<2x32xf32>
    %286 = arith.addf %285, %159 : vector<2x32xf32>
    %287 = arith.addf %221, %286 : vector<2x32xf32>
    %cst_84 = arith.constant 5.000000e-01 : f32
    %288 = vector.broadcast %cst_84 : f32 to vector<2x32xf32>
    %289 = arith.mulf %287, %288 : vector<2x32xf32>
    %290 = vector.extract_strided_slice %5 {offsets = [4, 0], sizes = [2, 192], strides = [1, 1]} : vector<16x192xf32> to vector<2x192xf32>
    %291 = vector.extract_strided_slice %290 {offsets = [0, 0], sizes = [2, 128], strides = [1, 1]} : vector<2x192xf32> to vector<2x128xf32>
    %292 = vector.extract_strided_slice %290 {offsets = [0, 128], sizes = [2, 32], strides = [1, 1]} : vector<2x192xf32> to vector<2x32xf32>
    %293 = vector.extract_strided_slice %290 {offsets = [0, 160], sizes = [2, 32], strides = [1, 1]} : vector<2x192xf32> to vector<2x32xf32>
    %cst_85 = arith.constant dense<0.000000e+00> : vector<2x128xf32>
    %294 = tpu.matmul %221, %6, %cst_85 {dimension_numbers = #tpu.dot_dimension_numbers<[1], [0], [0], [1], [0, 0, 1, 1], [], []>} : vector<2x32xf32>, vector<32x128xf32>, vector<2x128xf32> -> vector<2x128xf32>
    %295 = arith.addf %291, %294 : vector<2x128xf32>
    %296 = arith.negf %295 : vector<2x128xf32>
    %297 = math.exp %296 : vector<2x128xf32>
    %cst_86 = arith.constant 1.000000e+00 : f32
    %298 = vector.broadcast %cst_86 : f32 to vector<2x128xf32>
    %299 = arith.addf %298, %297 : vector<2x128xf32>
    %300 = arith.divf %298, %299 : vector<2x128xf32>
    %301 = math.tanh %295 : vector<2x128xf32>
    %302 = vector.extract_strided_slice %300 {offsets = [0, 0], sizes = [2, 32], strides = [1, 1]} : vector<2x128xf32> to vector<2x32xf32>
    %303 = vector.extract_strided_slice %300 {offsets = [0, 32], sizes = [2, 32], strides = [1, 1]} : vector<2x128xf32> to vector<2x32xf32>
    %304 = vector.extract_strided_slice %300 {offsets = [0, 96], sizes = [2, 32], strides = [1, 1]} : vector<2x128xf32> to vector<2x32xf32>
    %305 = vector.extract_strided_slice %301 {offsets = [0, 64], sizes = [2, 32], strides = [1, 1]} : vector<2x128xf32> to vector<2x32xf32>
    %306 = arith.mulf %303, %196 : vector<2x32xf32>
    %307 = arith.mulf %302, %305 : vector<2x32xf32>
    %308 = arith.addf %306, %307 : vector<2x32xf32>
    %cst_87 = arith.constant dense<0.000000e+00> : vector<2xf32>
    %309 = vector.multi_reduction <add>, %308, %cst_87 [1] : vector<2x32xf32> to vector<2xf32>
    %310 = vector.shape_cast %309 : vector<2xf32> to vector<2x1xf32>
    %cst_88 = arith.constant 3.200000e+01 : f32
    %311 = vector.broadcast %cst_88 : f32 to vector<2x1xf32>
    %312 = arith.divf %310, %311 : vector<2x1xf32>
    %313 = vector.broadcast %312 : vector<2x1xf32> to vector<2x32xf32>
    %314 = arith.subf %308, %313 : vector<2x32xf32>
    %315 = arith.mulf %314, %314 : vector<2x32xf32>
    %cst_89 = arith.constant dense<0.000000e+00> : vector<2xf32>
    %316 = vector.multi_reduction <add>, %315, %cst_89 [1] : vector<2x32xf32> to vector<2xf32>
    %317 = vector.shape_cast %316 : vector<2xf32> to vector<2x1xf32>
    %cst_90 = arith.constant 3.200000e+01 : f32
    %318 = vector.broadcast %cst_90 : f32 to vector<2x1xf32>
    %319 = arith.divf %317, %318 : vector<2x1xf32>
    %320 = vector.broadcast %312 : vector<2x1xf32> to vector<2x32xf32>
    %321 = arith.subf %308, %320 : vector<2x32xf32>
    %cst_91 = arith.constant 9.99999974E-6 : f32
    %322 = vector.broadcast %cst_91 : f32 to vector<2x1xf32>
    %323 = arith.addf %319, %322 : vector<2x1xf32>
    %324 = math.rsqrt %323 : vector<2x1xf32>
    %325 = vector.broadcast %324 : vector<2x1xf32> to vector<2x32xf32>
    %326 = arith.mulf %321, %325 : vector<2x32xf32>
    %327 = vector.broadcast %7 : vector<1x32xf32> to vector<2x32xf32>
    %328 = arith.mulf %326, %327 : vector<2x32xf32>
    %329 = vector.broadcast %8 : vector<1x32xf32> to vector<2x32xf32>
    %330 = arith.addf %328, %329 : vector<2x32xf32>
    %331 = math.tanh %330 : vector<2x32xf32>
    %332 = arith.mulf %304, %331 : vector<2x32xf32>
    %cst_92 = arith.constant dense<0.000000e+00> : vector<2xf32>
    %333 = vector.multi_reduction <add>, %332, %cst_92 [1] : vector<2x32xf32> to vector<2xf32>
    %334 = vector.shape_cast %333 : vector<2xf32> to vector<2x1xf32>
    %cst_93 = arith.constant 3.200000e+01 : f32
    %335 = vector.broadcast %cst_93 : f32 to vector<2x1xf32>
    %336 = arith.divf %334, %335 : vector<2x1xf32>
    %337 = vector.broadcast %336 : vector<2x1xf32> to vector<2x32xf32>
    %338 = arith.subf %332, %337 : vector<2x32xf32>
    %339 = arith.mulf %338, %338 : vector<2x32xf32>
    %cst_94 = arith.constant dense<0.000000e+00> : vector<2xf32>
    %340 = vector.multi_reduction <add>, %339, %cst_94 [1] : vector<2x32xf32> to vector<2xf32>
    %341 = vector.shape_cast %340 : vector<2xf32> to vector<2x1xf32>
    %cst_95 = arith.constant 3.200000e+01 : f32
    %342 = vector.broadcast %cst_95 : f32 to vector<2x1xf32>
    %343 = arith.divf %341, %342 : vector<2x1xf32>
    %344 = vector.broadcast %336 : vector<2x1xf32> to vector<2x32xf32>
    %345 = arith.subf %332, %344 : vector<2x32xf32>
    %cst_96 = arith.constant 9.99999974E-6 : f32
    %346 = vector.broadcast %cst_96 : f32 to vector<2x1xf32>
    %347 = arith.addf %343, %346 : vector<2x1xf32>
    %348 = math.rsqrt %347 : vector<2x1xf32>
    %349 = vector.broadcast %348 : vector<2x1xf32> to vector<2x32xf32>
    %350 = arith.mulf %345, %349 : vector<2x32xf32>
    %351 = vector.broadcast %9 : vector<1x32xf32> to vector<2x32xf32>
    %352 = arith.mulf %350, %351 : vector<2x32xf32>
    %353 = vector.broadcast %10 : vector<1x32xf32> to vector<2x32xf32>
    %354 = arith.addf %352, %353 : vector<2x32xf32>
    %355 = arith.addf %354, %292 : vector<2x32xf32>
    %cst_97 = arith.constant dense<0.000000e+00> : vector<2x128xf32>
    %356 = tpu.matmul %355, %11, %cst_97 {dimension_numbers = #tpu.dot_dimension_numbers<[1], [0], [0], [1], [0, 0, 1, 1], [], []>} : vector<2x32xf32>, vector<32x128xf32>, vector<2x128xf32> -> vector<2x128xf32>
    %cst_98 = arith.constant dense<0.000000e+00> : vector<2x128xf32>
    %357 = tpu.matmul %286, %12, %cst_98 {dimension_numbers = #tpu.dot_dimension_numbers<[1], [0], [0], [1], [0, 0, 1, 1], [], []>} : vector<2x32xf32>, vector<32x128xf32>, vector<2x128xf32> -> vector<2x128xf32>
    %358 = arith.addf %356, %357 : vector<2x128xf32>
    %359 = vector.broadcast %13 : vector<1x128xf32> to vector<2x128xf32>
    %360 = arith.addf %358, %359 : vector<2x128xf32>
    %361 = arith.negf %360 : vector<2x128xf32>
    %362 = math.exp %361 : vector<2x128xf32>
    %cst_99 = arith.constant 1.000000e+00 : f32
    %363 = vector.broadcast %cst_99 : f32 to vector<2x128xf32>
    %364 = arith.addf %363, %362 : vector<2x128xf32>
    %365 = arith.divf %363, %364 : vector<2x128xf32>
    %366 = math.tanh %360 : vector<2x128xf32>
    %367 = vector.extract_strided_slice %365 {offsets = [0, 0], sizes = [2, 32], strides = [1, 1]} : vector<2x128xf32> to vector<2x32xf32>
    %368 = vector.extract_strided_slice %365 {offsets = [0, 32], sizes = [2, 32], strides = [1, 1]} : vector<2x128xf32> to vector<2x32xf32>
    %369 = vector.extract_strided_slice %365 {offsets = [0, 96], sizes = [2, 32], strides = [1, 1]} : vector<2x128xf32> to vector<2x32xf32>
    %370 = vector.extract_strided_slice %366 {offsets = [0, 64], sizes = [2, 32], strides = [1, 1]} : vector<2x128xf32> to vector<2x32xf32>
    %371 = arith.mulf %368, %261 : vector<2x32xf32>
    %372 = arith.mulf %367, %370 : vector<2x32xf32>
    %373 = arith.addf %371, %372 : vector<2x32xf32>
    %cst_100 = arith.constant dense<0.000000e+00> : vector<2xf32>
    %374 = vector.multi_reduction <add>, %373, %cst_100 [1] : vector<2x32xf32> to vector<2xf32>
    %375 = vector.shape_cast %374 : vector<2xf32> to vector<2x1xf32>
    %cst_101 = arith.constant 3.200000e+01 : f32
    %376 = vector.broadcast %cst_101 : f32 to vector<2x1xf32>
    %377 = arith.divf %375, %376 : vector<2x1xf32>
    %378 = vector.broadcast %377 : vector<2x1xf32> to vector<2x32xf32>
    %379 = arith.subf %373, %378 : vector<2x32xf32>
    %380 = arith.mulf %379, %379 : vector<2x32xf32>
    %cst_102 = arith.constant dense<0.000000e+00> : vector<2xf32>
    %381 = vector.multi_reduction <add>, %380, %cst_102 [1] : vector<2x32xf32> to vector<2xf32>
    %382 = vector.shape_cast %381 : vector<2xf32> to vector<2x1xf32>
    %cst_103 = arith.constant 3.200000e+01 : f32
    %383 = vector.broadcast %cst_103 : f32 to vector<2x1xf32>
    %384 = arith.divf %382, %383 : vector<2x1xf32>
    %385 = vector.broadcast %377 : vector<2x1xf32> to vector<2x32xf32>
    %386 = arith.subf %373, %385 : vector<2x32xf32>
    %cst_104 = arith.constant 9.99999974E-6 : f32
    %387 = vector.broadcast %cst_104 : f32 to vector<2x1xf32>
    %388 = arith.addf %384, %387 : vector<2x1xf32>
    %389 = math.rsqrt %388 : vector<2x1xf32>
    %390 = vector.broadcast %389 : vector<2x1xf32> to vector<2x32xf32>
    %391 = arith.mulf %386, %390 : vector<2x32xf32>
    %392 = vector.broadcast %14 : vector<1x32xf32> to vector<2x32xf32>
    %393 = arith.mulf %391, %392 : vector<2x32xf32>
    %394 = vector.broadcast %15 : vector<1x32xf32> to vector<2x32xf32>
    %395 = arith.addf %393, %394 : vector<2x32xf32>
    %396 = math.tanh %395 : vector<2x32xf32>
    %397 = arith.mulf %369, %396 : vector<2x32xf32>
    %cst_105 = arith.constant dense<0.000000e+00> : vector<2xf32>
    %398 = vector.multi_reduction <add>, %397, %cst_105 [1] : vector<2x32xf32> to vector<2xf32>
    %399 = vector.shape_cast %398 : vector<2xf32> to vector<2x1xf32>
    %cst_106 = arith.constant 3.200000e+01 : f32
    %400 = vector.broadcast %cst_106 : f32 to vector<2x1xf32>
    %401 = arith.divf %399, %400 : vector<2x1xf32>
    %402 = vector.broadcast %401 : vector<2x1xf32> to vector<2x32xf32>
    %403 = arith.subf %397, %402 : vector<2x32xf32>
    %404 = arith.mulf %403, %403 : vector<2x32xf32>
    %cst_107 = arith.constant dense<0.000000e+00> : vector<2xf32>
    %405 = vector.multi_reduction <add>, %404, %cst_107 [1] : vector<2x32xf32> to vector<2xf32>
    %406 = vector.shape_cast %405 : vector<2xf32> to vector<2x1xf32>
    %cst_108 = arith.constant 3.200000e+01 : f32
    %407 = vector.broadcast %cst_108 : f32 to vector<2x1xf32>
    %408 = arith.divf %406, %407 : vector<2x1xf32>
    %409 = vector.broadcast %401 : vector<2x1xf32> to vector<2x32xf32>
    %410 = arith.subf %397, %409 : vector<2x32xf32>
    %cst_109 = arith.constant 9.99999974E-6 : f32
    %411 = vector.broadcast %cst_109 : f32 to vector<2x1xf32>
    %412 = arith.addf %408, %411 : vector<2x1xf32>
    %413 = math.rsqrt %412 : vector<2x1xf32>
    %414 = vector.broadcast %413 : vector<2x1xf32> to vector<2x32xf32>
    %415 = arith.mulf %410, %414 : vector<2x32xf32>
    %416 = vector.broadcast %16 : vector<1x32xf32> to vector<2x32xf32>
    %417 = arith.mulf %415, %416 : vector<2x32xf32>
    %418 = vector.broadcast %17 : vector<1x32xf32> to vector<2x32xf32>
    %419 = arith.addf %417, %418 : vector<2x32xf32>
    %420 = arith.addf %419, %293 : vector<2x32xf32>
    %421 = arith.addf %355, %420 : vector<2x32xf32>
    %cst_110 = arith.constant 5.000000e-01 : f32
    %422 = vector.broadcast %cst_110 : f32 to vector<2x32xf32>
    %423 = arith.mulf %421, %422 : vector<2x32xf32>
    %424 = vector.extract_strided_slice %5 {offsets = [6, 0], sizes = [2, 192], strides = [1, 1]} : vector<16x192xf32> to vector<2x192xf32>
    %425 = vector.extract_strided_slice %424 {offsets = [0, 0], sizes = [2, 128], strides = [1, 1]} : vector<2x192xf32> to vector<2x128xf32>
    %426 = vector.extract_strided_slice %424 {offsets = [0, 128], sizes = [2, 32], strides = [1, 1]} : vector<2x192xf32> to vector<2x32xf32>
    %427 = vector.extract_strided_slice %424 {offsets = [0, 160], sizes = [2, 32], strides = [1, 1]} : vector<2x192xf32> to vector<2x32xf32>
    %cst_111 = arith.constant dense<0.000000e+00> : vector<2x128xf32>
    %428 = tpu.matmul %355, %6, %cst_111 {dimension_numbers = #tpu.dot_dimension_numbers<[1], [0], [0], [1], [0, 0, 1, 1], [], []>} : vector<2x32xf32>, vector<32x128xf32>, vector<2x128xf32> -> vector<2x128xf32>
    %429 = arith.addf %425, %428 : vector<2x128xf32>
    %430 = arith.negf %429 : vector<2x128xf32>
    %431 = math.exp %430 : vector<2x128xf32>
    %cst_112 = arith.constant 1.000000e+00 : f32
    %432 = vector.broadcast %cst_112 : f32 to vector<2x128xf32>
    %433 = arith.addf %432, %431 : vector<2x128xf32>
    %434 = arith.divf %432, %433 : vector<2x128xf32>
    %435 = math.tanh %429 : vector<2x128xf32>
    %436 = vector.extract_strided_slice %434 {offsets = [0, 0], sizes = [2, 32], strides = [1, 1]} : vector<2x128xf32> to vector<2x32xf32>
    %437 = vector.extract_strided_slice %434 {offsets = [0, 32], sizes = [2, 32], strides = [1, 1]} : vector<2x128xf32> to vector<2x32xf32>
    %438 = vector.extract_strided_slice %434 {offsets = [0, 96], sizes = [2, 32], strides = [1, 1]} : vector<2x128xf32> to vector<2x32xf32>
    %439 = vector.extract_strided_slice %435 {offsets = [0, 64], sizes = [2, 32], strides = [1, 1]} : vector<2x128xf32> to vector<2x32xf32>
    %440 = arith.mulf %437, %330 : vector<2x32xf32>
    %441 = arith.mulf %436, %439 : vector<2x32xf32>
    %442 = arith.addf %440, %441 : vector<2x32xf32>
    %cst_113 = arith.constant dense<0.000000e+00> : vector<2xf32>
    %443 = vector.multi_reduction <add>, %442, %cst_113 [1] : vector<2x32xf32> to vector<2xf32>
    %444 = vector.shape_cast %443 : vector<2xf32> to vector<2x1xf32>
    %cst_114 = arith.constant 3.200000e+01 : f32
    %445 = vector.broadcast %cst_114 : f32 to vector<2x1xf32>
    %446 = arith.divf %444, %445 : vector<2x1xf32>
    %447 = vector.broadcast %446 : vector<2x1xf32> to vector<2x32xf32>
    %448 = arith.subf %442, %447 : vector<2x32xf32>
    %449 = arith.mulf %448, %448 : vector<2x32xf32>
    %cst_115 = arith.constant dense<0.000000e+00> : vector<2xf32>
    %450 = vector.multi_reduction <add>, %449, %cst_115 [1] : vector<2x32xf32> to vector<2xf32>
    %451 = vector.shape_cast %450 : vector<2xf32> to vector<2x1xf32>
    %cst_116 = arith.constant 3.200000e+01 : f32
    %452 = vector.broadcast %cst_116 : f32 to vector<2x1xf32>
    %453 = arith.divf %451, %452 : vector<2x1xf32>
    %454 = vector.broadcast %446 : vector<2x1xf32> to vector<2x32xf32>
    %455 = arith.subf %442, %454 : vector<2x32xf32>
    %cst_117 = arith.constant 9.99999974E-6 : f32
    %456 = vector.broadcast %cst_117 : f32 to vector<2x1xf32>
    %457 = arith.addf %453, %456 : vector<2x1xf32>
    %458 = math.rsqrt %457 : vector<2x1xf32>
    %459 = vector.broadcast %458 : vector<2x1xf32> to vector<2x32xf32>
    %460 = arith.mulf %455, %459 : vector<2x32xf32>
    %461 = vector.broadcast %7 : vector<1x32xf32> to vector<2x32xf32>
    %462 = arith.mulf %460, %461 : vector<2x32xf32>
    %463 = vector.broadcast %8 : vector<1x32xf32> to vector<2x32xf32>
    %464 = arith.addf %462, %463 : vector<2x32xf32>
    %465 = math.tanh %464 : vector<2x32xf32>
    %466 = arith.mulf %438, %465 : vector<2x32xf32>
    %cst_118 = arith.constant dense<0.000000e+00> : vector<2xf32>
    %467 = vector.multi_reduction <add>, %466, %cst_118 [1] : vector<2x32xf32> to vector<2xf32>
    %468 = vector.shape_cast %467 : vector<2xf32> to vector<2x1xf32>
    %cst_119 = arith.constant 3.200000e+01 : f32
    %469 = vector.broadcast %cst_119 : f32 to vector<2x1xf32>
    %470 = arith.divf %468, %469 : vector<2x1xf32>
    %471 = vector.broadcast %470 : vector<2x1xf32> to vector<2x32xf32>
    %472 = arith.subf %466, %471 : vector<2x32xf32>
    %473 = arith.mulf %472, %472 : vector<2x32xf32>
    %cst_120 = arith.constant dense<0.000000e+00> : vector<2xf32>
    %474 = vector.multi_reduction <add>, %473, %cst_120 [1] : vector<2x32xf32> to vector<2xf32>
    %475 = vector.shape_cast %474 : vector<2xf32> to vector<2x1xf32>
    %cst_121 = arith.constant 3.200000e+01 : f32
    %476 = vector.broadcast %cst_121 : f32 to vector<2x1xf32>
    %477 = arith.divf %475, %476 : vector<2x1xf32>
    %478 = vector.broadcast %470 : vector<2x1xf32> to vector<2x32xf32>
    %479 = arith.subf %466, %478 : vector<2x32xf32>
    %cst_122 = arith.constant 9.99999974E-6 : f32
    %480 = vector.broadcast %cst_122 : f32 to vector<2x1xf32>
    %481 = arith.addf %477, %480 : vector<2x1xf32>
    %482 = math.rsqrt %481 : vector<2x1xf32>
    %483 = vector.broadcast %482 : vector<2x1xf32> to vector<2x32xf32>
    %484 = arith.mulf %479, %483 : vector<2x32xf32>
    %485 = vector.broadcast %9 : vector<1x32xf32> to vector<2x32xf32>
    %486 = arith.mulf %484, %485 : vector<2x32xf32>
    %487 = vector.broadcast %10 : vector<1x32xf32> to vector<2x32xf32>
    %488 = arith.addf %486, %487 : vector<2x32xf32>
    %489 = arith.addf %488, %426 : vector<2x32xf32>
    %cst_123 = arith.constant dense<0.000000e+00> : vector<2x128xf32>
    %490 = tpu.matmul %489, %11, %cst_123 {dimension_numbers = #tpu.dot_dimension_numbers<[1], [0], [0], [1], [0, 0, 1, 1], [], []>} : vector<2x32xf32>, vector<32x128xf32>, vector<2x128xf32> -> vector<2x128xf32>
    %cst_124 = arith.constant dense<0.000000e+00> : vector<2x128xf32>
    %491 = tpu.matmul %420, %12, %cst_124 {dimension_numbers = #tpu.dot_dimension_numbers<[1], [0], [0], [1], [0, 0, 1, 1], [], []>} : vector<2x32xf32>, vector<32x128xf32>, vector<2x128xf32> -> vector<2x128xf32>
    %492 = arith.addf %490, %491 : vector<2x128xf32>
    %493 = vector.broadcast %13 : vector<1x128xf32> to vector<2x128xf32>
    %494 = arith.addf %492, %493 : vector<2x128xf32>
    %495 = arith.negf %494 : vector<2x128xf32>
    %496 = math.exp %495 : vector<2x128xf32>
    %cst_125 = arith.constant 1.000000e+00 : f32
    %497 = vector.broadcast %cst_125 : f32 to vector<2x128xf32>
    %498 = arith.addf %497, %496 : vector<2x128xf32>
    %499 = arith.divf %497, %498 : vector<2x128xf32>
    %500 = math.tanh %494 : vector<2x128xf32>
    %501 = vector.extract_strided_slice %499 {offsets = [0, 0], sizes = [2, 32], strides = [1, 1]} : vector<2x128xf32> to vector<2x32xf32>
    %502 = vector.extract_strided_slice %499 {offsets = [0, 32], sizes = [2, 32], strides = [1, 1]} : vector<2x128xf32> to vector<2x32xf32>
    %503 = vector.extract_strided_slice %499 {offsets = [0, 96], sizes = [2, 32], strides = [1, 1]} : vector<2x128xf32> to vector<2x32xf32>
    %504 = vector.extract_strided_slice %500 {offsets = [0, 64], sizes = [2, 32], strides = [1, 1]} : vector<2x128xf32> to vector<2x32xf32>
    %505 = arith.mulf %502, %395 : vector<2x32xf32>
    %506 = arith.mulf %501, %504 : vector<2x32xf32>
    %507 = arith.addf %505, %506 : vector<2x32xf32>
    %cst_126 = arith.constant dense<0.000000e+00> : vector<2xf32>
    %508 = vector.multi_reduction <add>, %507, %cst_126 [1] : vector<2x32xf32> to vector<2xf32>
    %509 = vector.shape_cast %508 : vector<2xf32> to vector<2x1xf32>
    %cst_127 = arith.constant 3.200000e+01 : f32
    %510 = vector.broadcast %cst_127 : f32 to vector<2x1xf32>
    %511 = arith.divf %509, %510 : vector<2x1xf32>
    %512 = vector.broadcast %511 : vector<2x1xf32> to vector<2x32xf32>
    %513 = arith.subf %507, %512 : vector<2x32xf32>
    %514 = arith.mulf %513, %513 : vector<2x32xf32>
    %cst_128 = arith.constant dense<0.000000e+00> : vector<2xf32>
    %515 = vector.multi_reduction <add>, %514, %cst_128 [1] : vector<2x32xf32> to vector<2xf32>
    %516 = vector.shape_cast %515 : vector<2xf32> to vector<2x1xf32>
    %cst_129 = arith.constant 3.200000e+01 : f32
    %517 = vector.broadcast %cst_129 : f32 to vector<2x1xf32>
    %518 = arith.divf %516, %517 : vector<2x1xf32>
    %519 = vector.broadcast %511 : vector<2x1xf32> to vector<2x32xf32>
    %520 = arith.subf %507, %519 : vector<2x32xf32>
    %cst_130 = arith.constant 9.99999974E-6 : f32
    %521 = vector.broadcast %cst_130 : f32 to vector<2x1xf32>
    %522 = arith.addf %518, %521 : vector<2x1xf32>
    %523 = math.rsqrt %522 : vector<2x1xf32>
    %524 = vector.broadcast %523 : vector<2x1xf32> to vector<2x32xf32>
    %525 = arith.mulf %520, %524 : vector<2x32xf32>
    %526 = vector.broadcast %14 : vector<1x32xf32> to vector<2x32xf32>
    %527 = arith.mulf %525, %526 : vector<2x32xf32>
    %528 = vector.broadcast %15 : vector<1x32xf32> to vector<2x32xf32>
    %529 = arith.addf %527, %528 : vector<2x32xf32>
    %530 = math.tanh %529 : vector<2x32xf32>
    %531 = arith.mulf %503, %530 : vector<2x32xf32>
    %cst_131 = arith.constant dense<0.000000e+00> : vector<2xf32>
    %532 = vector.multi_reduction <add>, %531, %cst_131 [1] : vector<2x32xf32> to vector<2xf32>
    %533 = vector.shape_cast %532 : vector<2xf32> to vector<2x1xf32>
    %cst_132 = arith.constant 3.200000e+01 : f32
    %534 = vector.broadcast %cst_132 : f32 to vector<2x1xf32>
    %535 = arith.divf %533, %534 : vector<2x1xf32>
    %536 = vector.broadcast %535 : vector<2x1xf32> to vector<2x32xf32>
    %537 = arith.subf %531, %536 : vector<2x32xf32>
    %538 = arith.mulf %537, %537 : vector<2x32xf32>
    %cst_133 = arith.constant dense<0.000000e+00> : vector<2xf32>
    %539 = vector.multi_reduction <add>, %538, %cst_133 [1] : vector<2x32xf32> to vector<2xf32>
    %540 = vector.shape_cast %539 : vector<2xf32> to vector<2x1xf32>
    %cst_134 = arith.constant 3.200000e+01 : f32
    %541 = vector.broadcast %cst_134 : f32 to vector<2x1xf32>
    %542 = arith.divf %540, %541 : vector<2x1xf32>
    %543 = vector.broadcast %535 : vector<2x1xf32> to vector<2x32xf32>
    %544 = arith.subf %531, %543 : vector<2x32xf32>
    %cst_135 = arith.constant 9.99999974E-6 : f32
    %545 = vector.broadcast %cst_135 : f32 to vector<2x1xf32>
    %546 = arith.addf %542, %545 : vector<2x1xf32>
    %547 = math.rsqrt %546 : vector<2x1xf32>
    %548 = vector.broadcast %547 : vector<2x1xf32> to vector<2x32xf32>
    %549 = arith.mulf %544, %548 : vector<2x32xf32>
    %550 = vector.broadcast %16 : vector<1x32xf32> to vector<2x32xf32>
    %551 = arith.mulf %549, %550 : vector<2x32xf32>
    %552 = vector.broadcast %17 : vector<1x32xf32> to vector<2x32xf32>
    %553 = arith.addf %551, %552 : vector<2x32xf32>
    %554 = arith.addf %553, %427 : vector<2x32xf32>
    %555 = arith.addf %489, %554 : vector<2x32xf32>
    %cst_136 = arith.constant 5.000000e-01 : f32
    %556 = vector.broadcast %cst_136 : f32 to vector<2x32xf32>
    %557 = arith.mulf %555, %556 : vector<2x32xf32>
    %558 = vector.extract_strided_slice %5 {offsets = [8, 0], sizes = [2, 192], strides = [1, 1]} : vector<16x192xf32> to vector<2x192xf32>
    %559 = vector.extract_strided_slice %558 {offsets = [0, 0], sizes = [2, 128], strides = [1, 1]} : vector<2x192xf32> to vector<2x128xf32>
    %560 = vector.extract_strided_slice %558 {offsets = [0, 128], sizes = [2, 32], strides = [1, 1]} : vector<2x192xf32> to vector<2x32xf32>
    %561 = vector.extract_strided_slice %558 {offsets = [0, 160], sizes = [2, 32], strides = [1, 1]} : vector<2x192xf32> to vector<2x32xf32>
    %cst_137 = arith.constant dense<0.000000e+00> : vector<2x128xf32>
    %562 = tpu.matmul %489, %6, %cst_137 {dimension_numbers = #tpu.dot_dimension_numbers<[1], [0], [0], [1], [0, 0, 1, 1], [], []>} : vector<2x32xf32>, vector<32x128xf32>, vector<2x128xf32> -> vector<2x128xf32>
    %563 = arith.addf %559, %562 : vector<2x128xf32>
    %564 = arith.negf %563 : vector<2x128xf32>
    %565 = math.exp %564 : vector<2x128xf32>
    %cst_138 = arith.constant 1.000000e+00 : f32
    %566 = vector.broadcast %cst_138 : f32 to vector<2x128xf32>
    %567 = arith.addf %566, %565 : vector<2x128xf32>
    %568 = arith.divf %566, %567 : vector<2x128xf32>
    %569 = math.tanh %563 : vector<2x128xf32>
    %570 = vector.extract_strided_slice %568 {offsets = [0, 0], sizes = [2, 32], strides = [1, 1]} : vector<2x128xf32> to vector<2x32xf32>
    %571 = vector.extract_strided_slice %568 {offsets = [0, 32], sizes = [2, 32], strides = [1, 1]} : vector<2x128xf32> to vector<2x32xf32>
    %572 = vector.extract_strided_slice %568 {offsets = [0, 96], sizes = [2, 32], strides = [1, 1]} : vector<2x128xf32> to vector<2x32xf32>
    %573 = vector.extract_strided_slice %569 {offsets = [0, 64], sizes = [2, 32], strides = [1, 1]} : vector<2x128xf32> to vector<2x32xf32>
    %574 = arith.mulf %571, %464 : vector<2x32xf32>
    %575 = arith.mulf %570, %573 : vector<2x32xf32>
    %576 = arith.addf %574, %575 : vector<2x32xf32>
    %cst_139 = arith.constant dense<0.000000e+00> : vector<2xf32>
    %577 = vector.multi_reduction <add>, %576, %cst_139 [1] : vector<2x32xf32> to vector<2xf32>
    %578 = vector.shape_cast %577 : vector<2xf32> to vector<2x1xf32>
    %cst_140 = arith.constant 3.200000e+01 : f32
    %579 = vector.broadcast %cst_140 : f32 to vector<2x1xf32>
    %580 = arith.divf %578, %579 : vector<2x1xf32>
    %581 = vector.broadcast %580 : vector<2x1xf32> to vector<2x32xf32>
    %582 = arith.subf %576, %581 : vector<2x32xf32>
    %583 = arith.mulf %582, %582 : vector<2x32xf32>
    %cst_141 = arith.constant dense<0.000000e+00> : vector<2xf32>
    %584 = vector.multi_reduction <add>, %583, %cst_141 [1] : vector<2x32xf32> to vector<2xf32>
    %585 = vector.shape_cast %584 : vector<2xf32> to vector<2x1xf32>
    %cst_142 = arith.constant 3.200000e+01 : f32
    %586 = vector.broadcast %cst_142 : f32 to vector<2x1xf32>
    %587 = arith.divf %585, %586 : vector<2x1xf32>
    %588 = vector.broadcast %580 : vector<2x1xf32> to vector<2x32xf32>
    %589 = arith.subf %576, %588 : vector<2x32xf32>
    %cst_143 = arith.constant 9.99999974E-6 : f32
    %590 = vector.broadcast %cst_143 : f32 to vector<2x1xf32>
    %591 = arith.addf %587, %590 : vector<2x1xf32>
    %592 = math.rsqrt %591 : vector<2x1xf32>
    %593 = vector.broadcast %592 : vector<2x1xf32> to vector<2x32xf32>
    %594 = arith.mulf %589, %593 : vector<2x32xf32>
    %595 = vector.broadcast %7 : vector<1x32xf32> to vector<2x32xf32>
    %596 = arith.mulf %594, %595 : vector<2x32xf32>
    %597 = vector.broadcast %8 : vector<1x32xf32> to vector<2x32xf32>
    %598 = arith.addf %596, %597 : vector<2x32xf32>
    %599 = math.tanh %598 : vector<2x32xf32>
    %600 = arith.mulf %572, %599 : vector<2x32xf32>
    %cst_144 = arith.constant dense<0.000000e+00> : vector<2xf32>
    %601 = vector.multi_reduction <add>, %600, %cst_144 [1] : vector<2x32xf32> to vector<2xf32>
    %602 = vector.shape_cast %601 : vector<2xf32> to vector<2x1xf32>
    %cst_145 = arith.constant 3.200000e+01 : f32
    %603 = vector.broadcast %cst_145 : f32 to vector<2x1xf32>
    %604 = arith.divf %602, %603 : vector<2x1xf32>
    %605 = vector.broadcast %604 : vector<2x1xf32> to vector<2x32xf32>
    %606 = arith.subf %600, %605 : vector<2x32xf32>
    %607 = arith.mulf %606, %606 : vector<2x32xf32>
    %cst_146 = arith.constant dense<0.000000e+00> : vector<2xf32>
    %608 = vector.multi_reduction <add>, %607, %cst_146 [1] : vector<2x32xf32> to vector<2xf32>
    %609 = vector.shape_cast %608 : vector<2xf32> to vector<2x1xf32>
    %cst_147 = arith.constant 3.200000e+01 : f32
    %610 = vector.broadcast %cst_147 : f32 to vector<2x1xf32>
    %611 = arith.divf %609, %610 : vector<2x1xf32>
    %612 = vector.broadcast %604 : vector<2x1xf32> to vector<2x32xf32>
    %613 = arith.subf %600, %612 : vector<2x32xf32>
    %cst_148 = arith.constant 9.99999974E-6 : f32
    %614 = vector.broadcast %cst_148 : f32 to vector<2x1xf32>
    %615 = arith.addf %611, %614 : vector<2x1xf32>
    %616 = math.rsqrt %615 : vector<2x1xf32>
    %617 = vector.broadcast %616 : vector<2x1xf32> to vector<2x32xf32>
    %618 = arith.mulf %613, %617 : vector<2x32xf32>
    %619 = vector.broadcast %9 : vector<1x32xf32> to vector<2x32xf32>
    %620 = arith.mulf %618, %619 : vector<2x32xf32>
    %621 = vector.broadcast %10 : vector<1x32xf32> to vector<2x32xf32>
    %622 = arith.addf %620, %621 : vector<2x32xf32>
    %623 = arith.addf %622, %560 : vector<2x32xf32>
    %cst_149 = arith.constant dense<0.000000e+00> : vector<2x128xf32>
    %624 = tpu.matmul %623, %11, %cst_149 {dimension_numbers = #tpu.dot_dimension_numbers<[1], [0], [0], [1], [0, 0, 1, 1], [], []>} : vector<2x32xf32>, vector<32x128xf32>, vector<2x128xf32> -> vector<2x128xf32>
    %cst_150 = arith.constant dense<0.000000e+00> : vector<2x128xf32>
    %625 = tpu.matmul %554, %12, %cst_150 {dimension_numbers = #tpu.dot_dimension_numbers<[1], [0], [0], [1], [0, 0, 1, 1], [], []>} : vector<2x32xf32>, vector<32x128xf32>, vector<2x128xf32> -> vector<2x128xf32>
    %626 = arith.addf %624, %625 : vector<2x128xf32>
    %627 = vector.broadcast %13 : vector<1x128xf32> to vector<2x128xf32>
    %628 = arith.addf %626, %627 : vector<2x128xf32>
    %629 = arith.negf %628 : vector<2x128xf32>
    %630 = math.exp %629 : vector<2x128xf32>
    %cst_151 = arith.constant 1.000000e+00 : f32
    %631 = vector.broadcast %cst_151 : f32 to vector<2x128xf32>
    %632 = arith.addf %631, %630 : vector<2x128xf32>
    %633 = arith.divf %631, %632 : vector<2x128xf32>
    %634 = math.tanh %628 : vector<2x128xf32>
    %635 = vector.extract_strided_slice %633 {offsets = [0, 0], sizes = [2, 32], strides = [1, 1]} : vector<2x128xf32> to vector<2x32xf32>
    %636 = vector.extract_strided_slice %633 {offsets = [0, 32], sizes = [2, 32], strides = [1, 1]} : vector<2x128xf32> to vector<2x32xf32>
    %637 = vector.extract_strided_slice %633 {offsets = [0, 96], sizes = [2, 32], strides = [1, 1]} : vector<2x128xf32> to vector<2x32xf32>
    %638 = vector.extract_strided_slice %634 {offsets = [0, 64], sizes = [2, 32], strides = [1, 1]} : vector<2x128xf32> to vector<2x32xf32>
    %639 = arith.mulf %636, %529 : vector<2x32xf32>
    %640 = arith.mulf %635, %638 : vector<2x32xf32>
    %641 = arith.addf %639, %640 : vector<2x32xf32>
    %cst_152 = arith.constant dense<0.000000e+00> : vector<2xf32>
    %642 = vector.multi_reduction <add>, %641, %cst_152 [1] : vector<2x32xf32> to vector<2xf32>
    %643 = vector.shape_cast %642 : vector<2xf32> to vector<2x1xf32>
    %cst_153 = arith.constant 3.200000e+01 : f32
    %644 = vector.broadcast %cst_153 : f32 to vector<2x1xf32>
    %645 = arith.divf %643, %644 : vector<2x1xf32>
    %646 = vector.broadcast %645 : vector<2x1xf32> to vector<2x32xf32>
    %647 = arith.subf %641, %646 : vector<2x32xf32>
    %648 = arith.mulf %647, %647 : vector<2x32xf32>
    %cst_154 = arith.constant dense<0.000000e+00> : vector<2xf32>
    %649 = vector.multi_reduction <add>, %648, %cst_154 [1] : vector<2x32xf32> to vector<2xf32>
    %650 = vector.shape_cast %649 : vector<2xf32> to vector<2x1xf32>
    %cst_155 = arith.constant 3.200000e+01 : f32
    %651 = vector.broadcast %cst_155 : f32 to vector<2x1xf32>
    %652 = arith.divf %650, %651 : vector<2x1xf32>
    %653 = vector.broadcast %645 : vector<2x1xf32> to vector<2x32xf32>
    %654 = arith.subf %641, %653 : vector<2x32xf32>
    %cst_156 = arith.constant 9.99999974E-6 : f32
    %655 = vector.broadcast %cst_156 : f32 to vector<2x1xf32>
    %656 = arith.addf %652, %655 : vector<2x1xf32>
    %657 = math.rsqrt %656 : vector<2x1xf32>
    %658 = vector.broadcast %657 : vector<2x1xf32> to vector<2x32xf32>
    %659 = arith.mulf %654, %658 : vector<2x32xf32>
    %660 = vector.broadcast %14 : vector<1x32xf32> to vector<2x32xf32>
    %661 = arith.mulf %659, %660 : vector<2x32xf32>
    %662 = vector.broadcast %15 : vector<1x32xf32> to vector<2x32xf32>
    %663 = arith.addf %661, %662 : vector<2x32xf32>
    %664 = math.tanh %663 : vector<2x32xf32>
    %665 = arith.mulf %637, %664 : vector<2x32xf32>
    %cst_157 = arith.constant dense<0.000000e+00> : vector<2xf32>
    %666 = vector.multi_reduction <add>, %665, %cst_157 [1] : vector<2x32xf32> to vector<2xf32>
    %667 = vector.shape_cast %666 : vector<2xf32> to vector<2x1xf32>
    %cst_158 = arith.constant 3.200000e+01 : f32
    %668 = vector.broadcast %cst_158 : f32 to vector<2x1xf32>
    %669 = arith.divf %667, %668 : vector<2x1xf32>
    %670 = vector.broadcast %669 : vector<2x1xf32> to vector<2x32xf32>
    %671 = arith.subf %665, %670 : vector<2x32xf32>
    %672 = arith.mulf %671, %671 : vector<2x32xf32>
    %cst_159 = arith.constant dense<0.000000e+00> : vector<2xf32>
    %673 = vector.multi_reduction <add>, %672, %cst_159 [1] : vector<2x32xf32> to vector<2xf32>
    %674 = vector.shape_cast %673 : vector<2xf32> to vector<2x1xf32>
    %cst_160 = arith.constant 3.200000e+01 : f32
    %675 = vector.broadcast %cst_160 : f32 to vector<2x1xf32>
    %676 = arith.divf %674, %675 : vector<2x1xf32>
    %677 = vector.broadcast %669 : vector<2x1xf32> to vector<2x32xf32>
    %678 = arith.subf %665, %677 : vector<2x32xf32>
    %cst_161 = arith.constant 9.99999974E-6 : f32
    %679 = vector.broadcast %cst_161 : f32 to vector<2x1xf32>
    %680 = arith.addf %676, %679 : vector<2x1xf32>
    %681 = math.rsqrt %680 : vector<2x1xf32>
    %682 = vector.broadcast %681 : vector<2x1xf32> to vector<2x32xf32>
    %683 = arith.mulf %678, %682 : vector<2x32xf32>
    %684 = vector.broadcast %16 : vector<1x32xf32> to vector<2x32xf32>
    %685 = arith.mulf %683, %684 : vector<2x32xf32>
    %686 = vector.broadcast %17 : vector<1x32xf32> to vector<2x32xf32>
    %687 = arith.addf %685, %686 : vector<2x32xf32>
    %688 = arith.addf %687, %561 : vector<2x32xf32>
    %689 = arith.addf %623, %688 : vector<2x32xf32>
    %cst_162 = arith.constant 5.000000e-01 : f32
    %690 = vector.broadcast %cst_162 : f32 to vector<2x32xf32>
    %691 = arith.mulf %689, %690 : vector<2x32xf32>
    %692 = vector.extract_strided_slice %5 {offsets = [10, 0], sizes = [2, 192], strides = [1, 1]} : vector<16x192xf32> to vector<2x192xf32>
    %693 = vector.extract_strided_slice %692 {offsets = [0, 0], sizes = [2, 128], strides = [1, 1]} : vector<2x192xf32> to vector<2x128xf32>
    %694 = vector.extract_strided_slice %692 {offsets = [0, 128], sizes = [2, 32], strides = [1, 1]} : vector<2x192xf32> to vector<2x32xf32>
    %695 = vector.extract_strided_slice %692 {offsets = [0, 160], sizes = [2, 32], strides = [1, 1]} : vector<2x192xf32> to vector<2x32xf32>
    %cst_163 = arith.constant dense<0.000000e+00> : vector<2x128xf32>
    %696 = tpu.matmul %623, %6, %cst_163 {dimension_numbers = #tpu.dot_dimension_numbers<[1], [0], [0], [1], [0, 0, 1, 1], [], []>} : vector<2x32xf32>, vector<32x128xf32>, vector<2x128xf32> -> vector<2x128xf32>
    %697 = arith.addf %693, %696 : vector<2x128xf32>
    %698 = arith.negf %697 : vector<2x128xf32>
    %699 = math.exp %698 : vector<2x128xf32>
    %cst_164 = arith.constant 1.000000e+00 : f32
    %700 = vector.broadcast %cst_164 : f32 to vector<2x128xf32>
    %701 = arith.addf %700, %699 : vector<2x128xf32>
    %702 = arith.divf %700, %701 : vector<2x128xf32>
    %703 = math.tanh %697 : vector<2x128xf32>
    %704 = vector.extract_strided_slice %702 {offsets = [0, 0], sizes = [2, 32], strides = [1, 1]} : vector<2x128xf32> to vector<2x32xf32>
    %705 = vector.extract_strided_slice %702 {offsets = [0, 32], sizes = [2, 32], strides = [1, 1]} : vector<2x128xf32> to vector<2x32xf32>
    %706 = vector.extract_strided_slice %702 {offsets = [0, 96], sizes = [2, 32], strides = [1, 1]} : vector<2x128xf32> to vector<2x32xf32>
    %707 = vector.extract_strided_slice %703 {offsets = [0, 64], sizes = [2, 32], strides = [1, 1]} : vector<2x128xf32> to vector<2x32xf32>
    %708 = arith.mulf %705, %598 : vector<2x32xf32>
    %709 = arith.mulf %704, %707 : vector<2x32xf32>
    %710 = arith.addf %708, %709 : vector<2x32xf32>
    %cst_165 = arith.constant dense<0.000000e+00> : vector<2xf32>
    %711 = vector.multi_reduction <add>, %710, %cst_165 [1] : vector<2x32xf32> to vector<2xf32>
    %712 = vector.shape_cast %711 : vector<2xf32> to vector<2x1xf32>
    %cst_166 = arith.constant 3.200000e+01 : f32
    %713 = vector.broadcast %cst_166 : f32 to vector<2x1xf32>
    %714 = arith.divf %712, %713 : vector<2x1xf32>
    %715 = vector.broadcast %714 : vector<2x1xf32> to vector<2x32xf32>
    %716 = arith.subf %710, %715 : vector<2x32xf32>
    %717 = arith.mulf %716, %716 : vector<2x32xf32>
    %cst_167 = arith.constant dense<0.000000e+00> : vector<2xf32>
    %718 = vector.multi_reduction <add>, %717, %cst_167 [1] : vector<2x32xf32> to vector<2xf32>
    %719 = vector.shape_cast %718 : vector<2xf32> to vector<2x1xf32>
    %cst_168 = arith.constant 3.200000e+01 : f32
    %720 = vector.broadcast %cst_168 : f32 to vector<2x1xf32>
    %721 = arith.divf %719, %720 : vector<2x1xf32>
    %722 = vector.broadcast %714 : vector<2x1xf32> to vector<2x32xf32>
    %723 = arith.subf %710, %722 : vector<2x32xf32>
    %cst_169 = arith.constant 9.99999974E-6 : f32
    %724 = vector.broadcast %cst_169 : f32 to vector<2x1xf32>
    %725 = arith.addf %721, %724 : vector<2x1xf32>
    %726 = math.rsqrt %725 : vector<2x1xf32>
    %727 = vector.broadcast %726 : vector<2x1xf32> to vector<2x32xf32>
    %728 = arith.mulf %723, %727 : vector<2x32xf32>
    %729 = vector.broadcast %7 : vector<1x32xf32> to vector<2x32xf32>
    %730 = arith.mulf %728, %729 : vector<2x32xf32>
    %731 = vector.broadcast %8 : vector<1x32xf32> to vector<2x32xf32>
    %732 = arith.addf %730, %731 : vector<2x32xf32>
    %733 = math.tanh %732 : vector<2x32xf32>
    %734 = arith.mulf %706, %733 : vector<2x32xf32>
    %cst_170 = arith.constant dense<0.000000e+00> : vector<2xf32>
    %735 = vector.multi_reduction <add>, %734, %cst_170 [1] : vector<2x32xf32> to vector<2xf32>
    %736 = vector.shape_cast %735 : vector<2xf32> to vector<2x1xf32>
    %cst_171 = arith.constant 3.200000e+01 : f32
    %737 = vector.broadcast %cst_171 : f32 to vector<2x1xf32>
    %738 = arith.divf %736, %737 : vector<2x1xf32>
    %739 = vector.broadcast %738 : vector<2x1xf32> to vector<2x32xf32>
    %740 = arith.subf %734, %739 : vector<2x32xf32>
    %741 = arith.mulf %740, %740 : vector<2x32xf32>
    %cst_172 = arith.constant dense<0.000000e+00> : vector<2xf32>
    %742 = vector.multi_reduction <add>, %741, %cst_172 [1] : vector<2x32xf32> to vector<2xf32>
    %743 = vector.shape_cast %742 : vector<2xf32> to vector<2x1xf32>
    %cst_173 = arith.constant 3.200000e+01 : f32
    %744 = vector.broadcast %cst_173 : f32 to vector<2x1xf32>
    %745 = arith.divf %743, %744 : vector<2x1xf32>
    %746 = vector.broadcast %738 : vector<2x1xf32> to vector<2x32xf32>
    %747 = arith.subf %734, %746 : vector<2x32xf32>
    %cst_174 = arith.constant 9.99999974E-6 : f32
    %748 = vector.broadcast %cst_174 : f32 to vector<2x1xf32>
    %749 = arith.addf %745, %748 : vector<2x1xf32>
    %750 = math.rsqrt %749 : vector<2x1xf32>
    %751 = vector.broadcast %750 : vector<2x1xf32> to vector<2x32xf32>
    %752 = arith.mulf %747, %751 : vector<2x32xf32>
    %753 = vector.broadcast %9 : vector<1x32xf32> to vector<2x32xf32>
    %754 = arith.mulf %752, %753 : vector<2x32xf32>
    %755 = vector.broadcast %10 : vector<1x32xf32> to vector<2x32xf32>
    %756 = arith.addf %754, %755 : vector<2x32xf32>
    %757 = arith.addf %756, %694 : vector<2x32xf32>
    %cst_175 = arith.constant dense<0.000000e+00> : vector<2x128xf32>
    %758 = tpu.matmul %757, %11, %cst_175 {dimension_numbers = #tpu.dot_dimension_numbers<[1], [0], [0], [1], [0, 0, 1, 1], [], []>} : vector<2x32xf32>, vector<32x128xf32>, vector<2x128xf32> -> vector<2x128xf32>
    %cst_176 = arith.constant dense<0.000000e+00> : vector<2x128xf32>
    %759 = tpu.matmul %688, %12, %cst_176 {dimension_numbers = #tpu.dot_dimension_numbers<[1], [0], [0], [1], [0, 0, 1, 1], [], []>} : vector<2x32xf32>, vector<32x128xf32>, vector<2x128xf32> -> vector<2x128xf32>
    %760 = arith.addf %758, %759 : vector<2x128xf32>
    %761 = vector.broadcast %13 : vector<1x128xf32> to vector<2x128xf32>
    %762 = arith.addf %760, %761 : vector<2x128xf32>
    %763 = arith.negf %762 : vector<2x128xf32>
    %764 = math.exp %763 : vector<2x128xf32>
    %cst_177 = arith.constant 1.000000e+00 : f32
    %765 = vector.broadcast %cst_177 : f32 to vector<2x128xf32>
    %766 = arith.addf %765, %764 : vector<2x128xf32>
    %767 = arith.divf %765, %766 : vector<2x128xf32>
    %768 = math.tanh %762 : vector<2x128xf32>
    %769 = vector.extract_strided_slice %767 {offsets = [0, 0], sizes = [2, 32], strides = [1, 1]} : vector<2x128xf32> to vector<2x32xf32>
    %770 = vector.extract_strided_slice %767 {offsets = [0, 32], sizes = [2, 32], strides = [1, 1]} : vector<2x128xf32> to vector<2x32xf32>
    %771 = vector.extract_strided_slice %767 {offsets = [0, 96], sizes = [2, 32], strides = [1, 1]} : vector<2x128xf32> to vector<2x32xf32>
    %772 = vector.extract_strided_slice %768 {offsets = [0, 64], sizes = [2, 32], strides = [1, 1]} : vector<2x128xf32> to vector<2x32xf32>
    %773 = arith.mulf %770, %663 : vector<2x32xf32>
    %774 = arith.mulf %769, %772 : vector<2x32xf32>
    %775 = arith.addf %773, %774 : vector<2x32xf32>
    %cst_178 = arith.constant dense<0.000000e+00> : vector<2xf32>
    %776 = vector.multi_reduction <add>, %775, %cst_178 [1] : vector<2x32xf32> to vector<2xf32>
    %777 = vector.shape_cast %776 : vector<2xf32> to vector<2x1xf32>
    %cst_179 = arith.constant 3.200000e+01 : f32
    %778 = vector.broadcast %cst_179 : f32 to vector<2x1xf32>
    %779 = arith.divf %777, %778 : vector<2x1xf32>
    %780 = vector.broadcast %779 : vector<2x1xf32> to vector<2x32xf32>
    %781 = arith.subf %775, %780 : vector<2x32xf32>
    %782 = arith.mulf %781, %781 : vector<2x32xf32>
    %cst_180 = arith.constant dense<0.000000e+00> : vector<2xf32>
    %783 = vector.multi_reduction <add>, %782, %cst_180 [1] : vector<2x32xf32> to vector<2xf32>
    %784 = vector.shape_cast %783 : vector<2xf32> to vector<2x1xf32>
    %cst_181 = arith.constant 3.200000e+01 : f32
    %785 = vector.broadcast %cst_181 : f32 to vector<2x1xf32>
    %786 = arith.divf %784, %785 : vector<2x1xf32>
    %787 = vector.broadcast %779 : vector<2x1xf32> to vector<2x32xf32>
    %788 = arith.subf %775, %787 : vector<2x32xf32>
    %cst_182 = arith.constant 9.99999974E-6 : f32
    %789 = vector.broadcast %cst_182 : f32 to vector<2x1xf32>
    %790 = arith.addf %786, %789 : vector<2x1xf32>
    %791 = math.rsqrt %790 : vector<2x1xf32>
    %792 = vector.broadcast %791 : vector<2x1xf32> to vector<2x32xf32>
    %793 = arith.mulf %788, %792 : vector<2x32xf32>
    %794 = vector.broadcast %14 : vector<1x32xf32> to vector<2x32xf32>
    %795 = arith.mulf %793, %794 : vector<2x32xf32>
    %796 = vector.broadcast %15 : vector<1x32xf32> to vector<2x32xf32>
    %797 = arith.addf %795, %796 : vector<2x32xf32>
    %798 = math.tanh %797 : vector<2x32xf32>
    %799 = arith.mulf %771, %798 : vector<2x32xf32>
    %cst_183 = arith.constant dense<0.000000e+00> : vector<2xf32>
    %800 = vector.multi_reduction <add>, %799, %cst_183 [1] : vector<2x32xf32> to vector<2xf32>
    %801 = vector.shape_cast %800 : vector<2xf32> to vector<2x1xf32>
    %cst_184 = arith.constant 3.200000e+01 : f32
    %802 = vector.broadcast %cst_184 : f32 to vector<2x1xf32>
    %803 = arith.divf %801, %802 : vector<2x1xf32>
    %804 = vector.broadcast %803 : vector<2x1xf32> to vector<2x32xf32>
    %805 = arith.subf %799, %804 : vector<2x32xf32>
    %806 = arith.mulf %805, %805 : vector<2x32xf32>
    %cst_185 = arith.constant dense<0.000000e+00> : vector<2xf32>
    %807 = vector.multi_reduction <add>, %806, %cst_185 [1] : vector<2x32xf32> to vector<2xf32>
    %808 = vector.shape_cast %807 : vector<2xf32> to vector<2x1xf32>
    %cst_186 = arith.constant 3.200000e+01 : f32
    %809 = vector.broadcast %cst_186 : f32 to vector<2x1xf32>
    %810 = arith.divf %808, %809 : vector<2x1xf32>
    %811 = vector.broadcast %803 : vector<2x1xf32> to vector<2x32xf32>
    %812 = arith.subf %799, %811 : vector<2x32xf32>
    %cst_187 = arith.constant 9.99999974E-6 : f32
    %813 = vector.broadcast %cst_187 : f32 to vector<2x1xf32>
    %814 = arith.addf %810, %813 : vector<2x1xf32>
    %815 = math.rsqrt %814 : vector<2x1xf32>
    %816 = vector.broadcast %815 : vector<2x1xf32> to vector<2x32xf32>
    %817 = arith.mulf %812, %816 : vector<2x32xf32>
    %818 = vector.broadcast %16 : vector<1x32xf32> to vector<2x32xf32>
    %819 = arith.mulf %817, %818 : vector<2x32xf32>
    %820 = vector.broadcast %17 : vector<1x32xf32> to vector<2x32xf32>
    %821 = arith.addf %819, %820 : vector<2x32xf32>
    %822 = arith.addf %821, %695 : vector<2x32xf32>
    %823 = arith.addf %757, %822 : vector<2x32xf32>
    %cst_188 = arith.constant 5.000000e-01 : f32
    %824 = vector.broadcast %cst_188 : f32 to vector<2x32xf32>
    %825 = arith.mulf %823, %824 : vector<2x32xf32>
    %826 = vector.extract_strided_slice %5 {offsets = [12, 0], sizes = [2, 192], strides = [1, 1]} : vector<16x192xf32> to vector<2x192xf32>
    %827 = vector.extract_strided_slice %826 {offsets = [0, 0], sizes = [2, 128], strides = [1, 1]} : vector<2x192xf32> to vector<2x128xf32>
    %828 = vector.extract_strided_slice %826 {offsets = [0, 128], sizes = [2, 32], strides = [1, 1]} : vector<2x192xf32> to vector<2x32xf32>
    %829 = vector.extract_strided_slice %826 {offsets = [0, 160], sizes = [2, 32], strides = [1, 1]} : vector<2x192xf32> to vector<2x32xf32>
    %cst_189 = arith.constant dense<0.000000e+00> : vector<2x128xf32>
    %830 = tpu.matmul %757, %6, %cst_189 {dimension_numbers = #tpu.dot_dimension_numbers<[1], [0], [0], [1], [0, 0, 1, 1], [], []>} : vector<2x32xf32>, vector<32x128xf32>, vector<2x128xf32> -> vector<2x128xf32>
    %831 = arith.addf %827, %830 : vector<2x128xf32>
    %832 = arith.negf %831 : vector<2x128xf32>
    %833 = math.exp %832 : vector<2x128xf32>
    %cst_190 = arith.constant 1.000000e+00 : f32
    %834 = vector.broadcast %cst_190 : f32 to vector<2x128xf32>
    %835 = arith.addf %834, %833 : vector<2x128xf32>
    %836 = arith.divf %834, %835 : vector<2x128xf32>
    %837 = math.tanh %831 : vector<2x128xf32>
    %838 = vector.extract_strided_slice %836 {offsets = [0, 0], sizes = [2, 32], strides = [1, 1]} : vector<2x128xf32> to vector<2x32xf32>
    %839 = vector.extract_strided_slice %836 {offsets = [0, 32], sizes = [2, 32], strides = [1, 1]} : vector<2x128xf32> to vector<2x32xf32>
    %840 = vector.extract_strided_slice %836 {offsets = [0, 96], sizes = [2, 32], strides = [1, 1]} : vector<2x128xf32> to vector<2x32xf32>
    %841 = vector.extract_strided_slice %837 {offsets = [0, 64], sizes = [2, 32], strides = [1, 1]} : vector<2x128xf32> to vector<2x32xf32>
    %842 = arith.mulf %839, %732 : vector<2x32xf32>
    %843 = arith.mulf %838, %841 : vector<2x32xf32>
    %844 = arith.addf %842, %843 : vector<2x32xf32>
    %cst_191 = arith.constant dense<0.000000e+00> : vector<2xf32>
    %845 = vector.multi_reduction <add>, %844, %cst_191 [1] : vector<2x32xf32> to vector<2xf32>
    %846 = vector.shape_cast %845 : vector<2xf32> to vector<2x1xf32>
    %cst_192 = arith.constant 3.200000e+01 : f32
    %847 = vector.broadcast %cst_192 : f32 to vector<2x1xf32>
    %848 = arith.divf %846, %847 : vector<2x1xf32>
    %849 = vector.broadcast %848 : vector<2x1xf32> to vector<2x32xf32>
    %850 = arith.subf %844, %849 : vector<2x32xf32>
    %851 = arith.mulf %850, %850 : vector<2x32xf32>
    %cst_193 = arith.constant dense<0.000000e+00> : vector<2xf32>
    %852 = vector.multi_reduction <add>, %851, %cst_193 [1] : vector<2x32xf32> to vector<2xf32>
    %853 = vector.shape_cast %852 : vector<2xf32> to vector<2x1xf32>
    %cst_194 = arith.constant 3.200000e+01 : f32
    %854 = vector.broadcast %cst_194 : f32 to vector<2x1xf32>
    %855 = arith.divf %853, %854 : vector<2x1xf32>
    %856 = vector.broadcast %848 : vector<2x1xf32> to vector<2x32xf32>
    %857 = arith.subf %844, %856 : vector<2x32xf32>
    %cst_195 = arith.constant 9.99999974E-6 : f32
    %858 = vector.broadcast %cst_195 : f32 to vector<2x1xf32>
    %859 = arith.addf %855, %858 : vector<2x1xf32>
    %860 = math.rsqrt %859 : vector<2x1xf32>
    %861 = vector.broadcast %860 : vector<2x1xf32> to vector<2x32xf32>
    %862 = arith.mulf %857, %861 : vector<2x32xf32>
    %863 = vector.broadcast %7 : vector<1x32xf32> to vector<2x32xf32>
    %864 = arith.mulf %862, %863 : vector<2x32xf32>
    %865 = vector.broadcast %8 : vector<1x32xf32> to vector<2x32xf32>
    %866 = arith.addf %864, %865 : vector<2x32xf32>
    %867 = math.tanh %866 : vector<2x32xf32>
    %868 = arith.mulf %840, %867 : vector<2x32xf32>
    %cst_196 = arith.constant dense<0.000000e+00> : vector<2xf32>
    %869 = vector.multi_reduction <add>, %868, %cst_196 [1] : vector<2x32xf32> to vector<2xf32>
    %870 = vector.shape_cast %869 : vector<2xf32> to vector<2x1xf32>
    %cst_197 = arith.constant 3.200000e+01 : f32
    %871 = vector.broadcast %cst_197 : f32 to vector<2x1xf32>
    %872 = arith.divf %870, %871 : vector<2x1xf32>
    %873 = vector.broadcast %872 : vector<2x1xf32> to vector<2x32xf32>
    %874 = arith.subf %868, %873 : vector<2x32xf32>
    %875 = arith.mulf %874, %874 : vector<2x32xf32>
    %cst_198 = arith.constant dense<0.000000e+00> : vector<2xf32>
    %876 = vector.multi_reduction <add>, %875, %cst_198 [1] : vector<2x32xf32> to vector<2xf32>
    %877 = vector.shape_cast %876 : vector<2xf32> to vector<2x1xf32>
    %cst_199 = arith.constant 3.200000e+01 : f32
    %878 = vector.broadcast %cst_199 : f32 to vector<2x1xf32>
    %879 = arith.divf %877, %878 : vector<2x1xf32>
    %880 = vector.broadcast %872 : vector<2x1xf32> to vector<2x32xf32>
    %881 = arith.subf %868, %880 : vector<2x32xf32>
    %cst_200 = arith.constant 9.99999974E-6 : f32
    %882 = vector.broadcast %cst_200 : f32 to vector<2x1xf32>
    %883 = arith.addf %879, %882 : vector<2x1xf32>
    %884 = math.rsqrt %883 : vector<2x1xf32>
    %885 = vector.broadcast %884 : vector<2x1xf32> to vector<2x32xf32>
    %886 = arith.mulf %881, %885 : vector<2x32xf32>
    %887 = vector.broadcast %9 : vector<1x32xf32> to vector<2x32xf32>
    %888 = arith.mulf %886, %887 : vector<2x32xf32>
    %889 = vector.broadcast %10 : vector<1x32xf32> to vector<2x32xf32>
    %890 = arith.addf %888, %889 : vector<2x32xf32>
    %891 = arith.addf %890, %828 : vector<2x32xf32>
    %cst_201 = arith.constant dense<0.000000e+00> : vector<2x128xf32>
    %892 = tpu.matmul %891, %11, %cst_201 {dimension_numbers = #tpu.dot_dimension_numbers<[1], [0], [0], [1], [0, 0, 1, 1], [], []>} : vector<2x32xf32>, vector<32x128xf32>, vector<2x128xf32> -> vector<2x128xf32>
    %cst_202 = arith.constant dense<0.000000e+00> : vector<2x128xf32>
    %893 = tpu.matmul %822, %12, %cst_202 {dimension_numbers = #tpu.dot_dimension_numbers<[1], [0], [0], [1], [0, 0, 1, 1], [], []>} : vector<2x32xf32>, vector<32x128xf32>, vector<2x128xf32> -> vector<2x128xf32>
    %894 = arith.addf %892, %893 : vector<2x128xf32>
    %895 = vector.broadcast %13 : vector<1x128xf32> to vector<2x128xf32>
    %896 = arith.addf %894, %895 : vector<2x128xf32>
    %897 = arith.negf %896 : vector<2x128xf32>
    %898 = math.exp %897 : vector<2x128xf32>
    %cst_203 = arith.constant 1.000000e+00 : f32
    %899 = vector.broadcast %cst_203 : f32 to vector<2x128xf32>
    %900 = arith.addf %899, %898 : vector<2x128xf32>
    %901 = arith.divf %899, %900 : vector<2x128xf32>
    %902 = math.tanh %896 : vector<2x128xf32>
    %903 = vector.extract_strided_slice %901 {offsets = [0, 0], sizes = [2, 32], strides = [1, 1]} : vector<2x128xf32> to vector<2x32xf32>
    %904 = vector.extract_strided_slice %901 {offsets = [0, 32], sizes = [2, 32], strides = [1, 1]} : vector<2x128xf32> to vector<2x32xf32>
    %905 = vector.extract_strided_slice %901 {offsets = [0, 96], sizes = [2, 32], strides = [1, 1]} : vector<2x128xf32> to vector<2x32xf32>
    %906 = vector.extract_strided_slice %902 {offsets = [0, 64], sizes = [2, 32], strides = [1, 1]} : vector<2x128xf32> to vector<2x32xf32>
    %907 = arith.mulf %904, %797 : vector<2x32xf32>
    %908 = arith.mulf %903, %906 : vector<2x32xf32>
    %909 = arith.addf %907, %908 : vector<2x32xf32>
    %cst_204 = arith.constant dense<0.000000e+00> : vector<2xf32>
    %910 = vector.multi_reduction <add>, %909, %cst_204 [1] : vector<2x32xf32> to vector<2xf32>
    %911 = vector.shape_cast %910 : vector<2xf32> to vector<2x1xf32>
    %cst_205 = arith.constant 3.200000e+01 : f32
    %912 = vector.broadcast %cst_205 : f32 to vector<2x1xf32>
    %913 = arith.divf %911, %912 : vector<2x1xf32>
    %914 = vector.broadcast %913 : vector<2x1xf32> to vector<2x32xf32>
    %915 = arith.subf %909, %914 : vector<2x32xf32>
    %916 = arith.mulf %915, %915 : vector<2x32xf32>
    %cst_206 = arith.constant dense<0.000000e+00> : vector<2xf32>
    %917 = vector.multi_reduction <add>, %916, %cst_206 [1] : vector<2x32xf32> to vector<2xf32>
    %918 = vector.shape_cast %917 : vector<2xf32> to vector<2x1xf32>
    %cst_207 = arith.constant 3.200000e+01 : f32
    %919 = vector.broadcast %cst_207 : f32 to vector<2x1xf32>
    %920 = arith.divf %918, %919 : vector<2x1xf32>
    %921 = vector.broadcast %913 : vector<2x1xf32> to vector<2x32xf32>
    %922 = arith.subf %909, %921 : vector<2x32xf32>
    %cst_208 = arith.constant 9.99999974E-6 : f32
    %923 = vector.broadcast %cst_208 : f32 to vector<2x1xf32>
    %924 = arith.addf %920, %923 : vector<2x1xf32>
    %925 = math.rsqrt %924 : vector<2x1xf32>
    %926 = vector.broadcast %925 : vector<2x1xf32> to vector<2x32xf32>
    %927 = arith.mulf %922, %926 : vector<2x32xf32>
    %928 = vector.broadcast %14 : vector<1x32xf32> to vector<2x32xf32>
    %929 = arith.mulf %927, %928 : vector<2x32xf32>
    %930 = vector.broadcast %15 : vector<1x32xf32> to vector<2x32xf32>
    %931 = arith.addf %929, %930 : vector<2x32xf32>
    %932 = math.tanh %931 : vector<2x32xf32>
    %933 = arith.mulf %905, %932 : vector<2x32xf32>
    %cst_209 = arith.constant dense<0.000000e+00> : vector<2xf32>
    %934 = vector.multi_reduction <add>, %933, %cst_209 [1] : vector<2x32xf32> to vector<2xf32>
    %935 = vector.shape_cast %934 : vector<2xf32> to vector<2x1xf32>
    %cst_210 = arith.constant 3.200000e+01 : f32
    %936 = vector.broadcast %cst_210 : f32 to vector<2x1xf32>
    %937 = arith.divf %935, %936 : vector<2x1xf32>
    %938 = vector.broadcast %937 : vector<2x1xf32> to vector<2x32xf32>
    %939 = arith.subf %933, %938 : vector<2x32xf32>
    %940 = arith.mulf %939, %939 : vector<2x32xf32>
    %cst_211 = arith.constant dense<0.000000e+00> : vector<2xf32>
    %941 = vector.multi_reduction <add>, %940, %cst_211 [1] : vector<2x32xf32> to vector<2xf32>
    %942 = vector.shape_cast %941 : vector<2xf32> to vector<2x1xf32>
    %cst_212 = arith.constant 3.200000e+01 : f32
    %943 = vector.broadcast %cst_212 : f32 to vector<2x1xf32>
    %944 = arith.divf %942, %943 : vector<2x1xf32>
    %945 = vector.broadcast %937 : vector<2x1xf32> to vector<2x32xf32>
    %946 = arith.subf %933, %945 : vector<2x32xf32>
    %cst_213 = arith.constant 9.99999974E-6 : f32
    %947 = vector.broadcast %cst_213 : f32 to vector<2x1xf32>
    %948 = arith.addf %944, %947 : vector<2x1xf32>
    %949 = math.rsqrt %948 : vector<2x1xf32>
    %950 = vector.broadcast %949 : vector<2x1xf32> to vector<2x32xf32>
    %951 = arith.mulf %946, %950 : vector<2x32xf32>
    %952 = vector.broadcast %16 : vector<1x32xf32> to vector<2x32xf32>
    %953 = arith.mulf %951, %952 : vector<2x32xf32>
    %954 = vector.broadcast %17 : vector<1x32xf32> to vector<2x32xf32>
    %955 = arith.addf %953, %954 : vector<2x32xf32>
    %956 = arith.addf %955, %829 : vector<2x32xf32>
    %957 = arith.addf %891, %956 : vector<2x32xf32>
    %cst_214 = arith.constant 5.000000e-01 : f32
    %958 = vector.broadcast %cst_214 : f32 to vector<2x32xf32>
    %959 = arith.mulf %957, %958 : vector<2x32xf32>
    %960 = vector.extract_strided_slice %5 {offsets = [14, 0], sizes = [2, 192], strides = [1, 1]} : vector<16x192xf32> to vector<2x192xf32>
    %961 = vector.extract_strided_slice %960 {offsets = [0, 0], sizes = [2, 128], strides = [1, 1]} : vector<2x192xf32> to vector<2x128xf32>
    %962 = vector.extract_strided_slice %960 {offsets = [0, 128], sizes = [2, 32], strides = [1, 1]} : vector<2x192xf32> to vector<2x32xf32>
    %963 = vector.extract_strided_slice %960 {offsets = [0, 160], sizes = [2, 32], strides = [1, 1]} : vector<2x192xf32> to vector<2x32xf32>
    %cst_215 = arith.constant dense<0.000000e+00> : vector<2x128xf32>
    %964 = tpu.matmul %891, %6, %cst_215 {dimension_numbers = #tpu.dot_dimension_numbers<[1], [0], [0], [1], [0, 0, 1, 1], [], []>} : vector<2x32xf32>, vector<32x128xf32>, vector<2x128xf32> -> vector<2x128xf32>
    %965 = arith.addf %961, %964 : vector<2x128xf32>
    %966 = arith.negf %965 : vector<2x128xf32>
    %967 = math.exp %966 : vector<2x128xf32>
    %cst_216 = arith.constant 1.000000e+00 : f32
    %968 = vector.broadcast %cst_216 : f32 to vector<2x128xf32>
    %969 = arith.addf %968, %967 : vector<2x128xf32>
    %970 = arith.divf %968, %969 : vector<2x128xf32>
    %971 = math.tanh %965 : vector<2x128xf32>
    %972 = vector.extract_strided_slice %970 {offsets = [0, 0], sizes = [2, 32], strides = [1, 1]} : vector<2x128xf32> to vector<2x32xf32>
    %973 = vector.extract_strided_slice %970 {offsets = [0, 32], sizes = [2, 32], strides = [1, 1]} : vector<2x128xf32> to vector<2x32xf32>
    %974 = vector.extract_strided_slice %970 {offsets = [0, 96], sizes = [2, 32], strides = [1, 1]} : vector<2x128xf32> to vector<2x32xf32>
    %975 = vector.extract_strided_slice %971 {offsets = [0, 64], sizes = [2, 32], strides = [1, 1]} : vector<2x128xf32> to vector<2x32xf32>
    %976 = arith.mulf %973, %866 : vector<2x32xf32>
    %977 = arith.mulf %972, %975 : vector<2x32xf32>
    %978 = arith.addf %976, %977 : vector<2x32xf32>
    %cst_217 = arith.constant dense<0.000000e+00> : vector<2xf32>
    %979 = vector.multi_reduction <add>, %978, %cst_217 [1] : vector<2x32xf32> to vector<2xf32>
    %980 = vector.shape_cast %979 : vector<2xf32> to vector<2x1xf32>
    %cst_218 = arith.constant 3.200000e+01 : f32
    %981 = vector.broadcast %cst_218 : f32 to vector<2x1xf32>
    %982 = arith.divf %980, %981 : vector<2x1xf32>
    %983 = vector.broadcast %982 : vector<2x1xf32> to vector<2x32xf32>
    %984 = arith.subf %978, %983 : vector<2x32xf32>
    %985 = arith.mulf %984, %984 : vector<2x32xf32>
    %cst_219 = arith.constant dense<0.000000e+00> : vector<2xf32>
    %986 = vector.multi_reduction <add>, %985, %cst_219 [1] : vector<2x32xf32> to vector<2xf32>
    %987 = vector.shape_cast %986 : vector<2xf32> to vector<2x1xf32>
    %cst_220 = arith.constant 3.200000e+01 : f32
    %988 = vector.broadcast %cst_220 : f32 to vector<2x1xf32>
    %989 = arith.divf %987, %988 : vector<2x1xf32>
    %990 = vector.broadcast %982 : vector<2x1xf32> to vector<2x32xf32>
    %991 = arith.subf %978, %990 : vector<2x32xf32>
    %cst_221 = arith.constant 9.99999974E-6 : f32
    %992 = vector.broadcast %cst_221 : f32 to vector<2x1xf32>
    %993 = arith.addf %989, %992 : vector<2x1xf32>
    %994 = math.rsqrt %993 : vector<2x1xf32>
    %995 = vector.broadcast %994 : vector<2x1xf32> to vector<2x32xf32>
    %996 = arith.mulf %991, %995 : vector<2x32xf32>
    %997 = vector.broadcast %7 : vector<1x32xf32> to vector<2x32xf32>
    %998 = arith.mulf %996, %997 : vector<2x32xf32>
    %999 = vector.broadcast %8 : vector<1x32xf32> to vector<2x32xf32>
    %1000 = arith.addf %998, %999 : vector<2x32xf32>
    %1001 = math.tanh %1000 : vector<2x32xf32>
    %1002 = arith.mulf %974, %1001 : vector<2x32xf32>
    %cst_222 = arith.constant dense<0.000000e+00> : vector<2xf32>
    %1003 = vector.multi_reduction <add>, %1002, %cst_222 [1] : vector<2x32xf32> to vector<2xf32>
    %1004 = vector.shape_cast %1003 : vector<2xf32> to vector<2x1xf32>
    %cst_223 = arith.constant 3.200000e+01 : f32
    %1005 = vector.broadcast %cst_223 : f32 to vector<2x1xf32>
    %1006 = arith.divf %1004, %1005 : vector<2x1xf32>
    %1007 = vector.broadcast %1006 : vector<2x1xf32> to vector<2x32xf32>
    %1008 = arith.subf %1002, %1007 : vector<2x32xf32>
    %1009 = arith.mulf %1008, %1008 : vector<2x32xf32>
    %cst_224 = arith.constant dense<0.000000e+00> : vector<2xf32>
    %1010 = vector.multi_reduction <add>, %1009, %cst_224 [1] : vector<2x32xf32> to vector<2xf32>
    %1011 = vector.shape_cast %1010 : vector<2xf32> to vector<2x1xf32>
    %cst_225 = arith.constant 3.200000e+01 : f32
    %1012 = vector.broadcast %cst_225 : f32 to vector<2x1xf32>
    %1013 = arith.divf %1011, %1012 : vector<2x1xf32>
    %1014 = vector.broadcast %1006 : vector<2x1xf32> to vector<2x32xf32>
    %1015 = arith.subf %1002, %1014 : vector<2x32xf32>
    %cst_226 = arith.constant 9.99999974E-6 : f32
    %1016 = vector.broadcast %cst_226 : f32 to vector<2x1xf32>
    %1017 = arith.addf %1013, %1016 : vector<2x1xf32>
    %1018 = math.rsqrt %1017 : vector<2x1xf32>
    %1019 = vector.broadcast %1018 : vector<2x1xf32> to vector<2x32xf32>
    %1020 = arith.mulf %1015, %1019 : vector<2x32xf32>
    %1021 = vector.broadcast %9 : vector<1x32xf32> to vector<2x32xf32>
    %1022 = arith.mulf %1020, %1021 : vector<2x32xf32>
    %1023 = vector.broadcast %10 : vector<1x32xf32> to vector<2x32xf32>
    %1024 = arith.addf %1022, %1023 : vector<2x32xf32>
    %1025 = arith.addf %1024, %962 : vector<2x32xf32>
    %cst_227 = arith.constant dense<0.000000e+00> : vector<2x128xf32>
    %1026 = tpu.matmul %1025, %11, %cst_227 {dimension_numbers = #tpu.dot_dimension_numbers<[1], [0], [0], [1], [0, 0, 1, 1], [], []>} : vector<2x32xf32>, vector<32x128xf32>, vector<2x128xf32> -> vector<2x128xf32>
    %cst_228 = arith.constant dense<0.000000e+00> : vector<2x128xf32>
    %1027 = tpu.matmul %956, %12, %cst_228 {dimension_numbers = #tpu.dot_dimension_numbers<[1], [0], [0], [1], [0, 0, 1, 1], [], []>} : vector<2x32xf32>, vector<32x128xf32>, vector<2x128xf32> -> vector<2x128xf32>
    %1028 = arith.addf %1026, %1027 : vector<2x128xf32>
    %1029 = vector.broadcast %13 : vector<1x128xf32> to vector<2x128xf32>
    %1030 = arith.addf %1028, %1029 : vector<2x128xf32>
    %1031 = arith.negf %1030 : vector<2x128xf32>
    %1032 = math.exp %1031 : vector<2x128xf32>
    %cst_229 = arith.constant 1.000000e+00 : f32
    %1033 = vector.broadcast %cst_229 : f32 to vector<2x128xf32>
    %1034 = arith.addf %1033, %1032 : vector<2x128xf32>
    %1035 = arith.divf %1033, %1034 : vector<2x128xf32>
    %1036 = math.tanh %1030 : vector<2x128xf32>
    %1037 = vector.extract_strided_slice %1035 {offsets = [0, 0], sizes = [2, 32], strides = [1, 1]} : vector<2x128xf32> to vector<2x32xf32>
    %1038 = vector.extract_strided_slice %1035 {offsets = [0, 32], sizes = [2, 32], strides = [1, 1]} : vector<2x128xf32> to vector<2x32xf32>
    %1039 = vector.extract_strided_slice %1035 {offsets = [0, 96], sizes = [2, 32], strides = [1, 1]} : vector<2x128xf32> to vector<2x32xf32>
    %1040 = vector.extract_strided_slice %1036 {offsets = [0, 64], sizes = [2, 32], strides = [1, 1]} : vector<2x128xf32> to vector<2x32xf32>
    %1041 = arith.mulf %1038, %931 : vector<2x32xf32>
    %1042 = arith.mulf %1037, %1040 : vector<2x32xf32>
    %1043 = arith.addf %1041, %1042 : vector<2x32xf32>
    %cst_230 = arith.constant dense<0.000000e+00> : vector<2xf32>
    %1044 = vector.multi_reduction <add>, %1043, %cst_230 [1] : vector<2x32xf32> to vector<2xf32>
    %1045 = vector.shape_cast %1044 : vector<2xf32> to vector<2x1xf32>
    %cst_231 = arith.constant 3.200000e+01 : f32
    %1046 = vector.broadcast %cst_231 : f32 to vector<2x1xf32>
    %1047 = arith.divf %1045, %1046 : vector<2x1xf32>
    %1048 = vector.broadcast %1047 : vector<2x1xf32> to vector<2x32xf32>
    %1049 = arith.subf %1043, %1048 : vector<2x32xf32>
    %1050 = arith.mulf %1049, %1049 : vector<2x32xf32>
    %cst_232 = arith.constant dense<0.000000e+00> : vector<2xf32>
    %1051 = vector.multi_reduction <add>, %1050, %cst_232 [1] : vector<2x32xf32> to vector<2xf32>
    %1052 = vector.shape_cast %1051 : vector<2xf32> to vector<2x1xf32>
    %cst_233 = arith.constant 3.200000e+01 : f32
    %1053 = vector.broadcast %cst_233 : f32 to vector<2x1xf32>
    %1054 = arith.divf %1052, %1053 : vector<2x1xf32>
    %1055 = vector.broadcast %1047 : vector<2x1xf32> to vector<2x32xf32>
    %1056 = arith.subf %1043, %1055 : vector<2x32xf32>
    %cst_234 = arith.constant 9.99999974E-6 : f32
    %1057 = vector.broadcast %cst_234 : f32 to vector<2x1xf32>
    %1058 = arith.addf %1054, %1057 : vector<2x1xf32>
    %1059 = math.rsqrt %1058 : vector<2x1xf32>
    %1060 = vector.broadcast %1059 : vector<2x1xf32> to vector<2x32xf32>
    %1061 = arith.mulf %1056, %1060 : vector<2x32xf32>
    %1062 = vector.broadcast %14 : vector<1x32xf32> to vector<2x32xf32>
    %1063 = arith.mulf %1061, %1062 : vector<2x32xf32>
    %1064 = vector.broadcast %15 : vector<1x32xf32> to vector<2x32xf32>
    %1065 = arith.addf %1063, %1064 : vector<2x32xf32>
    %1066 = math.tanh %1065 : vector<2x32xf32>
    %1067 = arith.mulf %1039, %1066 : vector<2x32xf32>
    %cst_235 = arith.constant dense<0.000000e+00> : vector<2xf32>
    %1068 = vector.multi_reduction <add>, %1067, %cst_235 [1] : vector<2x32xf32> to vector<2xf32>
    %1069 = vector.shape_cast %1068 : vector<2xf32> to vector<2x1xf32>
    %cst_236 = arith.constant 3.200000e+01 : f32
    %1070 = vector.broadcast %cst_236 : f32 to vector<2x1xf32>
    %1071 = arith.divf %1069, %1070 : vector<2x1xf32>
    %1072 = vector.broadcast %1071 : vector<2x1xf32> to vector<2x32xf32>
    %1073 = arith.subf %1067, %1072 : vector<2x32xf32>
    %1074 = arith.mulf %1073, %1073 : vector<2x32xf32>
    %cst_237 = arith.constant dense<0.000000e+00> : vector<2xf32>
    %1075 = vector.multi_reduction <add>, %1074, %cst_237 [1] : vector<2x32xf32> to vector<2xf32>
    %1076 = vector.shape_cast %1075 : vector<2xf32> to vector<2x1xf32>
    %cst_238 = arith.constant 3.200000e+01 : f32
    %1077 = vector.broadcast %cst_238 : f32 to vector<2x1xf32>
    %1078 = arith.divf %1076, %1077 : vector<2x1xf32>
    %1079 = vector.broadcast %1071 : vector<2x1xf32> to vector<2x32xf32>
    %1080 = arith.subf %1067, %1079 : vector<2x32xf32>
    %cst_239 = arith.constant 9.99999974E-6 : f32
    %1081 = vector.broadcast %cst_239 : f32 to vector<2x1xf32>
    %1082 = arith.addf %1078, %1081 : vector<2x1xf32>
    %1083 = math.rsqrt %1082 : vector<2x1xf32>
    %1084 = vector.broadcast %1083 : vector<2x1xf32> to vector<2x32xf32>
    %1085 = arith.mulf %1080, %1084 : vector<2x32xf32>
    %1086 = vector.broadcast %16 : vector<1x32xf32> to vector<2x32xf32>
    %1087 = arith.mulf %1085, %1086 : vector<2x32xf32>
    %1088 = vector.broadcast %17 : vector<1x32xf32> to vector<2x32xf32>
    %1089 = arith.addf %1087, %1088 : vector<2x32xf32>
    %1090 = arith.addf %1089, %963 : vector<2x32xf32>
    %1091 = arith.addf %1025, %1090 : vector<2x32xf32>
    %cst_240 = arith.constant 5.000000e-01 : f32
    %1092 = vector.broadcast %cst_240 : f32 to vector<2x32xf32>
    %1093 = arith.mulf %1091, %1092 : vector<2x32xf32>
    %c0_241 = arith.constant 0 : index
    %c0_242 = arith.constant 0 : index
    %1094 = vector.load %arg15[%c0_241, %c0_242] : memref<32x32xf32, #tpu.memory_space<vmem>>, vector<32x32xf32>
    %c0_243 = arith.constant 0 : index
    %c0_244 = arith.constant 0 : index
    %1095 = vector.load %arg16[%c0_243, %c0_244] : memref<1x32xf32, #tpu.memory_space<vmem>>, vector<1x32xf32>
    %c0_245 = arith.constant 0 : index
    %c0_246 = arith.constant 0 : index
    %1096 = vector.load %arg17[%c0_245, %c0_246] : memref<32x1xf32, #tpu.memory_space<vmem>>, vector<32x1xf32>
    %c0_247 = arith.constant 0 : index
    %c0_248 = arith.constant 0 : index
    %1097 = vector.load %arg18[%c0_247, %c0_248] : memref<1x1xf32, #tpu.memory_space<vmem>>, vector<1x1xf32>
    %cst_249 = arith.constant dense<0.000000e+00> : vector<2x32xf32>
    %1098 = tpu.matmul %155, %1094, %cst_249 {dimension_numbers = #tpu.dot_dimension_numbers<[1], [0], [0], [1], [0, 0, 1, 1], [], []>} : vector<2x32xf32>, vector<32x32xf32>, vector<2x32xf32> -> vector<2x32xf32>
    %1099 = vector.broadcast %1095 : vector<1x32xf32> to vector<2x32xf32>
    %1100 = arith.addf %1098, %1099 : vector<2x32xf32>
    %1101 = math.tanh %1100 : vector<2x32xf32>
    %cst_250 = arith.constant dense<0.000000e+00> : vector<2x1xf32>
    %1102 = tpu.matmul %1101, %1096, %cst_250 {dimension_numbers = #tpu.dot_dimension_numbers<[1], [0], [0], [1], [0, 0, 1, 1], [], []>} : vector<2x32xf32>, vector<32x1xf32>, vector<2x1xf32> -> vector<2x1xf32>
    %1103 = vector.broadcast %1097 : vector<1x1xf32> to vector<2x1xf32>
    %1104 = arith.addf %1102, %1103 : vector<2x1xf32>
    %c0_251 = arith.constant 0 : index
    %c0_252 = arith.constant 0 : index
    %1105 = vector.load %arg24[%c0_251, %c0_252] : memref<2x8xf32, #tpu.memory_space<vmem>>, vector<2x1xf32>
    tpu.vector_store %arg24[%c0_251, %c0_252], %1104 {strides = array<i32>} : memref<2x8xf32, #tpu.memory_space<vmem>>, vector<2x1xf32>,
    %cst_253 = arith.constant dense<0.000000e+00> : vector<2x32xf32>
    %1106 = tpu.matmul %289, %1094, %cst_253 {dimension_numbers = #tpu.dot_dimension_numbers<[1], [0], [0], [1], [0, 0, 1, 1], [], []>} : vector<2x32xf32>, vector<32x32xf32>, vector<2x32xf32> -> vector<2x32xf32>
    %1107 = vector.broadcast %1095 : vector<1x32xf32> to vector<2x32xf32>
    %1108 = arith.addf %1106, %1107 : vector<2x32xf32>
    %1109 = math.tanh %1108 : vector<2x32xf32>
    %cst_254 = arith.constant dense<0.000000e+00> : vector<2x1xf32>
    %1110 = tpu.matmul %1109, %1096, %cst_254 {dimension_numbers = #tpu.dot_dimension_numbers<[1], [0], [0], [1], [0, 0, 1, 1], [], []>} : vector<2x32xf32>, vector<32x1xf32>, vector<2x1xf32> -> vector<2x1xf32>
    %1111 = vector.broadcast %1097 : vector<1x1xf32> to vector<2x1xf32>
    %1112 = arith.addf %1110, %1111 : vector<2x1xf32>
    %c0_255 = arith.constant 0 : index
    %c1 = arith.constant 1 : index
    %1113 = vector.load %arg24[%c0_255, %c1] : memref<2x8xf32, #tpu.memory_space<vmem>>, vector<2x1xf32>
    tpu.vector_store %arg24[%c0_255, %c1], %1112 {strides = array<i32>} : memref<2x8xf32, #tpu.memory_space<vmem>>, vector<2x1xf32>,
    %cst_256 = arith.constant dense<0.000000e+00> : vector<2x32xf32>
    %1114 = tpu.matmul %423, %1094, %cst_256 {dimension_numbers = #tpu.dot_dimension_numbers<[1], [0], [0], [1], [0, 0, 1, 1], [], []>} : vector<2x32xf32>, vector<32x32xf32>, vector<2x32xf32> -> vector<2x32xf32>
    %1115 = vector.broadcast %1095 : vector<1x32xf32> to vector<2x32xf32>
    %1116 = arith.addf %1114, %1115 : vector<2x32xf32>
    %1117 = math.tanh %1116 : vector<2x32xf32>
    %cst_257 = arith.constant dense<0.000000e+00> : vector<2x1xf32>
    %1118 = tpu.matmul %1117, %1096, %cst_257 {dimension_numbers = #tpu.dot_dimension_numbers<[1], [0], [0], [1], [0, 0, 1, 1], [], []>} : vector<2x32xf32>, vector<32x1xf32>, vector<2x1xf32> -> vector<2x1xf32>
    %1119 = vector.broadcast %1097 : vector<1x1xf32> to vector<2x1xf32>
    %1120 = arith.addf %1118, %1119 : vector<2x1xf32>
    %c0_258 = arith.constant 0 : index
    %c2 = arith.constant 2 : index
    %1121 = vector.load %arg24[%c0_258, %c2] : memref<2x8xf32, #tpu.memory_space<vmem>>, vector<2x1xf32>
    tpu.vector_store %arg24[%c0_258, %c2], %1120 {strides = array<i32>} : memref<2x8xf32, #tpu.memory_space<vmem>>, vector<2x1xf32>,
    %cst_259 = arith.constant dense<0.000000e+00> : vector<2x32xf32>
    %1122 = tpu.matmul %557, %1094, %cst_259 {dimension_numbers = #tpu.dot_dimension_numbers<[1], [0], [0], [1], [0, 0, 1, 1], [], []>} : vector<2x32xf32>, vector<32x32xf32>, vector<2x32xf32> -> vector<2x32xf32>
    %1123 = vector.broadcast %1095 : vector<1x32xf32> to vector<2x32xf32>
    %1124 = arith.addf %1122, %1123 : vector<2x32xf32>
    %1125 = math.tanh %1124 : vector<2x32xf32>
    %cst_260 = arith.constant dense<0.000000e+00> : vector<2x1xf32>
    %1126 = tpu.matmul %1125, %1096, %cst_260 {dimension_numbers = #tpu.dot_dimension_numbers<[1], [0], [0], [1], [0, 0, 1, 1], [], []>} : vector<2x32xf32>, vector<32x1xf32>, vector<2x1xf32> -> vector<2x1xf32>
    %1127 = vector.broadcast %1097 : vector<1x1xf32> to vector<2x1xf32>
    %1128 = arith.addf %1126, %1127 : vector<2x1xf32>
    %c0_261 = arith.constant 0 : index
    %c3 = arith.constant 3 : index
    %1129 = vector.load %arg24[%c0_261, %c3] : memref<2x8xf32, #tpu.memory_space<vmem>>, vector<2x1xf32>
    tpu.vector_store %arg24[%c0_261, %c3], %1128 {strides = array<i32>} : memref<2x8xf32, #tpu.memory_space<vmem>>, vector<2x1xf32>,
    %cst_262 = arith.constant dense<0.000000e+00> : vector<2x32xf32>
    %1130 = tpu.matmul %691, %1094, %cst_262 {dimension_numbers = #tpu.dot_dimension_numbers<[1], [0], [0], [1], [0, 0, 1, 1], [], []>} : vector<2x32xf32>, vector<32x32xf32>, vector<2x32xf32> -> vector<2x32xf32>
    %1131 = vector.broadcast %1095 : vector<1x32xf32> to vector<2x32xf32>
    %1132 = arith.addf %1130, %1131 : vector<2x32xf32>
    %1133 = math.tanh %1132 : vector<2x32xf32>
    %cst_263 = arith.constant dense<0.000000e+00> : vector<2x1xf32>
    %1134 = tpu.matmul %1133, %1096, %cst_263 {dimension_numbers = #tpu.dot_dimension_numbers<[1], [0], [0], [1], [0, 0, 1, 1], [], []>} : vector<2x32xf32>, vector<32x1xf32>, vector<2x1xf32> -> vector<2x1xf32>
    %1135 = vector.broadcast %1097 : vector<1x1xf32> to vector<2x1xf32>
    %1136 = arith.addf %1134, %1135 : vector<2x1xf32>
    %c0_264 = arith.constant 0 : index
    %c4 = arith.constant 4 : index
    %1137 = vector.load %arg24[%c0_264, %c4] : memref<2x8xf32, #tpu.memory_space<vmem>>, vector<2x1xf32>
    tpu.vector_store %arg24[%c0_264, %c4], %1136 {strides = array<i32>} : memref<2x8xf32, #tpu.memory_space<vmem>>, vector<2x1xf32>,
    %cst_265 = arith.constant dense<0.000000e+00> : vector<2x32xf32>
    %1138 = tpu.matmul %825, %1094, %cst_265 {dimension_numbers = #tpu.dot_dimension_numbers<[1], [0], [0], [1], [0, 0, 1, 1], [], []>} : vector<2x32xf32>, vector<32x32xf32>, vector<2x32xf32> -> vector<2x32xf32>
    %1139 = vector.broadcast %1095 : vector<1x32xf32> to vector<2x32xf32>
    %1140 = arith.addf %1138, %1139 : vector<2x32xf32>
    %1141 = math.tanh %1140 : vector<2x32xf32>
    %cst_266 = arith.constant dense<0.000000e+00> : vector<2x1xf32>
    %1142 = tpu.matmul %1141, %1096, %cst_266 {dimension_numbers = #tpu.dot_dimension_numbers<[1], [0], [0], [1], [0, 0, 1, 1], [], []>} : vector<2x32xf32>, vector<32x1xf32>, vector<2x1xf32> -> vector<2x1xf32>
    %1143 = vector.broadcast %1097 : vector<1x1xf32> to vector<2x1xf32>
    %1144 = arith.addf %1142, %1143 : vector<2x1xf32>
    %c0_267 = arith.constant 0 : index
    %c5 = arith.constant 5 : index
    %1145 = vector.load %arg24[%c0_267, %c5] : memref<2x8xf32, #tpu.memory_space<vmem>>, vector<2x1xf32>
    tpu.vector_store %arg24[%c0_267, %c5], %1144 {strides = array<i32>} : memref<2x8xf32, #tpu.memory_space<vmem>>, vector<2x1xf32>,
    %cst_268 = arith.constant dense<0.000000e+00> : vector<2x32xf32>
    %1146 = tpu.matmul %959, %1094, %cst_268 {dimension_numbers = #tpu.dot_dimension_numbers<[1], [0], [0], [1], [0, 0, 1, 1], [], []>} : vector<2x32xf32>, vector<32x32xf32>, vector<2x32xf32> -> vector<2x32xf32>
    %1147 = vector.broadcast %1095 : vector<1x32xf32> to vector<2x32xf32>
    %1148 = arith.addf %1146, %1147 : vector<2x32xf32>
    %1149 = math.tanh %1148 : vector<2x32xf32>
    %cst_269 = arith.constant dense<0.000000e+00> : vector<2x1xf32>
    %1150 = tpu.matmul %1149, %1096, %cst_269 {dimension_numbers = #tpu.dot_dimension_numbers<[1], [0], [0], [1], [0, 0, 1, 1], [], []>} : vector<2x32xf32>, vector<32x1xf32>, vector<2x1xf32> -> vector<2x1xf32>
    %1151 = vector.broadcast %1097 : vector<1x1xf32> to vector<2x1xf32>
    %1152 = arith.addf %1150, %1151 : vector<2x1xf32>
    %c0_270 = arith.constant 0 : index
    %c6 = arith.constant 6 : index
    %1153 = vector.load %arg24[%c0_270, %c6] : memref<2x8xf32, #tpu.memory_space<vmem>>, vector<2x1xf32>
    tpu.vector_store %arg24[%c0_270, %c6], %1152 {strides = array<i32>} : memref<2x8xf32, #tpu.memory_space<vmem>>, vector<2x1xf32>,
    %cst_271 = arith.constant dense<0.000000e+00> : vector<2x32xf32>
    %1154 = tpu.matmul %1093, %1094, %cst_271 {dimension_numbers = #tpu.dot_dimension_numbers<[1], [0], [0], [1], [0, 0, 1, 1], [], []>} : vector<2x32xf32>, vector<32x32xf32>, vector<2x32xf32> -> vector<2x32xf32>
    %1155 = vector.broadcast %1095 : vector<1x32xf32> to vector<2x32xf32>
    %1156 = arith.addf %1154, %1155 : vector<2x32xf32>
    %1157 = math.tanh %1156 : vector<2x32xf32>
    %cst_272 = arith.constant dense<0.000000e+00> : vector<2x1xf32>
    %1158 = tpu.matmul %1157, %1096, %cst_272 {dimension_numbers = #tpu.dot_dimension_numbers<[1], [0], [0], [1], [0, 0, 1, 1], [], []>} : vector<2x32xf32>, vector<32x1xf32>, vector<2x1xf32> -> vector<2x1xf32>
    %1159 = vector.broadcast %1097 : vector<1x1xf32> to vector<2x1xf32>
    %1160 = arith.addf %1158, %1159 : vector<2x1xf32>
    %c0_273 = arith.constant 0 : index
    %c7 = arith.constant 7 : index
    %1161 = vector.load %arg24[%c0_273, %c7] : memref<2x8xf32, #tpu.memory_space<vmem>>, vector<2x1xf32>
    tpu.vector_store %arg24[%c0_273, %c7], %1160 {strides = array<i32>} : memref<2x8xf32, #tpu.memory_space<vmem>>, vector<2x1xf32>,
    %c0_274 = arith.constant 0 : index
    %c0_275 = arith.constant 0 : index
    %1162 = vector.load %arg24[%c0_274, %c0_275] : memref<2x8xf32, #tpu.memory_space<vmem>>, vector<2x8xf32>
    %cst_276 = arith.constant dense<0xFF800000> : vector<2xf32>
    %1163 = vector.multi_reduction <maximumf>, %1162, %cst_276 [1] : vector<2x8xf32> to vector<2xf32>
    %1164 = vector.shape_cast %1163 : vector<2xf32> to vector<2x1xf32>
    %1165 = vector.broadcast %1164 : vector<2x1xf32> to vector<2x8xf32>
    %1166 = arith.subf %1162, %1165 : vector<2x8xf32>
    %1167 = math.exp %1166 : vector<2x8xf32>
    %cst_277 = arith.constant dense<0.000000e+00> : vector<2xf32>
    %1168 = vector.multi_reduction <add>, %1167, %cst_277 [1] : vector<2x8xf32> to vector<2xf32>
    %1169 = vector.shape_cast %1168 : vector<2xf32> to vector<2x1xf32>
    %1170 = vector.broadcast %1169 : vector<2x1xf32> to vector<2x8xf32>
    %1171 = arith.divf %1167, %1170 : vector<2x8xf32>
    %c0_278 = arith.constant 0 : index
    %c0_279 = arith.constant 0 : index
    %1172 = vector.load %arg24[%c0_278, %c0_279] : memref<2x8xf32, #tpu.memory_space<vmem>>, vector<2x8xf32>
    tpu.vector_store %arg24[%c0_278, %c0_279], %1171 {strides = array<i32>} : memref<2x8xf32, #tpu.memory_space<vmem>>, vector<2x8xf32>,
    %1173 = vector.extract_strided_slice %1171 {offsets = [0, 0], sizes = [2, 1], strides = [1, 1]} : vector<2x8xf32> to vector<2x1xf32>
    %1174 = vector.broadcast %1173 : vector<2x1xf32> to vector<2x32xf32>
    %1175 = arith.mulf %1174, %155 : vector<2x32xf32>
    %1176 = vector.extract_strided_slice %1171 {offsets = [0, 1], sizes = [2, 1], strides = [1, 1]} : vector<2x8xf32> to vector<2x1xf32>
    %1177 = vector.broadcast %1176 : vector<2x1xf32> to vector<2x32xf32>
    %1178 = arith.mulf %1177, %289 : vector<2x32xf32>
    %1179 = arith.addf %1175, %1178 : vector<2x32xf32>
    %1180 = vector.extract_strided_slice %1171 {offsets = [0, 2], sizes = [2, 1], strides = [1, 1]} : vector<2x8xf32> to vector<2x1xf32>
    %1181 = vector.broadcast %1180 : vector<2x1xf32> to vector<2x32xf32>
    %1182 = arith.mulf %1181, %423 : vector<2x32xf32>
    %1183 = arith.addf %1179, %1182 : vector<2x32xf32>
    %1184 = vector.extract_strided_slice %1171 {offsets = [0, 3], sizes = [2, 1], strides = [1, 1]} : vector<2x8xf32> to vector<2x1xf32>
    %1185 = vector.broadcast %1184 : vector<2x1xf32> to vector<2x32xf32>
    %1186 = arith.mulf %1185, %557 : vector<2x32xf32>
    %1187 = arith.addf %1183, %1186 : vector<2x32xf32>
    %1188 = vector.extract_strided_slice %1171 {offsets = [0, 4], sizes = [2, 1], strides = [1, 1]} : vector<2x8xf32> to vector<2x1xf32>
    %1189 = vector.broadcast %1188 : vector<2x1xf32> to vector<2x32xf32>
    %1190 = arith.mulf %1189, %691 : vector<2x32xf32>
    %1191 = arith.addf %1187, %1190 : vector<2x32xf32>
    %1192 = vector.extract_strided_slice %1171 {offsets = [0, 5], sizes = [2, 1], strides = [1, 1]} : vector<2x8xf32> to vector<2x1xf32>
    %1193 = vector.broadcast %1192 : vector<2x1xf32> to vector<2x32xf32>
    %1194 = arith.mulf %1193, %825 : vector<2x32xf32>
    %1195 = arith.addf %1191, %1194 : vector<2x32xf32>
    %1196 = vector.extract_strided_slice %1171 {offsets = [0, 6], sizes = [2, 1], strides = [1, 1]} : vector<2x8xf32> to vector<2x1xf32>
    %1197 = vector.broadcast %1196 : vector<2x1xf32> to vector<2x32xf32>
    %1198 = arith.mulf %1197, %959 : vector<2x32xf32>
    %1199 = arith.addf %1195, %1198 : vector<2x32xf32>
    %1200 = vector.extract_strided_slice %1171 {offsets = [0, 7], sizes = [2, 1], strides = [1, 1]} : vector<2x8xf32> to vector<2x1xf32>
    %1201 = vector.broadcast %1200 : vector<2x1xf32> to vector<2x32xf32>
    %1202 = arith.mulf %1201, %1093 : vector<2x32xf32>
    %1203 = arith.addf %1199, %1202 : vector<2x32xf32>
    %c0_280 = arith.constant 0 : index
    %c0_281 = arith.constant 0 : index
    %1204 = vector.load %arg19[%c0_280, %c0_281] : memref<32x48xf32, #tpu.memory_space<vmem>>, vector<32x48xf32>
    %cst_282 = arith.constant dense<0.000000e+00> : vector<2x48xf32>
    %1205 = tpu.matmul %1203, %1204, %cst_282 {dimension_numbers = #tpu.dot_dimension_numbers<[1], [0], [0], [1], [0, 0, 1, 1], [], []>} : vector<2x32xf32>, vector<32x48xf32>, vector<2x48xf32> -> vector<2x48xf32>
    %c0_283 = arith.constant 0 : index
    %c0_284 = arith.constant 0 : index
    %1206 = vector.load %arg20[%c0_283, %c0_284] : memref<1x48xf32, #tpu.memory_space<vmem>>, vector<1x48xf32>
    %1207 = vector.broadcast %1206 : vector<1x48xf32> to vector<2x48xf32>
    %1208 = arith.addf %1205, %1207 : vector<2x48xf32>
    %cst_285 = arith.constant 0.000000e+00 : f32
    %1209 = vector.broadcast %cst_285 : f32 to vector<2x48xf32>
    %1210 = arith.maximumf %1208, %1209 : vector<2x48xf32>
    %c0_286 = arith.constant 0 : index
    %c0_287 = arith.constant 0 : index
    %1211 = vector.load %arg21[%c0_286, %c0_287] : memref<48x3xf32, #tpu.memory_space<vmem>>, vector<48x3xf32>
    %cst_288 = arith.constant dense<0.000000e+00> : vector<2x3xf32>
    %1212 = tpu.matmul %1210, %1211, %cst_288 {dimension_numbers = #tpu.dot_dimension_numbers<[1], [0], [0], [1], [0, 0, 1, 1], [], []>} : vector<2x48xf32>, vector<48x3xf32>, vector<2x3xf32> -> vector<2x3xf32>
    %c0_289 = arith.constant 0 : index
    %c0_290 = arith.constant 0 : index
    %1213 = vector.load %arg22[%c0_289, %c0_290] : memref<1x3xf32, #tpu.memory_space<vmem>>, vector<1x3xf32>
    %1214 = vector.broadcast %1213 : vector<1x3xf32> to vector<2x3xf32>
    %1215 = arith.addf %1212, %1214 : vector<2x3xf32>
    %c0_291 = arith.constant 0 : index
    %c0_292 = arith.constant 0 : index
    %1216 = vector.load %arg23[%c0_291, %c0_292] : memref<2x3xf32, #tpu.memory_space<vmem>>, vector<2x3xf32>
    tpu.vector_store %arg23[%c0_291, %c0_292], %1215 {strides = array<i32>} : memref<2x3xf32, #tpu.memory_space<vmem>>, vector<2x3xf32>,
    return
  }
}

</mosaic_0001>

<llo_original>
// kernel: tpu_custom_call.1
$region0: #{tpu_custom_call.1}
  #allocation0 [shape = 'u32[]', space=smem, size = 0x4, offset = 0x4, fixed_abs, tag = 'smem constant byte address 0x4 - core index']
  #allocation1 [shape = 'u32[144,128]{1,0:T(1,128)}', space=vmem, size = 0x12000, scoped, tag = 'internal scratch']
  #allocation2 [shape = 'f32[1,1]{1,0:T(1,128)S(1)}', space=vmem, size = 0x200, scoped, tag = 'scoped memory for tpu_custom_call.1']
  %s0 = inlined_call_operand.vmem [shape: f32[16,8], index: 0, kind: input, shape index: {}]
  %s1 = inlined_call_operand.hbm [shape: f32[8,192], index: 1, kind: input, shape index: {}]
  %s2 = inlined_call_operand.hbm [shape: f32[1,192], index: 2, kind: input, shape index: {}]
  %s3 = inlined_call_operand.vmem [shape: f32[32,128], index: 3, kind: input, shape index: {}]
  %s4 = inlined_call_operand.hbm [shape: f32[1,32], index: 4, kind: input, shape index: {}]
  %s5 = inlined_call_operand.hbm [shape: f32[1,32], index: 5, kind: input, shape index: {}]
  %s6 = inlined_call_operand.hbm [shape: f32[1,32], index: 6, kind: input, shape index: {}]
  %s7 = inlined_call_operand.hbm [shape: f32[1,32], index: 7, kind: input, shape index: {}]
  %s8 = inlined_call_operand.vmem [shape: f32[32,128], index: 8, kind: input, shape index: {}]
  %s9 = inlined_call_operand.vmem [shape: f32[32,128], index: 9, kind: input, shape index: {}]
  %s10 = inlined_call_operand.hbm [shape: f32[1,128], index: 10, kind: input, shape index: {}]
  %s11 = inlined_call_operand.hbm [shape: f32[1,32], index: 11, kind: input, shape index: {}]
  %s12 = inlined_call_operand.hbm [shape: f32[1,32], index: 12, kind: input, shape index: {}]
  %s13 = inlined_call_operand.vmem [shape: f32[1,32], index: 13, kind: input, shape index: {}]
  %s14 = inlined_call_operand.vmem [shape: f32[1,32], index: 14, kind: input, shape index: {}]
  %s15 = inlined_call_operand.vmem [shape: f32[32,32], index: 15, kind: input, shape index: {}]
  %s16 = inlined_call_operand.vmem [shape: f32[1,32], index: 16, kind: input, shape index: {}]
  %s17 = inlined_call_operand.vmem [shape: f32[32,1], index: 17, kind: input, shape index: {}]
  %s18 = inlined_call_operand.<no memory space> [shape: f32[1,1], index: 18, kind: input, shape index: {}]
  %s19 = inlined_call_operand.hbm [shape: f32[32,48], index: 19, kind: input, shape index: {}]
  %s20 = inlined_call_operand.vmem [shape: f32[1,48], index: 20, kind: input, shape index: {}]
  %s21 = inlined_call_operand.vmem [shape: f32[48,3], index: 21, kind: input, shape index: {}]
  %s22 = inlined_call_operand.vmem [shape: f32[1,3], index: 22, kind: input, shape index: {}]
  %s23 = inlined_call_operand.hbm [shape: f32[2,3], index: 23, kind: output, shape index: {0}]
  %s24 = inlined_call_operand.hbm [shape: f32[2,8], index: 24, kind: output, shape index: {1}]
  %25 = xla_tuple %s23, %s24
  %s26 = sld [smem:[#allocation0]]
  $region150: #{tpu_custom_call.1} parent=0
    _
  %s28 = ssub.s32 1, %s26
  %s29 = scalar_select 0, %s28, %s26
  %v30 = vstv %s18
  %31 = vst [vmem:[#allocation2] sm:$0x1] %v30
  $region1: #{tpu_custom_call.1} parent=0
    #allocation3 [shape = 'u8[8192]{0}', space=vmem, size = 0x2000, scoped, tag = 'input window, operand 1, single buffered']
    #allocation4 [shape = 's32[1]{0}', space=sflag, size = 0x4, scoped, tag = 'scoped memory for tpu_custom_call.1']
    #allocation5 [shape = 's32[1]{0}', space=sflag, size = 0x4, scoped, tag = 'scoped memory for tpu_custom_call.1']
    #allocation6 [shape = 'u8[1024]{0}', space=vmem, size = 0x400, scoped, tag = 'input window, operand 2, single buffered']
    #allocation7 [shape = 's32[1]{0}', space=sflag, size = 0x4, scoped, tag = 'scoped memory for tpu_custom_call.1']
    #allocation8 [shape = 'u8[512]{0}', space=vmem, size = 0x400, scoped, tag = 'input window, operand 4, single buffered']
    #allocation9 [shape = 'u8[512]{0}', space=vmem, size = 0x400, scoped, tag = 'input window, operand 5, single buffered']
    #allocation10 [shape = 's32[1]{0}', space=sflag, size = 0x4, scoped, tag = 'scoped memory for tpu_custom_call.1']
    #allocation11 [shape = 'u8[512]{0}', space=vmem, size = 0x400, scoped, tag = 'input window, operand 6, single buffered']
    #allocation12 [shape = 'u8[512]{0}', space=vmem, size = 0x400, scoped, tag = 'input window, operand 7, single buffered']
    #allocation13 [shape = 's32[1]{0}', space=sflag, size = 0x4, scoped, tag = 'scoped memory for tpu_custom_call.1']
    #allocation14 [shape = 'u8[512]{0}', space=vmem, size = 0x400, scoped, tag = 'input window, operand 10, single buffered']
    #allocation15 [shape = 'u8[512]{0}', space=vmem, size = 0x400, scoped, tag = 'input window, operand 11, single buffered']
    #allocation16 [shape = 's32[1]{0}', space=sflag, size = 0x4, scoped, tag = 'scoped memory for tpu_custom_call.1']
    #allocation17 [shape = 'u8[512]{0}', space=vmem, size = 0x400, scoped, tag = 'input window, operand 12, single buffered']
    #allocation18 [shape = 'u8[16384]{0}', space=vmem, size = 0x4000, scoped, tag = 'input window, operand 19, single buffered']
    #allocation19 [shape = 's32[1]{0}', space=sflag, size = 0x4, scoped, tag = 'scoped memory for tpu_custom_call.1']
    #allocation20 [shape = 'u8[1024]{0}', space=vmem, size = 0x400, scoped, tag = 'output window, operand 0, single buffered']
    #allocation21 [shape = 'u8[1024]{0}', space=vmem, size = 0x400, scoped, tag = 'output window, operand 1, single buffered']
    #allocation22 [shape = 's32[1]{0}', space=sflag, size = 0x4, scoped, tag = 'scoped memory for tpu_custom_call.1']
    %32 = vsyncpa [#allocation4], 0
    %33 = vsyncpa [#allocation7], 0
    %34 = vsyncpa [#allocation10], 0
    %35 = vsyncpa [#allocation13], 0
    %36 = vsyncpa [#allocation16], 0
    %37 = vsyncpa [#allocation19], 0
    %38 = vsyncpa [#allocation5], 0
    %39 = vsyncpa [#allocation22], 0
    // Predicated region
    $region2: #{tpu_custom_call.1} parent=1 // pred_check
      _
    $region3: #{tpu_custom_call.1} parent=1 // pred_check_branch
      %41 = sbr.rel (0) target = $region5
    $region4: #{tpu_custom_call.1} parent=1 // pred_region
      _
    $region5: #{tpu_custom_call.1} parent=1 // pred_fallthru
      _
    // Predicated region
    $region6: #{tpu_custom_call.1} parent=1 // pred_check
      _
    $region7: #{tpu_custom_call.1} parent=1 // pred_check_branch
      %43 = sbr.rel (0) target = $region9
    $region8: #{tpu_custom_call.1} parent=1 // pred_region
      %s45 = ssub.s32 256, 256
      %46 = vsyncadd [#allocation4], %s45
      %s48 = sshll.u32 [#allocation3], 4
      %s49 = int_to_ptr.vmem [resolvable:$true] %s48
      %51 = dma.hbm_to_vmem [thread:$0]  %s1, 256, %s49, [#allocation4]
    $region9: #{tpu_custom_call.1} parent=1 // pred_fallthru
      _
    // Predicated region
    $region10: #{tpu_custom_call.1} parent=1 // pred_check
      _
    $region11: #{tpu_custom_call.1} parent=1 // pred_check_branch
      %53 = sbr.rel (0) target = $region13
    $region12: #{tpu_custom_call.1} parent=1 // pred_region
      %s55 = ssub.s32 32, 32
      %56 = vsyncadd [#allocation7], %s55
      %s58 = sshll.u32 [#allocation6], 4
      %s59 = int_to_ptr.vmem [resolvable:$true] %s58
      %61 = dma.hbm_to_vmem [thread:$0]  %s2, 32, %s59, [#allocation7]
    $region13: #{tpu_custom_call.1} parent=1 // pred_fallthru
      _
    // Predicated region
    $region14: #{tpu_custom_call.1} parent=1 // pred_check
      _
    $region15: #{tpu_custom_call.1} parent=1 // pred_check_branch
      %63 = sbr.rel (0) target = $region17
    $region16: #{tpu_custom_call.1} parent=1 // pred_region
      _
    $region17: #{tpu_custom_call.1} parent=1 // pred_fallthru
      _
    // Predicated region
    $region18: #{tpu_custom_call.1} parent=1 // pred_check
      _
    $region19: #{tpu_custom_call.1} parent=1 // pred_check_branch
      %65 = sbr.rel (0) target = $region21
    $region20: #{tpu_custom_call.1} parent=1 // pred_region
      %s67 = ssub.s32 16, 16
      %68 = vsyncadd [#allocation7], %s67
      %s70 = sshll.u32 [#allocation8], 4
      %s71 = int_to_ptr.vmem [resolvable:$true] %s70
      %73 = dma.hbm_to_vmem [thread:$0]  %s4, 16, %s71, [#allocation7]
    $region21: #{tpu_custom_call.1} parent=1 // pred_fallthru
      _
    // Predicated region
    $region22: #{tpu_custom_call.1} parent=1 // pred_check
      _
    $region23: #{tpu_custom_call.1} parent=1 // pred_check_branch
      %75 = sbr.rel (0) target = $region25
    $region24: #{tpu_custom_call.1} parent=1 // pred_region
      %s77 = ssub.s32 16, 16
      %78 = vsyncadd [#allocation10], %s77
      %s80 = sshll.u32 [#allocation9], 4
      %s81 = int_to_ptr.vmem [resolvable:$true] %s80
      %83 = dma.hbm_to_vmem [thread:$0]  %s5, 16, %s81, [#allocation10]
    $region25: #{tpu_custom_call.1} parent=1 // pred_fallthru
      _
    // Predicated region
    $region26: #{tpu_custom_call.1} parent=1 // pred_check
      _
    $region27: #{tpu_custom_call.1} parent=1 // pred_check_branch
      %85 = sbr.rel (0) target = $region29
    $region28: #{tpu_custom_call.1} parent=1 // pred_region
      %s87 = ssub.s32 16, 16
      %88 = vsyncadd [#allocation10], %s87
      %s90 = sshll.u32 [#allocation11], 4
      %s91 = int_to_ptr.vmem [resolvable:$true] %s90
      %93 = dma.hbm_to_vmem [thread:$0]  %s6, 16, %s91, [#allocation10]
    $region29: #{tpu_custom_call.1} parent=1 // pred_fallthru
      _
    // Predicated region
    $region30: #{tpu_custom_call.1} parent=1 // pred_check
      _
    $region31: #{tpu_custom_call.1} parent=1 // pred_check_branch
      %95 = sbr.rel (0) target = $region33
    $region32: #{tpu_custom_call.1} parent=1 // pred_region
      %s97 = ssub.s32 16, 16
      %98 = vsyncadd [#allocation13], %s97
      %s100 = sshll.u32 [#allocation12], 4
      %s101 = int_to_ptr.vmem [resolvable:$true] %s100
      %103 = dma.hbm_to_vmem [thread:$0]  %s7, 16, %s101, [#allocation13]
    $region33: #{tpu_custom_call.1} parent=1 // pred_fallthru
      _
    // Predicated region
    $region34: #{tpu_custom_call.1} parent=1 // pred_check
      _
    $region35: #{tpu_custom_call.1} parent=1 // pred_check_branch
      %105 = sbr.rel (0) target = $region37
    $region36: #{tpu_custom_call.1} parent=1 // pred_region
      _
    $region37: #{tpu_custom_call.1} parent=1 // pred_fallthru
      _
    // Predicated region
    $region38: #{tpu_custom_call.1} parent=1 // pred_check
      _
    $region39: #{tpu_custom_call.1} parent=1 // pred_check_branch
      %107 = sbr.rel (0) target = $region41
    $region40: #{tpu_custom_call.1} parent=1 // pred_region
      _
    $region41: #{tpu_custom_call.1} parent=1 // pred_fallthru
      _
    // Predicated region
    $region42: #{tpu_custom_call.1} parent=1 // pred_check
      _
    $region43: #{tpu_custom_call.1} parent=1 // pred_check_branch
      %109 = sbr.rel (0) target = $region45
    $region44: #{tpu_custom_call.1} parent=1 // pred_region
      %s111 = ssub.s32 16, 16
      %112 = vsyncadd [#allocation13], %s111
      %s114 = sshll.u32 [#allocation14], 4
      %s115 = int_to_ptr.vmem [resolvable:$true] %s114
      %117 = dma.hbm_to_vmem [thread:$0]  %s10, 16, %s115, [#allocation13]
    $region45: #{tpu_custom_call.1} parent=1 // pred_fallthru
      _
    // Predicated region
    $region46: #{tpu_custom_call.1} parent=1 // pred_check
      _
    $region47: #{tpu_custom_call.1} parent=1 // pred_check_branch
      %119 = sbr.rel (0) target = $region49
    $region48: #{tpu_custom_call.1} parent=1 // pred_region
      %s121 = ssub.s32 16, 16
      %122 = vsyncadd [#allocation16], %s121
      %s124 = sshll.u32 [#allocation15], 4
      %s125 = int_to_ptr.vmem [resolvable:$true] %s124
      %127 = dma.hbm_to_vmem [thread:$0]  %s11, 16, %s125, [#allocation16]
    $region49: #{tpu_custom_call.1} parent=1 // pred_fallthru
      _
    // Predicated region
    $region50: #{tpu_custom_call.1} parent=1 // pred_check
      _
    $region51: #{tpu_custom_call.1} parent=1 // pred_check_branch
      %129 = sbr.rel (0) target = $region53
    $region52: #{tpu_custom_call.1} parent=1 // pred_region
      %s131 = ssub.s32 16, 16
      %132 = vsyncadd [#allocation16], %s131
      %s134 = sshll.u32 [#allocation17], 4
      %s135 = int_to_ptr.vmem [resolvable:$true] %s134
      %137 = dma.hbm_to_vmem [thread:$0]  %s12, 16, %s135, [#allocation16]
    $region53: #{tpu_custom_call.1} parent=1 // pred_fallthru
      _
    // Predicated region
    $region54: #{tpu_custom_call.1} parent=1 // pred_check
      _
    $region55: #{tpu_custom_call.1} parent=1 // pred_check_branch
      %139 = sbr.rel (0) target = $region57
    $region56: #{tpu_custom_call.1} parent=1 // pred_region
      _
    $region57: #{tpu_custom_call.1} parent=1 // pred_fallthru
      _
    // Predicated region
    $region58: #{tpu_custom_call.1} parent=1 // pred_check
      _
    $region59: #{tpu_custom_call.1} parent=1 // pred_check_branch
      %141 = sbr.rel (0) target = $region61
    $region60: #{tpu_custom_call.1} parent=1 // pred_region
      _
    $region61: #{tpu_custom_call.1} parent=1 // pred_fallthru
      _
    // Predicated region
    $region62: #{tpu_custom_call.1} parent=1 // pred_check
      _
    $region63: #{tpu_custom_call.1} parent=1 // pred_check_branch
      %143 = sbr.rel (0) target = $region65
    $region64: #{tpu_custom_call.1} parent=1 // pred_region
      _
    $region65: #{tpu_custom_call.1} parent=1 // pred_fallthru
      _
    // Predicated region
    $region66: #{tpu_custom_call.1} parent=1 // pred_check
      _
    $region67: #{tpu_custom_call.1} parent=1 // pred_check_branch
      %145 = sbr.rel (0) target = $region69
    $region68: #{tpu_custom_call.1} parent=1 // pred_region
      _
    $region69: #{tpu_custom_call.1} parent=1 // pred_fallthru
      _
    // Predicated region
    $region70: #{tpu_custom_call.1} parent=1 // pred_check
      _
    $region71: #{tpu_custom_call.1} parent=1 // pred_check_branch
      %147 = sbr.rel (0) target = $region73
    $region72: #{tpu_custom_call.1} parent=1 // pred_region
      _
    $region73: #{tpu_custom_call.1} parent=1 // pred_fallthru
      _
    // Predicated region
    $region74: #{tpu_custom_call.1} parent=1 // pred_check
      _
    $region75: #{tpu_custom_call.1} parent=1 // pred_check_branch
      %149 = sbr.rel (0) target = $region77
    $region76: #{tpu_custom_call.1} parent=1 // pred_region
      _
    $region77: #{tpu_custom_call.1} parent=1 // pred_fallthru
      _
    // Predicated region
    $region78: #{tpu_custom_call.1} parent=1 // pred_check
      _
    $region79: #{tpu_custom_call.1} parent=1 // pred_check_branch
      %151 = sbr.rel (0) target = $region81
    $region80: #{tpu_custom_call.1} parent=1 // pred_region
      %s153 = ssub.s32 512, 512
      %154 = vsyncadd [#allocation19], %s153
      %s155 = sshll.u32 [#allocation18], 4
      %s156 = int_to_ptr.vmem [resolvable:$true] %s155
      %161 = dma.hbm_to_vmem [thread:$0]  %s19, 512, %s156, [#allocation19], 128, 128, 8
    $region81: #{tpu_custom_call.1} parent=1 // pred_fallthru
      _
    // Predicated region
    $region82: #{tpu_custom_call.1} parent=1 // pred_check
      _
    $region83: #{tpu_custom_call.1} parent=1 // pred_check_branch
      %163 = sbr.rel (0) target = $region85
    $region84: #{tpu_custom_call.1} parent=1 // pred_region
      _
    $region85: #{tpu_custom_call.1} parent=1 // pred_fallthru
      _
    // Predicated region
    $region86: #{tpu_custom_call.1} parent=1 // pred_check
      _
    $region87: #{tpu_custom_call.1} parent=1 // pred_check_branch
      %165 = sbr.rel (0) target = $region89
    $region88: #{tpu_custom_call.1} parent=1 // pred_region
      _
    $region89: #{tpu_custom_call.1} parent=1 // pred_fallthru
      _
    // Predicated region
    $region90: #{tpu_custom_call.1} parent=1 // pred_check
      _
    $region91: #{tpu_custom_call.1} parent=1 // pred_check_branch
      %167 = sbr.rel (0) target = $region93
    $region92: #{tpu_custom_call.1} parent=1 // pred_region
      _
    $region93: #{tpu_custom_call.1} parent=1 // pred_fallthru
      _
    // Predicated region
    $region94: #{tpu_custom_call.1} parent=1 // pred_check
      _
    $region95: #{tpu_custom_call.1} parent=1 // pred_check_branch
      %169 = sbr.rel (0) target = $region97
    $region96: #{tpu_custom_call.1} parent=1 // pred_region
      %170 = dma.done [#allocation4], 256
    $region97: #{tpu_custom_call.1} parent=1 // pred_fallthru
      _
    // Predicated region
    $region98: #{tpu_custom_call.1} parent=1 // pred_check
      _
    $region99: #{tpu_custom_call.1} parent=1 // pred_check_branch
      %172 = sbr.rel (0) target = $region101
    $region100: #{tpu_custom_call.1} parent=1 // pred_region
      %173 = dma.done [#allocation7], 32
    $region101: #{tpu_custom_call.1} parent=1 // pred_fallthru
      _
    // Predicated region
    $region102: #{tpu_custom_call.1} parent=1 // pred_check
      _
    $region103: #{tpu_custom_call.1} parent=1 // pred_check_branch
      %175 = sbr.rel (0) target = $region105
    $region104: #{tpu_custom_call.1} parent=1 // pred_region
      %176 = dma.done [#allocation7], 16
    $region105: #{tpu_custom_call.1} parent=1 // pred_fallthru
      _
    // Predicated region
    $region106: #{tpu_custom_call.1} parent=1 // pred_check
      _
    $region107: #{tpu_custom_call.1} parent=1 // pred_check_branch
      %178 = sbr.rel (0) target = $region109
    $region108: #{tpu_custom_call.1} parent=1 // pred_region
      %179 = dma.done [#allocation10], 16
    $region109: #{tpu_custom_call.1} parent=1 // pred_fallthru
      _
    // Predicated region
    $region110: #{tpu_custom_call.1} parent=1 // pred_check
      _
    $region111: #{tpu_custom_call.1} parent=1 // pred_check_branch
      %181 = sbr.rel (0) target = $region113
    $region112: #{tpu_custom_call.1} parent=1 // pred_region
      %182 = dma.done [#allocation10], 16
    $region113: #{tpu_custom_call.1} parent=1 // pred_fallthru
      _
    // Predicated region
    $region114: #{tpu_custom_call.1} parent=1 // pred_check
      _
    $region115: #{tpu_custom_call.1} parent=1 // pred_check_branch
      %184 = sbr.rel (0) target = $region117
    $region116: #{tpu_custom_call.1} parent=1 // pred_region
      %185 = dma.done [#allocation13], 16
    $region117: #{tpu_custom_call.1} parent=1 // pred_fallthru
      _
    // Predicated region
    $region118: #{tpu_custom_call.1} parent=1 // pred_check
      _
    $region119: #{tpu_custom_call.1} parent=1 // pred_check_branch
      %187 = sbr.rel (0) target = $region121
    $region120: #{tpu_custom_call.1} parent=1 // pred_region
      %188 = dma.done [#allocation13], 16
    $region121: #{tpu_custom_call.1} parent=1 // pred_fallthru
      _
    // Predicated region
    $region122: #{tpu_custom_call.1} parent=1 // pred_check
      _
    $region123: #{tpu_custom_call.1} parent=1 // pred_check_branch
      %190 = sbr.rel (0) target = $region125
    $region124: #{tpu_custom_call.1} parent=1 // pred_region
      %191 = dma.done [#allocation16], 16
    $region125: #{tpu_custom_call.1} parent=1 // pred_fallthru
      _
    // Predicated region
    $region126: #{tpu_custom_call.1} parent=1 // pred_check
      _
    $region127: #{tpu_custom_call.1} parent=1 // pred_check_branch
      %193 = sbr.rel (0) target = $region129
    $region128: #{tpu_custom_call.1} parent=1 // pred_region
      %194 = dma.done [#allocation16], 16
    $region129: #{tpu_custom_call.1} parent=1 // pred_fallthru
      _
    // Predicated region
    $region130: #{tpu_custom_call.1} parent=1 // pred_check
      _
    $region131: #{tpu_custom_call.1} parent=1 // pred_check_branch
      %196 = sbr.rel (0) target = $region133
    $region132: #{tpu_custom_call.1} parent=1 // pred_region
      %197 = dma.done [#allocation19], 512
    $region133: #{tpu_custom_call.1} parent=1 // pred_fallthru
      _
    %v198 = vld [vmem:[%s0] sm:$0xff]
    %v199 = vld [vmem:[%s0 + $0x8] sm:$0xff]
    %v200 = vld [vmem:[#allocation3] sm:$0xff]
    %v201 = vld [vmem:[#allocation3 + $0x8] sm:$0xff]
    %v202 = vld [vmem:[#allocation6] sm:$0x3]
    %v204 = vlaneseq
    %v205 = vshrl.u32 %v204, 7
    %v206 = vsub.s32 0, %v205
    %v207 = vrot.slane %v202, %v206
    %v208 = vlaneseq
    %v209 = vshrl.u32 %v208, 7
    %v210 = vsub.s32 1, %v209
    %v211 = vrot.slane %v202, %v210
    %vm214 = vcmask 64512
    %v216 = vsel %vm214, %v198, 0
    %v219 = vsel %vm214, %v199, 0
    %221 = vmatprep.subr.mxu0 0.0
    %222 = vmatpush1.msra.mxu0 0.0
    %223 = vmatprep.subr.mxu0 0.0
    %224 = vmatpush1.msra.mxu0 0.0
    %225 = vmatprep.subr.mxu0 0.0
    %226 = vmatpush1.msra.mxu0 0.0
    %227 = vmatprep.subr.mxu0 0.0
    %228 = vmatpush1.msra.mxu0 0.0
    %229 = vmatprep.subr.mxu0 0.0
    %230 = vmatpush1.msra.mxu0 0.0
    %231 = vmatprep.subr.mxu0 0.0
    %232 = vmatpush1.msra.mxu0 0.0
    %233 = vmatprep.subr.mxu0 0.0
    %234 = vmatpush1.msra.mxu0 0.0
    %235 = vmatprep.subr.mxu0 0.0
    %236 = vmatpush1.msra.mxu0 0.0
    %237 = vmatprep.subr.mxu0 0.0
    %238 = vmatpush1.msra.mxu0 0.0
    %239 = vmatprep.subr.mxu0 0.0
    %240 = vmatpush1.msra.mxu0 0.0
    %241 = vmatprep.subr.mxu0 0.0
    %242 = vmatpush1.msra.mxu0 0.0
    %243 = vmatprep.subr.mxu0 0.0
    %244 = vmatpush1.msra.mxu0 0.0
    %245 = vmatprep.subr.mxu0 0.0
    %246 = vmatpush1.msra.mxu0 0.0
    %247 = vmatprep.subr.mxu0 0.0
    %248 = vmatpush1.msra.mxu0 0.0
    %249 = vmatprep.subr.mxu0 0.0
    %250 = vmatpush1.msra.mxu0 0.0
    %251 = vmatprep.subr.mxu0 %v201
    %252 = vmatpush1.msra.mxu0 %v200
    %253 = vmatprep.subr.mxu0 0.0
    %254 = vmatpush2.msra.mxu0 0.0
    %255 = vmatprep.subr.mxu0 0.0
    %256 = vmatpush2.msra.mxu0 0.0
    %257 = vmatprep.subr.mxu0 0.0
    %258 = vmatpush2.msra.mxu0 0.0
    %259 = vmatprep.subr.mxu0 0.0
    %260 = vmatpush2.msra.mxu0 0.0
    %261 = vmatprep.subr.mxu0 0.0
    %262 = vmatpush2.msra.mxu0 0.0
    %263 = vmatprep.subr.mxu0 0.0
    %264 = vmatpush2.msra.mxu0 0.0
    %265 = vmatprep.subr.mxu0 0.0
    %266 = vmatpush2.msra.mxu0 0.0
    %267 = vmatprep.subr.mxu0 0.0
    %268 = vmatpush2.msra.mxu0 0.0
    %269 = vmatprep.subr.mxu0 0.0
    %270 = vmatpush2.msra.mxu0 0.0
    %271 = vmatprep.subr.mxu0 0.0
    %272 = vmatpush2.msra.mxu0 0.0
    %273 = vmatprep.subr.mxu0 0.0
    %274 = vmatpush2.msra.mxu0 0.0
    %275 = vmatprep.subr.mxu0 0.0
    %276 = vmatpush2.msra.mxu0 0.0
    %277 = vmatprep.subr.mxu0 0.0
    %278 = vmatpush2.msra.mxu0 0.0
    %279 = vmatprep.subr.mxu0 0.0
    %280 = vmatpush2.msra.mxu0 0.0
    %281 = vmatprep.subr.mxu0 0.0
    %282 = vmatpush2.msra.mxu0 0.0
    %283 = vmatprep.subr.mxu0 0.0
    %284 = vmatpush2.msra.mxu0 0.0
    %285 = vmatprep.mubr.f32.mxu0 0.0
    %286 = vmatmul.mubr.f32.gmra.mxu0 %v216
    %v287 = vpop.f32.mrf.mxu0
    %v288 = vadd.f32 %v207, %v287
    %v289 = vpop.f32.mrf.mxu0
    %v290 = vadd.f32 %v211, %v289
    %291 = vmatprep.mubr.f32.mxu0 0.0
    %292 = vmatmul.mubr.f32.gmra.mxu0 %v219
    %v293 = vpop.f32.mrf.mxu0
    %v294 = vadd.f32 %v207, %v293
    %v295 = vpop.f32.mrf.mxu0
    %v296 = vadd.f32 %v211, %v295
    %297 = vdwg.mxu0
    %v298 = vld [vmem:[%s3] sm:$0xff]
    %v299 = vld [vmem:[%s3 + $0x8] sm:$0xff]
    %v300 = vld [vmem:[%s3 + $0x10] sm:$0xff]
    %v301 = vld [vmem:[%s3 + $0x18] sm:$0xff]
    %v302 = vld [vmem:[#allocation8] sm:$0x1]
    %v303 = vld [vmem:[#allocation9] sm:$0x1]
    %v304 = vld [vmem:[#allocation11] sm:$0x1]
    %v305 = vld [vmem:[#allocation12] sm:$0x1]
    %v306 = vld [vmem:[%s8] sm:$0xff]
    %v307 = vld [vmem:[%s8 + $0x8] sm:$0xff]
    %v308 = vld [vmem:[%s8 + $0x10] sm:$0xff]
    %v309 = vld [vmem:[%s8 + $0x18] sm:$0xff]
    %v310 = vld [vmem:[%s9] sm:$0xff]
    %v311 = vld [vmem:[%s9 + $0x8] sm:$0xff]
    %v312 = vld [vmem:[%s9 + $0x10] sm:$0xff]
    %v313 = vld [vmem:[%s9 + $0x18] sm:$0xff]
    %v314 = vld [vmem:[#allocation14] sm:$0x1]
    %v315 = vld [vmem:[#allocation15] sm:$0x1]
    %v316 = vld [vmem:[#allocation17] sm:$0x1]
    %v317 = vld [vmem:[%s13] sm:$0x1]
    %v318 = vld [vmem:[%s14] sm:$0x1]
    %vm319 = vcmask 261120
    %v321 = vsel %vm319, 0.0, 0
    %323 = vmatprep.subr.mxu0 0.0
    %324 = vmatpush1.msra.mxu0 0.0
    %325 = vmatprep.subr.mxu0 0.0
    %326 = vmatpush1.msra.mxu0 0.0
    %327 = vmatprep.subr.mxu0 0.0
    %328 = vmatpush1.msra.mxu0 0.0
    %329 = vmatprep.subr.mxu0 0.0
    %330 = vmatpush1.msra.mxu0 0.0
    %331 = vmatprep.subr.mxu0 0.0
    %332 = vmatpush1.msra.mxu0 0.0
    %333 = vmatprep.subr.mxu0 0.0
    %334 = vmatpush1.msra.mxu0 0.0
    %335 = vmatprep.subr.mxu0 0.0
    %336 = vmatpush1.msra.mxu0 0.0
    %337 = vmatprep.subr.mxu0 0.0
    %338 = vmatpush1.msra.mxu0 0.0
    %339 = vmatprep.subr.mxu0 0.0
    %340 = vmatpush1.msra.mxu0 0.0
    %341 = vmatprep.subr.mxu0 0.0
    %342 = vmatpush1.msra.mxu0 0.0
    %343 = vmatprep.subr.mxu0 0.0
    %344 = vmatpush1.msra.mxu0 0.0
    %345 = vmatprep.subr.mxu0 0.0
    %346 = vmatpush1.msra.mxu0 0.0
    %347 = vmatprep.subr.mxu0 0.0
    %348 = vmatpush1.msra.mxu0 %v301
    %349 = vmatprep.subr.mxu0 0.0
    %350 = vmatpush1.msra.mxu0 %v300
    %351 = vmatprep.subr.mxu0 0.0
    %352 = vmatpush1.msra.mxu0 %v299
    %353 = vmatprep.subr.mxu0 0.0
    %354 = vmatpush1.msra.mxu0 %v298
    %355 = vmatprep.subr.mxu0 0.0
    %356 = vmatpush2.msra.mxu0 0.0
    %357 = vmatprep.subr.mxu0 0.0
    %358 = vmatpush2.msra.mxu0 0.0
    %359 = vmatprep.subr.mxu0 0.0
    %360 = vmatpush2.msra.mxu0 0.0
    %361 = vmatprep.subr.mxu0 0.0
    %362 = vmatpush2.msra.mxu0 0.0
    %363 = vmatprep.subr.mxu0 0.0
    %364 = vmatpush2.msra.mxu0 0.0
    %365 = vmatprep.subr.mxu0 0.0
    %366 = vmatpush2.msra.mxu0 0.0
    %367 = vmatprep.subr.mxu0 0.0
    %368 = vmatpush2.msra.mxu0 0.0
    %369 = vmatprep.subr.mxu0 0.0
    %370 = vmatpush2.msra.mxu0 0.0
    %371 = vmatprep.subr.mxu0 0.0
    %372 = vmatpush2.msra.mxu0 0.0
    %373 = vmatprep.subr.mxu0 0.0
    %374 = vmatpush2.msra.mxu0 0.0
    %375 = vmatprep.subr.mxu0 0.0
    %376 = vmatpush2.msra.mxu0 0.0
    %377 = vmatprep.subr.mxu0 0.0
    %378 = vmatpush2.msra.mxu0 0.0
    %379 = vmatprep.subr.mxu0 0.0
    %380 = vmatpush2.msra.mxu0 0.0
    %381 = vmatprep.subr.mxu0 0.0
    %382 = vmatpush2.msra.mxu0 0.0
    %383 = vmatprep.subr.mxu0 0.0
    %384 = vmatpush2.msra.mxu0 0.0
    %385 = vmatprep.subr.mxu0 0.0
    %386 = vmatpush2.msra.mxu0 0.0
    %387 = vmatprep.mubr.f32.mxu0 0.0
    %388 = vmatmul.mubr.f32.gmra.mxu0 %v321
    %v389 = vpop.f32.mrf.mxu0
    %v390 = vadd.f32 0.0, %v389
    %v391 = vpop.f32.mrf.mxu0
    %392 = vdwg.mxu0
    %v393 = vadd.f32 %v288, %v390
    %v394 = vxor.u32 %v393, 2147483648
    %v395 = vmul.f32 %v394, 1.442695
    %v396 = vpow.pop %v395
    %v397 = vadd.f32 %v396, 1.0
    %v398 = vrcp.pop %v397
    %v399 = vmul.f32 1.0, %v398
    %v400 = vtanh.pop %v393
    %v401 = vmul.f32 %v399, 0.0
    %403 = vrot.lane.b32.xlu0 %v400, 64
    %v404 = vpop.permute.xlu0 %403
    %v406 = vmul.f32 %v399, %v404
    %408 = vrot.lane.b32.xlu0 %v406, 32
    %v409 = vpop.permute.xlu0 %408
    %v411 = vadd.f32 %v401, %v409
    %413 = vrot.lane.b32.xlu0 %v411, 96
    %v414 = vpop.permute.xlu0 %413
    %vm416 = vcmask 254976
    %v417 = vsel %vm416, %v414, 0.0
    %418 = vadd.xlane.f32.xlu0 %v417
    %v419 = vpop.xlane.xlu0 %418
    %v420 = vrcp.pop 32.0
    %v421 = vmul.f32 %v419, %v420
    %v422 = vsub.f32 %v411, %v421
    %v423 = vmul.f32 %v422, %v422
    %425 = vrot.lane.b32.xlu0 %v423, 96
    %v426 = vpop.permute.xlu0 %425
    %v428 = vsel %vm416, %v426, 0.0
    %429 = vadd.xlane.f32.xlu0 %v428
    %v430 = vpop.xlane.xlu0 %429
    %v431 = vmul.f32 %v430, %v420
    %v432 = vadd.f32 %v431, 1e-05
    %v433 = vrsqrt.pop %v432
    %v434 = vmul.f32 %v422, %v433
    %v436 = vlaneseq
    %v437 = vshrl.u32 %v436, 7
    %v438 = vsub.s32 0, %v437
    %v439 = vrot.slane %v302, %v438
    %440 = vrot.lane.b32.xlu0 %v439, 32
    %v441 = vpop.permute.xlu0 %440
    %v443 = vmul.f32 %v434, %v441
    %v445 = vlaneseq
    %v446 = vshrl.u32 %v445, 7
    %v447 = vsub.s32 0, %v446
    %v448 = vrot.slane %v303, %v447
    %449 = vrot.lane.b32.xlu0 %v448, 32
    %v450 = vpop.permute.xlu0 %449
    %v452 = vadd.f32 %v443, %v450
    %v453 = vtanh.pop %v452
    %455 = vrot.lane.b32.xlu0 %v453, 64
    %v456 = vpop.permute.xlu0 %455
    %v458 = vmul.f32 %v399, %v456
    %460 = vrot.lane.b32.xlu0 %v458, 32
    %v461 = vpop.permute.xlu0 %460
    %v463 = vsel %vm416, %v461, 0.0
    %464 = vadd.xlane.f32.xlu0 %v463
    %v465 = vpop.xlane.xlu0 %464
    %v466 = vmul.f32 %v465, %v420
    %v467 = vsub.f32 %v458, %v466
    %v468 = vmul.f32 %v467, %v467
    %470 = vrot.lane.b32.xlu0 %v468, 32
    %v471 = vpop.permute.xlu0 %470
    %v473 = vsel %vm416, %v471, 0.0
    %474 = vadd.xlane.f32.xlu0 %v473
    %v475 = vpop.xlane.xlu0 %474
    %v476 = vmul.f32 %v475, %v420
    %v477 = vadd.f32 %v476, 1e-05
    %v478 = vrsqrt.pop %v477
    %v479 = vmul.f32 %v467, %v478
    %v481 = vlaneseq
    %v482 = vshrl.u32 %v481, 7
    %v483 = vsub.s32 0, %v482
    %v484 = vrot.slane %v304, %v483
    %485 = vrot.lane.b32.xlu0 %v484, 96
    %v486 = vpop.permute.xlu0 %485
    %v488 = vmul.f32 %v479, %v486
    %v490 = vlaneseq
    %v491 = vshrl.u32 %v490, 7
    %v492 = vsub.s32 0, %v491
    %v493 = vrot.slane %v305, %v492
    %494 = vrot.lane.b32.xlu0 %v493, 96
    %v495 = vpop.permute.xlu0 %494
    %v497 = vadd.f32 %v488, %v495
    %499 = vrot.lane.b32.xlu0 %v290, 96
    %v500 = vpop.permute.xlu0 %499
    %v502 = vadd.f32 %v497, %v500
    %503 = vmatprep.subr.mxu0 0.0
    %504 = vmatpush1.msra.mxu0 0.0
    %505 = vmatprep.subr.mxu0 0.0
    %506 = vmatpush1.msra.mxu0 0.0
    %507 = vmatprep.subr.mxu0 0.0
    %508 = vmatpush1.msra.mxu0 0.0
    %509 = vmatprep.subr.mxu0 0.0
    %510 = vmatpush1.msra.mxu0 0.0
    %511 = vmatprep.subr.mxu0 0.0
    %512 = vmatpush1.msra.mxu0 0.0
    %513 = vmatprep.subr.mxu0 0.0
    %514 = vmatpush1.msra.mxu0 0.0
    %515 = vmatprep.subr.mxu0 0.0
    %516 = vmatpush1.msra.mxu0 0.0
    %517 = vmatprep.subr.mxu0 0.0
    %518 = vmatpush1.msra.mxu0 0.0
    %519 = vmatprep.subr.mxu0 0.0
    %520 = vmatpush1.msra.mxu0 0.0
    %521 = vmatprep.subr.mxu0 0.0
    %522 = vmatpush1.msra.mxu0 0.0
    %523 = vmatprep.subr.mxu0 0.0
    %524 = vmatpush1.msra.mxu0 0.0
    %525 = vmatprep.subr.mxu0 0.0
    %526 = vmatpush1.msra.mxu0 0.0
    %527 = vmatprep.subr.mxu0 0.0
    %528 = vmatpush1.msra.mxu0 %v313
    %529 = vmatprep.subr.mxu0 0.0
    %530 = vmatpush1.msra.mxu0 %v312
    %531 = vmatprep.subr.mxu0 0.0
    %532 = vmatpush1.msra.mxu0 %v311
    %533 = vmatprep.subr.mxu0 0.0
    %534 = vmatpush1.msra.mxu0 %v310
    %535 = vmatprep.subr.mxu0 0.0
    %536 = vmatpush2.msra.mxu0 0.0
    %537 = vmatprep.subr.mxu0 0.0
    %538 = vmatpush2.msra.mxu0 0.0
    %539 = vmatprep.subr.mxu0 0.0
    %540 = vmatpush2.msra.mxu0 0.0
    %541 = vmatprep.subr.mxu0 0.0
    %542 = vmatpush2.msra.mxu0 0.0
    %543 = vmatprep.subr.mxu0 0.0
    %544 = vmatpush2.msra.mxu0 0.0
    %545 = vmatprep.subr.mxu0 0.0
    %546 = vmatpush2.msra.mxu0 0.0
    %547 = vmatprep.subr.mxu0 0.0
    %548 = vmatpush2.msra.mxu0 0.0
    %549 = vmatprep.subr.mxu0 0.0
    %550 = vmatpush2.msra.mxu0 0.0
    %551 = vmatprep.subr.mxu0 0.0
    %552 = vmatpush2.msra.mxu0 0.0
    %553 = vmatprep.subr.mxu0 0.0
    %554 = vmatpush2.msra.mxu0 0.0
    %555 = vmatprep.subr.mxu0 0.0
    %556 = vmatpush2.msra.mxu0 0.0
    %557 = vmatprep.subr.mxu0 0.0
    %558 = vmatpush2.msra.mxu0 0.0
    %559 = vmatprep.subr.mxu0 0.0
    %560 = vmatpush2.msra.mxu0 0.0
    %561 = vmatprep.subr.mxu0 0.0
    %562 = vmatpush2.msra.mxu0 0.0
    %563 = vmatprep.subr.mxu0 0.0
    %564 = vmatpush2.msra.mxu0 0.0
    %565 = vmatprep.subr.mxu0 0.0
    %566 = vmatpush2.msra.mxu0 0.0
    %567 = vmatprep.mubr.f32.mxu0 0.0
    %568 = vmatmul.mubr.f32.gmra.mxu0 %v321
    %v569 = vpop.f32.mrf.mxu0
    %v570 = vadd.f32 0.0, %v569
    %v571 = vpop.f32.mrf.mxu0
    %572 = vdwg.mxu0
    %574 = vrot.lane.b32.xlu0 %v502, 32
    %v575 = vpop.permute.xlu0 %574
    %v576 = vsel %vm319, %v575, 0
    %578 = vmatprep.subr.mxu0 0.0
    %579 = vmatpush1.msra.mxu0 0.0
    %580 = vmatprep.subr.mxu0 0.0
    %581 = vmatpush1.msra.mxu0 0.0
    %582 = vmatprep.subr.mxu0 0.0
    %583 = vmatpush1.msra.mxu0 0.0
    %584 = vmatprep.subr.mxu0 0.0
    %585 = vmatpush1.msra.mxu0 0.0
    %586 = vmatprep.subr.mxu0 0.0
    %587 = vmatpush1.msra.mxu0 0.0
    %588 = vmatprep.subr.mxu0 0.0
    %589 = vmatpush1.msra.mxu0 0.0
    %590 = vmatprep.subr.mxu0 0.0
    %591 = vmatpush1.msra.mxu0 0.0
    %592 = vmatprep.subr.mxu0 0.0
    %593 = vmatpush1.msra.mxu0 0.0
    %594 = vmatprep.subr.mxu0 0.0
    %595 = vmatpush1.msra.mxu0 0.0
    %596 = vmatprep.subr.mxu0 0.0
    %597 = vmatpush1.msra.mxu0 0.0
    %598 = vmatprep.subr.mxu0 0.0
    %599 = vmatpush1.msra.mxu0 0.0
    %600 = vmatprep.subr.mxu0 0.0
    %601 = vmatpush1.msra.mxu0 0.0
    %602 = vmatprep.subr.mxu0 0.0
    %603 = vmatpush1.msra.mxu0 %v309
    %604 = vmatprep.subr.mxu0 0.0
    %605 = vmatpush1.msra.mxu0 %v308
    %606 = vmatprep.subr.mxu0 0.0
    %607 = vmatpush1.msra.mxu0 %v307
    %608 = vmatprep.subr.mxu0 0.0
    %609 = vmatpush1.msra.mxu0 %v306
    %610 = vmatprep.subr.mxu0 0.0
    %611 = vmatpush2.msra.mxu0 0.0
    %612 = vmatprep.subr.mxu0 0.0
    %613 = vmatpush2.msra.mxu0 0.0
    %614 = vmatprep.subr.mxu0 0.0
    %615 = vmatpush2.msra.mxu0 0.0
    %616 = vmatprep.subr.mxu0 0.0
    %617 = vmatpush2.msra.mxu0 0.0
    %618 = vmatprep.subr.mxu0 0.0
    %619 = vmatpush2.msra.mxu0 0.0
    %620 = vmatprep.subr.mxu0 0.0
    %621 = vmatpush2.msra.mxu0 0.0
    %622 = vmatprep.subr.mxu0 0.0
    %623 = vmatpush2.msra.mxu0 0.0
    %624 = vmatprep.subr.mxu0 0.0
    %625 = vmatpush2.msra.mxu0 0.0
    %626 = vmatprep.subr.mxu0 0.0
    %627 = vmatpush2.msra.mxu0 0.0
    %628 = vmatprep.subr.mxu0 0.0
    %629 = vmatpush2.msra.mxu0 0.0
    %630 = vmatprep.subr.mxu0 0.0
    %631 = vmatpush2.msra.mxu0 0.0
    %632 = vmatprep.subr.mxu0 0.0
    %633 = vmatpush2.msra.mxu0 0.0
    %634 = vmatprep.subr.mxu0 0.0
    %635 = vmatpush2.msra.mxu0 0.0
    %636 = vmatprep.subr.mxu0 0.0
    %637 = vmatpush2.msra.mxu0 0.0
    %638 = vmatprep.subr.mxu0 0.0
    %639 = vmatpush2.msra.mxu0 0.0
    %640 = vmatprep.subr.mxu0 0.0
    %641 = vmatpush2.msra.mxu0 0.0
    %642 = vmatprep.mubr.f32.mxu0 0.0
    %643 = vmatmul.mubr.f32.gmra.mxu0 %v576
    %v644 = vpop.f32.mrf.mxu0
    %v645 = vadd.f32 %v570, %v644
    %v646 = vpop.f32.mrf.mxu0
    %647 = vdwg.mxu0
    %v649 = vlaneseq
    %v650 = vshrl.u32 %v649, 7
    %v651 = vsub.s32 0, %v650
    %v652 = vrot.slane %v314, %v651
    %v654 = vadd.f32 %v645, %v652
    %v655 = vxor.u32 %v654, 2147483648
    %v656 = vmul.f32 %v655, 1.442695
    %v657 = vpow.pop %v656
    %v658 = vadd.f32 %v657, 1.0
    %v659 = vrcp.pop %v658
    %v660 = vmul.f32 1.0, %v659
    %v661 = vtanh.pop %v654
    %v662 = vmul.f32 %v660, 0.0
    %664 = vrot.lane.b32.xlu0 %v661, 64
    %v665 = vpop.permute.xlu0 %664
    %v667 = vmul.f32 %v660, %v665
    %669 = vrot.lane.b32.xlu0 %v667, 32
    %v670 = vpop.permute.xlu0 %669
    %v672 = vadd.f32 %v662, %v670
    %674 = vrot.lane.b32.xlu0 %v672, 96
    %v675 = vpop.permute.xlu0 %674
    %v677 = vsel %vm416, %v675, 0.0
    %678 = vadd.xlane.f32.xlu0 %v677
    %v679 = vpop.xlane.xlu0 %678
    %v680 = vmul.f32 %v679, %v420
    %v681 = vsub.f32 %v672, %v680
    %v682 = vmul.f32 %v681, %v681
    %684 = vrot.lane.b32.xlu0 %v682, 96
    %v685 = vpop.permute.xlu0 %684
    %v687 = vsel %vm416, %v685, 0.0
    %688 = vadd.xlane.f32.xlu0 %v687
    %v689 = vpop.xlane.xlu0 %688
    %v690 = vmul.f32 %v689, %v420
    %v691 = vadd.f32 %v690, 1e-05
    %v692 = vrsqrt.pop %v691
    %v693 = vmul.f32 %v681, %v692
    %v695 = vlaneseq
    %v696 = vshrl.u32 %v695, 7
    %v697 = vsub.s32 0, %v696
    %v698 = vrot.slane %v315, %v697
    %699 = vrot.lane.b32.xlu0 %v698, 32
    %v700 = vpop.permute.xlu0 %699
    %v702 = vmul.f32 %v693, %v700
    %v704 = vlaneseq
    %v705 = vshrl.u32 %v704, 7
    %v706 = vsub.s32 0, %v705
    %v707 = vrot.slane %v316, %v706
    %708 = vrot.lane.b32.xlu0 %v707, 32
    %v709 = vpop.permute.xlu0 %708
    %v711 = vadd.f32 %v702, %v709
    %v712 = vtanh.pop %v711
    %714 = vrot.lane.b32.xlu0 %v712, 64
    %v715 = vpop.permute.xlu0 %714
    %v717 = vmul.f32 %v660, %v715
    %719 = vrot.lane.b32.xlu0 %v717, 32
    %v720 = vpop.permute.xlu0 %719
    %v722 = vsel %vm416, %v720, 0.0
    %723 = vadd.xlane.f32.xlu0 %v722
    %v724 = vpop.xlane.xlu0 %723
    %v725 = vmul.f32 %v724, %v420
    %v726 = vsub.f32 %v717, %v725
    %v727 = vmul.f32 %v726, %v726
    %729 = vrot.lane.b32.xlu0 %v727, 32
    %v730 = vpop.permute.xlu0 %729
    %v732 = vsel %vm416, %v730, 0.0
    %733 = vadd.xlane.f32.xlu0 %v732
    %v734 = vpop.xlane.xlu0 %733
    %v735 = vmul.f32 %v734, %v420
    %v736 = vadd.f32 %v735, 1e-05
    %v737 = vrsqrt.pop %v736
    %v738 = vmul.f32 %v726, %v737
    %v740 = vlaneseq
    %v741 = vshrl.u32 %v740, 7
    %v742 = vsub.s32 0, %v741
    %v743 = vrot.slane %v317, %v742
    %744 = vrot.lane.b32.xlu0 %v743, 96
    %v745 = vpop.permute.xlu0 %744
    %v747 = vmul.f32 %v738, %v745
    %v749 = vlaneseq
    %v750 = vshrl.u32 %v749, 7
    %v751 = vsub.s32 0, %v750
    %v752 = vrot.slane %v318, %v751
    %753 = vrot.lane.b32.xlu0 %v752, 96
    %v754 = vpop.permute.xlu0 %753
    %v756 = vadd.f32 %v747, %v754
    %757 = vrot.lane.b32.xlu0 %v290, 64
    %v758 = vpop.permute.xlu0 %757
    %v760 = vadd.f32 %v756, %v758
    %v761 = vadd.f32 %v502, %v760
    %v762 = vmul.f32 %v761, 0.5
    %763 = vmatprep.subr.mxu0 0.0
    %764 = vmatpush1.msra.mxu0 0.0
    %765 = vmatprep.subr.mxu0 0.0
    %766 = vmatpush1.msra.mxu0 0.0
    %767 = vmatprep.subr.mxu0 0.0
    %768 = vmatpush1.msra.mxu0 0.0
    %769 = vmatprep.subr.mxu0 0.0
    %770 = vmatpush1.msra.mxu0 0.0
    %771 = vmatprep.subr.mxu0 0.0
    %772 = vmatpush1.msra.mxu0 0.0
    %773 = vmatprep.subr.mxu0 0.0
    %774 = vmatpush1.msra.mxu0 0.0
    %775 = vmatprep.subr.mxu0 0.0
    %776 = vmatpush1.msra.mxu0 0.0
    %777 = vmatprep.subr.mxu0 0.0
    %778 = vmatpush1.msra.mxu0 0.0
    %779 = vmatprep.subr.mxu0 0.0
    %780 = vmatpush1.msra.mxu0 0.0
    %781 = vmatprep.subr.mxu0 0.0
    %782 = vmatpush1.msra.mxu0 0.0
    %783 = vmatprep.subr.mxu0 0.0
    %784 = vmatpush1.msra.mxu0 0.0
    %785 = vmatprep.subr.mxu0 0.0
    %786 = vmatpush1.msra.mxu0 0.0
    %787 = vmatprep.subr.mxu0 0.0
    %788 = vmatpush1.msra.mxu0 %v301
    %789 = vmatprep.subr.mxu0 0.0
    %790 = vmatpush1.msra.mxu0 %v300
    %791 = vmatprep.subr.mxu0 0.0
    %792 = vmatpush1.msra.mxu0 %v299
    %793 = vmatprep.subr.mxu0 0.0
    %794 = vmatpush1.msra.mxu0 %v298
    %795 = vmatprep.subr.mxu0 0.0
    %796 = vmatpush2.msra.mxu0 0.0
    %797 = vmatprep.subr.mxu0 0.0
    %798 = vmatpush2.msra.mxu0 0.0
    %799 = vmatprep.subr.mxu0 0.0
    %800 = vmatpush2.msra.mxu0 0.0
    %801 = vmatprep.subr.mxu0 0.0
    %802 = vmatpush2.msra.mxu0 0.0
    %803 = vmatprep.subr.mxu0 0.0
    %804 = vmatpush2.msra.mxu0 0.0
    %805 = vmatprep.subr.mxu0 0.0
    %806 = vmatpush2.msra.mxu0 0.0
    %807 = vmatprep.subr.mxu0 0.0
    %808 = vmatpush2.msra.mxu0 0.0
    %809 = vmatprep.subr.mxu0 0.0
    %810 = vmatpush2.msra.mxu0 0.0
    %811 = vmatprep.subr.mxu0 0.0
    %812 = vmatpush2.msra.mxu0 0.0
    %813 = vmatprep.subr.mxu0 0.0
    %814 = vmatpush2.msra.mxu0 0.0
    %815 = vmatprep.subr.mxu0 0.0
    %816 = vmatpush2.msra.mxu0 0.0
    %817 = vmatprep.subr.mxu0 0.0
    %818 = vmatpush2.msra.mxu0 0.0
    %819 = vmatprep.subr.mxu0 0.0
    %820 = vmatpush2.msra.mxu0 0.0
    %821 = vmatprep.subr.mxu0 0.0
    %822 = vmatpush2.msra.mxu0 0.0
    %823 = vmatprep.subr.mxu0 0.0
    %824 = vmatpush2.msra.mxu0 0.0
    %825 = vmatprep.subr.mxu0 0.0
    %826 = vmatpush2.msra.mxu0 0.0
    %827 = vmatprep.mubr.f32.mxu0 0.0
    %828 = vmatmul.mubr.f32.gmra.mxu0 %v576
    %v829 = vpop.f32.mrf.mxu0
    %v830 = vadd.f32 0.0, %v829
    %v831 = vpop.f32.mrf.mxu0
    %832 = vdwg.mxu0
    %v834 = vrot.slane %v830, 6
    %v836 = vadd.f32 %v288, %v834
    %v837 = vxor.u32 %v836, 2147483648
    %v838 = vmul.f32 %v837, 1.442695
    %v839 = vpow.pop %v838
    %v840 = vadd.f32 %v839, 1.0
    %v841 = vrcp.pop %v840
    %v842 = vmul.f32 1.0, %v841
    %v843 = vtanh.pop %v836
    %v845 = vrot.slane %v452, 6
    %v847 = vmul.f32 %v842, %v845
    %849 = vrot.lane.b32.xlu0 %v843, 64
    %v850 = vpop.permute.xlu0 %849
    %v852 = vmul.f32 %v842, %v850
    %854 = vrot.lane.b32.xlu0 %v852, 32
    %v855 = vpop.permute.xlu0 %854
    %v857 = vadd.f32 %v847, %v855
    %859 = vrot.lane.b32.xlu0 %v857, 96
    %v860 = vpop.permute.xlu0 %859
    %vm862 = vcmask 257026
    %v863 = vsel %vm862, %v860, 0.0
    %864 = vadd.xlane.f32.xlu0 %v863
    %v865 = vpop.xlane.xlu0 %864
    %v866 = vmul.f32 %v865, %v420
    %v867 = vsub.f32 %v857, %v866
    %v868 = vmul.f32 %v867, %v867
    %870 = vrot.lane.b32.xlu0 %v868, 96
    %v871 = vpop.permute.xlu0 %870
    %v873 = vsel %vm862, %v871, 0.0
    %874 = vadd.xlane.f32.xlu0 %v873
    %v875 = vpop.xlane.xlu0 %874
    %v876 = vmul.f32 %v875, %v420
    %v877 = vadd.f32 %v876, 1e-05
    %v878 = vrsqrt.pop %v877
    %v879 = vmul.f32 %v867, %v878
    %v880 = vmul.f32 %v879, %v441
    %v881 = vadd.f32 %v880, %v450
    %v882 = vtanh.pop %v881
    %884 = vrot.lane.b32.xlu0 %v882, 64
    %v885 = vpop.permute.xlu0 %884
    %v887 = vmul.f32 %v842, %v885
    %889 = vrot.lane.b32.xlu0 %v887, 32
    %v890 = vpop.permute.xlu0 %889
    %v892 = vsel %vm862, %v890, 0.0
    %893 = vadd.xlane.f32.xlu0 %v892
    %v894 = vpop.xlane.xlu0 %893
    %v895 = vmul.f32 %v894, %v420
    %v896 = vsub.f32 %v887, %v895
    %v897 = vmul.f32 %v896, %v896
    %899 = vrot.lane.b32.xlu0 %v897, 32
    %v900 = vpop.permute.xlu0 %899
    %v902 = vsel %vm862, %v900, 0.0
    %903 = vadd.xlane.f32.xlu0 %v902
    %v904 = vpop.xlane.xlu0 %903
    %v905 = vmul.f32 %v904, %v420
    %v906 = vadd.f32 %v905, 1e-05
    %v907 = vrsqrt.pop %v906
    %v908 = vmul.f32 %v896, %v907
    %v909 = vmul.f32 %v908, %v486
    %v910 = vadd.f32 %v909, %v495
    %v911 = vadd.f32 %v910, %v500
    %913 = vrot.lane.b32.xlu0 %v760, 32
    %v914 = vpop.permute.xlu0 %913
    %v915 = vsel %vm319, %v914, 0
    %917 = vmatprep.subr.mxu0 0.0
    %918 = vmatpush1.msra.mxu0 0.0
    %919 = vmatprep.subr.mxu0 0.0
    %920 = vmatpush1.msra.mxu0 0.0
    %921 = vmatprep.subr.mxu0 0.0
    %922 = vmatpush1.msra.mxu0 0.0
    %923 = vmatprep.subr.mxu0 0.0
    %924 = vmatpush1.msra.mxu0 0.0
    %925 = vmatprep.subr.mxu0 0.0
    %926 = vmatpush1.msra.mxu0 0.0
    %927 = vmatprep.subr.mxu0 0.0
    %928 = vmatpush1.msra.mxu0 0.0
    %929 = vmatprep.subr.mxu0 0.0
    %930 = vmatpush1.msra.mxu0 0.0
    %931 = vmatprep.subr.mxu0 0.0
    %932 = vmatpush1.msra.mxu0 0.0
    %933 = vmatprep.subr.mxu0 0.0
    %934 = vmatpush1.msra.mxu0 0.0
    %935 = vmatprep.subr.mxu0 0.0
    %936 = vmatpush1.msra.mxu0 0.0
    %937 = vmatprep.subr.mxu0 0.0
    %938 = vmatpush1.msra.mxu0 0.0
    %939 = vmatprep.subr.mxu0 0.0
    %940 = vmatpush1.msra.mxu0 0.0
    %941 = vmatprep.subr.mxu0 0.0
    %942 = vmatpush1.msra.mxu0 %v313
    %943 = vmatprep.subr.mxu0 0.0
    %944 = vmatpush1.msra.mxu0 %v312
    %945 = vmatprep.subr.mxu0 0.0
    %946 = vmatpush1.msra.mxu0 %v311
    %947 = vmatprep.subr.mxu0 0.0
    %948 = vmatpush1.msra.mxu0 %v310
    %949 = vmatprep.subr.mxu0 0.0
    %950 = vmatpush2.msra.mxu0 0.0
    %951 = vmatprep.subr.mxu0 0.0
    %952 = vmatpush2.msra.mxu0 0.0
    %953 = vmatprep.subr.mxu0 0.0
    %954 = vmatpush2.msra.mxu0 0.0
    %955 = vmatprep.subr.mxu0 0.0
    %956 = vmatpush2.msra.mxu0 0.0
    %957 = vmatprep.subr.mxu0 0.0
    %958 = vmatpush2.msra.mxu0 0.0
    %959 = vmatprep.subr.mxu0 0.0
    %960 = vmatpush2.msra.mxu0 0.0
    %961 = vmatprep.subr.mxu0 0.0
    %962 = vmatpush2.msra.mxu0 0.0
    %963 = vmatprep.subr.mxu0 0.0
    %964 = vmatpush2.msra.mxu0 0.0
    %965 = vmatprep.subr.mxu0 0.0
    %966 = vmatpush2.msra.mxu0 0.0
    %967 = vmatprep.subr.mxu0 0.0
    %968 = vmatpush2.msra.mxu0 0.0
    %969 = vmatprep.subr.mxu0 0.0
    %970 = vmatpush2.msra.mxu0 0.0
    %971 = vmatprep.subr.mxu0 0.0
    %972 = vmatpush2.msra.mxu0 0.0
    %973 = vmatprep.subr.mxu0 0.0
    %974 = vmatpush2.msra.mxu0 0.0
    %975 = vmatprep.subr.mxu0 0.0
    %976 = vmatpush2.msra.mxu0 0.0
    %977 = vmatprep.subr.mxu0 0.0
    %978 = vmatpush2.msra.mxu0 0.0
    %979 = vmatprep.subr.mxu0 0.0
    %980 = vmatpush2.msra.mxu0 0.0
    %981 = vmatprep.mubr.f32.mxu0 0.0
    %982 = vmatmul.mubr.f32.gmra.mxu0 %v915
    %v983 = vpop.f32.mrf.mxu0
    %v984 = vadd.f32 0.0, %v983
    %v985 = vpop.f32.mrf.mxu0
    %986 = vdwg.mxu0
    %v988 = vrot.slane %v911, 2
    %989 = vrot.lane.b32.xlu0 %v988, 32
    %v990 = vpop.permute.xlu0 %989
    %v991 = vsel %vm319, %v990, 0
    %993 = vmatprep.subr.mxu0 0.0
    %994 = vmatpush1.msra.mxu0 0.0
    %995 = vmatprep.subr.mxu0 0.0
    %996 = vmatpush1.msra.mxu0 0.0
    %997 = vmatprep.subr.mxu0 0.0
    %998 = vmatpush1.msra.mxu0 0.0
    %999 = vmatprep.subr.mxu0 0.0
    %1000 = vmatpush1.msra.mxu0 0.0
    %1001 = vmatprep.subr.mxu0 0.0
    %1002 = vmatpush1.msra.mxu0 0.0
    %1003 = vmatprep.subr.mxu0 0.0
    %1004 = vmatpush1.msra.mxu0 0.0
    %1005 = vmatprep.subr.mxu0 0.0
    %1006 = vmatpush1.msra.mxu0 0.0
    %1007 = vmatprep.subr.mxu0 0.0
    %1008 = vmatpush1.msra.mxu0 0.0
    %1009 = vmatprep.subr.mxu0 0.0
    %1010 = vmatpush1.msra.mxu0 0.0
    %1011 = vmatprep.subr.mxu0 0.0
    %1012 = vmatpush1.msra.mxu0 0.0
    %1013 = vmatprep.subr.mxu0 0.0
    %1014 = vmatpush1.msra.mxu0 0.0
    %1015 = vmatprep.subr.mxu0 0.0
    %1016 = vmatpush1.msra.mxu0 0.0
    %1017 = vmatprep.subr.mxu0 0.0
    %1018 = vmatpush1.msra.mxu0 %v309
    %1019 = vmatprep.subr.mxu0 0.0
    %1020 = vmatpush1.msra.mxu0 %v308
    %1021 = vmatprep.subr.mxu0 0.0
    %1022 = vmatpush1.msra.mxu0 %v307
    %1023 = vmatprep.subr.mxu0 0.0
    %1024 = vmatpush1.msra.mxu0 %v306
    %1025 = vmatprep.subr.mxu0 0.0
    %1026 = vmatpush2.msra.mxu0 0.0
    %1027 = vmatprep.subr.mxu0 0.0
    %1028 = vmatpush2.msra.mxu0 0.0
    %1029 = vmatprep.subr.mxu0 0.0
    %1030 = vmatpush2.msra.mxu0 0.0
    %1031 = vmatprep.subr.mxu0 0.0
    %1032 = vmatpush2.msra.mxu0 0.0
    %1033 = vmatprep.subr.mxu0 0.0
    %1034 = vmatpush2.msra.mxu0 0.0
    %1035 = vmatprep.subr.mxu0 0.0
    %1036 = vmatpush2.msra.mxu0 0.0
    %1037 = vmatprep.subr.mxu0 0.0
    %1038 = vmatpush2.msra.mxu0 0.0
    %1039 = vmatprep.subr.mxu0 0.0
    %1040 = vmatpush2.msra.mxu0 0.0
    %1041 = vmatprep.subr.mxu0 0.0
    %1042 = vmatpush2.msra.mxu0 0.0
    %1043 = vmatprep.subr.mxu0 0.0
    %1044 = vmatpush2.msra.mxu0 0.0
    %1045 = vmatprep.subr.mxu0 0.0
    %1046 = vmatpush2.msra.mxu0 0.0
    %1047 = vmatprep.subr.mxu0 0.0
    %1048 = vmatpush2.msra.mxu0 0.0
    %1049 = vmatprep.subr.mxu0 0.0
    %1050 = vmatpush2.msra.mxu0 0.0
    %1051 = vmatprep.subr.mxu0 0.0
    %1052 = vmatpush2.msra.mxu0 0.0
    %1053 = vmatprep.subr.mxu0 0.0
    %1054 = vmatpush2.msra.mxu0 0.0
    %1055 = vmatprep.subr.mxu0 0.0
    %1056 = vmatpush2.msra.mxu0 0.0
    %1057 = vmatprep.mubr.f32.mxu0 0.0
    %1058 = vmatmul.mubr.f32.gmra.mxu0 %v991
    %v1059 = vpop.f32.mrf.mxu0
    %v1060 = vadd.f32 %v984, %v1059
    %v1061 = vpop.f32.mrf.mxu0
    %1062 = vdwg.mxu0
    %v1063 = vadd.f32 %v1060, %v652
    %v1064 = vxor.u32 %v1063, 2147483648
    %v1065 = vmul.f32 %v1064, 1.442695
    %v1066 = vpow.pop %v1065
    %v1067 = vadd.f32 %v1066, 1.0
    %v1068 = vrcp.pop %v1067
    %v1069 = vmul.f32 1.0, %v1068
    %v1070 = vtanh.pop %v1063
    %v1071 = vmul.f32 %v1069, %v711
    %1073 = vrot.lane.b32.xlu0 %v1070, 64
    %v1074 = vpop.permute.xlu0 %1073
    %v1076 = vmul.f32 %v1069, %v1074
    %1078 = vrot.lane.b32.xlu0 %v1076, 32
    %v1079 = vpop.permute.xlu0 %1078
    %v1081 = vadd.f32 %v1071, %v1079
    %1083 = vrot.lane.b32.xlu0 %v1081, 96
    %v1084 = vpop.permute.xlu0 %1083
    %v1086 = vsel %vm416, %v1084, 0.0
    %1087 = vadd.xlane.f32.xlu0 %v1086
    %v1088 = vpop.xlane.xlu0 %1087
    %v1089 = vmul.f32 %v1088, %v420
    %v1090 = vsub.f32 %v1081, %v1089
    %v1091 = vmul.f32 %v1090, %v1090
    %1093 = vrot.lane.b32.xlu0 %v1091, 96
    %v1094 = vpop.permute.xlu0 %1093
    %v1096 = vsel %vm416, %v1094, 0.0
    %1097 = vadd.xlane.f32.xlu0 %v1096
    %v1098 = vpop.xlane.xlu0 %1097
    %v1099 = vmul.f32 %v1098, %v420
    %v1100 = vadd.f32 %v1099, 1e-05
    %v1101 = vrsqrt.pop %v1100
    %v1102 = vmul.f32 %v1090, %v1101
    %v1103 = vmul.f32 %v1102, %v700
    %v1104 = vadd.f32 %v1103, %v709
    %v1105 = vtanh.pop %v1104
    %1107 = vrot.lane.b32.xlu0 %v1105, 64
    %v1108 = vpop.permute.xlu0 %1107
    %v1110 = vmul.f32 %v1069, %v1108
    %1112 = vrot.lane.b32.xlu0 %v1110, 32
    %v1113 = vpop.permute.xlu0 %1112
    %v1115 = vsel %vm416, %v1113, 0.0
    %1116 = vadd.xlane.f32.xlu0 %v1115
    %v1117 = vpop.xlane.xlu0 %1116
    %v1118 = vmul.f32 %v1117, %v420
    %v1119 = vsub.f32 %v1110, %v1118
    %v1120 = vmul.f32 %v1119, %v1119
    %1122 = vrot.lane.b32.xlu0 %v1120, 32
    %v1123 = vpop.permute.xlu0 %1122
    %v1125 = vsel %vm416, %v1123, 0.0
    %1126 = vadd.xlane.f32.xlu0 %v1125
    %v1127 = vpop.xlane.xlu0 %1126
    %v1128 = vmul.f32 %v1127, %v420
    %v1129 = vadd.f32 %v1128, 1e-05
    %v1130 = vrsqrt.pop %v1129
    %v1131 = vmul.f32 %v1119, %v1130
    %v1132 = vmul.f32 %v1131, %v745
    %v1133 = vadd.f32 %v1132, %v754
    %v1134 = vrot.slane %v290, 2
    %1135 = vrot.lane.b32.xlu0 %v1134, 64
    %v1136 = vpop.permute.xlu0 %1135
    %v1138 = vadd.f32 %v1133, %v1136
    %v1140 = vrot.slane %v1138, 6
    %v1142 = vadd.f32 %v911, %v1140
    %v1143 = vmul.f32 %v1142, 0.5
    %1144 = vmatprep.subr.mxu0 0.0
    %1145 = vmatpush1.msra.mxu0 0.0
    %1146 = vmatprep.subr.mxu0 0.0
    %1147 = vmatpush1.msra.mxu0 0.0
    %1148 = vmatprep.subr.mxu0 0.0
    %1149 = vmatpush1.msra.mxu0 0.0
    %1150 = vmatprep.subr.mxu0 0.0
    %1151 = vmatpush1.msra.mxu0 0.0
    %1152 = vmatprep.subr.mxu0 0.0
    %1153 = vmatpush1.msra.mxu0 0.0
    %1154 = vmatprep.subr.mxu0 0.0
    %1155 = vmatpush1.msra.mxu0 0.0
    %1156 = vmatprep.subr.mxu0 0.0
    %1157 = vmatpush1.msra.mxu0 0.0
    %1158 = vmatprep.subr.mxu0 0.0
    %1159 = vmatpush1.msra.mxu0 0.0
    %1160 = vmatprep.subr.mxu0 0.0
    %1161 = vmatpush1.msra.mxu0 0.0
    %1162 = vmatprep.subr.mxu0 0.0
    %1163 = vmatpush1.msra.mxu0 0.0
    %1164 = vmatprep.subr.mxu0 0.0
    %1165 = vmatpush1.msra.mxu0 0.0
    %1166 = vmatprep.subr.mxu0 0.0
    %1167 = vmatpush1.msra.mxu0 0.0
    %1168 = vmatprep.subr.mxu0 0.0
    %1169 = vmatpush1.msra.mxu0 %v301
    %1170 = vmatprep.subr.mxu0 0.0
    %1171 = vmatpush1.msra.mxu0 %v300
    %1172 = vmatprep.subr.mxu0 0.0
    %1173 = vmatpush1.msra.mxu0 %v299
    %1174 = vmatprep.subr.mxu0 0.0
    %1175 = vmatpush1.msra.mxu0 %v298
    %1176 = vmatprep.subr.mxu0 0.0
    %1177 = vmatpush2.msra.mxu0 0.0
    %1178 = vmatprep.subr.mxu0 0.0
    %1179 = vmatpush2.msra.mxu0 0.0
    %1180 = vmatprep.subr.mxu0 0.0
    %1181 = vmatpush2.msra.mxu0 0.0
    %1182 = vmatprep.subr.mxu0 0.0
    %1183 = vmatpush2.msra.mxu0 0.0
    %1184 = vmatprep.subr.mxu0 0.0
    %1185 = vmatpush2.msra.mxu0 0.0
    %1186 = vmatprep.subr.mxu0 0.0
    %1187 = vmatpush2.msra.mxu0 0.0
    %1188 = vmatprep.subr.mxu0 0.0
    %1189 = vmatpush2.msra.mxu0 0.0
    %1190 = vmatprep.subr.mxu0 0.0
    %1191 = vmatpush2.msra.mxu0 0.0
    %1192 = vmatprep.subr.mxu0 0.0
    %1193 = vmatpush2.msra.mxu0 0.0
    %1194 = vmatprep.subr.mxu0 0.0
    %1195 = vmatpush2.msra.mxu0 0.0
    %1196 = vmatprep.subr.mxu0 0.0
    %1197 = vmatpush2.msra.mxu0 0.0
    %1198 = vmatprep.subr.mxu0 0.0
    %1199 = vmatpush2.msra.mxu0 0.0
    %1200 = vmatprep.subr.mxu0 0.0
    %1201 = vmatpush2.msra.mxu0 0.0
    %1202 = vmatprep.subr.mxu0 0.0
    %1203 = vmatpush2.msra.mxu0 0.0
    %1204 = vmatprep.subr.mxu0 0.0
    %1205 = vmatpush2.msra.mxu0 0.0
    %1206 = vmatprep.subr.mxu0 0.0
    %1207 = vmatpush2.msra.mxu0 0.0
    %1208 = vmatprep.mubr.f32.mxu0 0.0
    %1209 = vmatmul.mubr.f32.gmra.mxu0 %v991
    %v1210 = vpop.f32.mrf.mxu0
    %v1211 = vadd.f32 0.0, %v1210
    %v1212 = vpop.f32.mrf.mxu0
    %1213 = vdwg.mxu0
    %v1215 = vrot.slane %v1211, 4
    %v1217 = vadd.f32 %v288, %v1215
    %v1218 = vxor.u32 %v1217, 2147483648
    %v1219 = vmul.f32 %v1218, 1.442695
    %v1220 = vpow.pop %v1219
    %v1221 = vadd.f32 %v1220, 1.0
    %v1222 = vrcp.pop %v1221
    %v1223 = vmul.f32 1.0, %v1222
    %v1224 = vtanh.pop %v1217
    %v1226 = vrot.slane %v881, 6
    %v1228 = vmul.f32 %v1223, %v1226
    %1230 = vrot.lane.b32.xlu0 %v1224, 64
    %v1231 = vpop.permute.xlu0 %1230
    %v1233 = vmul.f32 %v1223, %v1231
    %1235 = vrot.lane.b32.xlu0 %v1233, 32
    %v1236 = vpop.permute.xlu0 %1235
    %v1238 = vadd.f32 %v1228, %v1236
    %1240 = vrot.lane.b32.xlu0 %v1238, 96
    %v1241 = vpop.permute.xlu0 %1240
    %vm1243 = vcmask 259076
    %v1244 = vsel %vm1243, %v1241, 0.0
    %1245 = vadd.xlane.f32.xlu0 %v1244
    %v1246 = vpop.xlane.xlu0 %1245
    %v1247 = vmul.f32 %v1246, %v420
    %v1248 = vsub.f32 %v1238, %v1247
    %v1249 = vmul.f32 %v1248, %v1248
    %1251 = vrot.lane.b32.xlu0 %v1249, 96
    %v1252 = vpop.permute.xlu0 %1251
    %v1254 = vsel %vm1243, %v1252, 0.0
    %1255 = vadd.xlane.f32.xlu0 %v1254
    %v1256 = vpop.xlane.xlu0 %1255
    %v1257 = vmul.f32 %v1256, %v420
    %v1258 = vadd.f32 %v1257, 1e-05
    %v1259 = vrsqrt.pop %v1258
    %v1260 = vmul.f32 %v1248, %v1259
    %v1261 = vmul.f32 %v1260, %v441
    %v1262 = vadd.f32 %v1261, %v450
    %v1263 = vtanh.pop %v1262
    %1265 = vrot.lane.b32.xlu0 %v1263, 64
    %v1266 = vpop.permute.xlu0 %1265
    %v1268 = vmul.f32 %v1223, %v1266
    %1270 = vrot.lane.b32.xlu0 %v1268, 32
    %v1271 = vpop.permute.xlu0 %1270
    %v1273 = vsel %vm1243, %v1271, 0.0
    %1274 = vadd.xlane.f32.xlu0 %v1273
    %v1275 = vpop.xlane.xlu0 %1274
    %v1276 = vmul.f32 %v1275, %v420
    %v1277 = vsub.f32 %v1268, %v1276
    %v1278 = vmul.f32 %v1277, %v1277
    %1280 = vrot.lane.b32.xlu0 %v1278, 32
    %v1281 = vpop.permute.xlu0 %1280
    %v1283 = vsel %vm1243, %v1281, 0.0
    %1284 = vadd.xlane.f32.xlu0 %v1283
    %v1285 = vpop.xlane.xlu0 %1284
    %v1286 = vmul.f32 %v1285, %v420
    %v1287 = vadd.f32 %v1286, 1e-05
    %v1288 = vrsqrt.pop %v1287
    %v1289 = vmul.f32 %v1277, %v1288
    %v1290 = vmul.f32 %v1289, %v486
    %v1291 = vadd.f32 %v1290, %v495
    %v1292 = vadd.f32 %v1291, %v500
    %1293 = vrot.lane.b32.xlu0 %v1138, 32
    %v1294 = vpop.permute.xlu0 %1293
    %v1295 = vsel %vm319, %v1294, 0
    %1297 = vmatprep.subr.mxu0 0.0
    %1298 = vmatpush1.msra.mxu0 0.0
    %1299 = vmatprep.subr.mxu0 0.0
    %1300 = vmatpush1.msra.mxu0 0.0
    %1301 = vmatprep.subr.mxu0 0.0
    %1302 = vmatpush1.msra.mxu0 0.0
    %1303 = vmatprep.subr.mxu0 0.0
    %1304 = vmatpush1.msra.mxu0 0.0
    %1305 = vmatprep.subr.mxu0 0.0
    %1306 = vmatpush1.msra.mxu0 0.0
    %1307 = vmatprep.subr.mxu0 0.0
    %1308 = vmatpush1.msra.mxu0 0.0
    %1309 = vmatprep.subr.mxu0 0.0
    %1310 = vmatpush1.msra.mxu0 0.0
    %1311 = vmatprep.subr.mxu0 0.0
    %1312 = vmatpush1.msra.mxu0 0.0
    %1313 = vmatprep.subr.mxu0 0.0
    %1314 = vmatpush1.msra.mxu0 0.0
    %1315 = vmatprep.subr.mxu0 0.0
    %1316 = vmatpush1.msra.mxu0 0.0
    %1317 = vmatprep.subr.mxu0 0.0
    %1318 = vmatpush1.msra.mxu0 0.0
    %1319 = vmatprep.subr.mxu0 0.0
    %1320 = vmatpush1.msra.mxu0 0.0
    %1321 = vmatprep.subr.mxu0 0.0
    %1322 = vmatpush1.msra.mxu0 %v313
    %1323 = vmatprep.subr.mxu0 0.0
    %1324 = vmatpush1.msra.mxu0 %v312
    %1325 = vmatprep.subr.mxu0 0.0
    %1326 = vmatpush1.msra.mxu0 %v311
    %1327 = vmatprep.subr.mxu0 0.0
    %1328 = vmatpush1.msra.mxu0 %v310
    %1329 = vmatprep.subr.mxu0 0.0
    %1330 = vmatpush2.msra.mxu0 0.0
    %1331 = vmatprep.subr.mxu0 0.0
    %1332 = vmatpush2.msra.mxu0 0.0
    %1333 = vmatprep.subr.mxu0 0.0
    %1334 = vmatpush2.msra.mxu0 0.0
    %1335 = vmatprep.subr.mxu0 0.0
    %1336 = vmatpush2.msra.mxu0 0.0
    %1337 = vmatprep.subr.mxu0 0.0
    %1338 = vmatpush2.msra.mxu0 0.0
    %1339 = vmatprep.subr.mxu0 0.0
    %1340 = vmatpush2.msra.mxu0 0.0
    %1341 = vmatprep.subr.mxu0 0.0
    %1342 = vmatpush2.msra.mxu0 0.0
    %1343 = vmatprep.subr.mxu0 0.0
    %1344 = vmatpush2.msra.mxu0 0.0
    %1345 = vmatprep.subr.mxu0 0.0
    %1346 = vmatpush2.msra.mxu0 0.0
    %1347 = vmatprep.subr.mxu0 0.0
    %1348 = vmatpush2.msra.mxu0 0.0
    %1349 = vmatprep.subr.mxu0 0.0
    %1350 = vmatpush2.msra.mxu0 0.0
    %1351 = vmatprep.subr.mxu0 0.0
    %1352 = vmatpush2.msra.mxu0 0.0
    %1353 = vmatprep.subr.mxu0 0.0
    %1354 = vmatpush2.msra.mxu0 0.0
    %1355 = vmatprep.subr.mxu0 0.0
    %1356 = vmatpush2.msra.mxu0 0.0
    %1357 = vmatprep.subr.mxu0 0.0
    %1358 = vmatpush2.msra.mxu0 0.0
    %1359 = vmatprep.subr.mxu0 0.0
    %1360 = vmatpush2.msra.mxu0 0.0
    %1361 = vmatprep.mubr.f32.mxu0 0.0
    %1362 = vmatmul.mubr.f32.gmra.mxu0 %v1295
    %v1363 = vpop.f32.mrf.mxu0
    %v1364 = vadd.f32 0.0, %v1363
    %v1365 = vpop.f32.mrf.mxu0
    %1366 = vdwg.mxu0
    %v1368 = vrot.slane %v1292, 4
    %1369 = vrot.lane.b32.xlu0 %v1368, 32
    %v1370 = vpop.permute.xlu0 %1369
    %v1371 = vsel %vm319, %v1370, 0
    %1373 = vmatprep.subr.mxu0 0.0
    %1374 = vmatpush1.msra.mxu0 0.0
    %1375 = vmatprep.subr.mxu0 0.0
    %1376 = vmatpush1.msra.mxu0 0.0
    %1377 = vmatprep.subr.mxu0 0.0
    %1378 = vmatpush1.msra.mxu0 0.0
    %1379 = vmatprep.subr.mxu0 0.0
    %1380 = vmatpush1.msra.mxu0 0.0
    %1381 = vmatprep.subr.mxu0 0.0
    %1382 = vmatpush1.msra.mxu0 0.0
    %1383 = vmatprep.subr.mxu0 0.0
    %1384 = vmatpush1.msra.mxu0 0.0
    %1385 = vmatprep.subr.mxu0 0.0
    %1386 = vmatpush1.msra.mxu0 0.0
    %1387 = vmatprep.subr.mxu0 0.0
    %1388 = vmatpush1.msra.mxu0 0.0
    %1389 = vmatprep.subr.mxu0 0.0
    %1390 = vmatpush1.msra.mxu0 0.0
    %1391 = vmatprep.subr.mxu0 0.0
    %1392 = vmatpush1.msra.mxu0 0.0
    %1393 = vmatprep.subr.mxu0 0.0
    %1394 = vmatpush1.msra.mxu0 0.0
    %1395 = vmatprep.subr.mxu0 0.0
    %1396 = vmatpush1.msra.mxu0 0.0
    %1397 = vmatprep.subr.mxu0 0.0
    %1398 = vmatpush1.msra.mxu0 %v309
    %1399 = vmatprep.subr.mxu0 0.0
    %1400 = vmatpush1.msra.mxu0 %v308
    %1401 = vmatprep.subr.mxu0 0.0
    %1402 = vmatpush1.msra.mxu0 %v307
    %1403 = vmatprep.subr.mxu0 0.0
    %1404 = vmatpush1.msra.mxu0 %v306
    %1405 = vmatprep.subr.mxu0 0.0
    %1406 = vmatpush2.msra.mxu0 0.0
    %1407 = vmatprep.subr.mxu0 0.0
    %1408 = vmatpush2.msra.mxu0 0.0
    %1409 = vmatprep.subr.mxu0 0.0
    %1410 = vmatpush2.msra.mxu0 0.0
    %1411 = vmatprep.subr.mxu0 0.0
    %1412 = vmatpush2.msra.mxu0 0.0
    %1413 = vmatprep.subr.mxu0 0.0
    %1414 = vmatpush2.msra.mxu0 0.0
    %1415 = vmatprep.subr.mxu0 0.0
    %1416 = vmatpush2.msra.mxu0 0.0
    %1417 = vmatprep.subr.mxu0 0.0
    %1418 = vmatpush2.msra.mxu0 0.0
    %1419 = vmatprep.subr.mxu0 0.0
    %1420 = vmatpush2.msra.mxu0 0.0
    %1421 = vmatprep.subr.mxu0 0.0
    %1422 = vmatpush2.msra.mxu0 0.0
    %1423 = vmatprep.subr.mxu0 0.0
    %1424 = vmatpush2.msra.mxu0 0.0
    %1425 = vmatprep.subr.mxu0 0.0
    %1426 = vmatpush2.msra.mxu0 0.0
    %1427 = vmatprep.subr.mxu0 0.0
    %1428 = vmatpush2.msra.mxu0 0.0
    %1429 = vmatprep.subr.mxu0 0.0
    %1430 = vmatpush2.msra.mxu0 0.0
    %1431 = vmatprep.subr.mxu0 0.0
    %1432 = vmatpush2.msra.mxu0 0.0
    %1433 = vmatprep.subr.mxu0 0.0
    %1434 = vmatpush2.msra.mxu0 0.0
    %1435 = vmatprep.subr.mxu0 0.0
    %1436 = vmatpush2.msra.mxu0 0.0
    %1437 = vmatprep.mubr.f32.mxu0 0.0
    %1438 = vmatmul.mubr.f32.gmra.mxu0 %v1371
    %v1439 = vpop.f32.mrf.mxu0
    %v1440 = vadd.f32 %v1364, %v1439
    %v1441 = vpop.f32.mrf.mxu0
    %1442 = vdwg.mxu0
    %v1443 = vadd.f32 %v1440, %v652
    %v1444 = vxor.u32 %v1443, 2147483648
    %v1445 = vmul.f32 %v1444, 1.442695
    %v1446 = vpow.pop %v1445
    %v1447 = vadd.f32 %v1446, 1.0
    %v1448 = vrcp.pop %v1447
    %v1449 = vmul.f32 1.0, %v1448
    %v1450 = vtanh.pop %v1443
    %v1451 = vmul.f32 %v1449, %v1104
    %1453 = vrot.lane.b32.xlu0 %v1450, 64
    %v1454 = vpop.permute.xlu0 %1453
    %v1456 = vmul.f32 %v1449, %v1454
    %1458 = vrot.lane.b32.xlu0 %v1456, 32
    %v1459 = vpop.permute.xlu0 %1458
    %v1461 = vadd.f32 %v1451, %v1459
    %1463 = vrot.lane.b32.xlu0 %v1461, 96
    %v1464 = vpop.permute.xlu0 %1463
    %v1466 = vsel %vm416, %v1464, 0.0
    %1467 = vadd.xlane.f32.xlu0 %v1466
    %v1468 = vpop.xlane.xlu0 %1467
    %v1469 = vmul.f32 %v1468, %v420
    %v1470 = vsub.f32 %v1461, %v1469
    %v1471 = vmul.f32 %v1470, %v1470
    %1473 = vrot.lane.b32.xlu0 %v1471, 96
    %v1474 = vpop.permute.xlu0 %1473
    %v1476 = vsel %vm416, %v1474, 0.0
    %1477 = vadd.xlane.f32.xlu0 %v1476
    %v1478 = vpop.xlane.xlu0 %1477
    %v1479 = vmul.f32 %v1478, %v420
    %v1480 = vadd.f32 %v1479, 1e-05
    %v1481 = vrsqrt.pop %v1480
    %v1482 = vmul.f32 %v1470, %v1481
    %v1483 = vmul.f32 %v1482, %v700
    %v1484 = vadd.f32 %v1483, %v709
    %v1485 = vtanh.pop %v1484
    %1487 = vrot.lane.b32.xlu0 %v1485, 64
    %v1488 = vpop.permute.xlu0 %1487
    %v1490 = vmul.f32 %v1449, %v1488
    %1492 = vrot.lane.b32.xlu0 %v1490, 32
    %v1493 = vpop.permute.xlu0 %1492
    %v1495 = vsel %vm416, %v1493, 0.0
    %1496 = vadd.xlane.f32.xlu0 %v1495
    %v1497 = vpop.xlane.xlu0 %1496
    %v1498 = vmul.f32 %v1497, %v420
    %v1499 = vsub.f32 %v1490, %v1498
    %v1500 = vmul.f32 %v1499, %v1499
    %1502 = vrot.lane.b32.xlu0 %v1500, 32
    %v1503 = vpop.permute.xlu0 %1502
    %v1505 = vsel %vm416, %v1503, 0.0
    %1506 = vadd.xlane.f32.xlu0 %v1505
    %v1507 = vpop.xlane.xlu0 %1506
    %v1508 = vmul.f32 %v1507, %v420
    %v1509 = vadd.f32 %v1508, 1e-05
    %v1510 = vrsqrt.pop %v1509
    %v1511 = vmul.f32 %v1499, %v1510
    %v1512 = vmul.f32 %v1511, %v745
    %v1513 = vadd.f32 %v1512, %v754
    %v1514 = vrot.slane %v290, 4
    %1515 = vrot.lane.b32.xlu0 %v1514, 64
    %v1516 = vpop.permute.xlu0 %1515
    %v1518 = vadd.f32 %v1513, %v1516
    %v1520 = vrot.slane %v1518, 4
    %v1522 = vadd.f32 %v1292, %v1520
    %v1523 = vmul.f32 %v1522, 0.5
    %1524 = vmatprep.subr.mxu0 0.0
    %1525 = vmatpush1.msra.mxu0 0.0
    %1526 = vmatprep.subr.mxu0 0.0
    %1527 = vmatpush1.msra.mxu0 0.0
    %1528 = vmatprep.subr.mxu0 0.0
    %1529 = vmatpush1.msra.mxu0 0.0
    %1530 = vmatprep.subr.mxu0 0.0
    %1531 = vmatpush1.msra.mxu0 0.0
    %1532 = vmatprep.subr.mxu0 0.0
    %1533 = vmatpush1.msra.mxu0 0.0
    %1534 = vmatprep.subr.mxu0 0.0
    %1535 = vmatpush1.msra.mxu0 0.0
    %1536 = vmatprep.subr.mxu0 0.0
    %1537 = vmatpush1.msra.mxu0 0.0
    %1538 = vmatprep.subr.mxu0 0.0
    %1539 = vmatpush1.msra.mxu0 0.0
    %1540 = vmatprep.subr.mxu0 0.0
    %1541 = vmatpush1.msra.mxu0 0.0
    %1542 = vmatprep.subr.mxu0 0.0
    %1543 = vmatpush1.msra.mxu0 0.0
    %1544 = vmatprep.subr.mxu0 0.0
    %1545 = vmatpush1.msra.mxu0 0.0
    %1546 = vmatprep.subr.mxu0 0.0
    %1547 = vmatpush1.msra.mxu0 0.0
    %1548 = vmatprep.subr.mxu0 0.0
    %1549 = vmatpush1.msra.mxu0 %v301
    %1550 = vmatprep.subr.mxu0 0.0
    %1551 = vmatpush1.msra.mxu0 %v300
    %1552 = vmatprep.subr.mxu0 0.0
    %1553 = vmatpush1.msra.mxu0 %v299
    %1554 = vmatprep.subr.mxu0 0.0
    %1555 = vmatpush1.msra.mxu0 %v298
    %1556 = vmatprep.subr.mxu0 0.0
    %1557 = vmatpush2.msra.mxu0 0.0
    %1558 = vmatprep.subr.mxu0 0.0
    %1559 = vmatpush2.msra.mxu0 0.0
    %1560 = vmatprep.subr.mxu0 0.0
    %1561 = vmatpush2.msra.mxu0 0.0
    %1562 = vmatprep.subr.mxu0 0.0
    %1563 = vmatpush2.msra.mxu0 0.0
    %1564 = vmatprep.subr.mxu0 0.0
    %1565 = vmatpush2.msra.mxu0 0.0
    %1566 = vmatprep.subr.mxu0 0.0
    %1567 = vmatpush2.msra.mxu0 0.0
    %1568 = vmatprep.subr.mxu0 0.0
    %1569 = vmatpush2.msra.mxu0 0.0
    %1570 = vmatprep.subr.mxu0 0.0
    %1571 = vmatpush2.msra.mxu0 0.0
    %1572 = vmatprep.subr.mxu0 0.0
    %1573 = vmatpush2.msra.mxu0 0.0
    %1574 = vmatprep.subr.mxu0 0.0
    %1575 = vmatpush2.msra.mxu0 0.0
    %1576 = vmatprep.subr.mxu0 0.0
    %1577 = vmatpush2.msra.mxu0 0.0
    %1578 = vmatprep.subr.mxu0 0.0
    %1579 = vmatpush2.msra.mxu0 0.0
    %1580 = vmatprep.subr.mxu0 0.0
    %1581 = vmatpush2.msra.mxu0 0.0
    %1582 = vmatprep.subr.mxu0 0.0
    %1583 = vmatpush2.msra.mxu0 0.0
    %1584 = vmatprep.subr.mxu0 0.0
    %1585 = vmatpush2.msra.mxu0 0.0
    %1586 = vmatprep.subr.mxu0 0.0
    %1587 = vmatpush2.msra.mxu0 0.0
    %1588 = vmatprep.mubr.f32.mxu0 0.0
    %1589 = vmatmul.mubr.f32.gmra.mxu0 %v1371
    %v1590 = vpop.f32.mrf.mxu0
    %v1591 = vadd.f32 0.0, %v1590
    %v1592 = vpop.f32.mrf.mxu0
    %1593 = vdwg.mxu0
    %v1595 = vrot.slane %v1591, 2
    %v1597 = vadd.f32 %v288, %v1595
    %v1598 = vxor.u32 %v1597, 2147483648
    %v1599 = vmul.f32 %v1598, 1.442695
    %v1600 = vpow.pop %v1599
    %v1601 = vadd.f32 %v1600, 1.0
    %v1602 = vrcp.pop %v1601
    %v1603 = vmul.f32 1.0, %v1602
    %v1604 = vtanh.pop %v1597
    %v1606 = vrot.slane %v1262, 6
    %v1608 = vmul.f32 %v1603, %v1606
    %1610 = vrot.lane.b32.xlu0 %v1604, 64
    %v1611 = vpop.permute.xlu0 %1610
    %v1613 = vmul.f32 %v1603, %v1611
    %1615 = vrot.lane.b32.xlu0 %v1613, 32
    %v1616 = vpop.permute.xlu0 %1615
    %v1618 = vadd.f32 %v1608, %v1616
    %1620 = vrot.lane.b32.xlu0 %v1618, 96
    %v1621 = vpop.permute.xlu0 %1620
    %vm1623 = vcmask 261126
    %v1624 = vsel %vm1623, %v1621, 0.0
    %1625 = vadd.xlane.f32.xlu0 %v1624
    %v1626 = vpop.xlane.xlu0 %1625
    %v1627 = vmul.f32 %v1626, %v420
    %v1628 = vsub.f32 %v1618, %v1627
    %v1629 = vmul.f32 %v1628, %v1628
    %1631 = vrot.lane.b32.xlu0 %v1629, 96
    %v1632 = vpop.permute.xlu0 %1631
    %v1634 = vsel %vm1623, %v1632, 0.0
    %1635 = vadd.xlane.f32.xlu0 %v1634
    %v1636 = vpop.xlane.xlu0 %1635
    %v1637 = vmul.f32 %v1636, %v420
    %v1638 = vadd.f32 %v1637, 1e-05
    %v1639 = vrsqrt.pop %v1638
    %v1640 = vmul.f32 %v1628, %v1639
    %v1641 = vmul.f32 %v1640, %v441
    %v1642 = vadd.f32 %v1641, %v450
    %v1643 = vtanh.pop %v1642
    %1645 = vrot.lane.b32.xlu0 %v1643, 64
    %v1646 = vpop.permute.xlu0 %1645
    %v1648 = vmul.f32 %v1603, %v1646
    %1650 = vrot.lane.b32.xlu0 %v1648, 32
    %v1651 = vpop.permute.xlu0 %1650
    %v1653 = vsel %vm1623, %v1651, 0.0
    %1654 = vadd.xlane.f32.xlu0 %v1653
    %v1655 = vpop.xlane.xlu0 %1654
    %v1656 = vmul.f32 %v1655, %v420
    %v1657 = vsub.f32 %v1648, %v1656
    %v1658 = vmul.f32 %v1657, %v1657
    %1660 = vrot.lane.b32.xlu0 %v1658, 32
    %v1661 = vpop.permute.xlu0 %1660
    %v1663 = vsel %vm1623, %v1661, 0.0
    %1664 = vadd.xlane.f32.xlu0 %v1663
    %v1665 = vpop.xlane.xlu0 %1664
    %v1666 = vmul.f32 %v1665, %v420
    %v1667 = vadd.f32 %v1666, 1e-05
    %v1668 = vrsqrt.pop %v1667
    %v1669 = vmul.f32 %v1657, %v1668
    %v1670 = vmul.f32 %v1669, %v486
    %v1671 = vadd.f32 %v1670, %v495
    %v1672 = vadd.f32 %v1671, %v500
    %1673 = vrot.lane.b32.xlu0 %v1518, 32
    %v1674 = vpop.permute.xlu0 %1673
    %v1675 = vsel %vm319, %v1674, 0
    %1677 = vmatprep.subr.mxu0 0.0
    %1678 = vmatpush1.msra.mxu0 0.0
    %1679 = vmatprep.subr.mxu0 0.0
    %1680 = vmatpush1.msra.mxu0 0.0
    %1681 = vmatprep.subr.mxu0 0.0
    %1682 = vmatpush1.msra.mxu0 0.0
    %1683 = vmatprep.subr.mxu0 0.0
    %1684 = vmatpush1.msra.mxu0 0.0
    %1685 = vmatprep.subr.mxu0 0.0
    %1686 = vmatpush1.msra.mxu0 0.0
    %1687 = vmatprep.subr.mxu0 0.0
    %1688 = vmatpush1.msra.mxu0 0.0
    %1689 = vmatprep.subr.mxu0 0.0
    %1690 = vmatpush1.msra.mxu0 0.0
    %1691 = vmatprep.subr.mxu0 0.0
    %1692 = vmatpush1.msra.mxu0 0.0
    %1693 = vmatprep.subr.mxu0 0.0
    %1694 = vmatpush1.msra.mxu0 0.0
    %1695 = vmatprep.subr.mxu0 0.0
    %1696 = vmatpush1.msra.mxu0 0.0
    %1697 = vmatprep.subr.mxu0 0.0
    %1698 = vmatpush1.msra.mxu0 0.0
    %1699 = vmatprep.subr.mxu0 0.0
    %1700 = vmatpush1.msra.mxu0 0.0
    %1701 = vmatprep.subr.mxu0 0.0
    %1702 = vmatpush1.msra.mxu0 %v313
    %1703 = vmatprep.subr.mxu0 0.0
    %1704 = vmatpush1.msra.mxu0 %v312
    %1705 = vmatprep.subr.mxu0 0.0
    %1706 = vmatpush1.msra.mxu0 %v311
    %1707 = vmatprep.subr.mxu0 0.0
    %1708 = vmatpush1.msra.mxu0 %v310
    %1709 = vmatprep.subr.mxu0 0.0
    %1710 = vmatpush2.msra.mxu0 0.0
    %1711 = vmatprep.subr.mxu0 0.0
    %1712 = vmatpush2.msra.mxu0 0.0
    %1713 = vmatprep.subr.mxu0 0.0
    %1714 = vmatpush2.msra.mxu0 0.0
    %1715 = vmatprep.subr.mxu0 0.0
    %1716 = vmatpush2.msra.mxu0 0.0
    %1717 = vmatprep.subr.mxu0 0.0
    %1718 = vmatpush2.msra.mxu0 0.0
    %1719 = vmatprep.subr.mxu0 0.0
    %1720 = vmatpush2.msra.mxu0 0.0
    %1721 = vmatprep.subr.mxu0 0.0
    %1722 = vmatpush2.msra.mxu0 0.0
    %1723 = vmatprep.subr.mxu0 0.0
    %1724 = vmatpush2.msra.mxu0 0.0
    %1725 = vmatprep.subr.mxu0 0.0
    %1726 = vmatpush2.msra.mxu0 0.0
    %1727 = vmatprep.subr.mxu0 0.0
    %1728 = vmatpush2.msra.mxu0 0.0
    %1729 = vmatprep.subr.mxu0 0.0
    %1730 = vmatpush2.msra.mxu0 0.0
    %1731 = vmatprep.subr.mxu0 0.0
    %1732 = vmatpush2.msra.mxu0 0.0
    %1733 = vmatprep.subr.mxu0 0.0
    %1734 = vmatpush2.msra.mxu0 0.0
    %1735 = vmatprep.subr.mxu0 0.0
    %1736 = vmatpush2.msra.mxu0 0.0
    %1737 = vmatprep.subr.mxu0 0.0
    %1738 = vmatpush2.msra.mxu0 0.0
    %1739 = vmatprep.subr.mxu0 0.0
    %1740 = vmatpush2.msra.mxu0 0.0
    %1741 = vmatprep.mubr.f32.mxu0 0.0
    %1742 = vmatmul.mubr.f32.gmra.mxu0 %v1675
    %v1743 = vpop.f32.mrf.mxu0
    %v1744 = vadd.f32 0.0, %v1743
    %v1745 = vpop.f32.mrf.mxu0
    %1746 = vdwg.mxu0
    %v1748 = vrot.slane %v1672, 6
    %1749 = vrot.lane.b32.xlu0 %v1748, 32
    %v1750 = vpop.permute.xlu0 %1749
    %v1751 = vsel %vm319, %v1750, 0
    %1753 = vmatprep.subr.mxu0 0.0
    %1754 = vmatpush1.msra.mxu0 0.0
    %1755 = vmatprep.subr.mxu0 0.0
    %1756 = vmatpush1.msra.mxu0 0.0
    %1757 = vmatprep.subr.mxu0 0.0
    %1758 = vmatpush1.msra.mxu0 0.0
    %1759 = vmatprep.subr.mxu0 0.0
    %1760 = vmatpush1.msra.mxu0 0.0
    %1761 = vmatprep.subr.mxu0 0.0
    %1762 = vmatpush1.msra.mxu0 0.0
    %1763 = vmatprep.subr.mxu0 0.0
    %1764 = vmatpush1.msra.mxu0 0.0
    %1765 = vmatprep.subr.mxu0 0.0
    %1766 = vmatpush1.msra.mxu0 0.0
    %1767 = vmatprep.subr.mxu0 0.0
    %1768 = vmatpush1.msra.mxu0 0.0
    %1769 = vmatprep.subr.mxu0 0.0
    %1770 = vmatpush1.msra.mxu0 0.0
    %1771 = vmatprep.subr.mxu0 0.0
    %1772 = vmatpush1.msra.mxu0 0.0
    %1773 = vmatprep.subr.mxu0 0.0
    %1774 = vmatpush1.msra.mxu0 0.0
    %1775 = vmatprep.subr.mxu0 0.0
    %1776 = vmatpush1.msra.mxu0 0.0
    %1777 = vmatprep.subr.mxu0 0.0
    %1778 = vmatpush1.msra.mxu0 %v309
    %1779 = vmatprep.subr.mxu0 0.0
    %1780 = vmatpush1.msra.mxu0 %v308
    %1781 = vmatprep.subr.mxu0 0.0
    %1782 = vmatpush1.msra.mxu0 %v307
    %1783 = vmatprep.subr.mxu0 0.0
    %1784 = vmatpush1.msra.mxu0 %v306
    %1785 = vmatprep.subr.mxu0 0.0
    %1786 = vmatpush2.msra.mxu0 0.0
    %1787 = vmatprep.subr.mxu0 0.0
    %1788 = vmatpush2.msra.mxu0 0.0
    %1789 = vmatprep.subr.mxu0 0.0
    %1790 = vmatpush2.msra.mxu0 0.0
    %1791 = vmatprep.subr.mxu0 0.0
    %1792 = vmatpush2.msra.mxu0 0.0
    %1793 = vmatprep.subr.mxu0 0.0
    %1794 = vmatpush2.msra.mxu0 0.0
    %1795 = vmatprep.subr.mxu0 0.0
    %1796 = vmatpush2.msra.mxu0 0.0
    %1797 = vmatprep.subr.mxu0 0.0
    %1798 = vmatpush2.msra.mxu0 0.0
    %1799 = vmatprep.subr.mxu0 0.0
    %1800 = vmatpush2.msra.mxu0 0.0
    %1801 = vmatprep.subr.mxu0 0.0
    %1802 = vmatpush2.msra.mxu0 0.0
    %1803 = vmatprep.subr.mxu0 0.0
    %1804 = vmatpush2.msra.mxu0 0.0
    %1805 = vmatprep.subr.mxu0 0.0
    %1806 = vmatpush2.msra.mxu0 0.0
    %1807 = vmatprep.subr.mxu0 0.0
    %1808 = vmatpush2.msra.mxu0 0.0
    %1809 = vmatprep.subr.mxu0 0.0
    %1810 = vmatpush2.msra.mxu0 0.0
    %1811 = vmatprep.subr.mxu0 0.0
    %1812 = vmatpush2.msra.mxu0 0.0
    %1813 = vmatprep.subr.mxu0 0.0
    %1814 = vmatpush2.msra.mxu0 0.0
    %1815 = vmatprep.subr.mxu0 0.0
    %1816 = vmatpush2.msra.mxu0 0.0
    %1817 = vmatprep.mubr.f32.mxu0 0.0
    %1818 = vmatmul.mubr.f32.gmra.mxu0 %v1751
    %v1819 = vpop.f32.mrf.mxu0
    %v1820 = vadd.f32 %v1744, %v1819
    %v1821 = vpop.f32.mrf.mxu0
    %1822 = vdwg.mxu0
    %v1823 = vadd.f32 %v1820, %v652
    %v1824 = vxor.u32 %v1823, 2147483648
    %v1825 = vmul.f32 %v1824, 1.442695
    %v1826 = vpow.pop %v1825
    %v1827 = vadd.f32 %v1826, 1.0
    %v1828 = vrcp.pop %v1827
    %v1829 = vmul.f32 1.0, %v1828
    %v1830 = vtanh.pop %v1823
    %v1831 = vmul.f32 %v1829, %v1484
    %1833 = vrot.lane.b32.xlu0 %v1830, 64
    %v1834 = vpop.permute.xlu0 %1833
    %v1836 = vmul.f32 %v1829, %v1834
    %1838 = vrot.lane.b32.xlu0 %v1836, 32
    %v1839 = vpop.permute.xlu0 %1838
    %v1841 = vadd.f32 %v1831, %v1839
    %1843 = vrot.lane.b32.xlu0 %v1841, 96
    %v1844 = vpop.permute.xlu0 %1843
    %v1846 = vsel %vm416, %v1844, 0.0
    %1847 = vadd.xlane.f32.xlu0 %v1846
    %v1848 = vpop.xlane.xlu0 %1847
    %v1849 = vmul.f32 %v1848, %v420
    %v1850 = vsub.f32 %v1841, %v1849
    %v1851 = vmul.f32 %v1850, %v1850
    %1853 = vrot.lane.b32.xlu0 %v1851, 96
    %v1854 = vpop.permute.xlu0 %1853
    %v1856 = vsel %vm416, %v1854, 0.0
    %1857 = vadd.xlane.f32.xlu0 %v1856
    %v1858 = vpop.xlane.xlu0 %1857
    %v1859 = vmul.f32 %v1858, %v420
    %v1860 = vadd.f32 %v1859, 1e-05
    %v1861 = vrsqrt.pop %v1860
    %v1862 = vmul.f32 %v1850, %v1861
    %v1863 = vmul.f32 %v1862, %v700
    %v1864 = vadd.f32 %v1863, %v709
    %v1865 = vtanh.pop %v1864
    %1867 = vrot.lane.b32.xlu0 %v1865, 64
    %v1868 = vpop.permute.xlu0 %1867
    %v1870 = vmul.f32 %v1829, %v1868
    %1872 = vrot.lane.b32.xlu0 %v1870, 32
    %v1873 = vpop.permute.xlu0 %1872
    %v1875 = vsel %vm416, %v1873, 0.0
    %1876 = vadd.xlane.f32.xlu0 %v1875
    %v1877 = vpop.xlane.xlu0 %1876
    %v1878 = vmul.f32 %v1877, %v420
    %v1879 = vsub.f32 %v1870, %v1878
    %v1880 = vmul.f32 %v1879, %v1879
    %1882 = vrot.lane.b32.xlu0 %v1880, 32
    %v1883 = vpop.permute.xlu0 %1882
    %v1885 = vsel %vm416, %v1883, 0.0
    %1886 = vadd.xlane.f32.xlu0 %v1885
    %v1887 = vpop.xlane.xlu0 %1886
    %v1888 = vmul.f32 %v1887, %v420
    %v1889 = vadd.f32 %v1888, 1e-05
    %v1890 = vrsqrt.pop %v1889
    %v1891 = vmul.f32 %v1879, %v1890
    %v1892 = vmul.f32 %v1891, %v745
    %v1893 = vadd.f32 %v1892, %v754
    %v1894 = vrot.slane %v290, 6
    %1895 = vrot.lane.b32.xlu0 %v1894, 64
    %v1896 = vpop.permute.xlu0 %1895
    %v1898 = vadd.f32 %v1893, %v1896
    %v1900 = vrot.slane %v1898, 2
    %v1902 = vadd.f32 %v1672, %v1900
    %v1903 = vmul.f32 %v1902, 0.5
    %1904 = vmatprep.subr.mxu0 0.0
    %1905 = vmatpush1.msra.mxu0 0.0
    %1906 = vmatprep.subr.mxu0 0.0
    %1907 = vmatpush1.msra.mxu0 0.0
    %1908 = vmatprep.subr.mxu0 0.0
    %1909 = vmatpush1.msra.mxu0 0.0
    %1910 = vmatprep.subr.mxu0 0.0
    %1911 = vmatpush1.msra.mxu0 0.0
    %1912 = vmatprep.subr.mxu0 0.0
    %1913 = vmatpush1.msra.mxu0 0.0
    %1914 = vmatprep.subr.mxu0 0.0
    %1915 = vmatpush1.msra.mxu0 0.0
    %1916 = vmatprep.subr.mxu0 0.0
    %1917 = vmatpush1.msra.mxu0 0.0
    %1918 = vmatprep.subr.mxu0 0.0
    %1919 = vmatpush1.msra.mxu0 0.0
    %1920 = vmatprep.subr.mxu0 0.0
    %1921 = vmatpush1.msra.mxu0 0.0
    %1922 = vmatprep.subr.mxu0 0.0
    %1923 = vmatpush1.msra.mxu0 0.0
    %1924 = vmatprep.subr.mxu0 0.0
    %1925 = vmatpush1.msra.mxu0 0.0
    %1926 = vmatprep.subr.mxu0 0.0
    %1927 = vmatpush1.msra.mxu0 0.0
    %1928 = vmatprep.subr.mxu0 0.0
    %1929 = vmatpush1.msra.mxu0 %v301
    %1930 = vmatprep.subr.mxu0 0.0
    %1931 = vmatpush1.msra.mxu0 %v300
    %1932 = vmatprep.subr.mxu0 0.0
    %1933 = vmatpush1.msra.mxu0 %v299
    %1934 = vmatprep.subr.mxu0 0.0
    %1935 = vmatpush1.msra.mxu0 %v298
    %1936 = vmatprep.subr.mxu0 0.0
    %1937 = vmatpush2.msra.mxu0 0.0
    %1938 = vmatprep.subr.mxu0 0.0
    %1939 = vmatpush2.msra.mxu0 0.0
    %1940 = vmatprep.subr.mxu0 0.0
    %1941 = vmatpush2.msra.mxu0 0.0
    %1942 = vmatprep.subr.mxu0 0.0
    %1943 = vmatpush2.msra.mxu0 0.0
    %1944 = vmatprep.subr.mxu0 0.0
    %1945 = vmatpush2.msra.mxu0 0.0
    %1946 = vmatprep.subr.mxu0 0.0
    %1947 = vmatpush2.msra.mxu0 0.0
    %1948 = vmatprep.subr.mxu0 0.0
    %1949 = vmatpush2.msra.mxu0 0.0
    %1950 = vmatprep.subr.mxu0 0.0
    %1951 = vmatpush2.msra.mxu0 0.0
    %1952 = vmatprep.subr.mxu0 0.0
    %1953 = vmatpush2.msra.mxu0 0.0
    %1954 = vmatprep.subr.mxu0 0.0
    %1955 = vmatpush2.msra.mxu0 0.0
    %1956 = vmatprep.subr.mxu0 0.0
    %1957 = vmatpush2.msra.mxu0 0.0
    %1958 = vmatprep.subr.mxu0 0.0
    %1959 = vmatpush2.msra.mxu0 0.0
    %1960 = vmatprep.subr.mxu0 0.0
    %1961 = vmatpush2.msra.mxu0 0.0
    %1962 = vmatprep.subr.mxu0 0.0
    %1963 = vmatpush2.msra.mxu0 0.0
    %1964 = vmatprep.subr.mxu0 0.0
    %1965 = vmatpush2.msra.mxu0 0.0
    %1966 = vmatprep.subr.mxu0 0.0
    %1967 = vmatpush2.msra.mxu0 0.0
    %1968 = vmatprep.mubr.f32.mxu0 0.0
    %1969 = vmatmul.mubr.f32.gmra.mxu0 %v1751
    %v1970 = vpop.f32.mrf.mxu0
    %v1971 = vadd.f32 0.0, %v1970
    %v1972 = vpop.f32.mrf.mxu0
    %1973 = vdwg.mxu0
    %v1974 = vadd.f32 %v294, %v1971
    %v1975 = vxor.u32 %v1974, 2147483648
    %v1976 = vmul.f32 %v1975, 1.442695
    %v1977 = vpow.pop %v1976
    %v1978 = vadd.f32 %v1977, 1.0
    %v1979 = vrcp.pop %v1978
    %v1980 = vmul.f32 1.0, %v1979
    %v1981 = vtanh.pop %v1974
    %v1983 = vrot.slane %v1642, 6
    %v1985 = vmul.f32 %v1980, %v1983
    %1987 = vrot.lane.b32.xlu0 %v1981, 64
    %v1988 = vpop.permute.xlu0 %1987
    %v1990 = vmul.f32 %v1980, %v1988
    %1992 = vrot.lane.b32.xlu0 %v1990, 32
    %v1993 = vpop.permute.xlu0 %1992
    %v1995 = vadd.f32 %v1985, %v1993
    %1997 = vrot.lane.b32.xlu0 %v1995, 96
    %v1998 = vpop.permute.xlu0 %1997
    %v2000 = vsel %vm416, %v1998, 0.0
    %2001 = vadd.xlane.f32.xlu0 %v2000
    %v2002 = vpop.xlane.xlu0 %2001
    %v2003 = vmul.f32 %v2002, %v420
    %v2004 = vsub.f32 %v1995, %v2003
    %v2005 = vmul.f32 %v2004, %v2004
    %2007 = vrot.lane.b32.xlu0 %v2005, 96
    %v2008 = vpop.permute.xlu0 %2007
    %v2010 = vsel %vm416, %v2008, 0.0
    %2011 = vadd.xlane.f32.xlu0 %v2010
    %v2012 = vpop.xlane.xlu0 %2011
    %v2013 = vmul.f32 %v2012, %v420
    %v2014 = vadd.f32 %v2013, 1e-05
    %v2015 = vrsqrt.pop %v2014
    %v2016 = vmul.f32 %v2004, %v2015
    %v2017 = vmul.f32 %v2016, %v441
    %v2018 = vadd.f32 %v2017, %v450
    %v2019 = vtanh.pop %v2018
    %2021 = vrot.lane.b32.xlu0 %v2019, 64
    %v2022 = vpop.permute.xlu0 %2021
    %v2024 = vmul.f32 %v1980, %v2022
    %2026 = vrot.lane.b32.xlu0 %v2024, 32
    %v2027 = vpop.permute.xlu0 %2026
    %v2029 = vsel %vm416, %v2027, 0.0
    %2030 = vadd.xlane.f32.xlu0 %v2029
    %v2031 = vpop.xlane.xlu0 %2030
    %v2032 = vmul.f32 %v2031, %v420
    %v2033 = vsub.f32 %v2024, %v2032
    %v2034 = vmul.f32 %v2033, %v2033
    %2036 = vrot.lane.b32.xlu0 %v2034, 32
    %v2037 = vpop.permute.xlu0 %2036
    %v2039 = vsel %vm416, %v2037, 0.0
    %2040 = vadd.xlane.f32.xlu0 %v2039
    %v2041 = vpop.xlane.xlu0 %2040
    %v2042 = vmul.f32 %v2041, %v420
    %v2043 = vadd.f32 %v2042, 1e-05
    %v2044 = vrsqrt.pop %v2043
    %v2045 = vmul.f32 %v2033, %v2044
    %v2046 = vmul.f32 %v2045, %v486
    %v2047 = vadd.f32 %v2046, %v495
    %2049 = vrot.lane.b32.xlu0 %v296, 96
    %v2050 = vpop.permute.xlu0 %2049
    %v2052 = vadd.f32 %v2047, %v2050
    %2053 = vrot.lane.b32.xlu0 %v1898, 32
    %v2054 = vpop.permute.xlu0 %2053
    %v2055 = vsel %vm319, %v2054, 0
    %2057 = vmatprep.subr.mxu0 0.0
    %2058 = vmatpush1.msra.mxu0 0.0
    %2059 = vmatprep.subr.mxu0 0.0
    %2060 = vmatpush1.msra.mxu0 0.0
    %2061 = vmatprep.subr.mxu0 0.0
    %2062 = vmatpush1.msra.mxu0 0.0
    %2063 = vmatprep.subr.mxu0 0.0
    %2064 = vmatpush1.msra.mxu0 0.0
    %2065 = vmatprep.subr.mxu0 0.0
    %2066 = vmatpush1.msra.mxu0 0.0
    %2067 = vmatprep.subr.mxu0 0.0
    %2068 = vmatpush1.msra.mxu0 0.0
    %2069 = vmatprep.subr.mxu0 0.0
    %2070 = vmatpush1.msra.mxu0 0.0
    %2071 = vmatprep.subr.mxu0 0.0
    %2072 = vmatpush1.msra.mxu0 0.0
    %2073 = vmatprep.subr.mxu0 0.0
    %2074 = vmatpush1.msra.mxu0 0.0
    %2075 = vmatprep.subr.mxu0 0.0
    %2076 = vmatpush1.msra.mxu0 0.0
    %2077 = vmatprep.subr.mxu0 0.0
    %2078 = vmatpush1.msra.mxu0 0.0
    %2079 = vmatprep.subr.mxu0 0.0
    %2080 = vmatpush1.msra.mxu0 0.0
    %2081 = vmatprep.subr.mxu0 0.0
    %2082 = vmatpush1.msra.mxu0 %v313
    %2083 = vmatprep.subr.mxu0 0.0
    %2084 = vmatpush1.msra.mxu0 %v312
    %2085 = vmatprep.subr.mxu0 0.0
    %2086 = vmatpush1.msra.mxu0 %v311
    %2087 = vmatprep.subr.mxu0 0.0
    %2088 = vmatpush1.msra.mxu0 %v310
    %2089 = vmatprep.subr.mxu0 0.0
    %2090 = vmatpush2.msra.mxu0 0.0
    %2091 = vmatprep.subr.mxu0 0.0
    %2092 = vmatpush2.msra.mxu0 0.0
    %2093 = vmatprep.subr.mxu0 0.0
    %2094 = vmatpush2.msra.mxu0 0.0
    %2095 = vmatprep.subr.mxu0 0.0
    %2096 = vmatpush2.msra.mxu0 0.0
    %2097 = vmatprep.subr.mxu0 0.0
    %2098 = vmatpush2.msra.mxu0 0.0
    %2099 = vmatprep.subr.mxu0 0.0
    %2100 = vmatpush2.msra.mxu0 0.0
    %2101 = vmatprep.subr.mxu0 0.0
    %2102 = vmatpush2.msra.mxu0 0.0
    %2103 = vmatprep.subr.mxu0 0.0
    %2104 = vmatpush2.msra.mxu0 0.0
    %2105 = vmatprep.subr.mxu0 0.0
    %2106 = vmatpush2.msra.mxu0 0.0
    %2107 = vmatprep.subr.mxu0 0.0
    %2108 = vmatpush2.msra.mxu0 0.0
    %2109 = vmatprep.subr.mxu0 0.0
    %2110 = vmatpush2.msra.mxu0 0.0
    %2111 = vmatprep.subr.mxu0 0.0
    %2112 = vmatpush2.msra.mxu0 0.0
    %2113 = vmatprep.subr.mxu0 0.0
    %2114 = vmatpush2.msra.mxu0 0.0
    %2115 = vmatprep.subr.mxu0 0.0
    %2116 = vmatpush2.msra.mxu0 0.0
    %2117 = vmatprep.subr.mxu0 0.0
    %2118 = vmatpush2.msra.mxu0 0.0
    %2119 = vmatprep.subr.mxu0 0.0
    %2120 = vmatpush2.msra.mxu0 0.0
    %2121 = vmatprep.mubr.f32.mxu0 0.0
    %2122 = vmatmul.mubr.f32.gmra.mxu0 %v2055
    %v2123 = vpop.f32.mrf.mxu0
    %v2124 = vadd.f32 0.0, %v2123
    %v2125 = vpop.f32.mrf.mxu0
    %2126 = vdwg.mxu0
    %2128 = vrot.lane.b32.xlu0 %v2052, 32
    %v2129 = vpop.permute.xlu0 %2128
    %v2130 = vsel %vm319, %v2129, 0
    %2132 = vmatprep.subr.mxu0 0.0
    %2133 = vmatpush1.msra.mxu0 0.0
    %2134 = vmatprep.subr.mxu0 0.0
    %2135 = vmatpush1.msra.mxu0 0.0
    %2136 = vmatprep.subr.mxu0 0.0
    %2137 = vmatpush1.msra.mxu0 0.0
    %2138 = vmatprep.subr.mxu0 0.0
    %2139 = vmatpush1.msra.mxu0 0.0
    %2140 = vmatprep.subr.mxu0 0.0
    %2141 = vmatpush1.msra.mxu0 0.0
    %2142 = vmatprep.subr.mxu0 0.0
    %2143 = vmatpush1.msra.mxu0 0.0
    %2144 = vmatprep.subr.mxu0 0.0
    %2145 = vmatpush1.msra.mxu0 0.0
    %2146 = vmatprep.subr.mxu0 0.0
    %2147 = vmatpush1.msra.mxu0 0.0
    %2148 = vmatprep.subr.mxu0 0.0
    %2149 = vmatpush1.msra.mxu0 0.0
    %2150 = vmatprep.subr.mxu0 0.0
    %2151 = vmatpush1.msra.mxu0 0.0
    %2152 = vmatprep.subr.mxu0 0.0
    %2153 = vmatpush1.msra.mxu0 0.0
    %2154 = vmatprep.subr.mxu0 0.0
    %2155 = vmatpush1.msra.mxu0 0.0
    %2156 = vmatprep.subr.mxu0 0.0
    %2157 = vmatpush1.msra.mxu0 %v309
    %2158 = vmatprep.subr.mxu0 0.0
    %2159 = vmatpush1.msra.mxu0 %v308
    %2160 = vmatprep.subr.mxu0 0.0
    %2161 = vmatpush1.msra.mxu0 %v307
    %2162 = vmatprep.subr.mxu0 0.0
    %2163 = vmatpush1.msra.mxu0 %v306
    %2164 = vmatprep.subr.mxu0 0.0
    %2165 = vmatpush2.msra.mxu0 0.0
    %2166 = vmatprep.subr.mxu0 0.0
    %2167 = vmatpush2.msra.mxu0 0.0
    %2168 = vmatprep.subr.mxu0 0.0
    %2169 = vmatpush2.msra.mxu0 0.0
    %2170 = vmatprep.subr.mxu0 0.0
    %2171 = vmatpush2.msra.mxu0 0.0
    %2172 = vmatprep.subr.mxu0 0.0
    %2173 = vmatpush2.msra.mxu0 0.0
    %2174 = vmatprep.subr.mxu0 0.0
    %2175 = vmatpush2.msra.mxu0 0.0
    %2176 = vmatprep.subr.mxu0 0.0
    %2177 = vmatpush2.msra.mxu0 0.0
    %2178 = vmatprep.subr.mxu0 0.0
    %2179 = vmatpush2.msra.mxu0 0.0
    %2180 = vmatprep.subr.mxu0 0.0
    %2181 = vmatpush2.msra.mxu0 0.0
    %2182 = vmatprep.subr.mxu0 0.0
    %2183 = vmatpush2.msra.mxu0 0.0
    %2184 = vmatprep.subr.mxu0 0.0
    %2185 = vmatpush2.msra.mxu0 0.0
    %2186 = vmatprep.subr.mxu0 0.0
    %2187 = vmatpush2.msra.mxu0 0.0
    %2188 = vmatprep.subr.mxu0 0.0
    %2189 = vmatpush2.msra.mxu0 0.0
    %2190 = vmatprep.subr.mxu0 0.0
    %2191 = vmatpush2.msra.mxu0 0.0
    %2192 = vmatprep.subr.mxu0 0.0
    %2193 = vmatpush2.msra.mxu0 0.0
    %2194 = vmatprep.subr.mxu0 0.0
    %2195 = vmatpush2.msra.mxu0 0.0
    %2196 = vmatprep.mubr.f32.mxu0 0.0
    %2197 = vmatmul.mubr.f32.gmra.mxu0 %v2130
    %v2198 = vpop.f32.mrf.mxu0
    %v2199 = vadd.f32 %v2124, %v2198
    %v2200 = vpop.f32.mrf.mxu0
    %2201 = vdwg.mxu0
    %v2202 = vadd.f32 %v2199, %v652
    %v2203 = vxor.u32 %v2202, 2147483648
    %v2204 = vmul.f32 %v2203, 1.442695
    %v2205 = vpow.pop %v2204
    %v2206 = vadd.f32 %v2205, 1.0
    %v2207 = vrcp.pop %v2206
    %v2208 = vmul.f32 1.0, %v2207
    %v2209 = vtanh.pop %v2202
    %v2210 = vmul.f32 %v2208, %v1864
    %2212 = vrot.lane.b32.xlu0 %v2209, 64
    %v2213 = vpop.permute.xlu0 %2212
    %v2215 = vmul.f32 %v2208, %v2213
    %2217 = vrot.lane.b32.xlu0 %v2215, 32
    %v2218 = vpop.permute.xlu0 %2217
    %v2220 = vadd.f32 %v2210, %v2218
    %2222 = vrot.lane.b32.xlu0 %v2220, 96
    %v2223 = vpop.permute.xlu0 %2222
    %v2225 = vsel %vm416, %v2223, 0.0
    %2226 = vadd.xlane.f32.xlu0 %v2225
    %v2227 = vpop.xlane.xlu0 %2226
    %v2228 = vmul.f32 %v2227, %v420
    %v2229 = vsub.f32 %v2220, %v2228
    %v2230 = vmul.f32 %v2229, %v2229
    %2232 = vrot.lane.b32.xlu0 %v2230, 96
    %v2233 = vpop.permute.xlu0 %2232
    %v2235 = vsel %vm416, %v2233, 0.0
    %2236 = vadd.xlane.f32.xlu0 %v2235
    %v2237 = vpop.xlane.xlu0 %2236
    %v2238 = vmul.f32 %v2237, %v420
    %v2239 = vadd.f32 %v2238, 1e-05
    %v2240 = vrsqrt.pop %v2239
    %v2241 = vmul.f32 %v2229, %v2240
    %v2242 = vmul.f32 %v2241, %v700
    %v2243 = vadd.f32 %v2242, %v709
    %v2244 = vtanh.pop %v2243
    %2246 = vrot.lane.b32.xlu0 %v2244, 64
    %v2247 = vpop.permute.xlu0 %2246
    %v2249 = vmul.f32 %v2208, %v2247
    %2251 = vrot.lane.b32.xlu0 %v2249, 32
    %v2252 = vpop.permute.xlu0 %2251
    %v2254 = vsel %vm416, %v2252, 0.0
    %2255 = vadd.xlane.f32.xlu0 %v2254
    %v2256 = vpop.xlane.xlu0 %2255
    %v2257 = vmul.f32 %v2256, %v420
    %v2258 = vsub.f32 %v2249, %v2257
    %v2259 = vmul.f32 %v2258, %v2258
    %2261 = vrot.lane.b32.xlu0 %v2259, 32
    %v2262 = vpop.permute.xlu0 %2261
    %v2264 = vsel %vm416, %v2262, 0.0
    %2265 = vadd.xlane.f32.xlu0 %v2264
    %v2266 = vpop.xlane.xlu0 %2265
    %v2267 = vmul.f32 %v2266, %v420
    %v2268 = vadd.f32 %v2267, 1e-05
    %v2269 = vrsqrt.pop %v2268
    %v2270 = vmul.f32 %v2258, %v2269
    %v2271 = vmul.f32 %v2270, %v745
    %v2272 = vadd.f32 %v2271, %v754
    %2273 = vrot.lane.b32.xlu0 %v296, 64
    %v2274 = vpop.permute.xlu0 %2273
    %v2276 = vadd.f32 %v2272, %v2274
    %v2277 = vadd.f32 %v2052, %v2276
    %v2278 = vmul.f32 %v2277, 0.5
    %2279 = vmatprep.subr.mxu0 0.0
    %2280 = vmatpush1.msra.mxu0 0.0
    %2281 = vmatprep.subr.mxu0 0.0
    %2282 = vmatpush1.msra.mxu0 0.0
    %2283 = vmatprep.subr.mxu0 0.0
    %2284 = vmatpush1.msra.mxu0 0.0
    %2285 = vmatprep.subr.mxu0 0.0
    %2286 = vmatpush1.msra.mxu0 0.0
    %2287 = vmatprep.subr.mxu0 0.0
    %2288 = vmatpush1.msra.mxu0 0.0
    %2289 = vmatprep.subr.mxu0 0.0
    %2290 = vmatpush1.msra.mxu0 0.0
    %2291 = vmatprep.subr.mxu0 0.0
    %2292 = vmatpush1.msra.mxu0 0.0
    %2293 = vmatprep.subr.mxu0 0.0
    %2294 = vmatpush1.msra.mxu0 0.0
    %2295 = vmatprep.subr.mxu0 0.0
    %2296 = vmatpush1.msra.mxu0 0.0
    %2297 = vmatprep.subr.mxu0 0.0
    %2298 = vmatpush1.msra.mxu0 0.0
    %2299 = vmatprep.subr.mxu0 0.0
    %2300 = vmatpush1.msra.mxu0 0.0
    %2301 = vmatprep.subr.mxu0 0.0
    %2302 = vmatpush1.msra.mxu0 0.0
    %2303 = vmatprep.subr.mxu0 0.0
    %2304 = vmatpush1.msra.mxu0 %v301
    %2305 = vmatprep.subr.mxu0 0.0
    %2306 = vmatpush1.msra.mxu0 %v300
    %2307 = vmatprep.subr.mxu0 0.0
    %2308 = vmatpush1.msra.mxu0 %v299
    %2309 = vmatprep.subr.mxu0 0.0
    %2310 = vmatpush1.msra.mxu0 %v298
    %2311 = vmatprep.subr.mxu0 0.0
    %2312 = vmatpush2.msra.mxu0 0.0
    %2313 = vmatprep.subr.mxu0 0.0
    %2314 = vmatpush2.msra.mxu0 0.0
    %2315 = vmatprep.subr.mxu0 0.0
    %2316 = vmatpush2.msra.mxu0 0.0
    %2317 = vmatprep.subr.mxu0 0.0
    %2318 = vmatpush2.msra.mxu0 0.0
    %2319 = vmatprep.subr.mxu0 0.0
    %2320 = vmatpush2.msra.mxu0 0.0
    %2321 = vmatprep.subr.mxu0 0.0
    %2322 = vmatpush2.msra.mxu0 0.0
    %2323 = vmatprep.subr.mxu0 0.0
    %2324 = vmatpush2.msra.mxu0 0.0
    %2325 = vmatprep.subr.mxu0 0.0
    %2326 = vmatpush2.msra.mxu0 0.0
    %2327 = vmatprep.subr.mxu0 0.0
    %2328 = vmatpush2.msra.mxu0 0.0
    %2329 = vmatprep.subr.mxu0 0.0
    %2330 = vmatpush2.msra.mxu0 0.0
    %2331 = vmatprep.subr.mxu0 0.0
    %2332 = vmatpush2.msra.mxu0 0.0
    %2333 = vmatprep.subr.mxu0 0.0
    %2334 = vmatpush2.msra.mxu0 0.0
    %2335 = vmatprep.subr.mxu0 0.0
    %2336 = vmatpush2.msra.mxu0 0.0
    %2337 = vmatprep.subr.mxu0 0.0
    %2338 = vmatpush2.msra.mxu0 0.0
    %2339 = vmatprep.subr.mxu0 0.0
    %2340 = vmatpush2.msra.mxu0 0.0
    %2341 = vmatprep.subr.mxu0 0.0
    %2342 = vmatpush2.msra.mxu0 0.0
    %2343 = vmatprep.mubr.f32.mxu0 0.0
    %2344 = vmatmul.mubr.f32.gmra.mxu0 %v2130
    %v2345 = vpop.f32.mrf.mxu0
    %v2346 = vadd.f32 0.0, %v2345
    %v2347 = vpop.f32.mrf.mxu0
    %2348 = vdwg.mxu0
    %v2350 = vrot.slane %v2346, 6
    %v2352 = vadd.f32 %v294, %v2350
    %v2353 = vxor.u32 %v2352, 2147483648
    %v2354 = vmul.f32 %v2353, 1.442695
    %v2355 = vpow.pop %v2354
    %v2356 = vadd.f32 %v2355, 1.0
    %v2357 = vrcp.pop %v2356
    %v2358 = vmul.f32 1.0, %v2357
    %v2359 = vtanh.pop %v2352
    %v2361 = vrot.slane %v2018, 6
    %v2363 = vmul.f32 %v2358, %v2361
    %2365 = vrot.lane.b32.xlu0 %v2359, 64
    %v2366 = vpop.permute.xlu0 %2365
    %v2368 = vmul.f32 %v2358, %v2366
    %2370 = vrot.lane.b32.xlu0 %v2368, 32
    %v2371 = vpop.permute.xlu0 %2370
    %v2373 = vadd.f32 %v2363, %v2371
    %2375 = vrot.lane.b32.xlu0 %v2373, 96
    %v2376 = vpop.permute.xlu0 %2375
    %v2378 = vsel %vm862, %v2376, 0.0
    %2379 = vadd.xlane.f32.xlu0 %v2378
    %v2380 = vpop.xlane.xlu0 %2379
    %v2381 = vmul.f32 %v2380, %v420
    %v2382 = vsub.f32 %v2373, %v2381
    %v2383 = vmul.f32 %v2382, %v2382
    %2385 = vrot.lane.b32.xlu0 %v2383, 96
    %v2386 = vpop.permute.xlu0 %2385
    %v2388 = vsel %vm862, %v2386, 0.0
    %2389 = vadd.xlane.f32.xlu0 %v2388
    %v2390 = vpop.xlane.xlu0 %2389
    %v2391 = vmul.f32 %v2390, %v420
    %v2392 = vadd.f32 %v2391, 1e-05
    %v2393 = vrsqrt.pop %v2392
    %v2394 = vmul.f32 %v2382, %v2393
    %v2395 = vmul.f32 %v2394, %v441
    %v2396 = vadd.f32 %v2395, %v450
    %v2397 = vtanh.pop %v2396
    %2399 = vrot.lane.b32.xlu0 %v2397, 64
    %v2400 = vpop.permute.xlu0 %2399
    %v2402 = vmul.f32 %v2358, %v2400
    %2404 = vrot.lane.b32.xlu0 %v2402, 32
    %v2405 = vpop.permute.xlu0 %2404
    %v2407 = vsel %vm862, %v2405, 0.0
    %2408 = vadd.xlane.f32.xlu0 %v2407
    %v2409 = vpop.xlane.xlu0 %2408
    %v2410 = vmul.f32 %v2409, %v420
    %v2411 = vsub.f32 %v2402, %v2410
    %v2412 = vmul.f32 %v2411, %v2411
    %2414 = vrot.lane.b32.xlu0 %v2412, 32
    %v2415 = vpop.permute.xlu0 %2414
    %v2417 = vsel %vm862, %v2415, 0.0
    %2418 = vadd.xlane.f32.xlu0 %v2417
    %v2419 = vpop.xlane.xlu0 %2418
    %v2420 = vmul.f32 %v2419, %v420
    %v2421 = vadd.f32 %v2420, 1e-05
    %v2422 = vrsqrt.pop %v2421
    %v2423 = vmul.f32 %v2411, %v2422
    %v2424 = vmul.f32 %v2423, %v486
    %v2425 = vadd.f32 %v2424, %v495
    %v2426 = vadd.f32 %v2425, %v2050
    %2428 = vrot.lane.b32.xlu0 %v2276, 32
    %v2429 = vpop.permute.xlu0 %2428
    %v2430 = vsel %vm319, %v2429, 0
    %2432 = vmatprep.subr.mxu0 0.0
    %2433 = vmatpush1.msra.mxu0 0.0
    %2434 = vmatprep.subr.mxu0 0.0
    %2435 = vmatpush1.msra.mxu0 0.0
    %2436 = vmatprep.subr.mxu0 0.0
    %2437 = vmatpush1.msra.mxu0 0.0
    %2438 = vmatprep.subr.mxu0 0.0
    %2439 = vmatpush1.msra.mxu0 0.0
    %2440 = vmatprep.subr.mxu0 0.0
    %2441 = vmatpush1.msra.mxu0 0.0
    %2442 = vmatprep.subr.mxu0 0.0
    %2443 = vmatpush1.msra.mxu0 0.0
    %2444 = vmatprep.subr.mxu0 0.0
    %2445 = vmatpush1.msra.mxu0 0.0
    %2446 = vmatprep.subr.mxu0 0.0
    %2447 = vmatpush1.msra.mxu0 0.0
    %2448 = vmatprep.subr.mxu0 0.0
    %2449 = vmatpush1.msra.mxu0 0.0
    %2450 = vmatprep.subr.mxu0 0.0
    %2451 = vmatpush1.msra.mxu0 0.0
    %2452 = vmatprep.subr.mxu0 0.0
    %2453 = vmatpush1.msra.mxu0 0.0
    %2454 = vmatprep.subr.mxu0 0.0
    %2455 = vmatpush1.msra.mxu0 0.0
    %2456 = vmatprep.subr.mxu0 0.0
    %2457 = vmatpush1.msra.mxu0 %v313
    %2458 = vmatprep.subr.mxu0 0.0
    %2459 = vmatpush1.msra.mxu0 %v312
    %2460 = vmatprep.subr.mxu0 0.0
    %2461 = vmatpush1.msra.mxu0 %v311
    %2462 = vmatprep.subr.mxu0 0.0
    %2463 = vmatpush1.msra.mxu0 %v310
    %2464 = vmatprep.subr.mxu0 0.0
    %2465 = vmatpush2.msra.mxu0 0.0
    %2466 = vmatprep.subr.mxu0 0.0
    %2467 = vmatpush2.msra.mxu0 0.0
    %2468 = vmatprep.subr.mxu0 0.0
    %2469 = vmatpush2.msra.mxu0 0.0
    %2470 = vmatprep.subr.mxu0 0.0
    %2471 = vmatpush2.msra.mxu0 0.0
    %2472 = vmatprep.subr.mxu0 0.0
    %2473 = vmatpush2.msra.mxu0 0.0
    %2474 = vmatprep.subr.mxu0 0.0
    %2475 = vmatpush2.msra.mxu0 0.0
    %2476 = vmatprep.subr.mxu0 0.0
    %2477 = vmatpush2.msra.mxu0 0.0
    %2478 = vmatprep.subr.mxu0 0.0
    %2479 = vmatpush2.msra.mxu0 0.0
    %2480 = vmatprep.subr.mxu0 0.0
    %2481 = vmatpush2.msra.mxu0 0.0
    %2482 = vmatprep.subr.mxu0 0.0
    %2483 = vmatpush2.msra.mxu0 0.0
    %2484 = vmatprep.subr.mxu0 0.0
    %2485 = vmatpush2.msra.mxu0 0.0
    %2486 = vmatprep.subr.mxu0 0.0
    %2487 = vmatpush2.msra.mxu0 0.0
    %2488 = vmatprep.subr.mxu0 0.0
    %2489 = vmatpush2.msra.mxu0 0.0
    %2490 = vmatprep.subr.mxu0 0.0
    %2491 = vmatpush2.msra.mxu0 0.0
    %2492 = vmatprep.subr.mxu0 0.0
    %2493 = vmatpush2.msra.mxu0 0.0
    %2494 = vmatprep.subr.mxu0 0.0
    %2495 = vmatpush2.msra.mxu0 0.0
    %2496 = vmatprep.mubr.f32.mxu0 0.0
    %2497 = vmatmul.mubr.f32.gmra.mxu0 %v2430
    %v2498 = vpop.f32.mrf.mxu0
    %v2499 = vadd.f32 0.0, %v2498
    %v2500 = vpop.f32.mrf.mxu0
    %2501 = vdwg.mxu0
    %v2503 = vrot.slane %v2426, 2
    %2504 = vrot.lane.b32.xlu0 %v2503, 32
    %v2505 = vpop.permute.xlu0 %2504
    %v2506 = vsel %vm319, %v2505, 0
    %2508 = vmatprep.subr.mxu0 0.0
    %2509 = vmatpush1.msra.mxu0 0.0
    %2510 = vmatprep.subr.mxu0 0.0
    %2511 = vmatpush1.msra.mxu0 0.0
    %2512 = vmatprep.subr.mxu0 0.0
    %2513 = vmatpush1.msra.mxu0 0.0
    %2514 = vmatprep.subr.mxu0 0.0
    %2515 = vmatpush1.msra.mxu0 0.0
    %2516 = vmatprep.subr.mxu0 0.0
    %2517 = vmatpush1.msra.mxu0 0.0
    %2518 = vmatprep.subr.mxu0 0.0
    %2519 = vmatpush1.msra.mxu0 0.0
    %2520 = vmatprep.subr.mxu0 0.0
    %2521 = vmatpush1.msra.mxu0 0.0
    %2522 = vmatprep.subr.mxu0 0.0
    %2523 = vmatpush1.msra.mxu0 0.0
    %2524 = vmatprep.subr.mxu0 0.0
    %2525 = vmatpush1.msra.mxu0 0.0
    %2526 = vmatprep.subr.mxu0 0.0
    %2527 = vmatpush1.msra.mxu0 0.0
    %2528 = vmatprep.subr.mxu0 0.0
    %2529 = vmatpush1.msra.mxu0 0.0
    %2530 = vmatprep.subr.mxu0 0.0
    %2531 = vmatpush1.msra.mxu0 0.0
    %2532 = vmatprep.subr.mxu0 0.0
    %2533 = vmatpush1.msra.mxu0 %v309
    %2534 = vmatprep.subr.mxu0 0.0
    %2535 = vmatpush1.msra.mxu0 %v308
    %2536 = vmatprep.subr.mxu0 0.0
    %2537 = vmatpush1.msra.mxu0 %v307
    %2538 = vmatprep.subr.mxu0 0.0
    %2539 = vmatpush1.msra.mxu0 %v306
    %2540 = vmatprep.subr.mxu0 0.0
    %2541 = vmatpush2.msra.mxu0 0.0
    %2542 = vmatprep.subr.mxu0 0.0
    %2543 = vmatpush2.msra.mxu0 0.0
    %2544 = vmatprep.subr.mxu0 0.0
    %2545 = vmatpush2.msra.mxu0 0.0
    %2546 = vmatprep.subr.mxu0 0.0
    %2547 = vmatpush2.msra.mxu0 0.0
    %2548 = vmatprep.subr.mxu0 0.0
    %2549 = vmatpush2.msra.mxu0 0.0
    %2550 = vmatprep.subr.mxu0 0.0
    %2551 = vmatpush2.msra.mxu0 0.0
    %2552 = vmatprep.subr.mxu0 0.0
    %2553 = vmatpush2.msra.mxu0 0.0
    %2554 = vmatprep.subr.mxu0 0.0
    %2555 = vmatpush2.msra.mxu0 0.0
    %2556 = vmatprep.subr.mxu0 0.0
    %2557 = vmatpush2.msra.mxu0 0.0
    %2558 = vmatprep.subr.mxu0 0.0
    %2559 = vmatpush2.msra.mxu0 0.0
    %2560 = vmatprep.subr.mxu0 0.0
    %2561 = vmatpush2.msra.mxu0 0.0
    %2562 = vmatprep.subr.mxu0 0.0
    %2563 = vmatpush2.msra.mxu0 0.0
    %2564 = vmatprep.subr.mxu0 0.0
    %2565 = vmatpush2.msra.mxu0 0.0
    %2566 = vmatprep.subr.mxu0 0.0
    %2567 = vmatpush2.msra.mxu0 0.0
    %2568 = vmatprep.subr.mxu0 0.0
    %2569 = vmatpush2.msra.mxu0 0.0
    %2570 = vmatprep.subr.mxu0 0.0
    %2571 = vmatpush2.msra.mxu0 0.0
    %2572 = vmatprep.mubr.f32.mxu0 0.0
    %2573 = vmatmul.mubr.f32.gmra.mxu0 %v2506
    %v2574 = vpop.f32.mrf.mxu0
    %v2575 = vadd.f32 %v2499, %v2574
    %v2576 = vpop.f32.mrf.mxu0
    %2577 = vdwg.mxu0
    %v2578 = vadd.f32 %v2575, %v652
    %v2579 = vxor.u32 %v2578, 2147483648
    %v2580 = vmul.f32 %v2579, 1.442695
    %v2581 = vpow.pop %v2580
    %v2582 = vadd.f32 %v2581, 1.0
    %v2583 = vrcp.pop %v2582
    %v2584 = vmul.f32 1.0, %v2583
    %v2585 = vtanh.pop %v2578
    %v2586 = vmul.f32 %v2584, %v2243
    %2588 = vrot.lane.b32.xlu0 %v2585, 64
    %v2589 = vpop.permute.xlu0 %2588
    %v2591 = vmul.f32 %v2584, %v2589
    %2593 = vrot.lane.b32.xlu0 %v2591, 32
    %v2594 = vpop.permute.xlu0 %2593
    %v2596 = vadd.f32 %v2586, %v2594
    %2598 = vrot.lane.b32.xlu0 %v2596, 96
    %v2599 = vpop.permute.xlu0 %2598
    %v2601 = vsel %vm416, %v2599, 0.0
    %2602 = vadd.xlane.f32.xlu0 %v2601
    %v2603 = vpop.xlane.xlu0 %2602
    %v2604 = vmul.f32 %v2603, %v420
    %v2605 = vsub.f32 %v2596, %v2604
    %v2606 = vmul.f32 %v2605, %v2605
    %2608 = vrot.lane.b32.xlu0 %v2606, 96
    %v2609 = vpop.permute.xlu0 %2608
    %v2611 = vsel %vm416, %v2609, 0.0
    %2612 = vadd.xlane.f32.xlu0 %v2611
    %v2613 = vpop.xlane.xlu0 %2612
    %v2614 = vmul.f32 %v2613, %v420
    %v2615 = vadd.f32 %v2614, 1e-05
    %v2616 = vrsqrt.pop %v2615
    %v2617 = vmul.f32 %v2605, %v2616
    %v2618 = vmul.f32 %v2617, %v700
    %v2619 = vadd.f32 %v2618, %v709
    %v2620 = vtanh.pop %v2619
    %2622 = vrot.lane.b32.xlu0 %v2620, 64
    %v2623 = vpop.permute.xlu0 %2622
    %v2625 = vmul.f32 %v2584, %v2623
    %2627 = vrot.lane.b32.xlu0 %v2625, 32
    %v2628 = vpop.permute.xlu0 %2627
    %v2630 = vsel %vm416, %v2628, 0.0
    %2631 = vadd.xlane.f32.xlu0 %v2630
    %v2632 = vpop.xlane.xlu0 %2631
    %v2633 = vmul.f32 %v2632, %v420
    %v2634 = vsub.f32 %v2625, %v2633
    %v2635 = vmul.f32 %v2634, %v2634
    %2637 = vrot.lane.b32.xlu0 %v2635, 32
    %v2638 = vpop.permute.xlu0 %2637
    %v2640 = vsel %vm416, %v2638, 0.0
    %2641 = vadd.xlane.f32.xlu0 %v2640
    %v2642 = vpop.xlane.xlu0 %2641
    %v2643 = vmul.f32 %v2642, %v420
    %v2644 = vadd.f32 %v2643, 1e-05
    %v2645 = vrsqrt.pop %v2644
    %v2646 = vmul.f32 %v2634, %v2645
    %v2647 = vmul.f32 %v2646, %v745
    %v2648 = vadd.f32 %v2647, %v754
    %v2649 = vrot.slane %v296, 2
    %2650 = vrot.lane.b32.xlu0 %v2649, 64
    %v2651 = vpop.permute.xlu0 %2650
    %v2653 = vadd.f32 %v2648, %v2651
    %v2655 = vrot.slane %v2653, 6
    %v2657 = vadd.f32 %v2426, %v2655
    %v2658 = vmul.f32 %v2657, 0.5
    %2659 = vmatprep.subr.mxu0 0.0
    %2660 = vmatpush1.msra.mxu0 0.0
    %2661 = vmatprep.subr.mxu0 0.0
    %2662 = vmatpush1.msra.mxu0 0.0
    %2663 = vmatprep.subr.mxu0 0.0
    %2664 = vmatpush1.msra.mxu0 0.0
    %2665 = vmatprep.subr.mxu0 0.0
    %2666 = vmatpush1.msra.mxu0 0.0
    %2667 = vmatprep.subr.mxu0 0.0
    %2668 = vmatpush1.msra.mxu0 0.0
    %2669 = vmatprep.subr.mxu0 0.0
    %2670 = vmatpush1.msra.mxu0 0.0
    %2671 = vmatprep.subr.mxu0 0.0
    %2672 = vmatpush1.msra.mxu0 0.0
    %2673 = vmatprep.subr.mxu0 0.0
    %2674 = vmatpush1.msra.mxu0 0.0
    %2675 = vmatprep.subr.mxu0 0.0
    %2676 = vmatpush1.msra.mxu0 0.0
    %2677 = vmatprep.subr.mxu0 0.0
    %2678 = vmatpush1.msra.mxu0 0.0
    %2679 = vmatprep.subr.mxu0 0.0
    %2680 = vmatpush1.msra.mxu0 0.0
    %2681 = vmatprep.subr.mxu0 0.0
    %2682 = vmatpush1.msra.mxu0 0.0
    %2683 = vmatprep.subr.mxu0 0.0
    %2684 = vmatpush1.msra.mxu0 %v301
    %2685 = vmatprep.subr.mxu0 0.0
    %2686 = vmatpush1.msra.mxu0 %v300
    %2687 = vmatprep.subr.mxu0 0.0
    %2688 = vmatpush1.msra.mxu0 %v299
    %2689 = vmatprep.subr.mxu0 0.0
    %2690 = vmatpush1.msra.mxu0 %v298
    %2691 = vmatprep.subr.mxu0 0.0
    %2692 = vmatpush2.msra.mxu0 0.0
    %2693 = vmatprep.subr.mxu0 0.0
    %2694 = vmatpush2.msra.mxu0 0.0
    %2695 = vmatprep.subr.mxu0 0.0
    %2696 = vmatpush2.msra.mxu0 0.0
    %2697 = vmatprep.subr.mxu0 0.0
    %2698 = vmatpush2.msra.mxu0 0.0
    %2699 = vmatprep.subr.mxu0 0.0
    %2700 = vmatpush2.msra.mxu0 0.0
    %2701 = vmatprep.subr.mxu0 0.0
    %2702 = vmatpush2.msra.mxu0 0.0
    %2703 = vmatprep.subr.mxu0 0.0
    %2704 = vmatpush2.msra.mxu0 0.0
    %2705 = vmatprep.subr.mxu0 0.0
    %2706 = vmatpush2.msra.mxu0 0.0
    %2707 = vmatprep.subr.mxu0 0.0
    %2708 = vmatpush2.msra.mxu0 0.0
    %2709 = vmatprep.subr.mxu0 0.0
    %2710 = vmatpush2.msra.mxu0 0.0
    %2711 = vmatprep.subr.mxu0 0.0
    %2712 = vmatpush2.msra.mxu0 0.0
    %2713 = vmatprep.subr.mxu0 0.0
    %2714 = vmatpush2.msra.mxu0 0.0
    %2715 = vmatprep.subr.mxu0 0.0
    %2716 = vmatpush2.msra.mxu0 0.0
    %2717 = vmatprep.subr.mxu0 0.0
    %2718 = vmatpush2.msra.mxu0 0.0
    %2719 = vmatprep.subr.mxu0 0.0
    %2720 = vmatpush2.msra.mxu0 0.0
    %2721 = vmatprep.subr.mxu0 0.0
    %2722 = vmatpush2.msra.mxu0 0.0
    %2723 = vmatprep.mubr.f32.mxu0 0.0
    %2724 = vmatmul.mubr.f32.gmra.mxu0 %v2506
    %v2725 = vpop.f32.mrf.mxu0
    %v2726 = vadd.f32 0.0, %v2725
    %v2727 = vpop.f32.mrf.mxu0
    %2728 = vdwg.mxu0
    %v2730 = vrot.slane %v2726, 4
    %v2732 = vadd.f32 %v294, %v2730
    %v2733 = vxor.u32 %v2732, 2147483648
    %v2734 = vmul.f32 %v2733, 1.442695
    %v2735 = vpow.pop %v2734
    %v2736 = vadd.f32 %v2735, 1.0
    %v2737 = vrcp.pop %v2736
    %v2738 = vmul.f32 1.0, %v2737
    %v2739 = vtanh.pop %v2732
    %v2741 = vrot.slane %v2396, 6
    %v2743 = vmul.f32 %v2738, %v2741
    %2745 = vrot.lane.b32.xlu0 %v2739, 64
    %v2746 = vpop.permute.xlu0 %2745
    %v2748 = vmul.f32 %v2738, %v2746
    %2750 = vrot.lane.b32.xlu0 %v2748, 32
    %v2751 = vpop.permute.xlu0 %2750
    %v2753 = vadd.f32 %v2743, %v2751
    %2755 = vrot.lane.b32.xlu0 %v2753, 96
    %v2756 = vpop.permute.xlu0 %2755
    %v2758 = vsel %vm1243, %v2756, 0.0
    %2759 = vadd.xlane.f32.xlu0 %v2758
    %v2760 = vpop.xlane.xlu0 %2759
    %v2761 = vmul.f32 %v2760, %v420
    %v2762 = vsub.f32 %v2753, %v2761
    %v2763 = vmul.f32 %v2762, %v2762
    %2765 = vrot.lane.b32.xlu0 %v2763, 96
    %v2766 = vpop.permute.xlu0 %2765
    %v2768 = vsel %vm1243, %v2766, 0.0
    %2769 = vadd.xlane.f32.xlu0 %v2768
    %v2770 = vpop.xlane.xlu0 %2769
    %v2771 = vmul.f32 %v2770, %v420
    %v2772 = vadd.f32 %v2771, 1e-05
    %v2773 = vrsqrt.pop %v2772
    %v2774 = vmul.f32 %v2762, %v2773
    %v2775 = vmul.f32 %v2774, %v441
    %v2776 = vadd.f32 %v2775, %v450
    %v2777 = vtanh.pop %v2776
    %2779 = vrot.lane.b32.xlu0 %v2777, 64
    %v2780 = vpop.permute.xlu0 %2779
    %v2782 = vmul.f32 %v2738, %v2780
    %2784 = vrot.lane.b32.xlu0 %v2782, 32
    %v2785 = vpop.permute.xlu0 %2784
    %v2787 = vsel %vm1243, %v2785, 0.0
    %2788 = vadd.xlane.f32.xlu0 %v2787
    %v2789 = vpop.xlane.xlu0 %2788
    %v2790 = vmul.f32 %v2789, %v420
    %v2791 = vsub.f32 %v2782, %v2790
    %v2792 = vmul.f32 %v2791, %v2791
    %2794 = vrot.lane.b32.xlu0 %v2792, 32
    %v2795 = vpop.permute.xlu0 %2794
    %v2797 = vsel %vm1243, %v2795, 0.0
    %2798 = vadd.xlane.f32.xlu0 %v2797
    %v2799 = vpop.xlane.xlu0 %2798
    %v2800 = vmul.f32 %v2799, %v420
    %v2801 = vadd.f32 %v2800, 1e-05
    %v2802 = vrsqrt.pop %v2801
    %v2803 = vmul.f32 %v2791, %v2802
    %v2804 = vmul.f32 %v2803, %v486
    %v2805 = vadd.f32 %v2804, %v495
    %v2806 = vadd.f32 %v2805, %v2050
    %2807 = vrot.lane.b32.xlu0 %v2653, 32
    %v2808 = vpop.permute.xlu0 %2807
    %v2809 = vsel %vm319, %v2808, 0
    %2811 = vmatprep.subr.mxu0 0.0
    %2812 = vmatpush1.msra.mxu0 0.0
    %2813 = vmatprep.subr.mxu0 0.0
    %2814 = vmatpush1.msra.mxu0 0.0
    %2815 = vmatprep.subr.mxu0 0.0
    %2816 = vmatpush1.msra.mxu0 0.0
    %2817 = vmatprep.subr.mxu0 0.0
    %2818 = vmatpush1.msra.mxu0 0.0
    %2819 = vmatprep.subr.mxu0 0.0
    %2820 = vmatpush1.msra.mxu0 0.0
    %2821 = vmatprep.subr.mxu0 0.0
    %2822 = vmatpush1.msra.mxu0 0.0
    %2823 = vmatprep.subr.mxu0 0.0
    %2824 = vmatpush1.msra.mxu0 0.0
    %2825 = vmatprep.subr.mxu0 0.0
    %2826 = vmatpush1.msra.mxu0 0.0
    %2827 = vmatprep.subr.mxu0 0.0
    %2828 = vmatpush1.msra.mxu0 0.0
    %2829 = vmatprep.subr.mxu0 0.0
    %2830 = vmatpush1.msra.mxu0 0.0
    %2831 = vmatprep.subr.mxu0 0.0
    %2832 = vmatpush1.msra.mxu0 0.0
    %2833 = vmatprep.subr.mxu0 0.0
    %2834 = vmatpush1.msra.mxu0 0.0
    %2835 = vmatprep.subr.mxu0 0.0
    %2836 = vmatpush1.msra.mxu0 %v313
    %2837 = vmatprep.subr.mxu0 0.0
    %2838 = vmatpush1.msra.mxu0 %v312
    %2839 = vmatprep.subr.mxu0 0.0
    %2840 = vmatpush1.msra.mxu0 %v311
    %2841 = vmatprep.subr.mxu0 0.0
    %2842 = vmatpush1.msra.mxu0 %v310
    %2843 = vmatprep.subr.mxu0 0.0
    %2844 = vmatpush2.msra.mxu0 0.0
    %2845 = vmatprep.subr.mxu0 0.0
    %2846 = vmatpush2.msra.mxu0 0.0
    %2847 = vmatprep.subr.mxu0 0.0
    %2848 = vmatpush2.msra.mxu0 0.0
    %2849 = vmatprep.subr.mxu0 0.0
    %2850 = vmatpush2.msra.mxu0 0.0
    %2851 = vmatprep.subr.mxu0 0.0
    %2852 = vmatpush2.msra.mxu0 0.0
    %2853 = vmatprep.subr.mxu0 0.0
    %2854 = vmatpush2.msra.mxu0 0.0
    %2855 = vmatprep.subr.mxu0 0.0
    %2856 = vmatpush2.msra.mxu0 0.0
    %2857 = vmatprep.subr.mxu0 0.0
    %2858 = vmatpush2.msra.mxu0 0.0
    %2859 = vmatprep.subr.mxu0 0.0
    %2860 = vmatpush2.msra.mxu0 0.0
    %2861 = vmatprep.subr.mxu0 0.0
    %2862 = vmatpush2.msra.mxu0 0.0
    %2863 = vmatprep.subr.mxu0 0.0
    %2864 = vmatpush2.msra.mxu0 0.0
    %2865 = vmatprep.subr.mxu0 0.0
    %2866 = vmatpush2.msra.mxu0 0.0
    %2867 = vmatprep.subr.mxu0 0.0
    %2868 = vmatpush2.msra.mxu0 0.0
    %2869 = vmatprep.subr.mxu0 0.0
    %2870 = vmatpush2.msra.mxu0 0.0
    %2871 = vmatprep.subr.mxu0 0.0
    %2872 = vmatpush2.msra.mxu0 0.0
    %2873 = vmatprep.subr.mxu0 0.0
    %2874 = vmatpush2.msra.mxu0 0.0
    %2875 = vmatprep.mubr.f32.mxu0 0.0
    %2876 = vmatmul.mubr.f32.gmra.mxu0 %v2809
    %v2877 = vpop.f32.mrf.mxu0
    %v2878 = vadd.f32 0.0, %v2877
    %v2879 = vpop.f32.mrf.mxu0
    %2880 = vdwg.mxu0
    %v2882 = vrot.slane %v2806, 4
    %2883 = vrot.lane.b32.xlu0 %v2882, 32
    %v2884 = vpop.permute.xlu0 %2883
    %v2885 = vsel %vm319, %v2884, 0
    %2887 = vmatprep.subr.mxu0 0.0
    %2888 = vmatpush1.msra.mxu0 0.0
    %2889 = vmatprep.subr.mxu0 0.0
    %2890 = vmatpush1.msra.mxu0 0.0
    %2891 = vmatprep.subr.mxu0 0.0
    %2892 = vmatpush1.msra.mxu0 0.0
    %2893 = vmatprep.subr.mxu0 0.0
    %2894 = vmatpush1.msra.mxu0 0.0
    %2895 = vmatprep.subr.mxu0 0.0
    %2896 = vmatpush1.msra.mxu0 0.0
    %2897 = vmatprep.subr.mxu0 0.0
    %2898 = vmatpush1.msra.mxu0 0.0
    %2899 = vmatprep.subr.mxu0 0.0
    %2900 = vmatpush1.msra.mxu0 0.0
    %2901 = vmatprep.subr.mxu0 0.0
    %2902 = vmatpush1.msra.mxu0 0.0
    %2903 = vmatprep.subr.mxu0 0.0
    %2904 = vmatpush1.msra.mxu0 0.0
    %2905 = vmatprep.subr.mxu0 0.0
    %2906 = vmatpush1.msra.mxu0 0.0
    %2907 = vmatprep.subr.mxu0 0.0
    %2908 = vmatpush1.msra.mxu0 0.0
    %2909 = vmatprep.subr.mxu0 0.0
    %2910 = vmatpush1.msra.mxu0 0.0
    %2911 = vmatprep.subr.mxu0 0.0
    %2912 = vmatpush1.msra.mxu0 %v309
    %2913 = vmatprep.subr.mxu0 0.0
    %2914 = vmatpush1.msra.mxu0 %v308
    %2915 = vmatprep.subr.mxu0 0.0
    %2916 = vmatpush1.msra.mxu0 %v307
    %2917 = vmatprep.subr.mxu0 0.0
    %2918 = vmatpush1.msra.mxu0 %v306
    %2919 = vmatprep.subr.mxu0 0.0
    %2920 = vmatpush2.msra.mxu0 0.0
    %2921 = vmatprep.subr.mxu0 0.0
    %2922 = vmatpush2.msra.mxu0 0.0
    %2923 = vmatprep.subr.mxu0 0.0
    %2924 = vmatpush2.msra.mxu0 0.0
    %2925 = vmatprep.subr.mxu0 0.0
    %2926 = vmatpush2.msra.mxu0 0.0
    %2927 = vmatprep.subr.mxu0 0.0
    %2928 = vmatpush2.msra.mxu0 0.0
    %2929 = vmatprep.subr.mxu0 0.0
    %2930 = vmatpush2.msra.mxu0 0.0
    %2931 = vmatprep.subr.mxu0 0.0
    %2932 = vmatpush2.msra.mxu0 0.0
    %2933 = vmatprep.subr.mxu0 0.0
    %2934 = vmatpush2.msra.mxu0 0.0
    %2935 = vmatprep.subr.mxu0 0.0
    %2936 = vmatpush2.msra.mxu0 0.0
    %2937 = vmatprep.subr.mxu0 0.0
    %2938 = vmatpush2.msra.mxu0 0.0
    %2939 = vmatprep.subr.mxu0 0.0
    %2940 = vmatpush2.msra.mxu0 0.0
    %2941 = vmatprep.subr.mxu0 0.0
    %2942 = vmatpush2.msra.mxu0 0.0
    %2943 = vmatprep.subr.mxu0 0.0
    %2944 = vmatpush2.msra.mxu0 0.0
    %2945 = vmatprep.subr.mxu0 0.0
    %2946 = vmatpush2.msra.mxu0 0.0
    %2947 = vmatprep.subr.mxu0 0.0
    %2948 = vmatpush2.msra.mxu0 0.0
    %2949 = vmatprep.subr.mxu0 0.0
    %2950 = vmatpush2.msra.mxu0 0.0
    %2951 = vmatprep.mubr.f32.mxu0 0.0
    %2952 = vmatmul.mubr.f32.gmra.mxu0 %v2885
    %v2953 = vpop.f32.mrf.mxu0
    %v2954 = vadd.f32 %v2878, %v2953
    %v2955 = vpop.f32.mrf.mxu0
    %2956 = vdwg.mxu0
    %v2957 = vadd.f32 %v2954, %v652
    %v2958 = vxor.u32 %v2957, 2147483648
    %v2959 = vmul.f32 %v2958, 1.442695
    %v2960 = vpow.pop %v2959
    %v2961 = vadd.f32 %v2960, 1.0
    %v2962 = vrcp.pop %v2961
    %v2963 = vmul.f32 1.0, %v2962
    %v2964 = vtanh.pop %v2957
    %v2965 = vmul.f32 %v2963, %v2619
    %2967 = vrot.lane.b32.xlu0 %v2964, 64
    %v2968 = vpop.permute.xlu0 %2967
    %v2970 = vmul.f32 %v2963, %v2968
    %2972 = vrot.lane.b32.xlu0 %v2970, 32
    %v2973 = vpop.permute.xlu0 %2972
    %v2975 = vadd.f32 %v2965, %v2973
    %2977 = vrot.lane.b32.xlu0 %v2975, 96
    %v2978 = vpop.permute.xlu0 %2977
    %v2980 = vsel %vm416, %v2978, 0.0
    %2981 = vadd.xlane.f32.xlu0 %v2980
    %v2982 = vpop.xlane.xlu0 %2981
    %v2983 = vmul.f32 %v2982, %v420
    %v2984 = vsub.f32 %v2975, %v2983
    %v2985 = vmul.f32 %v2984, %v2984
    %2987 = vrot.lane.b32.xlu0 %v2985, 96
    %v2988 = vpop.permute.xlu0 %2987
    %v2990 = vsel %vm416, %v2988, 0.0
    %2991 = vadd.xlane.f32.xlu0 %v2990
    %v2992 = vpop.xlane.xlu0 %2991
    %v2993 = vmul.f32 %v2992, %v420
    %v2994 = vadd.f32 %v2993, 1e-05
    %v2995 = vrsqrt.pop %v2994
    %v2996 = vmul.f32 %v2984, %v2995
    %v2997 = vmul.f32 %v2996, %v700
    %v2998 = vadd.f32 %v2997, %v709
    %v2999 = vtanh.pop %v2998
    %3001 = vrot.lane.b32.xlu0 %v2999, 64
    %v3002 = vpop.permute.xlu0 %3001
    %v3004 = vmul.f32 %v2963, %v3002
    %3006 = vrot.lane.b32.xlu0 %v3004, 32
    %v3007 = vpop.permute.xlu0 %3006
    %v3009 = vsel %vm416, %v3007, 0.0
    %3010 = vadd.xlane.f32.xlu0 %v3009
    %v3011 = vpop.xlane.xlu0 %3010
    %v3012 = vmul.f32 %v3011, %v420
    %v3013 = vsub.f32 %v3004, %v3012
    %v3014 = vmul.f32 %v3013, %v3013
    %3016 = vrot.lane.b32.xlu0 %v3014, 32
    %v3017 = vpop.permute.xlu0 %3016
    %v3019 = vsel %vm416, %v3017, 0.0
    %3020 = vadd.xlane.f32.xlu0 %v3019
    %v3021 = vpop.xlane.xlu0 %3020
    %v3022 = vmul.f32 %v3021, %v420
    %v3023 = vadd.f32 %v3022, 1e-05
    %v3024 = vrsqrt.pop %v3023
    %v3025 = vmul.f32 %v3013, %v3024
    %v3026 = vmul.f32 %v3025, %v745
    %v3027 = vadd.f32 %v3026, %v754
    %v3028 = vrot.slane %v296, 4
    %3029 = vrot.lane.b32.xlu0 %v3028, 64
    %v3030 = vpop.permute.xlu0 %3029
    %v3032 = vadd.f32 %v3027, %v3030
    %v3034 = vrot.slane %v3032, 4
    %v3036 = vadd.f32 %v2806, %v3034
    %v3037 = vmul.f32 %v3036, 0.5
    %3038 = vmatprep.subr.mxu0 0.0
    %3039 = vmatpush1.msra.mxu0 0.0
    %3040 = vmatprep.subr.mxu0 0.0
    %3041 = vmatpush1.msra.mxu0 0.0
    %3042 = vmatprep.subr.mxu0 0.0
    %3043 = vmatpush1.msra.mxu0 0.0
    %3044 = vmatprep.subr.mxu0 0.0
    %3045 = vmatpush1.msra.mxu0 0.0
    %3046 = vmatprep.subr.mxu0 0.0
    %3047 = vmatpush1.msra.mxu0 0.0
    %3048 = vmatprep.subr.mxu0 0.0
    %3049 = vmatpush1.msra.mxu0 0.0
    %3050 = vmatprep.subr.mxu0 0.0
    %3051 = vmatpush1.msra.mxu0 0.0
    %3052 = vmatprep.subr.mxu0 0.0
    %3053 = vmatpush1.msra.mxu0 0.0
    %3054 = vmatprep.subr.mxu0 0.0
    %3055 = vmatpush1.msra.mxu0 0.0
    %3056 = vmatprep.subr.mxu0 0.0
    %3057 = vmatpush1.msra.mxu0 0.0
    %3058 = vmatprep.subr.mxu0 0.0
    %3059 = vmatpush1.msra.mxu0 0.0
    %3060 = vmatprep.subr.mxu0 0.0
    %3061 = vmatpush1.msra.mxu0 0.0
    %3062 = vmatprep.subr.mxu0 0.0
    %3063 = vmatpush1.msra.mxu0 %v301
    %3064 = vmatprep.subr.mxu0 0.0
    %3065 = vmatpush1.msra.mxu0 %v300
    %3066 = vmatprep.subr.mxu0 0.0
    %3067 = vmatpush1.msra.mxu0 %v299
    %3068 = vmatprep.subr.mxu0 0.0
    %3069 = vmatpush1.msra.mxu0 %v298
    %3070 = vmatprep.subr.mxu0 0.0
    %3071 = vmatpush2.msra.mxu0 0.0
    %3072 = vmatprep.subr.mxu0 0.0
    %3073 = vmatpush2.msra.mxu0 0.0
    %3074 = vmatprep.subr.mxu0 0.0
    %3075 = vmatpush2.msra.mxu0 0.0
    %3076 = vmatprep.subr.mxu0 0.0
    %3077 = vmatpush2.msra.mxu0 0.0
    %3078 = vmatprep.subr.mxu0 0.0
    %3079 = vmatpush2.msra.mxu0 0.0
    %3080 = vmatprep.subr.mxu0 0.0
    %3081 = vmatpush2.msra.mxu0 0.0
    %3082 = vmatprep.subr.mxu0 0.0
    %3083 = vmatpush2.msra.mxu0 0.0
    %3084 = vmatprep.subr.mxu0 0.0
    %3085 = vmatpush2.msra.mxu0 0.0
    %3086 = vmatprep.subr.mxu0 0.0
    %3087 = vmatpush2.msra.mxu0 0.0
    %3088 = vmatprep.subr.mxu0 0.0
    %3089 = vmatpush2.msra.mxu0 0.0
    %3090 = vmatprep.subr.mxu0 0.0
    %3091 = vmatpush2.msra.mxu0 0.0
    %3092 = vmatprep.subr.mxu0 0.0
    %3093 = vmatpush2.msra.mxu0 0.0
    %3094 = vmatprep.subr.mxu0 0.0
    %3095 = vmatpush2.msra.mxu0 0.0
    %3096 = vmatprep.subr.mxu0 0.0
    %3097 = vmatpush2.msra.mxu0 0.0
    %3098 = vmatprep.subr.mxu0 0.0
    %3099 = vmatpush2.msra.mxu0 0.0
    %3100 = vmatprep.subr.mxu0 0.0
    %3101 = vmatpush2.msra.mxu0 0.0
    %3102 = vmatprep.mubr.f32.mxu0 0.0
    %3103 = vmatmul.mubr.f32.gmra.mxu0 %v2885
    %v3104 = vpop.f32.mrf.mxu0
    %v3105 = vadd.f32 0.0, %v3104
    %v3106 = vpop.f32.mrf.mxu0
    %3107 = vdwg.mxu0
    %v3109 = vrot.slane %v3105, 2
    %v3111 = vadd.f32 %v294, %v3109
    %v3112 = vxor.u32 %v3111, 2147483648
    %v3113 = vmul.f32 %v3112, 1.442695
    %v3114 = vpow.pop %v3113
    %v3115 = vadd.f32 %v3114, 1.0
    %v3116 = vrcp.pop %v3115
    %v3117 = vmul.f32 1.0, %v3116
    %v3118 = vtanh.pop %v3111
    %v3120 = vrot.slane %v2776, 6
    %v3122 = vmul.f32 %v3117, %v3120
    %3124 = vrot.lane.b32.xlu0 %v3118, 64
    %v3125 = vpop.permute.xlu0 %3124
    %v3127 = vmul.f32 %v3117, %v3125
    %3129 = vrot.lane.b32.xlu0 %v3127, 32
    %v3130 = vpop.permute.xlu0 %3129
    %v3132 = vadd.f32 %v3122, %v3130
    %3134 = vrot.lane.b32.xlu0 %v3132, 96
    %v3135 = vpop.permute.xlu0 %3134
    %v3137 = vsel %vm1623, %v3135, 0.0
    %3138 = vadd.xlane.f32.xlu0 %v3137
    %v3139 = vpop.xlane.xlu0 %3138
    %v3140 = vmul.f32 %v3139, %v420
    %v3141 = vsub.f32 %v3132, %v3140
    %v3142 = vmul.f32 %v3141, %v3141
    %3144 = vrot.lane.b32.xlu0 %v3142, 96
    %v3145 = vpop.permute.xlu0 %3144
    %v3147 = vsel %vm1623, %v3145, 0.0
    %3148 = vadd.xlane.f32.xlu0 %v3147
    %v3149 = vpop.xlane.xlu0 %3148
    %v3150 = vmul.f32 %v3149, %v420
    %v3151 = vadd.f32 %v3150, 1e-05
    %v3152 = vrsqrt.pop %v3151
    %v3153 = vmul.f32 %v3141, %v3152
    %v3154 = vmul.f32 %v3153, %v441
    %v3155 = vadd.f32 %v3154, %v450
    %v3156 = vtanh.pop %v3155
    %3158 = vrot.lane.b32.xlu0 %v3156, 64
    %v3159 = vpop.permute.xlu0 %3158
    %v3161 = vmul.f32 %v3117, %v3159
    %3163 = vrot.lane.b32.xlu0 %v3161, 32
    %v3164 = vpop.permute.xlu0 %3163
    %v3166 = vsel %vm1623, %v3164, 0.0
    %3167 = vadd.xlane.f32.xlu0 %v3166
    %v3168 = vpop.xlane.xlu0 %3167
    %v3169 = vmul.f32 %v3168, %v420
    %v3170 = vsub.f32 %v3161, %v3169
    %v3171 = vmul.f32 %v3170, %v3170
    %3173 = vrot.lane.b32.xlu0 %v3171, 32
    %v3174 = vpop.permute.xlu0 %3173
    %v3176 = vsel %vm1623, %v3174, 0.0
    %3177 = vadd.xlane.f32.xlu0 %v3176
    %v3178 = vpop.xlane.xlu0 %3177
    %v3179 = vmul.f32 %v3178, %v420
    %v3180 = vadd.f32 %v3179, 1e-05
    %v3181 = vrsqrt.pop %v3180
    %v3182 = vmul.f32 %v3170, %v3181
    %v3183 = vmul.f32 %v3182, %v486
    %v3184 = vadd.f32 %v3183, %v495
    %v3185 = vadd.f32 %v3184, %v2050
    %3186 = vrot.lane.b32.xlu0 %v3032, 32
    %v3187 = vpop.permute.xlu0 %3186
    %v3188 = vsel %vm319, %v3187, 0
    %3190 = vmatprep.subr.mxu0 0.0
    %3191 = vmatpush1.msra.mxu0 0.0
    %3192 = vmatprep.subr.mxu0 0.0
    %3193 = vmatpush1.msra.mxu0 0.0
    %3194 = vmatprep.subr.mxu0 0.0
    %3195 = vmatpush1.msra.mxu0 0.0
    %3196 = vmatprep.subr.mxu0 0.0
    %3197 = vmatpush1.msra.mxu0 0.0
    %3198 = vmatprep.subr.mxu0 0.0
    %3199 = vmatpush1.msra.mxu0 0.0
    %3200 = vmatprep.subr.mxu0 0.0
    %3201 = vmatpush1.msra.mxu0 0.0
    %3202 = vmatprep.subr.mxu0 0.0
    %3203 = vmatpush1.msra.mxu0 0.0
    %3204 = vmatprep.subr.mxu0 0.0
    %3205 = vmatpush1.msra.mxu0 0.0
    %3206 = vmatprep.subr.mxu0 0.0
    %3207 = vmatpush1.msra.mxu0 0.0
    %3208 = vmatprep.subr.mxu0 0.0
    %3209 = vmatpush1.msra.mxu0 0.0
    %3210 = vmatprep.subr.mxu0 0.0
    %3211 = vmatpush1.msra.mxu0 0.0
    %3212 = vmatprep.subr.mxu0 0.0
    %3213 = vmatpush1.msra.mxu0 0.0
    %3214 = vmatprep.subr.mxu0 0.0
    %3215 = vmatpush1.msra.mxu0 %v313
    %3216 = vmatprep.subr.mxu0 0.0
    %3217 = vmatpush1.msra.mxu0 %v312
    %3218 = vmatprep.subr.mxu0 0.0
    %3219 = vmatpush1.msra.mxu0 %v311
    %3220 = vmatprep.subr.mxu0 0.0
    %3221 = vmatpush1.msra.mxu0 %v310
    %3222 = vmatprep.subr.mxu0 0.0
    %3223 = vmatpush2.msra.mxu0 0.0
    %3224 = vmatprep.subr.mxu0 0.0
    %3225 = vmatpush2.msra.mxu0 0.0
    %3226 = vmatprep.subr.mxu0 0.0
    %3227 = vmatpush2.msra.mxu0 0.0
    %3228 = vmatprep.subr.mxu0 0.0
    %3229 = vmatpush2.msra.mxu0 0.0
    %3230 = vmatprep.subr.mxu0 0.0
    %3231 = vmatpush2.msra.mxu0 0.0
    %3232 = vmatprep.subr.mxu0 0.0
    %3233 = vmatpush2.msra.mxu0 0.0
    %3234 = vmatprep.subr.mxu0 0.0
    %3235 = vmatpush2.msra.mxu0 0.0
    %3236 = vmatprep.subr.mxu0 0.0
    %3237 = vmatpush2.msra.mxu0 0.0
    %3238 = vmatprep.subr.mxu0 0.0
    %3239 = vmatpush2.msra.mxu0 0.0
    %3240 = vmatprep.subr.mxu0 0.0
    %3241 = vmatpush2.msra.mxu0 0.0
    %3242 = vmatprep.subr.mxu0 0.0
    %3243 = vmatpush2.msra.mxu0 0.0
    %3244 = vmatprep.subr.mxu0 0.0
    %3245 = vmatpush2.msra.mxu0 0.0
    %3246 = vmatprep.subr.mxu0 0.0
    %3247 = vmatpush2.msra.mxu0 0.0
    %3248 = vmatprep.subr.mxu0 0.0
    %3249 = vmatpush2.msra.mxu0 0.0
    %3250 = vmatprep.subr.mxu0 0.0
    %3251 = vmatpush2.msra.mxu0 0.0
    %3252 = vmatprep.subr.mxu0 0.0
    %3253 = vmatpush2.msra.mxu0 0.0
    %3254 = vmatprep.mubr.f32.mxu0 0.0
    %3255 = vmatmul.mubr.f32.gmra.mxu0 %v3188
    %v3256 = vpop.f32.mrf.mxu0
    %v3257 = vadd.f32 0.0, %v3256
    %v3258 = vpop.f32.mrf.mxu0
    %3259 = vdwg.mxu0
    %v3261 = vrot.slane %v3185, 6
    %3262 = vrot.lane.b32.xlu0 %v3261, 32
    %v3263 = vpop.permute.xlu0 %3262
    %v3264 = vsel %vm319, %v3263, 0
    %3266 = vmatprep.subr.mxu0 0.0
    %3267 = vmatpush1.msra.mxu0 0.0
    %3268 = vmatprep.subr.mxu0 0.0
    %3269 = vmatpush1.msra.mxu0 0.0
    %3270 = vmatprep.subr.mxu0 0.0
    %3271 = vmatpush1.msra.mxu0 0.0
    %3272 = vmatprep.subr.mxu0 0.0
    %3273 = vmatpush1.msra.mxu0 0.0
    %3274 = vmatprep.subr.mxu0 0.0
    %3275 = vmatpush1.msra.mxu0 0.0
    %3276 = vmatprep.subr.mxu0 0.0
    %3277 = vmatpush1.msra.mxu0 0.0
    %3278 = vmatprep.subr.mxu0 0.0
    %3279 = vmatpush1.msra.mxu0 0.0
    %3280 = vmatprep.subr.mxu0 0.0
    %3281 = vmatpush1.msra.mxu0 0.0
    %3282 = vmatprep.subr.mxu0 0.0
    %3283 = vmatpush1.msra.mxu0 0.0
    %3284 = vmatprep.subr.mxu0 0.0
    %3285 = vmatpush1.msra.mxu0 0.0
    %3286 = vmatprep.subr.mxu0 0.0
    %3287 = vmatpush1.msra.mxu0 0.0
    %3288 = vmatprep.subr.mxu0 0.0
    %3289 = vmatpush1.msra.mxu0 0.0
    %3290 = vmatprep.subr.mxu0 0.0
    %3291 = vmatpush1.msra.mxu0 %v309
    %3292 = vmatprep.subr.mxu0 0.0
    %3293 = vmatpush1.msra.mxu0 %v308
    %3294 = vmatprep.subr.mxu0 0.0
    %3295 = vmatpush1.msra.mxu0 %v307
    %3296 = vmatprep.subr.mxu0 0.0
    %3297 = vmatpush1.msra.mxu0 %v306
    %3298 = vmatprep.subr.mxu0 0.0
    %3299 = vmatpush2.msra.mxu0 0.0
    %3300 = vmatprep.subr.mxu0 0.0
    %3301 = vmatpush2.msra.mxu0 0.0
    %3302 = vmatprep.subr.mxu0 0.0
    %3303 = vmatpush2.msra.mxu0 0.0
    %3304 = vmatprep.subr.mxu0 0.0
    %3305 = vmatpush2.msra.mxu0 0.0
    %3306 = vmatprep.subr.mxu0 0.0
    %3307 = vmatpush2.msra.mxu0 0.0
    %3308 = vmatprep.subr.mxu0 0.0
    %3309 = vmatpush2.msra.mxu0 0.0
    %3310 = vmatprep.subr.mxu0 0.0
    %3311 = vmatpush2.msra.mxu0 0.0
    %3312 = vmatprep.subr.mxu0 0.0
    %3313 = vmatpush2.msra.mxu0 0.0
    %3314 = vmatprep.subr.mxu0 0.0
    %3315 = vmatpush2.msra.mxu0 0.0
    %3316 = vmatprep.subr.mxu0 0.0
    %3317 = vmatpush2.msra.mxu0 0.0
    %3318 = vmatprep.subr.mxu0 0.0
    %3319 = vmatpush2.msra.mxu0 0.0
    %3320 = vmatprep.subr.mxu0 0.0
    %3321 = vmatpush2.msra.mxu0 0.0
    %3322 = vmatprep.subr.mxu0 0.0
    %3323 = vmatpush2.msra.mxu0 0.0
    %3324 = vmatprep.subr.mxu0 0.0
    %3325 = vmatpush2.msra.mxu0 0.0
    %3326 = vmatprep.subr.mxu0 0.0
    %3327 = vmatpush2.msra.mxu0 0.0
    %3328 = vmatprep.subr.mxu0 0.0
    %3329 = vmatpush2.msra.mxu0 0.0
    %3330 = vmatprep.mubr.f32.mxu0 0.0
    %3331 = vmatmul.mubr.f32.gmra.mxu0 %v3264
    %v3332 = vpop.f32.mrf.mxu0
    %v3333 = vadd.f32 %v3257, %v3332
    %v3334 = vpop.f32.mrf.mxu0
    %3335 = vdwg.mxu0
    %v3336 = vadd.f32 %v3333, %v652
    %v3337 = vxor.u32 %v3336, 2147483648
    %v3338 = vmul.f32 %v3337, 1.442695
    %v3339 = vpow.pop %v3338
    %v3340 = vadd.f32 %v3339, 1.0
    %v3341 = vrcp.pop %v3340
    %v3342 = vmul.f32 1.0, %v3341
    %v3343 = vtanh.pop %v3336
    %v3344 = vmul.f32 %v3342, %v2998
    %3346 = vrot.lane.b32.xlu0 %v3343, 64
    %v3347 = vpop.permute.xlu0 %3346
    %v3349 = vmul.f32 %v3342, %v3347
    %3351 = vrot.lane.b32.xlu0 %v3349, 32
    %v3352 = vpop.permute.xlu0 %3351
    %v3354 = vadd.f32 %v3344, %v3352
    %3356 = vrot.lane.b32.xlu0 %v3354, 96
    %v3357 = vpop.permute.xlu0 %3356
    %v3359 = vsel %vm416, %v3357, 0.0
    %3360 = vadd.xlane.f32.xlu0 %v3359
    %v3361 = vpop.xlane.xlu0 %3360
    %v3362 = vmul.f32 %v3361, %v420
    %v3363 = vsub.f32 %v3354, %v3362
    %v3364 = vmul.f32 %v3363, %v3363
    %3366 = vrot.lane.b32.xlu0 %v3364, 96
    %v3367 = vpop.permute.xlu0 %3366
    %v3369 = vsel %vm416, %v3367, 0.0
    %3370 = vadd.xlane.f32.xlu0 %v3369
    %v3371 = vpop.xlane.xlu0 %3370
    %v3372 = vmul.f32 %v3371, %v420
    %v3373 = vadd.f32 %v3372, 1e-05
    %v3374 = vrsqrt.pop %v3373
    %v3375 = vmul.f32 %v3363, %v3374
    %v3376 = vmul.f32 %v3375, %v700
    %v3377 = vadd.f32 %v3376, %v709
    %v3378 = vtanh.pop %v3377
    %3380 = vrot.lane.b32.xlu0 %v3378, 64
    %v3381 = vpop.permute.xlu0 %3380
    %v3383 = vmul.f32 %v3342, %v3381
    %3385 = vrot.lane.b32.xlu0 %v3383, 32
    %v3386 = vpop.permute.xlu0 %3385
    %v3388 = vsel %vm416, %v3386, 0.0
    %3389 = vadd.xlane.f32.xlu0 %v3388
    %v3390 = vpop.xlane.xlu0 %3389
    %v3391 = vmul.f32 %v3390, %v420
    %v3392 = vsub.f32 %v3383, %v3391
    %v3393 = vmul.f32 %v3392, %v3392
    %3395 = vrot.lane.b32.xlu0 %v3393, 32
    %v3396 = vpop.permute.xlu0 %3395
    %v3398 = vsel %vm416, %v3396, 0.0
    %3399 = vadd.xlane.f32.xlu0 %v3398
    %v3400 = vpop.xlane.xlu0 %3399
    %v3401 = vmul.f32 %v3400, %v420
    %v3402 = vadd.f32 %v3401, 1e-05
    %v3403 = vrsqrt.pop %v3402
    %v3404 = vmul.f32 %v3392, %v3403
    %v3405 = vmul.f32 %v3404, %v745
    %v3406 = vadd.f32 %v3405, %v754
    %v3407 = vrot.slane %v296, 6
    %3408 = vrot.lane.b32.xlu0 %v3407, 64
    %v3409 = vpop.permute.xlu0 %3408
    %v3411 = vadd.f32 %v3406, %v3409
    %v3413 = vrot.slane %v3411, 2
    %v3415 = vadd.f32 %v3185, %v3413
    %v3416 = vmul.f32 %v3415, 0.5
    %v3417 = vld [vmem:[%s15] sm:$0xff]
    %v3418 = vld [vmem:[%s15 + $0x8] sm:$0xff]
    %v3419 = vld [vmem:[%s15 + $0x10] sm:$0xff]
    %v3420 = vld [vmem:[%s15 + $0x18] sm:$0xff]
    %v3421 = vld [vmem:[%s16] sm:$0x1]
    %v3422 = vld [vmem:[%s17] sm:$0xff]
    %v3423 = vld [vmem:[%s17 + $0x8] sm:$0xff]
    %v3424 = vld [vmem:[%s17 + $0x10] sm:$0xff]
    %v3425 = vld [vmem:[%s17 + $0x18] sm:$0xff]
    %v3426 = vld [vmem:[#allocation2] sm:$0x1]
    %v3428 = vlaneseq
    %v3429 = vshrl.u32 %v3428, 7
    %v3430 = vsub.s32 0, %v3429
    %v3431 = vrot.slane %v3421, %v3430
    %3434 = vrot.lane.b32.xlu0 %v762, 32
    %v3435 = vpop.permute.xlu0 %3434
    %v3436 = vsel %vm319, %v3435, 0
    %3438 = vmatprep.subr.mxu0 0.0
    %3439 = vmatpush1.msra.mxu0 0.0
    %3440 = vmatprep.subr.mxu0 0.0
    %3441 = vmatpush1.msra.mxu0 0.0
    %3442 = vmatprep.subr.mxu0 0.0
    %3443 = vmatpush1.msra.mxu0 0.0
    %3444 = vmatprep.subr.mxu0 0.0
    %3445 = vmatpush1.msra.mxu0 0.0
    %3446 = vmatprep.subr.mxu0 0.0
    %3447 = vmatpush1.msra.mxu0 0.0
    %3448 = vmatprep.subr.mxu0 0.0
    %3449 = vmatpush1.msra.mxu0 0.0
    %3450 = vmatprep.subr.mxu0 0.0
    %3451 = vmatpush1.msra.mxu0 0.0
    %3452 = vmatprep.subr.mxu0 0.0
    %3453 = vmatpush1.msra.mxu0 0.0
    %3454 = vmatprep.subr.mxu0 0.0
    %3455 = vmatpush1.msra.mxu0 0.0
    %3456 = vmatprep.subr.mxu0 0.0
    %3457 = vmatpush1.msra.mxu0 0.0
    %3458 = vmatprep.subr.mxu0 0.0
    %3459 = vmatpush1.msra.mxu0 0.0
    %3460 = vmatprep.subr.mxu0 0.0
    %3461 = vmatpush1.msra.mxu0 0.0
    %3462 = vmatprep.subr.mxu0 0.0
    %3463 = vmatpush1.msra.mxu0 %v3420
    %3464 = vmatprep.subr.mxu0 0.0
    %3465 = vmatpush1.msra.mxu0 %v3419
    %3466 = vmatprep.subr.mxu0 0.0
    %3467 = vmatpush1.msra.mxu0 %v3418
    %3468 = vmatprep.subr.mxu0 0.0
    %3469 = vmatpush1.msra.mxu0 %v3417
    %3470 = vmatprep.subr.mxu0 0.0
    %3471 = vmatpush2.msra.mxu0 0.0
    %3472 = vmatprep.subr.mxu0 0.0
    %3473 = vmatpush2.msra.mxu0 0.0
    %3474 = vmatprep.subr.mxu0 0.0
    %3475 = vmatpush2.msra.mxu0 0.0
    %3476 = vmatprep.subr.mxu0 0.0
    %3477 = vmatpush2.msra.mxu0 0.0
    %3478 = vmatprep.subr.mxu0 0.0
    %3479 = vmatpush2.msra.mxu0 0.0
    %3480 = vmatprep.subr.mxu0 0.0
    %3481 = vmatpush2.msra.mxu0 0.0
    %3482 = vmatprep.subr.mxu0 0.0
    %3483 = vmatpush2.msra.mxu0 0.0
    %3484 = vmatprep.subr.mxu0 0.0
    %3485 = vmatpush2.msra.mxu0 0.0
    %3486 = vmatprep.subr.mxu0 0.0
    %3487 = vmatpush2.msra.mxu0 0.0
    %3488 = vmatprep.subr.mxu0 0.0
    %3489 = vmatpush2.msra.mxu0 0.0
    %3490 = vmatprep.subr.mxu0 0.0
    %3491 = vmatpush2.msra.mxu0 0.0
    %3492 = vmatprep.subr.mxu0 0.0
    %3493 = vmatpush2.msra.mxu0 0.0
    %3494 = vmatprep.subr.mxu0 0.0
    %3495 = vmatpush2.msra.mxu0 0.0
    %3496 = vmatprep.subr.mxu0 0.0
    %3497 = vmatpush2.msra.mxu0 0.0
    %3498 = vmatprep.subr.mxu0 0.0
    %3499 = vmatpush2.msra.mxu0 0.0
    %3500 = vmatprep.subr.mxu0 0.0
    %3501 = vmatpush2.msra.mxu0 0.0
    %3502 = vmatprep.mubr.f32.mxu0 0.0
    %3503 = vmatmul.mubr.f32.gmra.mxu0 %v3436
    %v3504 = vpop.f32.mrf.mxu0
    %v3505 = vadd.f32 %v3431, %v3504
    %v3506 = vpop.f32.mrf.mxu0
    %3507 = vdwg.mxu0
    %v3508 = vtanh.pop %v3505
    %v3510 = vlaneseq
    %v3511 = vshrl.u32 %v3510, 7
    %v3512 = vsub.s32 0, %v3511
    %v3513 = vrot.slane %v3426, %v3512
    %v3516 = vsel %vm319, %v3508, 0
    %3518 = vmatprep.subr.mxu0 0.0
    %3519 = vmatpush1.msra.mxu0 0.0
    %3520 = vmatprep.subr.mxu0 0.0
    %3521 = vmatpush1.msra.mxu0 0.0
    %3522 = vmatprep.subr.mxu0 0.0
    %3523 = vmatpush1.msra.mxu0 0.0
    %3524 = vmatprep.subr.mxu0 0.0
    %3525 = vmatpush1.msra.mxu0 0.0
    %3526 = vmatprep.subr.mxu0 0.0
    %3527 = vmatpush1.msra.mxu0 0.0
    %3528 = vmatprep.subr.mxu0 0.0
    %3529 = vmatpush1.msra.mxu0 0.0
    %3530 = vmatprep.subr.mxu0 0.0
    %3531 = vmatpush1.msra.mxu0 0.0
    %3532 = vmatprep.subr.mxu0 0.0
    %3533 = vmatpush1.msra.mxu0 0.0
    %3534 = vmatprep.subr.mxu0 0.0
    %3535 = vmatpush1.msra.mxu0 0.0
    %3536 = vmatprep.subr.mxu0 0.0
    %3537 = vmatpush1.msra.mxu0 0.0
    %3538 = vmatprep.subr.mxu0 0.0
    %3539 = vmatpush1.msra.mxu0 0.0
    %3540 = vmatprep.subr.mxu0 0.0
    %3541 = vmatpush1.msra.mxu0 0.0
    %3542 = vmatprep.subr.mxu0 0.0
    %3543 = vmatpush1.msra.mxu0 %v3425
    %3544 = vmatprep.subr.mxu0 0.0
    %3545 = vmatpush1.msra.mxu0 %v3424
    %3546 = vmatprep.subr.mxu0 0.0
    %3547 = vmatpush1.msra.mxu0 %v3423
    %3548 = vmatprep.subr.mxu0 0.0
    %3549 = vmatpush1.msra.mxu0 %v3422
    %3550 = vmatprep.subr.mxu0 0.0
    %3551 = vmatpush2.msra.mxu0 0.0
    %3552 = vmatprep.subr.mxu0 0.0
    %3553 = vmatpush2.msra.mxu0 0.0
    %3554 = vmatprep.subr.mxu0 0.0
    %3555 = vmatpush2.msra.mxu0 0.0
    %3556 = vmatprep.subr.mxu0 0.0
    %3557 = vmatpush2.msra.mxu0 0.0
    %3558 = vmatprep.subr.mxu0 0.0
    %3559 = vmatpush2.msra.mxu0 0.0
    %3560 = vmatprep.subr.mxu0 0.0
    %3561 = vmatpush2.msra.mxu0 0.0
    %3562 = vmatprep.subr.mxu0 0.0
    %3563 = vmatpush2.msra.mxu0 0.0
    %3564 = vmatprep.subr.mxu0 0.0
    %3565 = vmatpush2.msra.mxu0 0.0
    %3566 = vmatprep.subr.mxu0 0.0
    %3567 = vmatpush2.msra.mxu0 0.0
    %3568 = vmatprep.subr.mxu0 0.0
    %3569 = vmatpush2.msra.mxu0 0.0
    %3570 = vmatprep.subr.mxu0 0.0
    %3571 = vmatpush2.msra.mxu0 0.0
    %3572 = vmatprep.subr.mxu0 0.0
    %3573 = vmatpush2.msra.mxu0 0.0
    %3574 = vmatprep.subr.mxu0 0.0
    %3575 = vmatpush2.msra.mxu0 0.0
    %3576 = vmatprep.subr.mxu0 0.0
    %3577 = vmatpush2.msra.mxu0 0.0
    %3578 = vmatprep.subr.mxu0 0.0
    %3579 = vmatpush2.msra.mxu0 0.0
    %3580 = vmatprep.subr.mxu0 0.0
    %3581 = vmatpush2.msra.mxu0 0.0
    %3582 = vmatprep.mubr.f32.mxu0 0.0
    %3583 = vmatmul.mubr.f32.gmra.mxu0 %v3516
    %v3584 = vpop.f32.mrf.mxu0
    %v3585 = vadd.f32 %v3513, %v3584
    %v3586 = vpop.f32.mrf.mxu0
    %3587 = vdwg.mxu0
    %vm3588 = vcmask 1024
    %3589 = vst.msk [vmem:[#allocation21] sm:$0x3] %vm3588, %v3585
    %v3591 = vrot.slane %v1143, 2
    %3592 = vrot.lane.b32.xlu0 %v3591, 32
    %v3593 = vpop.permute.xlu0 %3592
    %v3594 = vsel %vm319, %v3593, 0
    %3596 = vmatprep.subr.mxu0 0.0
    %3597 = vmatpush1.msra.mxu0 0.0
    %3598 = vmatprep.subr.mxu0 0.0
    %3599 = vmatpush1.msra.mxu0 0.0
    %3600 = vmatprep.subr.mxu0 0.0
    %3601 = vmatpush1.msra.mxu0 0.0
    %3602 = vmatprep.subr.mxu0 0.0
    %3603 = vmatpush1.msra.mxu0 0.0
    %3604 = vmatprep.subr.mxu0 0.0
    %3605 = vmatpush1.msra.mxu0 0.0
    %3606 = vmatprep.subr.mxu0 0.0
    %3607 = vmatpush1.msra.mxu0 0.0
    %3608 = vmatprep.subr.mxu0 0.0
    %3609 = vmatpush1.msra.mxu0 0.0
    %3610 = vmatprep.subr.mxu0 0.0
    %3611 = vmatpush1.msra.mxu0 0.0
    %3612 = vmatprep.subr.mxu0 0.0
    %3613 = vmatpush1.msra.mxu0 0.0
    %3614 = vmatprep.subr.mxu0 0.0
    %3615 = vmatpush1.msra.mxu0 0.0
    %3616 = vmatprep.subr.mxu0 0.0
    %3617 = vmatpush1.msra.mxu0 0.0
    %3618 = vmatprep.subr.mxu0 0.0
    %3619 = vmatpush1.msra.mxu0 0.0
    %3620 = vmatprep.subr.mxu0 0.0
    %3621 = vmatpush1.msra.mxu0 %v3420
    %3622 = vmatprep.subr.mxu0 0.0
    %3623 = vmatpush1.msra.mxu0 %v3419
    %3624 = vmatprep.subr.mxu0 0.0
    %3625 = vmatpush1.msra.mxu0 %v3418
    %3626 = vmatprep.subr.mxu0 0.0
    %3627 = vmatpush1.msra.mxu0 %v3417
    %3628 = vmatprep.subr.mxu0 0.0
    %3629 = vmatpush2.msra.mxu0 0.0
    %3630 = vmatprep.subr.mxu0 0.0
    %3631 = vmatpush2.msra.mxu0 0.0
    %3632 = vmatprep.subr.mxu0 0.0
    %3633 = vmatpush2.msra.mxu0 0.0
    %3634 = vmatprep.subr.mxu0 0.0
    %3635 = vmatpush2.msra.mxu0 0.0
    %3636 = vmatprep.subr.mxu0 0.0
    %3637 = vmatpush2.msra.mxu0 0.0
    %3638 = vmatprep.subr.mxu0 0.0
    %3639 = vmatpush2.msra.mxu0 0.0
    %3640 = vmatprep.subr.mxu0 0.0
    %3641 = vmatpush2.msra.mxu0 0.0
    %3642 = vmatprep.subr.mxu0 0.0
    %3643 = vmatpush2.msra.mxu0 0.0
    %3644 = vmatprep.subr.mxu0 0.0
    %3645 = vmatpush2.msra.mxu0 0.0
    %3646 = vmatprep.subr.mxu0 0.0
    %3647 = vmatpush2.msra.mxu0 0.0
    %3648 = vmatprep.subr.mxu0 0.0
    %3649 = vmatpush2.msra.mxu0 0.0
    %3650 = vmatprep.subr.mxu0 0.0
    %3651 = vmatpush2.msra.mxu0 0.0
    %3652 = vmatprep.subr.mxu0 0.0
    %3653 = vmatpush2.msra.mxu0 0.0
    %3654 = vmatprep.subr.mxu0 0.0
    %3655 = vmatpush2.msra.mxu0 0.0
    %3656 = vmatprep.subr.mxu0 0.0
    %3657 = vmatpush2.msra.mxu0 0.0
    %3658 = vmatprep.subr.mxu0 0.0
    %3659 = vmatpush2.msra.mxu0 0.0
    %3660 = vmatprep.mubr.f32.mxu0 0.0
    %3661 = vmatmul.mubr.f32.gmra.mxu0 %v3594
    %v3662 = vpop.f32.mrf.mxu0
    %v3663 = vadd.f32 %v3431, %v3662
    %v3664 = vpop.f32.mrf.mxu0
    %3665 = vdwg.mxu0
    %v3666 = vtanh.pop %v3663
    %v3668 = vsel %vm319, %v3666, 0
    %3670 = vmatprep.subr.mxu0 0.0
    %3671 = vmatpush1.msra.mxu0 0.0
    %3672 = vmatprep.subr.mxu0 0.0
    %3673 = vmatpush1.msra.mxu0 0.0
    %3674 = vmatprep.subr.mxu0 0.0
    %3675 = vmatpush1.msra.mxu0 0.0
    %3676 = vmatprep.subr.mxu0 0.0
    %3677 = vmatpush1.msra.mxu0 0.0
    %3678 = vmatprep.subr.mxu0 0.0
    %3679 = vmatpush1.msra.mxu0 0.0
    %3680 = vmatprep.subr.mxu0 0.0
    %3681 = vmatpush1.msra.mxu0 0.0
    %3682 = vmatprep.subr.mxu0 0.0
    %3683 = vmatpush1.msra.mxu0 0.0
    %3684 = vmatprep.subr.mxu0 0.0
    %3685 = vmatpush1.msra.mxu0 0.0
    %3686 = vmatprep.subr.mxu0 0.0
    %3687 = vmatpush1.msra.mxu0 0.0
    %3688 = vmatprep.subr.mxu0 0.0
    %3689 = vmatpush1.msra.mxu0 0.0
    %3690 = vmatprep.subr.mxu0 0.0
    %3691 = vmatpush1.msra.mxu0 0.0
    %3692 = vmatprep.subr.mxu0 0.0
    %3693 = vmatpush1.msra.mxu0 0.0
    %3694 = vmatprep.subr.mxu0 0.0
    %3695 = vmatpush1.msra.mxu0 %v3425
    %3696 = vmatprep.subr.mxu0 0.0
    %3697 = vmatpush1.msra.mxu0 %v3424
    %3698 = vmatprep.subr.mxu0 0.0
    %3699 = vmatpush1.msra.mxu0 %v3423
    %3700 = vmatprep.subr.mxu0 0.0
    %3701 = vmatpush1.msra.mxu0 %v3422
    %3702 = vmatprep.subr.mxu0 0.0
    %3703 = vmatpush2.msra.mxu0 0.0
    %3704 = vmatprep.subr.mxu0 0.0
    %3705 = vmatpush2.msra.mxu0 0.0
    %3706 = vmatprep.subr.mxu0 0.0
    %3707 = vmatpush2.msra.mxu0 0.0
    %3708 = vmatprep.subr.mxu0 0.0
    %3709 = vmatpush2.msra.mxu0 0.0
    %3710 = vmatprep.subr.mxu0 0.0
    %3711 = vmatpush2.msra.mxu0 0.0
    %3712 = vmatprep.subr.mxu0 0.0
    %3713 = vmatpush2.msra.mxu0 0.0
    %3714 = vmatprep.subr.mxu0 0.0
    %3715 = vmatpush2.msra.mxu0 0.0
    %3716 = vmatprep.subr.mxu0 0.0
    %3717 = vmatpush2.msra.mxu0 0.0
    %3718 = vmatprep.subr.mxu0 0.0
    %3719 = vmatpush2.msra.mxu0 0.0
    %3720 = vmatprep.subr.mxu0 0.0
    %3721 = vmatpush2.msra.mxu0 0.0
    %3722 = vmatprep.subr.mxu0 0.0
    %3723 = vmatpush2.msra.mxu0 0.0
    %3724 = vmatprep.subr.mxu0 0.0
    %3725 = vmatpush2.msra.mxu0 0.0
    %3726 = vmatprep.subr.mxu0 0.0
    %3727 = vmatpush2.msra.mxu0 0.0
    %3728 = vmatprep.subr.mxu0 0.0
    %3729 = vmatpush2.msra.mxu0 0.0
    %3730 = vmatprep.subr.mxu0 0.0
    %3731 = vmatpush2.msra.mxu0 0.0
    %3732 = vmatprep.subr.mxu0 0.0
    %3733 = vmatpush2.msra.mxu0 0.0
    %3734 = vmatprep.mubr.f32.mxu0 0.0
    %3735 = vmatmul.mubr.f32.gmra.mxu0 %v3668
    %v3736 = vpop.f32.mrf.mxu0
    %v3737 = vadd.f32 %v3513, %v3736
    %v3738 = vpop.f32.mrf.mxu0
    %3739 = vdwg.mxu0
    %3741 = vrot.lane.b32.xlu0 %v3737, 1
    %v3742 = vpop.permute.xlu0 %3741
    %vm3744 = vcmask 9224
    %3745 = vst.msk [vmem:[#allocation21] sm:$0x3] %vm3744, %v3742
    %v3747 = vrot.slane %v1523, 4
    %3748 = vrot.lane.b32.xlu0 %v3747, 32
    %v3749 = vpop.permute.xlu0 %3748
    %v3750 = vsel %vm319, %v3749, 0
    %3752 = vmatprep.subr.mxu0 0.0
    %3753 = vmatpush1.msra.mxu0 0.0
    %3754 = vmatprep.subr.mxu0 0.0
    %3755 = vmatpush1.msra.mxu0 0.0
    %3756 = vmatprep.subr.mxu0 0.0
    %3757 = vmatpush1.msra.mxu0 0.0
    %3758 = vmatprep.subr.mxu0 0.0
    %3759 = vmatpush1.msra.mxu0 0.0
    %3760 = vmatprep.subr.mxu0 0.0
    %3761 = vmatpush1.msra.mxu0 0.0
    %3762 = vmatprep.subr.mxu0 0.0
    %3763 = vmatpush1.msra.mxu0 0.0
    %3764 = vmatprep.subr.mxu0 0.0
    %3765 = vmatpush1.msra.mxu0 0.0
    %3766 = vmatprep.subr.mxu0 0.0
    %3767 = vmatpush1.msra.mxu0 0.0
    %3768 = vmatprep.subr.mxu0 0.0
    %3769 = vmatpush1.msra.mxu0 0.0
    %3770 = vmatprep.subr.mxu0 0.0
    %3771 = vmatpush1.msra.mxu0 0.0
    %3772 = vmatprep.subr.mxu0 0.0
    %3773 = vmatpush1.msra.mxu0 0.0
    %3774 = vmatprep.subr.mxu0 0.0
    %3775 = vmatpush1.msra.mxu0 0.0
    %3776 = vmatprep.subr.mxu0 0.0
    %3777 = vmatpush1.msra.mxu0 %v3420
    %3778 = vmatprep.subr.mxu0 0.0
    %3779 = vmatpush1.msra.mxu0 %v3419
    %3780 = vmatprep.subr.mxu0 0.0
    %3781 = vmatpush1.msra.mxu0 %v3418
    %3782 = vmatprep.subr.mxu0 0.0
    %3783 = vmatpush1.msra.mxu0 %v3417
    %3784 = vmatprep.subr.mxu0 0.0
    %3785 = vmatpush2.msra.mxu0 0.0
    %3786 = vmatprep.subr.mxu0 0.0
    %3787 = vmatpush2.msra.mxu0 0.0
    %3788 = vmatprep.subr.mxu0 0.0
    %3789 = vmatpush2.msra.mxu0 0.0
    %3790 = vmatprep.subr.mxu0 0.0
    %3791 = vmatpush2.msra.mxu0 0.0
    %3792 = vmatprep.subr.mxu0 0.0
    %3793 = vmatpush2.msra.mxu0 0.0
    %3794 = vmatprep.subr.mxu0 0.0
    %3795 = vmatpush2.msra.mxu0 0.0
    %3796 = vmatprep.subr.mxu0 0.0
    %3797 = vmatpush2.msra.mxu0 0.0
    %3798 = vmatprep.subr.mxu0 0.0
    %3799 = vmatpush2.msra.mxu0 0.0
    %3800 = vmatprep.subr.mxu0 0.0
    %3801 = vmatpush2.msra.mxu0 0.0
    %3802 = vmatprep.subr.mxu0 0.0
    %3803 = vmatpush2.msra.mxu0 0.0
    %3804 = vmatprep.subr.mxu0 0.0
    %3805 = vmatpush2.msra.mxu0 0.0
    %3806 = vmatprep.subr.mxu0 0.0
    %3807 = vmatpush2.msra.mxu0 0.0
    %3808 = vmatprep.subr.mxu0 0.0
    %3809 = vmatpush2.msra.mxu0 0.0
    %3810 = vmatprep.subr.mxu0 0.0
    %3811 = vmatpush2.msra.mxu0 0.0
    %3812 = vmatprep.subr.mxu0 0.0
    %3813 = vmatpush2.msra.mxu0 0.0
    %3814 = vmatprep.subr.mxu0 0.0
    %3815 = vmatpush2.msra.mxu0 0.0
    %3816 = vmatprep.mubr.f32.mxu0 0.0
    %3817 = vmatmul.mubr.f32.gmra.mxu0 %v3750
    %v3818 = vpop.f32.mrf.mxu0
    %v3819 = vadd.f32 %v3431, %v3818
    %v3820 = vpop.f32.mrf.mxu0
    %3821 = vdwg.mxu0
    %v3822 = vtanh.pop %v3819
    %v3824 = vsel %vm319, %v3822, 0
    %3826 = vmatprep.subr.mxu0 0.0
    %3827 = vmatpush1.msra.mxu0 0.0
    %3828 = vmatprep.subr.mxu0 0.0
    %3829 = vmatpush1.msra.mxu0 0.0
    %3830 = vmatprep.subr.mxu0 0.0
    %3831 = vmatpush1.msra.mxu0 0.0
    %3832 = vmatprep.subr.mxu0 0.0
    %3833 = vmatpush1.msra.mxu0 0.0
    %3834 = vmatprep.subr.mxu0 0.0
    %3835 = vmatpush1.msra.mxu0 0.0
    %3836 = vmatprep.subr.mxu0 0.0
    %3837 = vmatpush1.msra.mxu0 0.0
    %3838 = vmatprep.subr.mxu0 0.0
    %3839 = vmatpush1.msra.mxu0 0.0
    %3840 = vmatprep.subr.mxu0 0.0
    %3841 = vmatpush1.msra.mxu0 0.0
    %3842 = vmatprep.subr.mxu0 0.0
    %3843 = vmatpush1.msra.mxu0 0.0
    %3844 = vmatprep.subr.mxu0 0.0
    %3845 = vmatpush1.msra.mxu0 0.0
    %3846 = vmatprep.subr.mxu0 0.0
    %3847 = vmatpush1.msra.mxu0 0.0
    %3848 = vmatprep.subr.mxu0 0.0
    %3849 = vmatpush1.msra.mxu0 0.0
    %3850 = vmatprep.subr.mxu0 0.0
    %3851 = vmatpush1.msra.mxu0 %v3425
    %3852 = vmatprep.subr.mxu0 0.0
    %3853 = vmatpush1.msra.mxu0 %v3424
    %3854 = vmatprep.subr.mxu0 0.0
    %3855 = vmatpush1.msra.mxu0 %v3423
    %3856 = vmatprep.subr.mxu0 0.0
    %3857 = vmatpush1.msra.mxu0 %v3422
    %3858 = vmatprep.subr.mxu0 0.0
    %3859 = vmatpush2.msra.mxu0 0.0
    %3860 = vmatprep.subr.mxu0 0.0
    %3861 = vmatpush2.msra.mxu0 0.0
    %3862 = vmatprep.subr.mxu0 0.0
    %3863 = vmatpush2.msra.mxu0 0.0
    %3864 = vmatprep.subr.mxu0 0.0
    %3865 = vmatpush2.msra.mxu0 0.0
    %3866 = vmatprep.subr.mxu0 0.0
    %3867 = vmatpush2.msra.mxu0 0.0
    %3868 = vmatprep.subr.mxu0 0.0
    %3869 = vmatpush2.msra.mxu0 0.0
    %3870 = vmatprep.subr.mxu0 0.0
    %3871 = vmatpush2.msra.mxu0 0.0
    %3872 = vmatprep.subr.mxu0 0.0
    %3873 = vmatpush2.msra.mxu0 0.0
    %3874 = vmatprep.subr.mxu0 0.0
    %3875 = vmatpush2.msra.mxu0 0.0
    %3876 = vmatprep.subr.mxu0 0.0
    %3877 = vmatpush2.msra.mxu0 0.0
    %3878 = vmatprep.subr.mxu0 0.0
    %3879 = vmatpush2.msra.mxu0 0.0
    %3880 = vmatprep.subr.mxu0 0.0
    %3881 = vmatpush2.msra.mxu0 0.0
    %3882 = vmatprep.subr.mxu0 0.0
    %3883 = vmatpush2.msra.mxu0 0.0
    %3884 = vmatprep.subr.mxu0 0.0
    %3885 = vmatpush2.msra.mxu0 0.0
    %3886 = vmatprep.subr.mxu0 0.0
    %3887 = vmatpush2.msra.mxu0 0.0
    %3888 = vmatprep.subr.mxu0 0.0
    %3889 = vmatpush2.msra.mxu0 0.0
    %3890 = vmatprep.mubr.f32.mxu0 0.0
    %3891 = vmatmul.mubr.f32.gmra.mxu0 %v3824
    %v3892 = vpop.f32.mrf.mxu0
    %v3893 = vadd.f32 %v3513, %v3892
    %v3894 = vpop.f32.mrf.mxu0
    %3895 = vdwg.mxu0
    %3897 = vrot.lane.b32.xlu0 %v3893, 2
    %v3898 = vpop.permute.xlu0 %3897
    %vm3900 = vcmask 17424
    %3901 = vst.msk [vmem:[#allocation21] sm:$0x3] %vm3900, %v3898
    %v3903 = vrot.slane %v1903, 6
    %3904 = vrot.lane.b32.xlu0 %v3903, 32
    %v3905 = vpop.permute.xlu0 %3904
    %v3906 = vsel %vm319, %v3905, 0
    %3908 = vmatprep.subr.mxu0 0.0
    %3909 = vmatpush1.msra.mxu0 0.0
    %3910 = vmatprep.subr.mxu0 0.0
    %3911 = vmatpush1.msra.mxu0 0.0
    %3912 = vmatprep.subr.mxu0 0.0
    %3913 = vmatpush1.msra.mxu0 0.0
    %3914 = vmatprep.subr.mxu0 0.0
    %3915 = vmatpush1.msra.mxu0 0.0
    %3916 = vmatprep.subr.mxu0 0.0
    %3917 = vmatpush1.msra.mxu0 0.0
    %3918 = vmatprep.subr.mxu0 0.0
    %3919 = vmatpush1.msra.mxu0 0.0
    %3920 = vmatprep.subr.mxu0 0.0
    %3921 = vmatpush1.msra.mxu0 0.0
    %3922 = vmatprep.subr.mxu0 0.0
    %3923 = vmatpush1.msra.mxu0 0.0
    %3924 = vmatprep.subr.mxu0 0.0
    %3925 = vmatpush1.msra.mxu0 0.0
    %3926 = vmatprep.subr.mxu0 0.0
    %3927 = vmatpush1.msra.mxu0 0.0
    %3928 = vmatprep.subr.mxu0 0.0
    %3929 = vmatpush1.msra.mxu0 0.0
    %3930 = vmatprep.subr.mxu0 0.0
    %3931 = vmatpush1.msra.mxu0 0.0
    %3932 = vmatprep.subr.mxu0 0.0
    %3933 = vmatpush1.msra.mxu0 %v3420
    %3934 = vmatprep.subr.mxu0 0.0
    %3935 = vmatpush1.msra.mxu0 %v3419
    %3936 = vmatprep.subr.mxu0 0.0
    %3937 = vmatpush1.msra.mxu0 %v3418
    %3938 = vmatprep.subr.mxu0 0.0
    %3939 = vmatpush1.msra.mxu0 %v3417
    %3940 = vmatprep.subr.mxu0 0.0
    %3941 = vmatpush2.msra.mxu0 0.0
    %3942 = vmatprep.subr.mxu0 0.0
    %3943 = vmatpush2.msra.mxu0 0.0
    %3944 = vmatprep.subr.mxu0 0.0
    %3945 = vmatpush2.msra.mxu0 0.0
    %3946 = vmatprep.subr.mxu0 0.0
    %3947 = vmatpush2.msra.mxu0 0.0
    %3948 = vmatprep.subr.mxu0 0.0
    %3949 = vmatpush2.msra.mxu0 0.0
    %3950 = vmatprep.subr.mxu0 0.0
    %3951 = vmatpush2.msra.mxu0 0.0
    %3952 = vmatprep.subr.mxu0 0.0
    %3953 = vmatpush2.msra.mxu0 0.0
    %3954 = vmatprep.subr.mxu0 0.0
    %3955 = vmatpush2.msra.mxu0 0.0
    %3956 = vmatprep.subr.mxu0 0.0
    %3957 = vmatpush2.msra.mxu0 0.0
    %3958 = vmatprep.subr.mxu0 0.0
    %3959 = vmatpush2.msra.mxu0 0.0
    %3960 = vmatprep.subr.mxu0 0.0
    %3961 = vmatpush2.msra.mxu0 0.0
    %3962 = vmatprep.subr.mxu0 0.0
    %3963 = vmatpush2.msra.mxu0 0.0
    %3964 = vmatprep.subr.mxu0 0.0
    %3965 = vmatpush2.msra.mxu0 0.0
    %3966 = vmatprep.subr.mxu0 0.0
    %3967 = vmatpush2.msra.mxu0 0.0
    %3968 = vmatprep.subr.mxu0 0.0
    %3969 = vmatpush2.msra.mxu0 0.0
    %3970 = vmatprep.subr.mxu0 0.0
    %3971 = vmatpush2.msra.mxu0 0.0
    %3972 = vmatprep.mubr.f32.mxu0 0.0
    %3973 = vmatmul.mubr.f32.gmra.mxu0 %v3906
    %v3974 = vpop.f32.mrf.mxu0
    %v3975 = vadd.f32 %v3431, %v3974
    %v3976 = vpop.f32.mrf.mxu0
    %3977 = vdwg.mxu0
    %v3978 = vtanh.pop %v3975
    %v3980 = vsel %vm319, %v3978, 0
    %3982 = vmatprep.subr.mxu0 0.0
    %3983 = vmatpush1.msra.mxu0 0.0
    %3984 = vmatprep.subr.mxu0 0.0
    %3985 = vmatpush1.msra.mxu0 0.0
    %3986 = vmatprep.subr.mxu0 0.0
    %3987 = vmatpush1.msra.mxu0 0.0
    %3988 = vmatprep.subr.mxu0 0.0
    %3989 = vmatpush1.msra.mxu0 0.0
    %3990 = vmatprep.subr.mxu0 0.0
    %3991 = vmatpush1.msra.mxu0 0.0
    %3992 = vmatprep.subr.mxu0 0.0
    %3993 = vmatpush1.msra.mxu0 0.0
    %3994 = vmatprep.subr.mxu0 0.0
    %3995 = vmatpush1.msra.mxu0 0.0
    %3996 = vmatprep.subr.mxu0 0.0
    %3997 = vmatpush1.msra.mxu0 0.0
    %3998 = vmatprep.subr.mxu0 0.0
    %3999 = vmatpush1.msra.mxu0 0.0
    %4000 = vmatprep.subr.mxu0 0.0
    %4001 = vmatpush1.msra.mxu0 0.0
    %4002 = vmatprep.subr.mxu0 0.0
    %4003 = vmatpush1.msra.mxu0 0.0
    %4004 = vmatprep.subr.mxu0 0.0
    %4005 = vmatpush1.msra.mxu0 0.0
    %4006 = vmatprep.subr.mxu0 0.0
    %4007 = vmatpush1.msra.mxu0 %v3425
    %4008 = vmatprep.subr.mxu0 0.0
    %4009 = vmatpush1.msra.mxu0 %v3424
    %4010 = vmatprep.subr.mxu0 0.0
    %4011 = vmatpush1.msra.mxu0 %v3423
    %4012 = vmatprep.subr.mxu0 0.0
    %4013 = vmatpush1.msra.mxu0 %v3422
    %4014 = vmatprep.subr.mxu0 0.0
    %4015 = vmatpush2.msra.mxu0 0.0
    %4016 = vmatprep.subr.mxu0 0.0
    %4017 = vmatpush2.msra.mxu0 0.0
    %4018 = vmatprep.subr.mxu0 0.0
    %4019 = vmatpush2.msra.mxu0 0.0
    %4020 = vmatprep.subr.mxu0 0.0
    %4021 = vmatpush2.msra.mxu0 0.0
    %4022 = vmatprep.subr.mxu0 0.0
    %4023 = vmatpush2.msra.mxu0 0.0
    %4024 = vmatprep.subr.mxu0 0.0
    %4025 = vmatpush2.msra.mxu0 0.0
    %4026 = vmatprep.subr.mxu0 0.0
    %4027 = vmatpush2.msra.mxu0 0.0
    %4028 = vmatprep.subr.mxu0 0.0
    %4029 = vmatpush2.msra.mxu0 0.0
    %4030 = vmatprep.subr.mxu0 0.0
    %4031 = vmatpush2.msra.mxu0 0.0
    %4032 = vmatprep.subr.mxu0 0.0
    %4033 = vmatpush2.msra.mxu0 0.0
    %4034 = vmatprep.subr.mxu0 0.0
    %4035 = vmatpush2.msra.mxu0 0.0
    %4036 = vmatprep.subr.mxu0 0.0
    %4037 = vmatpush2.msra.mxu0 0.0
    %4038 = vmatprep.subr.mxu0 0.0
    %4039 = vmatpush2.msra.mxu0 0.0
    %4040 = vmatprep.subr.mxu0 0.0
    %4041 = vmatpush2.msra.mxu0 0.0
    %4042 = vmatprep.subr.mxu0 0.0
    %4043 = vmatpush2.msra.mxu0 0.0
    %4044 = vmatprep.subr.mxu0 0.0
    %4045 = vmatpush2.msra.mxu0 0.0
    %4046 = vmatprep.mubr.f32.mxu0 0.0
    %4047 = vmatmul.mubr.f32.gmra.mxu0 %v3980
    %v4048 = vpop.f32.mrf.mxu0
    %v4049 = vadd.f32 %v3513, %v4048
    %v4050 = vpop.f32.mrf.mxu0
    %4051 = vdwg.mxu0
    %4053 = vrot.lane.b32.xlu0 %v4049, 3
    %v4054 = vpop.permute.xlu0 %4053
    %vm4056 = vcmask 25624
    %4057 = vst.msk [vmem:[#allocation21] sm:$0x3] %vm4056, %v4054
    %4059 = vrot.lane.b32.xlu0 %v2278, 32
    %v4060 = vpop.permute.xlu0 %4059
    %v4061 = vsel %vm319, %v4060, 0
    %4063 = vmatprep.subr.mxu0 0.0
    %4064 = vmatpush1.msra.mxu0 0.0
    %4065 = vmatprep.subr.mxu0 0.0
    %4066 = vmatpush1.msra.mxu0 0.0
    %4067 = vmatprep.subr.mxu0 0.0
    %4068 = vmatpush1.msra.mxu0 0.0
    %4069 = vmatprep.subr.mxu0 0.0
    %4070 = vmatpush1.msra.mxu0 0.0
    %4071 = vmatprep.subr.mxu0 0.0
    %4072 = vmatpush1.msra.mxu0 0.0
    %4073 = vmatprep.subr.mxu0 0.0
    %4074 = vmatpush1.msra.mxu0 0.0
    %4075 = vmatprep.subr.mxu0 0.0
    %4076 = vmatpush1.msra.mxu0 0.0
    %4077 = vmatprep.subr.mxu0 0.0
    %4078 = vmatpush1.msra.mxu0 0.0
    %4079 = vmatprep.subr.mxu0 0.0
    %4080 = vmatpush1.msra.mxu0 0.0
    %4081 = vmatprep.subr.mxu0 0.0
    %4082 = vmatpush1.msra.mxu0 0.0
    %4083 = vmatprep.subr.mxu0 0.0
    %4084 = vmatpush1.msra.mxu0 0.0
    %4085 = vmatprep.subr.mxu0 0.0
    %4086 = vmatpush1.msra.mxu0 0.0
    %4087 = vmatprep.subr.mxu0 0.0
    %4088 = vmatpush1.msra.mxu0 %v3420
    %4089 = vmatprep.subr.mxu0 0.0
    %4090 = vmatpush1.msra.mxu0 %v3419
    %4091 = vmatprep.subr.mxu0 0.0
    %4092 = vmatpush1.msra.mxu0 %v3418
    %4093 = vmatprep.subr.mxu0 0.0
    %4094 = vmatpush1.msra.mxu0 %v3417
    %4095 = vmatprep.subr.mxu0 0.0
    %4096 = vmatpush2.msra.mxu0 0.0
    %4097 = vmatprep.subr.mxu0 0.0
    %4098 = vmatpush2.msra.mxu0 0.0
    %4099 = vmatprep.subr.mxu0 0.0
    %4100 = vmatpush2.msra.mxu0 0.0
    %4101 = vmatprep.subr.mxu0 0.0
    %4102 = vmatpush2.msra.mxu0 0.0
    %4103 = vmatprep.subr.mxu0 0.0
    %4104 = vmatpush2.msra.mxu0 0.0
    %4105 = vmatprep.subr.mxu0 0.0
    %4106 = vmatpush2.msra.mxu0 0.0
    %4107 = vmatprep.subr.mxu0 0.0
    %4108 = vmatpush2.msra.mxu0 0.0
    %4109 = vmatprep.subr.mxu0 0.0
    %4110 = vmatpush2.msra.mxu0 0.0
    %4111 = vmatprep.subr.mxu0 0.0
    %4112 = vmatpush2.msra.mxu0 0.0
    %4113 = vmatprep.subr.mxu0 0.0
    %4114 = vmatpush2.msra.mxu0 0.0
    %4115 = vmatprep.subr.mxu0 0.0
    %4116 = vmatpush2.msra.mxu0 0.0
    %4117 = vmatprep.subr.mxu0 0.0
    %4118 = vmatpush2.msra.mxu0 0.0
    %4119 = vmatprep.subr.mxu0 0.0
    %4120 = vmatpush2.msra.mxu0 0.0
    %4121 = vmatprep.subr.mxu0 0.0
    %4122 = vmatpush2.msra.mxu0 0.0
    %4123 = vmatprep.subr.mxu0 0.0
    %4124 = vmatpush2.msra.mxu0 0.0
    %4125 = vmatprep.subr.mxu0 0.0
    %4126 = vmatpush2.msra.mxu0 0.0
    %4127 = vmatprep.mubr.f32.mxu0 0.0
    %4128 = vmatmul.mubr.f32.gmra.mxu0 %v4061
    %v4129 = vpop.f32.mrf.mxu0
    %v4130 = vadd.f32 %v3431, %v4129
    %v4131 = vpop.f32.mrf.mxu0
    %4132 = vdwg.mxu0
    %v4133 = vtanh.pop %v4130
    %v4135 = vsel %vm319, %v4133, 0
    %4137 = vmatprep.subr.mxu0 0.0
    %4138 = vmatpush1.msra.mxu0 0.0
    %4139 = vmatprep.subr.mxu0 0.0
    %4140 = vmatpush1.msra.mxu0 0.0
    %4141 = vmatprep.subr.mxu0 0.0
    %4142 = vmatpush1.msra.mxu0 0.0
    %4143 = vmatprep.subr.mxu0 0.0
    %4144 = vmatpush1.msra.mxu0 0.0
    %4145 = vmatprep.subr.mxu0 0.0
    %4146 = vmatpush1.msra.mxu0 0.0
    %4147 = vmatprep.subr.mxu0 0.0
    %4148 = vmatpush1.msra.mxu0 0.0
    %4149 = vmatprep.subr.mxu0 0.0
    %4150 = vmatpush1.msra.mxu0 0.0
    %4151 = vmatprep.subr.mxu0 0.0
    %4152 = vmatpush1.msra.mxu0 0.0
    %4153 = vmatprep.subr.mxu0 0.0
    %4154 = vmatpush1.msra.mxu0 0.0
    %4155 = vmatprep.subr.mxu0 0.0
    %4156 = vmatpush1.msra.mxu0 0.0
    %4157 = vmatprep.subr.mxu0 0.0
    %4158 = vmatpush1.msra.mxu0 0.0
    %4159 = vmatprep.subr.mxu0 0.0
    %4160 = vmatpush1.msra.mxu0 0.0
    %4161 = vmatprep.subr.mxu0 0.0
    %4162 = vmatpush1.msra.mxu0 %v3425
    %4163 = vmatprep.subr.mxu0 0.0
    %4164 = vmatpush1.msra.mxu0 %v3424
    %4165 = vmatprep.subr.mxu0 0.0
    %4166 = vmatpush1.msra.mxu0 %v3423
    %4167 = vmatprep.subr.mxu0 0.0
    %4168 = vmatpush1.msra.mxu0 %v3422
    %4169 = vmatprep.subr.mxu0 0.0
    %4170 = vmatpush2.msra.mxu0 0.0
    %4171 = vmatprep.subr.mxu0 0.0
    %4172 = vmatpush2.msra.mxu0 0.0
    %4173 = vmatprep.subr.mxu0 0.0
    %4174 = vmatpush2.msra.mxu0 0.0
    %4175 = vmatprep.subr.mxu0 0.0
    %4176 = vmatpush2.msra.mxu0 0.0
    %4177 = vmatprep.subr.mxu0 0.0
    %4178 = vmatpush2.msra.mxu0 0.0
    %4179 = vmatprep.subr.mxu0 0.0
    %4180 = vmatpush2.msra.mxu0 0.0
    %4181 = vmatprep.subr.mxu0 0.0
    %4182 = vmatpush2.msra.mxu0 0.0
    %4183 = vmatprep.subr.mxu0 0.0
    %4184 = vmatpush2.msra.mxu0 0.0
    %4185 = vmatprep.subr.mxu0 0.0
    %4186 = vmatpush2.msra.mxu0 0.0
    %4187 = vmatprep.subr.mxu0 0.0
    %4188 = vmatpush2.msra.mxu0 0.0
    %4189 = vmatprep.subr.mxu0 0.0
    %4190 = vmatpush2.msra.mxu0 0.0
    %4191 = vmatprep.subr.mxu0 0.0
    %4192 = vmatpush2.msra.mxu0 0.0
    %4193 = vmatprep.subr.mxu0 0.0
    %4194 = vmatpush2.msra.mxu0 0.0
    %4195 = vmatprep.subr.mxu0 0.0
    %4196 = vmatpush2.msra.mxu0 0.0
    %4197 = vmatprep.subr.mxu0 0.0
    %4198 = vmatpush2.msra.mxu0 0.0
    %4199 = vmatprep.subr.mxu0 0.0
    %4200 = vmatpush2.msra.mxu0 0.0
    %4201 = vmatprep.mubr.f32.mxu0 0.0
    %4202 = vmatmul.mubr.f32.gmra.mxu0 %v4135
    %v4203 = vpop.f32.mrf.mxu0
    %v4204 = vadd.f32 %v3513, %v4203
    %v4205 = vpop.f32.mrf.mxu0
    %4206 = vdwg.mxu0
    %4208 = vrot.lane.b32.xlu0 %v4204, 4
    %v4209 = vpop.permute.xlu0 %4208
    %vm4211 = vcmask 33824
    %4212 = vst.msk [vmem:[#allocation21] sm:$0x3] %vm4211, %v4209
    %v4214 = vrot.slane %v2658, 2
    %4215 = vrot.lane.b32.xlu0 %v4214, 32
    %v4216 = vpop.permute.xlu0 %4215
    %v4217 = vsel %vm319, %v4216, 0
    %4219 = vmatprep.subr.mxu0 0.0
    %4220 = vmatpush1.msra.mxu0 0.0
    %4221 = vmatprep.subr.mxu0 0.0
    %4222 = vmatpush1.msra.mxu0 0.0
    %4223 = vmatprep.subr.mxu0 0.0
    %4224 = vmatpush1.msra.mxu0 0.0
    %4225 = vmatprep.subr.mxu0 0.0
    %4226 = vmatpush1.msra.mxu0 0.0
    %4227 = vmatprep.subr.mxu0 0.0
    %4228 = vmatpush1.msra.mxu0 0.0
    %4229 = vmatprep.subr.mxu0 0.0
    %4230 = vmatpush1.msra.mxu0 0.0
    %4231 = vmatprep.subr.mxu0 0.0
    %4232 = vmatpush1.msra.mxu0 0.0
    %4233 = vmatprep.subr.mxu0 0.0
    %4234 = vmatpush1.msra.mxu0 0.0
    %4235 = vmatprep.subr.mxu0 0.0
    %4236 = vmatpush1.msra.mxu0 0.0
    %4237 = vmatprep.subr.mxu0 0.0
    %4238 = vmatpush1.msra.mxu0 0.0
    %4239 = vmatprep.subr.mxu0 0.0
    %4240 = vmatpush1.msra.mxu0 0.0
    %4241 = vmatprep.subr.mxu0 0.0
    %4242 = vmatpush1.msra.mxu0 0.0
    %4243 = vmatprep.subr.mxu0 0.0
    %4244 = vmatpush1.msra.mxu0 %v3420
    %4245 = vmatprep.subr.mxu0 0.0
    %4246 = vmatpush1.msra.mxu0 %v3419
    %4247 = vmatprep.subr.mxu0 0.0
    %4248 = vmatpush1.msra.mxu0 %v3418
    %4249 = vmatprep.subr.mxu0 0.0
    %4250 = vmatpush1.msra.mxu0 %v3417
    %4251 = vmatprep.subr.mxu0 0.0
    %4252 = vmatpush2.msra.mxu0 0.0
    %4253 = vmatprep.subr.mxu0 0.0
    %4254 = vmatpush2.msra.mxu0 0.0
    %4255 = vmatprep.subr.mxu0 0.0
    %4256 = vmatpush2.msra.mxu0 0.0
    %4257 = vmatprep.subr.mxu0 0.0
    %4258 = vmatpush2.msra.mxu0 0.0
    %4259 = vmatprep.subr.mxu0 0.0
    %4260 = vmatpush2.msra.mxu0 0.0
    %4261 = vmatprep.subr.mxu0 0.0
    %4262 = vmatpush2.msra.mxu0 0.0
    %4263 = vmatprep.subr.mxu0 0.0
    %4264 = vmatpush2.msra.mxu0 0.0
    %4265 = vmatprep.subr.mxu0 0.0
    %4266 = vmatpush2.msra.mxu0 0.0
    %4267 = vmatprep.subr.mxu0 0.0
    %4268 = vmatpush2.msra.mxu0 0.0
    %4269 = vmatprep.subr.mxu0 0.0
    %4270 = vmatpush2.msra.mxu0 0.0
    %4271 = vmatprep.subr.mxu0 0.0
    %4272 = vmatpush2.msra.mxu0 0.0
    %4273 = vmatprep.subr.mxu0 0.0
    %4274 = vmatpush2.msra.mxu0 0.0
    %4275 = vmatprep.subr.mxu0 0.0
    %4276 = vmatpush2.msra.mxu0 0.0
    %4277 = vmatprep.subr.mxu0 0.0
    %4278 = vmatpush2.msra.mxu0 0.0
    %4279 = vmatprep.subr.mxu0 0.0
    %4280 = vmatpush2.msra.mxu0 0.0
    %4281 = vmatprep.subr.mxu0 0.0
    %4282 = vmatpush2.msra.mxu0 0.0
    %4283 = vmatprep.mubr.f32.mxu0 0.0
    %4284 = vmatmul.mubr.f32.gmra.mxu0 %v4217
    %v4285 = vpop.f32.mrf.mxu0
    %v4286 = vadd.f32 %v3431, %v4285
    %v4287 = vpop.f32.mrf.mxu0
    %4288 = vdwg.mxu0
    %v4289 = vtanh.pop %v4286
    %v4291 = vsel %vm319, %v4289, 0
    %4293 = vmatprep.subr.mxu0 0.0
    %4294 = vmatpush1.msra.mxu0 0.0
    %4295 = vmatprep.subr.mxu0 0.0
    %4296 = vmatpush1.msra.mxu0 0.0
    %4297 = vmatprep.subr.mxu0 0.0
    %4298 = vmatpush1.msra.mxu0 0.0
    %4299 = vmatprep.subr.mxu0 0.0
    %4300 = vmatpush1.msra.mxu0 0.0
    %4301 = vmatprep.subr.mxu0 0.0
    %4302 = vmatpush1.msra.mxu0 0.0
    %4303 = vmatprep.subr.mxu0 0.0
    %4304 = vmatpush1.msra.mxu0 0.0
    %4305 = vmatprep.subr.mxu0 0.0
    %4306 = vmatpush1.msra.mxu0 0.0
    %4307 = vmatprep.subr.mxu0 0.0
    %4308 = vmatpush1.msra.mxu0 0.0
    %4309 = vmatprep.subr.mxu0 0.0
    %4310 = vmatpush1.msra.mxu0 0.0
    %4311 = vmatprep.subr.mxu0 0.0
    %4312 = vmatpush1.msra.mxu0 0.0
    %4313 = vmatprep.subr.mxu0 0.0
    %4314 = vmatpush1.msra.mxu0 0.0
    %4315 = vmatprep.subr.mxu0 0.0
    %4316 = vmatpush1.msra.mxu0 0.0
    %4317 = vmatprep.subr.mxu0 0.0
    %4318 = vmatpush1.msra.mxu0 %v3425
    %4319 = vmatprep.subr.mxu0 0.0
    %4320 = vmatpush1.msra.mxu0 %v3424
    %4321 = vmatprep.subr.mxu0 0.0
    %4322 = vmatpush1.msra.mxu0 %v3423
    %4323 = vmatprep.subr.mxu0 0.0
    %4324 = vmatpush1.msra.mxu0 %v3422
    %4325 = vmatprep.subr.mxu0 0.0
    %4326 = vmatpush2.msra.mxu0 0.0
    %4327 = vmatprep.subr.mxu0 0.0
    %4328 = vmatpush2.msra.mxu0 0.0
    %4329 = vmatprep.subr.mxu0 0.0
    %4330 = vmatpush2.msra.mxu0 0.0
    %4331 = vmatprep.subr.mxu0 0.0
    %4332 = vmatpush2.msra.mxu0 0.0
    %4333 = vmatprep.subr.mxu0 0.0
    %4334 = vmatpush2.msra.mxu0 0.0
    %4335 = vmatprep.subr.mxu0 0.0
    %4336 = vmatpush2.msra.mxu0 0.0
    %4337 = vmatprep.subr.mxu0 0.0
    %4338 = vmatpush2.msra.mxu0 0.0
    %4339 = vmatprep.subr.mxu0 0.0
    %4340 = vmatpush2.msra.mxu0 0.0
    %4341 = vmatprep.subr.mxu0 0.0
    %4342 = vmatpush2.msra.mxu0 0.0
    %4343 = vmatprep.subr.mxu0 0.0
    %4344 = vmatpush2.msra.mxu0 0.0
    %4345 = vmatprep.subr.mxu0 0.0
    %4346 = vmatpush2.msra.mxu0 0.0
    %4347 = vmatprep.subr.mxu0 0.0
    %4348 = vmatpush2.msra.mxu0 0.0
    %4349 = vmatprep.subr.mxu0 0.0
    %4350 = vmatpush2.msra.mxu0 0.0
    %4351 = vmatprep.subr.mxu0 0.0
    %4352 = vmatpush2.msra.mxu0 0.0
    %4353 = vmatprep.subr.mxu0 0.0
    %4354 = vmatpush2.msra.mxu0 0.0
    %4355 = vmatprep.subr.mxu0 0.0
    %4356 = vmatpush2.msra.mxu0 0.0
    %4357 = vmatprep.mubr.f32.mxu0 0.0
    %4358 = vmatmul.mubr.f32.gmra.mxu0 %v4291
    %v4359 = vpop.f32.mrf.mxu0
    %v4360 = vadd.f32 %v3513, %v4359
    %v4361 = vpop.f32.mrf.mxu0
    %4362 = vdwg.mxu0
    %4364 = vrot.lane.b32.xlu0 %v4360, 5
    %v4365 = vpop.permute.xlu0 %4364
    %vm4367 = vcmask 42024
    %4368 = vst.msk [vmem:[#allocation21] sm:$0x3] %vm4367, %v4365
    %v4370 = vrot.slane %v3037, 4
    %4371 = vrot.lane.b32.xlu0 %v4370, 32
    %v4372 = vpop.permute.xlu0 %4371
    %v4373 = vsel %vm319, %v4372, 0
    %4375 = vmatprep.subr.mxu0 0.0
    %4376 = vmatpush1.msra.mxu0 0.0
    %4377 = vmatprep.subr.mxu0 0.0
    %4378 = vmatpush1.msra.mxu0 0.0
    %4379 = vmatprep.subr.mxu0 0.0
    %4380 = vmatpush1.msra.mxu0 0.0
    %4381 = vmatprep.subr.mxu0 0.0
    %4382 = vmatpush1.msra.mxu0 0.0
    %4383 = vmatprep.subr.mxu0 0.0
    %4384 = vmatpush1.msra.mxu0 0.0
    %4385 = vmatprep.subr.mxu0 0.0
    %4386 = vmatpush1.msra.mxu0 0.0
    %4387 = vmatprep.subr.mxu0 0.0
    %4388 = vmatpush1.msra.mxu0 0.0
    %4389 = vmatprep.subr.mxu0 0.0
    %4390 = vmatpush1.msra.mxu0 0.0
    %4391 = vmatprep.subr.mxu0 0.0
    %4392 = vmatpush1.msra.mxu0 0.0
    %4393 = vmatprep.subr.mxu0 0.0
    %4394 = vmatpush1.msra.mxu0 0.0
    %4395 = vmatprep.subr.mxu0 0.0
    %4396 = vmatpush1.msra.mxu0 0.0
    %4397 = vmatprep.subr.mxu0 0.0
    %4398 = vmatpush1.msra.mxu0 0.0
    %4399 = vmatprep.subr.mxu0 0.0
    %4400 = vmatpush1.msra.mxu0 %v3420
    %4401 = vmatprep.subr.mxu0 0.0
    %4402 = vmatpush1.msra.mxu0 %v3419
    %4403 = vmatprep.subr.mxu0 0.0
    %4404 = vmatpush1.msra.mxu0 %v3418
    %4405 = vmatprep.subr.mxu0 0.0
    %4406 = vmatpush1.msra.mxu0 %v3417
    %4407 = vmatprep.subr.mxu0 0.0
    %4408 = vmatpush2.msra.mxu0 0.0
    %4409 = vmatprep.subr.mxu0 0.0
    %4410 = vmatpush2.msra.mxu0 0.0
    %4411 = vmatprep.subr.mxu0 0.0
    %4412 = vmatpush2.msra.mxu0 0.0
    %4413 = vmatprep.subr.mxu0 0.0
    %4414 = vmatpush2.msra.mxu0 0.0
    %4415 = vmatprep.subr.mxu0 0.0
    %4416 = vmatpush2.msra.mxu0 0.0
    %4417 = vmatprep.subr.mxu0 0.0
    %4418 = vmatpush2.msra.mxu0 0.0
    %4419 = vmatprep.subr.mxu0 0.0
    %4420 = vmatpush2.msra.mxu0 0.0
    %4421 = vmatprep.subr.mxu0 0.0
    %4422 = vmatpush2.msra.mxu0 0.0
    %4423 = vmatprep.subr.mxu0 0.0
    %4424 = vmatpush2.msra.mxu0 0.0
    %4425 = vmatprep.subr.mxu0 0.0
    %4426 = vmatpush2.msra.mxu0 0.0
    %4427 = vmatprep.subr.mxu0 0.0
    %4428 = vmatpush2.msra.mxu0 0.0
    %4429 = vmatprep.subr.mxu0 0.0
    %4430 = vmatpush2.msra.mxu0 0.0
    %4431 = vmatprep.subr.mxu0 0.0
    %4432 = vmatpush2.msra.mxu0 0.0
    %4433 = vmatprep.subr.mxu0 0.0
    %4434 = vmatpush2.msra.mxu0 0.0
    %4435 = vmatprep.subr.mxu0 0.0
    %4436 = vmatpush2.msra.mxu0 0.0
    %4437 = vmatprep.subr.mxu0 0.0
    %4438 = vmatpush2.msra.mxu0 0.0
    %4439 = vmatprep.mubr.f32.mxu0 0.0
    %4440 = vmatmul.mubr.f32.gmra.mxu0 %v4373
    %v4441 = vpop.f32.mrf.mxu0
    %v4442 = vadd.f32 %v3431, %v4441
    %v4443 = vpop.f32.mrf.mxu0
    %4444 = vdwg.mxu0
    %v4445 = vtanh.pop %v4442
    %v4447 = vsel %vm319, %v4445, 0
    %4449 = vmatprep.subr.mxu0 0.0
    %4450 = vmatpush1.msra.mxu0 0.0
    %4451 = vmatprep.subr.mxu0 0.0
    %4452 = vmatpush1.msra.mxu0 0.0
    %4453 = vmatprep.subr.mxu0 0.0
    %4454 = vmatpush1.msra.mxu0 0.0
    %4455 = vmatprep.subr.mxu0 0.0
    %4456 = vmatpush1.msra.mxu0 0.0
    %4457 = vmatprep.subr.mxu0 0.0
    %4458 = vmatpush1.msra.mxu0 0.0
    %4459 = vmatprep.subr.mxu0 0.0
    %4460 = vmatpush1.msra.mxu0 0.0
    %4461 = vmatprep.subr.mxu0 0.0
    %4462 = vmatpush1.msra.mxu0 0.0
    %4463 = vmatprep.subr.mxu0 0.0
    %4464 = vmatpush1.msra.mxu0 0.0
    %4465 = vmatprep.subr.mxu0 0.0
    %4466 = vmatpush1.msra.mxu0 0.0
    %4467 = vmatprep.subr.mxu0 0.0
    %4468 = vmatpush1.msra.mxu0 0.0
    %4469 = vmatprep.subr.mxu0 0.0
    %4470 = vmatpush1.msra.mxu0 0.0
    %4471 = vmatprep.subr.mxu0 0.0
    %4472 = vmatpush1.msra.mxu0 0.0
    %4473 = vmatprep.subr.mxu0 0.0
    %4474 = vmatpush1.msra.mxu0 %v3425
    %4475 = vmatprep.subr.mxu0 0.0
    %4476 = vmatpush1.msra.mxu0 %v3424
    %4477 = vmatprep.subr.mxu0 0.0
    %4478 = vmatpush1.msra.mxu0 %v3423
    %4479 = vmatprep.subr.mxu0 0.0
    %4480 = vmatpush1.msra.mxu0 %v3422
    %4481 = vmatprep.subr.mxu0 0.0
    %4482 = vmatpush2.msra.mxu0 0.0
    %4483 = vmatprep.subr.mxu0 0.0
    %4484 = vmatpush2.msra.mxu0 0.0
    %4485 = vmatprep.subr.mxu0 0.0
    %4486 = vmatpush2.msra.mxu0 0.0
    %4487 = vmatprep.subr.mxu0 0.0
    %4488 = vmatpush2.msra.mxu0 0.0
    %4489 = vmatprep.subr.mxu0 0.0
    %4490 = vmatpush2.msra.mxu0 0.0
    %4491 = vmatprep.subr.mxu0 0.0
    %4492 = vmatpush2.msra.mxu0 0.0
    %4493 = vmatprep.subr.mxu0 0.0
    %4494 = vmatpush2.msra.mxu0 0.0
    %4495 = vmatprep.subr.mxu0 0.0
    %4496 = vmatpush2.msra.mxu0 0.0
    %4497 = vmatprep.subr.mxu0 0.0
    %4498 = vmatpush2.msra.mxu0 0.0
    %4499 = vmatprep.subr.mxu0 0.0
    %4500 = vmatpush2.msra.mxu0 0.0
    %4501 = vmatprep.subr.mxu0 0.0
    %4502 = vmatpush2.msra.mxu0 0.0
    %4503 = vmatprep.subr.mxu0 0.0
    %4504 = vmatpush2.msra.mxu0 0.0
    %4505 = vmatprep.subr.mxu0 0.0
    %4506 = vmatpush2.msra.mxu0 0.0
    %4507 = vmatprep.subr.mxu0 0.0
    %4508 = vmatpush2.msra.mxu0 0.0
    %4509 = vmatprep.subr.mxu0 0.0
    %4510 = vmatpush2.msra.mxu0 0.0
    %4511 = vmatprep.subr.mxu0 0.0
    %4512 = vmatpush2.msra.mxu0 0.0
    %4513 = vmatprep.mubr.f32.mxu0 0.0
    %4514 = vmatmul.mubr.f32.gmra.mxu0 %v4447
    %v4515 = vpop.f32.mrf.mxu0
    %v4516 = vadd.f32 %v3513, %v4515
    %v4517 = vpop.f32.mrf.mxu0
    %4518 = vdwg.mxu0
    %4520 = vrot.lane.b32.xlu0 %v4516, 6
    %v4521 = vpop.permute.xlu0 %4520
    %vm4523 = vcmask 50224
    %4524 = vst.msk [vmem:[#allocation21] sm:$0x3] %vm4523, %v4521
    %v4526 = vrot.slane %v3416, 6
    %4527 = vrot.lane.b32.xlu0 %v4526, 32
    %v4528 = vpop.permute.xlu0 %4527
    %v4529 = vsel %vm319, %v4528, 0
    %4531 = vmatprep.subr.mxu0 0.0
    %4532 = vmatpush1.msra.mxu0 0.0
    %4533 = vmatprep.subr.mxu0 0.0
    %4534 = vmatpush1.msra.mxu0 0.0
    %4535 = vmatprep.subr.mxu0 0.0
    %4536 = vmatpush1.msra.mxu0 0.0
    %4537 = vmatprep.subr.mxu0 0.0
    %4538 = vmatpush1.msra.mxu0 0.0
    %4539 = vmatprep.subr.mxu0 0.0
    %4540 = vmatpush1.msra.mxu0 0.0
    %4541 = vmatprep.subr.mxu0 0.0
    %4542 = vmatpush1.msra.mxu0 0.0
    %4543 = vmatprep.subr.mxu0 0.0
    %4544 = vmatpush1.msra.mxu0 0.0
    %4545 = vmatprep.subr.mxu0 0.0
    %4546 = vmatpush1.msra.mxu0 0.0
    %4547 = vmatprep.subr.mxu0 0.0
    %4548 = vmatpush1.msra.mxu0 0.0
    %4549 = vmatprep.subr.mxu0 0.0
    %4550 = vmatpush1.msra.mxu0 0.0
    %4551 = vmatprep.subr.mxu0 0.0
    %4552 = vmatpush1.msra.mxu0 0.0
    %4553 = vmatprep.subr.mxu0 0.0
    %4554 = vmatpush1.msra.mxu0 0.0
    %4555 = vmatprep.subr.mxu0 0.0
    %4556 = vmatpush1.msra.mxu0 %v3420
    %4557 = vmatprep.subr.mxu0 0.0
    %4558 = vmatpush1.msra.mxu0 %v3419
    %4559 = vmatprep.subr.mxu0 0.0
    %4560 = vmatpush1.msra.mxu0 %v3418
    %4561 = vmatprep.subr.mxu0 0.0
    %4562 = vmatpush1.msra.mxu0 %v3417
    %4563 = vmatprep.subr.mxu0 0.0
    %4564 = vmatpush2.msra.mxu0 0.0
    %4565 = vmatprep.subr.mxu0 0.0
    %4566 = vmatpush2.msra.mxu0 0.0
    %4567 = vmatprep.subr.mxu0 0.0
    %4568 = vmatpush2.msra.mxu0 0.0
    %4569 = vmatprep.subr.mxu0 0.0
    %4570 = vmatpush2.msra.mxu0 0.0
    %4571 = vmatprep.subr.mxu0 0.0
    %4572 = vmatpush2.msra.mxu0 0.0
    %4573 = vmatprep.subr.mxu0 0.0
    %4574 = vmatpush2.msra.mxu0 0.0
    %4575 = vmatprep.subr.mxu0 0.0
    %4576 = vmatpush2.msra.mxu0 0.0
    %4577 = vmatprep.subr.mxu0 0.0
    %4578 = vmatpush2.msra.mxu0 0.0
    %4579 = vmatprep.subr.mxu0 0.0
    %4580 = vmatpush2.msra.mxu0 0.0
    %4581 = vmatprep.subr.mxu0 0.0
    %4582 = vmatpush2.msra.mxu0 0.0
    %4583 = vmatprep.subr.mxu0 0.0
    %4584 = vmatpush2.msra.mxu0 0.0
    %4585 = vmatprep.subr.mxu0 0.0
    %4586 = vmatpush2.msra.mxu0 0.0
    %4587 = vmatprep.subr.mxu0 0.0
    %4588 = vmatpush2.msra.mxu0 0.0
    %4589 = vmatprep.subr.mxu0 0.0
    %4590 = vmatpush2.msra.mxu0 0.0
    %4591 = vmatprep.subr.mxu0 0.0
    %4592 = vmatpush2.msra.mxu0 0.0
    %4593 = vmatprep.subr.mxu0 0.0
    %4594 = vmatpush2.msra.mxu0 0.0
    %4595 = vmatprep.mubr.f32.mxu0 0.0
    %4596 = vmatmul.mubr.f32.gmra.mxu0 %v4529
    %v4597 = vpop.f32.mrf.mxu0
    %v4598 = vadd.f32 %v3431, %v4597
    %v4599 = vpop.f32.mrf.mxu0
    %4600 = vdwg.mxu0
    %v4601 = vtanh.pop %v4598
    %v4603 = vsel %vm319, %v4601, 0
    %4605 = vmatprep.subr.mxu0 0.0
    %4606 = vmatpush1.msra.mxu0 0.0
    %4607 = vmatprep.subr.mxu0 0.0
    %4608 = vmatpush1.msra.mxu0 0.0
    %4609 = vmatprep.subr.mxu0 0.0
    %4610 = vmatpush1.msra.mxu0 0.0
    %4611 = vmatprep.subr.mxu0 0.0
    %4612 = vmatpush1.msra.mxu0 0.0
    %4613 = vmatprep.subr.mxu0 0.0
    %4614 = vmatpush1.msra.mxu0 0.0
    %4615 = vmatprep.subr.mxu0 0.0
    %4616 = vmatpush1.msra.mxu0 0.0
    %4617 = vmatprep.subr.mxu0 0.0
    %4618 = vmatpush1.msra.mxu0 0.0
    %4619 = vmatprep.subr.mxu0 0.0
    %4620 = vmatpush1.msra.mxu0 0.0
    %4621 = vmatprep.subr.mxu0 0.0
    %4622 = vmatpush1.msra.mxu0 0.0
    %4623 = vmatprep.subr.mxu0 0.0
    %4624 = vmatpush1.msra.mxu0 0.0
    %4625 = vmatprep.subr.mxu0 0.0
    %4626 = vmatpush1.msra.mxu0 0.0
    %4627 = vmatprep.subr.mxu0 0.0
    %4628 = vmatpush1.msra.mxu0 0.0
    %4629 = vmatprep.subr.mxu0 0.0
    %4630 = vmatpush1.msra.mxu0 %v3425
    %4631 = vmatprep.subr.mxu0 0.0
    %4632 = vmatpush1.msra.mxu0 %v3424
    %4633 = vmatprep.subr.mxu0 0.0
    %4634 = vmatpush1.msra.mxu0 %v3423
    %4635 = vmatprep.subr.mxu0 0.0
    %4636 = vmatpush1.msra.mxu0 %v3422
    %4637 = vmatprep.subr.mxu0 0.0
    %4638 = vmatpush2.msra.mxu0 0.0
    %4639 = vmatprep.subr.mxu0 0.0
    %4640 = vmatpush2.msra.mxu0 0.0
    %4641 = vmatprep.subr.mxu0 0.0
    %4642 = vmatpush2.msra.mxu0 0.0
    %4643 = vmatprep.subr.mxu0 0.0
    %4644 = vmatpush2.msra.mxu0 0.0
    %4645 = vmatprep.subr.mxu0 0.0
    %4646 = vmatpush2.msra.mxu0 0.0
    %4647 = vmatprep.subr.mxu0 0.0
    %4648 = vmatpush2.msra.mxu0 0.0
    %4649 = vmatprep.subr.mxu0 0.0
    %4650 = vmatpush2.msra.mxu0 0.0
    %4651 = vmatprep.subr.mxu0 0.0
    %4652 = vmatpush2.msra.mxu0 0.0
    %4653 = vmatprep.subr.mxu0 0.0
    %4654 = vmatpush2.msra.mxu0 0.0
    %4655 = vmatprep.subr.mxu0 0.0
    %4656 = vmatpush2.msra.mxu0 0.0
    %4657 = vmatprep.subr.mxu0 0.0
    %4658 = vmatpush2.msra.mxu0 0.0
    %4659 = vmatprep.subr.mxu0 0.0
    %4660 = vmatpush2.msra.mxu0 0.0
    %4661 = vmatprep.subr.mxu0 0.0
    %4662 = vmatpush2.msra.mxu0 0.0
    %4663 = vmatprep.subr.mxu0 0.0
    %4664 = vmatpush2.msra.mxu0 0.0
    %4665 = vmatprep.subr.mxu0 0.0
    %4666 = vmatpush2.msra.mxu0 0.0
    %4667 = vmatprep.subr.mxu0 0.0
    %4668 = vmatpush2.msra.mxu0 0.0
    %4669 = vmatprep.mubr.f32.mxu0 0.0
    %4670 = vmatmul.mubr.f32.gmra.mxu0 %v4603
    %v4671 = vpop.f32.mrf.mxu0
    %v4672 = vadd.f32 %v3513, %v4671
    %v4673 = vpop.f32.mrf.mxu0
    %4674 = vdwg.mxu0
    %4676 = vrot.lane.b32.xlu0 %v4672, 7
    %v4677 = vpop.permute.xlu0 %4676
    %vm4679 = vcmask 58424
    %4680 = vst.msk [vmem:[#allocation21] sm:$0x3] %vm4679, %v4677
    %v4681 = vld [vmem:[#allocation21] sm:$0x3]
    %vm4682 = vcmask 58368
    %v4683 = vsel %vm4682, %v4681, -inf
    %4684 = vmax.xlane.f32.xlu0 %v4683
    %v4685 = vpop.xlane.xlu0 %4684
    %v4686 = vsub.f32 %v4681, %v4685
    %v4687 = vmul.f32 %v4686, 1.442695
    %v4688 = vpow.pop %v4687
    %v4689 = vsel %vm4682, %v4688, 0.0
    %4690 = vadd.xlane.f32.xlu0 %v4689
    %v4691 = vpop.xlane.xlu0 %4690
    %v4692 = vrcp.pop %v4691
    %v4693 = vmul.f32 %v4688, %v4692
    %4694 = vst.msk [vmem:[#allocation21] sm:$0x3] %vm4682, %v4693
    %4696 = vset.pattern.permute.xlu0 0
    %4697 = vperm.xlu0 %4696, %v4693
    %v4698 = vpop.permute.xlu0 %4697
    %v4700 = vmul.f32 %v4698, %v762
    %4701 = vset.pattern.permute.xlu0 1
    %4702 = vperm.xlu0 %4701, %v4693
    %v4703 = vpop.permute.xlu0 %4702
    %v4706 = vmul.f32 %v4703, %v3593
    %4708 = vrot.lane.b32.xlu0 %v4706, 96
    %v4709 = vpop.permute.xlu0 %4708
    %v4711 = vadd.f32 %v4700, %v4709
    %4712 = vset.pattern.permute.xlu0 2
    %4713 = vperm.xlu0 %4712, %v4693
    %v4714 = vpop.permute.xlu0 %4713
    %v4717 = vmul.f32 %v4714, %v3749
    %4719 = vrot.lane.b32.xlu0 %v4717, 96
    %v4720 = vpop.permute.xlu0 %4719
    %v4722 = vadd.f32 %v4711, %v4720
    %4723 = vset.pattern.permute.xlu0 3
    %4724 = vperm.xlu0 %4723, %v4693
    %v4725 = vpop.permute.xlu0 %4724
    %v4728 = vmul.f32 %v4725, %v3905
    %4730 = vrot.lane.b32.xlu0 %v4728, 96
    %v4731 = vpop.permute.xlu0 %4730
    %v4733 = vadd.f32 %v4722, %v4731
    %4734 = vset.pattern.permute.xlu0 4
    %4735 = vperm.xlu0 %4734, %v4693
    %v4736 = vpop.permute.xlu0 %4735
    %v4738 = vmul.f32 %v4736, %v2278
    %v4739 = vadd.f32 %v4733, %v4738
    %4740 = vset.pattern.permute.xlu0 5
    %4741 = vperm.xlu0 %4740, %v4693
    %v4742 = vpop.permute.xlu0 %4741
    %v4745 = vmul.f32 %v4742, %v4216
    %4747 = vrot.lane.b32.xlu0 %v4745, 96
    %v4748 = vpop.permute.xlu0 %4747
    %v4750 = vadd.f32 %v4739, %v4748
    %4751 = vset.pattern.permute.xlu0 6
    %4752 = vperm.xlu0 %4751, %v4693
    %v4753 = vpop.permute.xlu0 %4752
    %v4756 = vmul.f32 %v4753, %v4372
    %4758 = vrot.lane.b32.xlu0 %v4756, 96
    %v4759 = vpop.permute.xlu0 %4758
    %v4761 = vadd.f32 %v4750, %v4759
    %4762 = vset.pattern.permute.xlu0 7
    %4763 = vperm.xlu0 %4762, %v4693
    %v4764 = vpop.permute.xlu0 %4763
    %v4767 = vmul.f32 %v4764, %v4528
    %4769 = vrot.lane.b32.xlu0 %v4767, 96
    %v4770 = vpop.permute.xlu0 %4769
    %v4772 = vadd.f32 %v4761, %v4770
    %v4773 = vld [vmem:[#allocation18] sm:$0xff]
    %v4774 = vld [vmem:[#allocation18 + $0x8] sm:$0xff]
    %v4775 = vld [vmem:[#allocation18 + $0x10] sm:$0xff]
    %v4776 = vld [vmem:[#allocation18 + $0x18] sm:$0xff]
    %v4777 = vld [vmem:[%s20] sm:$0x1]
    %v4779 = vlaneseq
    %v4780 = vshrl.u32 %v4779, 7
    %v4781 = vsub.s32 0, %v4780
    %v4782 = vrot.slane %v4777, %v4781
    %4785 = vrot.lane.b32.xlu0 %v4772, 32
    %v4786 = vpop.permute.xlu0 %4785
    %v4787 = vsel %vm319, %v4786, 0
    %4789 = vmatprep.subr.mxu0 0.0
    %4790 = vmatpush1.msra.mxu0 0.0
    %4791 = vmatprep.subr.mxu0 0.0
    %4792 = vmatpush1.msra.mxu0 0.0
    %4793 = vmatprep.subr.mxu0 0.0
    %4794 = vmatpush1.msra.mxu0 0.0
    %4795 = vmatprep.subr.mxu0 0.0
    %4796 = vmatpush1.msra.mxu0 0.0
    %4797 = vmatprep.subr.mxu0 0.0
    %4798 = vmatpush1.msra.mxu0 0.0
    %4799 = vmatprep.subr.mxu0 0.0
    %4800 = vmatpush1.msra.mxu0 0.0
    %4801 = vmatprep.subr.mxu0 0.0
    %4802 = vmatpush1.msra.mxu0 0.0
    %4803 = vmatprep.subr.mxu0 0.0
    %4804 = vmatpush1.msra.mxu0 0.0
    %4805 = vmatprep.subr.mxu0 0.0
    %4806 = vmatpush1.msra.mxu0 0.0
    %4807 = vmatprep.subr.mxu0 0.0
    %4808 = vmatpush1.msra.mxu0 0.0
    %4809 = vmatprep.subr.mxu0 0.0
    %4810 = vmatpush1.msra.mxu0 0.0
    %4811 = vmatprep.subr.mxu0 0.0
    %4812 = vmatpush1.msra.mxu0 0.0
    %4813 = vmatprep.subr.mxu0 0.0
    %4814 = vmatpush1.msra.mxu0 %v4776
    %4815 = vmatprep.subr.mxu0 0.0
    %4816 = vmatpush1.msra.mxu0 %v4775
    %4817 = vmatprep.subr.mxu0 0.0
    %4818 = vmatpush1.msra.mxu0 %v4774
    %4819 = vmatprep.subr.mxu0 0.0
    %4820 = vmatpush1.msra.mxu0 %v4773
    %4821 = vmatprep.subr.mxu0 0.0
    %4822 = vmatpush2.msra.mxu0 0.0
    %4823 = vmatprep.subr.mxu0 0.0
    %4824 = vmatpush2.msra.mxu0 0.0
    %4825 = vmatprep.subr.mxu0 0.0
    %4826 = vmatpush2.msra.mxu0 0.0
    %4827 = vmatprep.subr.mxu0 0.0
    %4828 = vmatpush2.msra.mxu0 0.0
    %4829 = vmatprep.subr.mxu0 0.0
    %4830 = vmatpush2.msra.mxu0 0.0
    %4831 = vmatprep.subr.mxu0 0.0
    %4832 = vmatpush2.msra.mxu0 0.0
    %4833 = vmatprep.subr.mxu0 0.0
    %4834 = vmatpush2.msra.mxu0 0.0
    %4835 = vmatprep.subr.mxu0 0.0
    %4836 = vmatpush2.msra.mxu0 0.0
    %4837 = vmatprep.subr.mxu0 0.0
    %4838 = vmatpush2.msra.mxu0 0.0
    %4839 = vmatprep.subr.mxu0 0.0
    %4840 = vmatpush2.msra.mxu0 0.0
    %4841 = vmatprep.subr.mxu0 0.0
    %4842 = vmatpush2.msra.mxu0 0.0
    %4843 = vmatprep.subr.mxu0 0.0
    %4844 = vmatpush2.msra.mxu0 0.0
    %4845 = vmatprep.subr.mxu0 0.0
    %4846 = vmatpush2.msra.mxu0 0.0
    %4847 = vmatprep.subr.mxu0 0.0
    %4848 = vmatpush2.msra.mxu0 0.0
    %4849 = vmatprep.subr.mxu0 0.0
    %4850 = vmatpush2.msra.mxu0 0.0
    %4851 = vmatprep.subr.mxu0 0.0
    %4852 = vmatpush2.msra.mxu0 0.0
    %4853 = vmatprep.mubr.f32.mxu0 0.0
    %4854 = vmatmul.mubr.f32.gmra.mxu0 %v4787
    %v4855 = vpop.f32.mrf.mxu0
    %v4856 = vadd.f32 %v4782, %v4855
    %v4857 = vpop.f32.mrf.mxu0
    %4858 = vdwg.mxu0
    %v4859 = vmax.f32 %v4856, 0.0
    %v4860 = vld [vmem:[%s21] sm:$0xff]
    %v4861 = vld [vmem:[%s21 + $0x8] sm:$0xff]
    %v4862 = vld [vmem:[%s21 + $0x10] sm:$0xff]
    %v4863 = vld [vmem:[%s21 + $0x18] sm:$0xff]
    %v4864 = vld [vmem:[%s21 + $0x20] sm:$0xff]
    %v4865 = vld [vmem:[%s21 + $0x28] sm:$0xff]
    %v4866 = vld [vmem:[%s22] sm:$0x1]
    %v4868 = vlaneseq
    %v4869 = vshrl.u32 %v4868, 7
    %v4870 = vsub.s32 0, %v4869
    %v4871 = vrot.slane %v4866, %v4870
    %vm4873 = vcmask 392192
    %v4875 = vsel %vm4873, %v4859, 0
    %4877 = vmatprep.subr.mxu0 0.0
    %4878 = vmatpush1.msra.mxu0 0.0
    %4879 = vmatprep.subr.mxu0 0.0
    %4880 = vmatpush1.msra.mxu0 0.0
    %4881 = vmatprep.subr.mxu0 0.0
    %4882 = vmatpush1.msra.mxu0 0.0
    %4883 = vmatprep.subr.mxu0 0.0
    %4884 = vmatpush1.msra.mxu0 0.0
    %4885 = vmatprep.subr.mxu0 0.0
    %4886 = vmatpush1.msra.mxu0 0.0
    %4887 = vmatprep.subr.mxu0 0.0
    %4888 = vmatpush1.msra.mxu0 0.0
    %4889 = vmatprep.subr.mxu0 0.0
    %4890 = vmatpush1.msra.mxu0 0.0
    %4891 = vmatprep.subr.mxu0 0.0
    %4892 = vmatpush1.msra.mxu0 0.0
    %4893 = vmatprep.subr.mxu0 0.0
    %4894 = vmatpush1.msra.mxu0 0.0
    %4895 = vmatprep.subr.mxu0 0.0
    %4896 = vmatpush1.msra.mxu0 0.0
    %4897 = vmatprep.subr.mxu0 0.0
    %4898 = vmatpush1.msra.mxu0 %v4865
    %4899 = vmatprep.subr.mxu0 0.0
    %4900 = vmatpush1.msra.mxu0 %v4864
    %4901 = vmatprep.subr.mxu0 0.0
    %4902 = vmatpush1.msra.mxu0 %v4863
    %4903 = vmatprep.subr.mxu0 0.0
    %4904 = vmatpush1.msra.mxu0 %v4862
    %4905 = vmatprep.subr.mxu0 0.0
    %4906 = vmatpush1.msra.mxu0 %v4861
    %4907 = vmatprep.subr.mxu0 0.0
    %4908 = vmatpush1.msra.mxu0 %v4860
    %4909 = vmatprep.subr.mxu0 0.0
    %4910 = vmatpush2.msra.mxu0 0.0
    %4911 = vmatprep.subr.mxu0 0.0
    %4912 = vmatpush2.msra.mxu0 0.0
    %4913 = vmatprep.subr.mxu0 0.0
    %4914 = vmatpush2.msra.mxu0 0.0
    %4915 = vmatprep.subr.mxu0 0.0
    %4916 = vmatpush2.msra.mxu0 0.0
    %4917 = vmatprep.subr.mxu0 0.0
    %4918 = vmatpush2.msra.mxu0 0.0
    %4919 = vmatprep.subr.mxu0 0.0
    %4920 = vmatpush2.msra.mxu0 0.0
    %4921 = vmatprep.subr.mxu0 0.0
    %4922 = vmatpush2.msra.mxu0 0.0
    %4923 = vmatprep.subr.mxu0 0.0
    %4924 = vmatpush2.msra.mxu0 0.0
    %4925 = vmatprep.subr.mxu0 0.0
    %4926 = vmatpush2.msra.mxu0 0.0
    %4927 = vmatprep.subr.mxu0 0.0
    %4928 = vmatpush2.msra.mxu0 0.0
    %4929 = vmatprep.subr.mxu0 0.0
    %4930 = vmatpush2.msra.mxu0 0.0
    %4931 = vmatprep.subr.mxu0 0.0
    %4932 = vmatpush2.msra.mxu0 0.0
    %4933 = vmatprep.subr.mxu0 0.0
    %4934 = vmatpush2.msra.mxu0 0.0
    %4935 = vmatprep.subr.mxu0 0.0
    %4936 = vmatpush2.msra.mxu0 0.0
    %4937 = vmatprep.subr.mxu0 0.0
    %4938 = vmatpush2.msra.mxu0 0.0
    %4939 = vmatprep.subr.mxu0 0.0
    %4940 = vmatpush2.msra.mxu0 0.0
    %4941 = vmatprep.mubr.f32.mxu0 0.0
    %4942 = vmatmul.mubr.f32.gmra.mxu0 %v4875
    %v4943 = vpop.f32.mrf.mxu0
    %v4944 = vadd.f32 %v4871, %v4943
    %v4945 = vpop.f32.mrf.mxu0
    %4946 = vdwg.mxu0
    %vm4947 = vcmask 17408
    %4948 = vst.msk [vmem:[#allocation20] sm:$0x3] %vm4947, %v4944
    // Predicated region
    $region134: #{tpu_custom_call.1} parent=1 // pred_check
      _
    $region135: #{tpu_custom_call.1} parent=1 // pred_check_branch
      %4950 = sbr.rel (0) target = $region137
    $region136: #{tpu_custom_call.1} parent=1 // pred_region
      %s4952 = ssub.s32 32, 32
      %4953 = vsyncadd [#allocation5], %s4952
      %s4955 = sshll.u32 [#allocation20], 4
      %s4956 = int_to_ptr.vmem [resolvable:$true] %s4955
      %4958 = dma.vmem_to_hbm [thread:$0]  %s4956, 32, %s23, [#allocation5]
    $region137: #{tpu_custom_call.1} parent=1 // pred_fallthru
      _
    // Predicated region
    $region138: #{tpu_custom_call.1} parent=1 // pred_check
      _
    $region139: #{tpu_custom_call.1} parent=1 // pred_check_branch
      %4960 = sbr.rel (0) target = $region141
    $region140: #{tpu_custom_call.1} parent=1 // pred_region
      %s4962 = ssub.s32 32, 32
      %4963 = vsyncadd [#allocation22], %s4962
      %s4965 = sshll.u32 [#allocation21], 4
      %s4966 = int_to_ptr.vmem [resolvable:$true] %s4965
      %4968 = dma.vmem_to_hbm [thread:$0]  %s4966, 32, %s24, [#allocation22]
    $region141: #{tpu_custom_call.1} parent=1 // pred_fallthru
      _
    // Predicated region
    $region142: #{tpu_custom_call.1} parent=1 // pred_check
      _
    $region143: #{tpu_custom_call.1} parent=1 // pred_check_branch
      %4970 = sbr.rel (0) target = $region145
    $region144: #{tpu_custom_call.1} parent=1 // pred_region
      %4971 = dma.done [#allocation5], 32
    $region145: #{tpu_custom_call.1} parent=1 // pred_fallthru
      _
    // Predicated region
    $region146: #{tpu_custom_call.1} parent=1 // pred_check
      _
    $region147: #{tpu_custom_call.1} parent=1 // pred_check_branch
      %4973 = sbr.rel (0) target = $region149
    $region148: #{tpu_custom_call.1} parent=1 // pred_region
      %4974 = dma.done [#allocation22], 32
    $region149: #{tpu_custom_call.1} parent=1 // pred_fallthru
      _
    %4975 = vsyncpa [#allocation4], 1
    %4976 = vsyncpa [#allocation7], 1
    %4977 = vsyncpa [#allocation10], 1
    %4978 = vsyncpa [#allocation13], 1
    %4979 = vsyncpa [#allocation16], 1
    %4980 = vsyncpa [#allocation19], 1
    %4981 = vsyncpa [#allocation5], 1
    %4982 = vsyncpa [#allocation22], 1

</llo_original>
